<compile_context>
chip_gen: v7x
topology: tpu7x:2x2x1
jax: 0.10.0
libtpu: 0.0.40
codegen_flags: <defaults>
</compile_context>

<pallas_src>
import jax
import jax.numpy as jnp
from jax import lax
from jax.experimental import pallas as pl
from jax.experimental.pallas import tpu as pltpu

EPS = 1e-5            # nn.BatchNorm2d default eps
LANE = 128            # TPU lane width: pad channels / FC dims to this
ROW_TILE_TARGET = 1024  # conservative (fits v7x 64MiB VMEM); v6e could go bigger


def _round_up(x, m):
    return (x + m - 1) // m * m


def _row_tiling(m, target=ROW_TILE_TARGET, min_steps=2):
    """Pick (tile, padded_m) for a row dimension of size m.

    tile is a multiple of 8 and <= target; rows are padded up to a multiple of
    the tile.  Prefers the fewest grid steps, then the least row padding, then
    the largest tile; caps the tile so there are >= min_steps grid steps when
    there is enough work (v7x: feed both TensorCores)."""
    m8 = _round_up(max(m, 1), 8)
    cap = min(target, m8)
    if m8 >= 16 * min_steps:                       # enough work to split
        cap = min(cap, _round_up(-(-m8 // min_steps), 8))
    best_key, best = None, (8, m8)
    for t in range(8, cap + 1, 8):
        pad_m = _round_up(m8, t)
        key = (pad_m // t, pad_m - m8, -t)
        if best_key is None or key < best_key:
            best_key, best = key, (t, pad_m)
    return best


def _compiler_params():
    return pltpu.CompilerParams(
        dimension_semantics=("parallel",),          # v7x: shard row tiles over 2 TCs
        vmem_limit_bytes=32 * 1024 * 1024,
    )


# ---------------------------------------------------------------- kernels ---

def conv_stats_kernel(p_ref, w_ref, stat_ref):
    """p_ref: (4, TILE, KPAD) bf16 pool-member patch slabs, w_ref: (KPAD, 128) bf16.
    Emits per-tile channel sum / sum-of-squares of z = P @ W (no bias; the bias
    is folded analytically in the XLA glue, so zero-padded rows contribute 0)."""
    s1 = jnp.zeros((1, LANE), jnp.float32)
    s2 = jnp.zeros((1, LANE), jnp.float32)
    for m in range(4):                                           # static unroll
        z = jnp.dot(p_ref[m], w_ref[...], preferred_element_type=jnp.float32)
        s1 = s1 + jnp.sum(z, axis=0, keepdims=True)
        s2 = s2 + jnp.sum(z * z, axis=0, keepdims=True)
    stat_ref[...] = jnp.concatenate([s1, s2], axis=0).reshape(1, 2, LANE)


def conv_bn_relu_pool_kernel(p_ref, w_ref, scale_ref, shift_ref, o_ref):
    """Recompute the conv matmul per pool member, apply the prefolded BN affine
    (conv bias + batch-stat BN) + ReLU, and 2x2 max-pool = elementwise max over
    the four member slabs.  Output tile: (TILE, 128) bf16, lane-dense."""
    y = None
    for m in range(4):                                           # static unroll
        z = jnp.dot(p_ref[m], w_ref[...], preferred_element_type=jnp.float32)
        ym = jnp.maximum(z * scale_ref[...] + shift_ref[...], 0.0)
        y = ym if y is None else jnp.maximum(y, ym)
    o_ref[...] = y.astype(o_ref.dtype)


def mlp_kernel(x_ref, w1_ref, b1_ref, w2_ref, b2_ref, w3_ref, b3_ref, o_ref):
    h = jnp.dot(x_ref[...], w1_ref[...], preferred_element_type=jnp.float32)
    h = jnp.maximum(h + b1_ref[...], 0.0)
    h = jnp.dot(h.astype(jnp.bfloat16), w2_ref[...],
                preferred_element_type=jnp.float32)
    h = jnp.maximum(h + b2_ref[...], 0.0)
    o_ref[...] = jnp.dot(h.astype(jnp.bfloat16), w3_ref[...],
                         preferred_element_type=jnp.float32) + b3_ref[...]


# --------------------------------------------------------------- wrappers ---

def conv_bn_relu_pool(x_nhwc, w, b, gamma, beta):
    """Conv2d(k=5, stride 1, pad 0) + BatchNorm2d (training-mode batch stats)
    + ReLU + MaxPool2d(2, 2).

    x_nhwc: (N, H, W, C) with only the REAL input channels.
    w: PyTorch layout (OC, IC, K, K).  Returns (N, OH//2, OW//2, OC) bf16 NHWC."""
    oc, ic, k, _ = w.shape
    n, h, w_in, c = x_nhwc.shape
    assert c == ic
    oh, ow = h - k + 1, w_in - k + 1
    assert oh % 2 == 0 and ow % 2 == 0
    oh2, ow2 = oh // 2, ow // 2
    mp = n * oh2 * ow2                      # pooled pixels (= conv pixels / 4)
    m_conv = n * oh * ow                    # conv output pixels (BN denominator)

    kk = ic * k * k
    kpad = _round_up(kk, LANE)
    tile, mp_pad = _row_tiling(mp)
    grid = (mp_pad // tile,)

    # im2col in XLA (bf16), arranged as 4 pool-member slabs: slab m=(di,dj)
    # holds patches of conv outputs (2i+di, 2j+dj), rows in (n, i, j) order,
    # columns ordered (ki, kj, c).  Padded rows / columns are zero.
    cols = [x_nhwc[:, ki:ki + oh, kj:kj + ow, :]
            for ki in range(k) for kj in range(k)]
    p = jnp.concatenate(cols, axis=-1)                    # (N, OH, OW, kk)
    slabs = jnp.stack([p[:, di::2, dj::2, :].reshape(mp, kk)
                       for di in (0, 1) for dj in (0, 1)], axis=0)
    slabs = jnp.pad(slabs, ((0, 0), (0, mp_pad - mp), (0, kpad - kk)))
    slabs = slabs.astype(jnp.bfloat16)

    # Conv weight: rows (ki, kj, ic) to match patch columns, padded to 128 lanes.
    wt = w.transpose(2, 3, 1, 0).reshape(kk, oc)
    wt = jnp.pad(wt, ((0, kpad - kk), (0, LANE - oc))).astype(jnp.bfloat16)

    # ---- pass A: per-tile channel statistics of z = P @ W ------------------
    partial = pl.pallas_call(
        conv_stats_kernel,
        out_shape=jax.ShapeDtypeStruct((grid[0], 2, LANE), jnp.float32),
        grid=grid,
        in_specs=[
            pl.BlockSpec((4, tile, kpad), lambda i: (0, i, 0)),
            pl.BlockSpec((kpad, LANE), lambda i: (0, 0)),
        ],
        out_specs=pl.BlockSpec((1, 2, LANE), lambda i: (i, 0, 0)),
        compiler_params=_compiler_params(),
    )(slabs, wt)
    s = jnp.sum(partial, axis=0)                           # (2, 128) global sums

    # ---- tiny XLA glue: fold conv bias + BN(batch stats) into one affine ---
    b_pad = jnp.pad(b, (0, LANE - oc)).astype(jnp.float32)
    g_pad = jnp.pad(gamma, (0, LANE - oc)).astype(jnp.float32)
    beta_pad = jnp.pad(beta, (0, LANE - oc)).astype(jnp.float32)
    mean_z = s[0] / float(m_conv)                          # mean of P @ W
    mean = mean_z + b_pad                                  # mean of conv + bias
    var = jnp.maximum(s[1] / float(m_conv) - mean_z * mean_z, 0.0)  # biased var
    scale = g_pad * lax.rsqrt(var + EPS)
    shift = beta_pad + (b_pad - mean) * scale              # applied to z = P @ W
    scale = scale.reshape(1, LANE)
    shift = shift.reshape(1, LANE)

    # ---- pass B: recompute conv + BN + ReLU + 2x2 max-pool ------------------
    pooled = pl.pallas_call(
        conv_bn_relu_pool_kernel,
        out_shape=jax.ShapeDtypeStruct((mp_pad, LANE), jnp.bfloat16),
        grid=grid,
        in_specs=[
            pl.BlockSpec((4, tile, kpad), lambda i: (0, i, 0)),
            pl.BlockSpec((kpad, LANE), lambda i: (0, 0)),
            pl.BlockSpec((1, LANE), lambda i: (0, 0)),
            pl.BlockSpec((1, LANE), lambda i: (0, 0)),
        ],
        out_specs=pl.BlockSpec((tile, LANE), lambda i: (i, 0)),
        compiler_params=_compiler_params(),
    )(slabs, wt, scale, shift)

    # Drop padded rows / lanes; rows are already in (n, i, j) NHWC order.
    return pooled[:mp, :oc].reshape(n, oh2, ow2, oc)


def mlp(a2, p):
    """fc1+ReLU, fc2+ReLU, fc3 as one fused Pallas kernel.

    a2: (N, 5, 5, 16) NHWC (real channels only) -> fc1 contraction is 512
    columns (400 real + pad), not 3200."""
    n = a2.shape[0]
    kk = 5 * 5 * 16
    kin = _round_up(kk, LANE)                              # 512
    tile, n_pad = _row_tiling(n, target=512)
    x = a2.reshape(n, kk)
    x = jnp.pad(x, ((0, n_pad - n), (0, kin - kk))).astype(jnp.bfloat16)

    # fc1 weight: PyTorch flatten order is (c, h, w); ours is (h, w, c).
    w1 = p["fc1_w"].reshape(120, 16, 5, 5).transpose(2, 3, 1, 0).reshape(kk, 120)
    w1 = jnp.pad(w1, ((0, kin - kk), (0, LANE - 120))).astype(jnp.bfloat16)
    b1 = jnp.pad(p["fc1_b"], (0, LANE - 120)).reshape(1, LANE).astype(jnp.float32)
    w2 = jnp.pad(p["fc2_w"].T, ((0, LANE - 120), (0, LANE - 84))).astype(jnp.bfloat16)
    b2 = jnp.pad(p["fc2_b"], (0, LANE - 84)).reshape(1, LANE).astype(jnp.float32)
    w3 = jnp.pad(p["fc3_w"].T, ((0, LANE - 84), (0, LANE - 10))).astype(jnp.bfloat16)
    b3 = jnp.pad(p["fc3_b"], (0, LANE - 10)).reshape(1, LANE).astype(jnp.float32)

    grid = (n_pad // tile,)
    out = pl.pallas_call(
        mlp_kernel,
        out_shape=jax.ShapeDtypeStruct((n_pad, LANE), jnp.float32),
        grid=grid,
        in_specs=[
            pl.BlockSpec((tile, kin), lambda i: (i, 0)),
            pl.BlockSpec((kin, LANE), lambda i: (0, 0)),
            pl.BlockSpec((1, LANE), lambda i: (0, 0)),
            pl.BlockSpec((LANE, LANE), lambda i: (0, 0)),
            pl.BlockSpec((1, LANE), lambda i: (0, 0)),
            pl.BlockSpec((LANE, LANE), lambda i: (0, 0)),
            pl.BlockSpec((1, LANE), lambda i: (0, 0)),
        ],
        out_specs=pl.BlockSpec((tile, LANE), lambda i: (i, 0)),
        compiler_params=_compiler_params(),
    )(x, w1, b1, w2, b2, w3, b3)
    return out[:n, :10]


@jax.jit
def cnn_forward(x, params):
    p = params
    x = jnp.transpose(x, (0, 2, 3, 1))                     # NCHW -> NHWC once
    a1 = conv_bn_relu_pool(x, p["w1"], p["b1"], p["g1"], p["beta1"])   # (N,14,14,6)
    a2 = conv_bn_relu_pool(a1, p["w2"], p["b2"], p["g2"], p["beta2"])  # (N,5,5,16)
    return mlp(a2, p)


# ------------------------------------------------------------------ params ---

def _uniform(key, shape, fan_in):
    bound = 1.0 / jnp.sqrt(jnp.float32(fan_in))
    return jax.random.uniform(key, shape, jnp.float32, -bound, bound)


def init_params(key):
    ks = jax.random.split(key, 10)
    return {
        # conv1: 3 -> 6, k=5
        "w1": _uniform(ks[0], (6, 3, 5, 5), 3 * 25),
        "b1": _uniform(ks[1], (6,), 3 * 25),
        "g1": jnp.ones((6,), jnp.float32),
        "beta1": jnp.zeros((6,), jnp.float32),
        # conv2: 6 -> 16, k=5
        "w2": _uniform(ks[2], (16, 6, 5, 5), 6 * 25),
        "b2": _uniform(ks[3], (16,), 6 * 25),
        "g2": jnp.ones((16,), jnp.float32),
        "beta2": jnp.zeros((16,), jnp.float32),
        # fc layers (PyTorch (out, in) layout)
        "fc1_w": _uniform(ks[4], (120, 400), 400),
        "fc1_b": _uniform(ks[5], (120,), 400),
        "fc2_w": _uniform(ks[6], (84, 120), 120),
        "fc2_b": _uniform(ks[7], (84,), 120),
        "fc3_w": _uniform(ks[8], (10, 84), 84),
        "fc3_b": _uniform(ks[9], (10,), 84),
    }


if __name__ == "__main__":
    key = jax.random.PRNGKey(0)
    kx, kp = jax.random.split(key)
    # CIFAR-10-shaped input (16*5*5 flatten implies 32x32 spatial), small batch.
    x = jax.random.normal(kx, (2, 3, 32, 32), jnp.float32)
    params = init_params(kp)

    out = cnn_forward(x, params)
    out = jax.block_until_ready(out)
    assert out.shape == (2, 10), out.shape
    assert jnp.all(jnp.isfinite(out))
    print("KERNEL_OK")
</pallas_src>

<mosaic_0001>
module attributes {stable_mosaic.version = 11 : i64} {
  func.func @conv_stats_kernel(%arg0: i32, %arg1: memref<4x200x128xbf16, #tpu.memory_space<vmem>>, %arg2: memref<128x128xbf16, #tpu.memory_space<vmem>>, %arg3: memref<1x2x128xf32, #tpu.memory_space<vmem>>) attributes {dimension_semantics = [#tpu.dimension_semantics<parallel>], iteration_bounds = array<i64: 2>, scalar_prefetch = 0 : i64, scratch_operands = 0 : i64, tpu.core_type = #tpu.core_type<tc>, window_params = [{transform_indices = @transform_0, window_bounds = array<i64: 4, 200, 128>}, {pipeline_mode = #tpu.pipeline_mode<synchronous>, transform_indices = @transform_1, window_bounds = array<i64: 128, 128>}, {transform_indices = @transform_2, window_bounds = array<i64: 1, 2, 128>}]} {
    %cst = arith.constant 0.000000e+00 : f32
    %0 = vector.broadcast %cst : f32 to vector<1x128xf32>
    %cst_0 = arith.constant 0.000000e+00 : f32
    %1 = vector.broadcast %cst_0 : f32 to vector<1x128xf32>
    %c0 = arith.constant 0 : index
    %c0_1 = arith.constant 0 : index
    %c0_2 = arith.constant 0 : index
    %2 = vector.load %arg1[%c0, %c0_1, %c0_2] : memref<4x200x128xbf16, #tpu.memory_space<vmem>>, vector<1x200x128xbf16>
    %3 = vector.shape_cast %2 : vector<1x200x128xbf16> to vector<200x128xbf16>
    %c0_3 = arith.constant 0 : index
    %c0_4 = arith.constant 0 : index
    %4 = vector.load %arg2[%c0_3, %c0_4] : memref<128x128xbf16, #tpu.memory_space<vmem>>, vector<128x128xbf16>
    %cst_5 = arith.constant dense<0.000000e+00> : vector<200x128xf32>
    %5 = tpu.matmul %3, %4, %cst_5 {dimension_numbers = #tpu.dot_dimension_numbers<[1], [0], [0], [1], [0, 0, 1, 1], [], []>} : vector<200x128xbf16>, vector<128x128xbf16>, vector<200x128xf32> -> vector<200x128xf32>
    %cst_6 = arith.constant dense<0.000000e+00> : vector<128xf32>
    %6 = vector.multi_reduction <add>, %5, %cst_6 [0] : vector<200x128xf32> to vector<128xf32>
    %7 = vector.shape_cast %6 : vector<128xf32> to vector<1x128xf32>
    %8 = arith.addf %0, %7 : vector<1x128xf32>
    %9 = arith.mulf %5, %5 : vector<200x128xf32>
    %cst_7 = arith.constant dense<0.000000e+00> : vector<128xf32>
    %10 = vector.multi_reduction <add>, %9, %cst_7 [0] : vector<200x128xf32> to vector<128xf32>
    %11 = vector.shape_cast %10 : vector<128xf32> to vector<1x128xf32>
    %12 = arith.addf %1, %11 : vector<1x128xf32>
    %c1 = arith.constant 1 : index
    %c0_8 = arith.constant 0 : index
    %c0_9 = arith.constant 0 : index
    %13 = vector.load %arg1[%c1, %c0_8, %c0_9] : memref<4x200x128xbf16, #tpu.memory_space<vmem>>, vector<1x200x128xbf16>
    %14 = vector.shape_cast %13 : vector<1x200x128xbf16> to vector<200x128xbf16>
    %c0_10 = arith.constant 0 : index
    %c0_11 = arith.constant 0 : index
    %15 = vector.load %arg2[%c0_10, %c0_11] : memref<128x128xbf16, #tpu.memory_space<vmem>>, vector<128x128xbf16>
    %cst_12 = arith.constant dense<0.000000e+00> : vector<200x128xf32>
    %16 = tpu.matmul %14, %15, %cst_12 {dimension_numbers = #tpu.dot_dimension_numbers<[1], [0], [0], [1], [0, 0, 1, 1], [], []>} : vector<200x128xbf16>, vector<128x128xbf16>, vector<200x128xf32> -> vector<200x128xf32>
    %cst_13 = arith.constant dense<0.000000e+00> : vector<128xf32>
    %17 = vector.multi_reduction <add>, %16, %cst_13 [0] : vector<200x128xf32> to vector<128xf32>
    %18 = vector.shape_cast %17 : vector<128xf32> to vector<1x128xf32>
    %19 = arith.addf %8, %18 : vector<1x128xf32>
    %20 = arith.mulf %16, %16 : vector<200x128xf32>
    %cst_14 = arith.constant dense<0.000000e+00> : vector<128xf32>
    %21 = vector.multi_reduction <add>, %20, %cst_14 [0] : vector<200x128xf32> to vector<128xf32>
    %22 = vector.shape_cast %21 : vector<128xf32> to vector<1x128xf32>
    %23 = arith.addf %12, %22 : vector<1x128xf32>
    %c2 = arith.constant 2 : index
    %c0_15 = arith.constant 0 : index
    %c0_16 = arith.constant 0 : index
    %24 = vector.load %arg1[%c2, %c0_15, %c0_16] : memref<4x200x128xbf16, #tpu.memory_space<vmem>>, vector<1x200x128xbf16>
    %25 = vector.shape_cast %24 : vector<1x200x128xbf16> to vector<200x128xbf16>
    %c0_17 = arith.constant 0 : index
    %c0_18 = arith.constant 0 : index
    %26 = vector.load %arg2[%c0_17, %c0_18] : memref<128x128xbf16, #tpu.memory_space<vmem>>, vector<128x128xbf16>
    %cst_19 = arith.constant dense<0.000000e+00> : vector<200x128xf32>
    %27 = tpu.matmul %25, %26, %cst_19 {dimension_numbers = #tpu.dot_dimension_numbers<[1], [0], [0], [1], [0, 0, 1, 1], [], []>} : vector<200x128xbf16>, vector<128x128xbf16>, vector<200x128xf32> -> vector<200x128xf32>
    %cst_20 = arith.constant dense<0.000000e+00> : vector<128xf32>
    %28 = vector.multi_reduction <add>, %27, %cst_20 [0] : vector<200x128xf32> to vector<128xf32>
    %29 = vector.shape_cast %28 : vector<128xf32> to vector<1x128xf32>
    %30 = arith.addf %19, %29 : vector<1x128xf32>
    %31 = arith.mulf %27, %27 : vector<200x128xf32>
    %cst_21 = arith.constant dense<0.000000e+00> : vector<128xf32>
    %32 = vector.multi_reduction <add>, %31, %cst_21 [0] : vector<200x128xf32> to vector<128xf32>
    %33 = vector.shape_cast %32 : vector<128xf32> to vector<1x128xf32>
    %34 = arith.addf %23, %33 : vector<1x128xf32>
    %c3 = arith.constant 3 : index
    %c0_22 = arith.constant 0 : index
    %c0_23 = arith.constant 0 : index
    %35 = vector.load %arg1[%c3, %c0_22, %c0_23] : memref<4x200x128xbf16, #tpu.memory_space<vmem>>, vector<1x200x128xbf16>
    %36 = vector.shape_cast %35 : vector<1x200x128xbf16> to vector<200x128xbf16>
    %c0_24 = arith.constant 0 : index
    %c0_25 = arith.constant 0 : index
    %37 = vector.load %arg2[%c0_24, %c0_25] : memref<128x128xbf16, #tpu.memory_space<vmem>>, vector<128x128xbf16>
    %cst_26 = arith.constant dense<0.000000e+00> : vector<200x128xf32>
    %38 = tpu.matmul %36, %37, %cst_26 {dimension_numbers = #tpu.dot_dimension_numbers<[1], [0], [0], [1], [0, 0, 1, 1], [], []>} : vector<200x128xbf16>, vector<128x128xbf16>, vector<200x128xf32> -> vector<200x128xf32>
    %cst_27 = arith.constant dense<0.000000e+00> : vector<128xf32>
    %39 = vector.multi_reduction <add>, %38, %cst_27 [0] : vector<200x128xf32> to vector<128xf32>
    %40 = vector.shape_cast %39 : vector<128xf32> to vector<1x128xf32>
    %41 = arith.addf %30, %40 : vector<1x128xf32>
    %42 = arith.mulf %38, %38 : vector<200x128xf32>
    %cst_28 = arith.constant dense<0.000000e+00> : vector<128xf32>
    %43 = vector.multi_reduction <add>, %42, %cst_28 [0] : vector<200x128xf32> to vector<128xf32>
    %44 = vector.shape_cast %43 : vector<128xf32> to vector<1x128xf32>
    %45 = arith.addf %34, %44 : vector<1x128xf32>
    %46 = tpu.concatenate %41, %45 in 0 : vector<1x128xf32>, vector<1x128xf32> -> vector<2x128xf32>
    %47 = vector.shape_cast %46 : vector<2x128xf32> to vector<1x2x128xf32>
    %c0_29 = arith.constant 0 : index
    %c0_30 = arith.constant 0 : index
    %c0_31 = arith.constant 0 : index
    %48 = vector.load %arg3[%c0_29, %c0_30, %c0_31] : memref<1x2x128xf32, #tpu.memory_space<vmem>>, vector<1x2x128xf32>
    tpu.vector_store %arg3[%c0_29, %c0_30, %c0_31], %47 {strides = array<i32>} : memref<1x2x128xf32, #tpu.memory_space<vmem>>, vector<1x2x128xf32>,
    return
  }
  func.func @transform_0(%arg0: i32) -> (i32, i32, i32) {
    %c0_i32 = arith.constant 0 : i32
    %c0_i32_0 = arith.constant 0 : i32
    %c0_i32_1 = arith.constant 0 : i32
    return %c0_i32, %arg0, %c0_i32_0 : i32, i32, i32
  }
  func.func @transform_1(%arg0: i32) -> (i32, i32) {
    %c0_i32 = arith.constant 0 : i32
    %c0_i32_0 = arith.constant 0 : i32
    %c0_i32_1 = arith.constant 0 : i32
    return %c0_i32, %c0_i32_0 : i32, i32
  }
  func.func @transform_2(%arg0: i32) -> (i32, i32, i32) {
    %c0_i32 = arith.constant 0 : i32
    %c0_i32_0 = arith.constant 0 : i32
    %c0_i32_1 = arith.constant 0 : i32
    return %arg0, %c0_i32, %c0_i32_0 : i32, i32, i32
  }
}

module attributes {stable_mosaic.version = 11 : i64} {
  func.func @conv_bn_relu_pool_kernel(%arg0: i32, %arg1: memref<4x200x128xbf16, #tpu.memory_space<vmem>>, %arg2: memref<128x128xbf16, #tpu.memory_space<vmem>>, %arg3: memref<1x128xf32, #tpu.memory_space<vmem>>, %arg4: memref<1x128xf32, #tpu.memory_space<vmem>>, %arg5: memref<200x128xbf16, #tpu.memory_space<vmem>>) attributes {dimension_semantics = [#tpu.dimension_semantics<parallel>], iteration_bounds = array<i64: 2>, scalar_prefetch = 0 : i64, scratch_operands = 0 : i64, tpu.core_type = #tpu.core_type<tc>, window_params = [{transform_indices = @transform_0, window_bounds = array<i64: 4, 200, 128>}, {pipeline_mode = #tpu.pipeline_mode<synchronous>, transform_indices = @transform_1, window_bounds = array<i64: 128, 128>}, {pipeline_mode = #tpu.pipeline_mode<synchronous>, transform_indices = @transform_2, window_bounds = array<i64: 1, 128>}, {pipeline_mode = #tpu.pipeline_mode<synchronous>, transform_indices = @transform_3, window_bounds = array<i64: 1, 128>}, {transform_indices = @transform_4, window_bounds = array<i64: 200, 128>}]} {
    %c0 = arith.constant 0 : index
    %c0_0 = arith.constant 0 : index
    %c0_1 = arith.constant 0 : index
    %0 = vector.load %arg1[%c0, %c0_0, %c0_1] : memref<4x200x128xbf16, #tpu.memory_space<vmem>>, vector<1x200x128xbf16>
    %1 = vector.shape_cast %0 : vector<1x200x128xbf16> to vector<200x128xbf16>
    %c0_2 = arith.constant 0 : index
    %c0_3 = arith.constant 0 : index
    %2 = vector.load %arg2[%c0_2, %c0_3] : memref<128x128xbf16, #tpu.memory_space<vmem>>, vector<128x128xbf16>
    %cst = arith.constant dense<0.000000e+00> : vector<200x128xf32>
    %3 = tpu.matmul %1, %2, %cst {dimension_numbers = #tpu.dot_dimension_numbers<[1], [0], [0], [1], [0, 0, 1, 1], [], []>} : vector<200x128xbf16>, vector<128x128xbf16>, vector<200x128xf32> -> vector<200x128xf32>
    %c0_4 = arith.constant 0 : index
    %c0_5 = arith.constant 0 : index
    %4 = vector.load %arg3[%c0_4, %c0_5] : memref<1x128xf32, #tpu.memory_space<vmem>>, vector<1x128xf32>
    %5 = vector.broadcast %4 : vector<1x128xf32> to vector<200x128xf32>
    %6 = arith.mulf %3, %5 : vector<200x128xf32>
    %c0_6 = arith.constant 0 : index
    %c0_7 = arith.constant 0 : index
    %7 = vector.load %arg4[%c0_6, %c0_7] : memref<1x128xf32, #tpu.memory_space<vmem>>, vector<1x128xf32>
    %8 = vector.broadcast %7 : vector<1x128xf32> to vector<200x128xf32>
    %9 = arith.addf %6, %8 : vector<200x128xf32>
    %cst_8 = arith.constant 0.000000e+00 : f32
    %10 = vector.broadcast %cst_8 : f32 to vector<200x128xf32>
    %11 = arith.maximumf %9, %10 : vector<200x128xf32>
    %c1 = arith.constant 1 : index
    %c0_9 = arith.constant 0 : index
    %c0_10 = arith.constant 0 : index
    %12 = vector.load %arg1[%c1, %c0_9, %c0_10] : memref<4x200x128xbf16, #tpu.memory_space<vmem>>, vector<1x200x128xbf16>
    %13 = vector.shape_cast %12 : vector<1x200x128xbf16> to vector<200x128xbf16>
    %c0_11 = arith.constant 0 : index
    %c0_12 = arith.constant 0 : index
    %14 = vector.load %arg2[%c0_11, %c0_12] : memref<128x128xbf16, #tpu.memory_space<vmem>>, vector<128x128xbf16>
    %cst_13 = arith.constant dense<0.000000e+00> : vector<200x128xf32>
    %15 = tpu.matmul %13, %14, %cst_13 {dimension_numbers = #tpu.dot_dimension_numbers<[1], [0], [0], [1], [0, 0, 1, 1], [], []>} : vector<200x128xbf16>, vector<128x128xbf16>, vector<200x128xf32> -> vector<200x128xf32>
    %c0_14 = arith.constant 0 : index
    %c0_15 = arith.constant 0 : index
    %16 = vector.load %arg3[%c0_14, %c0_15] : memref<1x128xf32, #tpu.memory_space<vmem>>, vector<1x128xf32>
    %17 = vector.broadcast %16 : vector<1x128xf32> to vector<200x128xf32>
    %18 = arith.mulf %15, %17 : vector<200x128xf32>
    %c0_16 = arith.constant 0 : index
    %c0_17 = arith.constant 0 : index
    %19 = vector.load %arg4[%c0_16, %c0_17] : memref<1x128xf32, #tpu.memory_space<vmem>>, vector<1x128xf32>
    %20 = vector.broadcast %19 : vector<1x128xf32> to vector<200x128xf32>
    %21 = arith.addf %18, %20 : vector<200x128xf32>
    %cst_18 = arith.constant 0.000000e+00 : f32
    %22 = vector.broadcast %cst_18 : f32 to vector<200x128xf32>
    %23 = arith.maximumf %21, %22 : vector<200x128xf32>
    %24 = arith.maximumf %11, %23 : vector<200x128xf32>
    %c2 = arith.constant 2 : index
    %c0_19 = arith.constant 0 : index
    %c0_20 = arith.constant 0 : index
    %25 = vector.load %arg1[%c2, %c0_19, %c0_20] : memref<4x200x128xbf16, #tpu.memory_space<vmem>>, vector<1x200x128xbf16>
    %26 = vector.shape_cast %25 : vector<1x200x128xbf16> to vector<200x128xbf16>
    %c0_21 = arith.constant 0 : index
    %c0_22 = arith.constant 0 : index
    %27 = vector.load %arg2[%c0_21, %c0_22] : memref<128x128xbf16, #tpu.memory_space<vmem>>, vector<128x128xbf16>
    %cst_23 = arith.constant dense<0.000000e+00> : vector<200x128xf32>
    %28 = tpu.matmul %26, %27, %cst_23 {dimension_numbers = #tpu.dot_dimension_numbers<[1], [0], [0], [1], [0, 0, 1, 1], [], []>} : vector<200x128xbf16>, vector<128x128xbf16>, vector<200x128xf32> -> vector<200x128xf32>
    %c0_24 = arith.constant 0 : index
    %c0_25 = arith.constant 0 : index
    %29 = vector.load %arg3[%c0_24, %c0_25] : memref<1x128xf32, #tpu.memory_space<vmem>>, vector<1x128xf32>
    %30 = vector.broadcast %29 : vector<1x128xf32> to vector<200x128xf32>
    %31 = arith.mulf %28, %30 : vector<200x128xf32>
    %c0_26 = arith.constant 0 : index
    %c0_27 = arith.constant 0 : index
    %32 = vector.load %arg4[%c0_26, %c0_27] : memref<1x128xf32, #tpu.memory_space<vmem>>, vector<1x128xf32>
    %33 = vector.broadcast %32 : vector<1x128xf32> to vector<200x128xf32>
    %34 = arith.addf %31, %33 : vector<200x128xf32>
    %cst_28 = arith.constant 0.000000e+00 : f32
    %35 = vector.broadcast %cst_28 : f32 to vector<200x128xf32>
    %36 = arith.maximumf %34, %35 : vector<200x128xf32>
    %37 = arith.maximumf %24, %36 : vector<200x128xf32>
    %c3 = arith.constant 3 : index
    %c0_29 = arith.constant 0 : index
    %c0_30 = arith.constant 0 : index
    %38 = vector.load %arg1[%c3, %c0_29, %c0_30] : memref<4x200x128xbf16, #tpu.memory_space<vmem>>, vector<1x200x128xbf16>
    %39 = vector.shape_cast %38 : vector<1x200x128xbf16> to vector<200x128xbf16>
    %c0_31 = arith.constant 0 : index
    %c0_32 = arith.constant 0 : index
    %40 = vector.load %arg2[%c0_31, %c0_32] : memref<128x128xbf16, #tpu.memory_space<vmem>>, vector<128x128xbf16>
    %cst_33 = arith.constant dense<0.000000e+00> : vector<200x128xf32>
    %41 = tpu.matmul %39, %40, %cst_33 {dimension_numbers = #tpu.dot_dimension_numbers<[1], [0], [0], [1], [0, 0, 1, 1], [], []>} : vector<200x128xbf16>, vector<128x128xbf16>, vector<200x128xf32> -> vector<200x128xf32>
    %c0_34 = arith.constant 0 : index
    %c0_35 = arith.constant 0 : index
    %42 = vector.load %arg3[%c0_34, %c0_35] : memref<1x128xf32, #tpu.memory_space<vmem>>, vector<1x128xf32>
    %43 = vector.broadcast %42 : vector<1x128xf32> to vector<200x128xf32>
    %44 = arith.mulf %41, %43 : vector<200x128xf32>
    %c0_36 = arith.constant 0 : index
    %c0_37 = arith.constant 0 : index
    %45 = vector.load %arg4[%c0_36, %c0_37] : memref<1x128xf32, #tpu.memory_space<vmem>>, vector<1x128xf32>
    %46 = vector.broadcast %45 : vector<1x128xf32> to vector<200x128xf32>
    %47 = arith.addf %44, %46 : vector<200x128xf32>
    %cst_38 = arith.constant 0.000000e+00 : f32
    %48 = vector.broadcast %cst_38 : f32 to vector<200x128xf32>
    %49 = arith.maximumf %47, %48 : vector<200x128xf32>
    %50 = arith.maximumf %37, %49 : vector<200x128xf32>
    %51 = arith.truncf %50 : vector<200x128xf32> to vector<200x128xbf16>
    %c0_39 = arith.constant 0 : index
    %c0_40 = arith.constant 0 : index
    %52 = vector.load %arg5[%c0_39, %c0_40] : memref<200x128xbf16, #tpu.memory_space<vmem>>, vector<200x128xbf16>
    tpu.vector_store %arg5[%c0_39, %c0_40], %51 {strides = array<i32>} : memref<200x128xbf16, #tpu.memory_space<vmem>>, vector<200x128xbf16>,
    return
  }
  func.func @transform_0(%arg0: i32) -> (i32, i32, i32) {
    %c0_i32 = arith.constant 0 : i32
    %c0_i32_0 = arith.constant 0 : i32
    %c0_i32_1 = arith.constant 0 : i32
    return %c0_i32, %arg0, %c0_i32_0 : i32, i32, i32
  }
  func.func @transform_1(%arg0: i32) -> (i32, i32) {
    %c0_i32 = arith.constant 0 : i32
    %c0_i32_0 = arith.constant 0 : i32
    %c0_i32_1 = arith.constant 0 : i32
    return %c0_i32, %c0_i32_0 : i32, i32
  }
  func.func @transform_2(%arg0: i32) -> (i32, i32) {
    %c0_i32 = arith.constant 0 : i32
    %c0_i32_0 = arith.constant 0 : i32
    %c0_i32_1 = arith.constant 0 : i32
    return %c0_i32, %c0_i32_0 : i32, i32
  }
  func.func @transform_3(%arg0: i32) -> (i32, i32) {
    %c0_i32 = arith.constant 0 : i32
    %c0_i32_0 = arith.constant 0 : i32
    %c0_i32_1 = arith.constant 0 : i32
    return %c0_i32, %c0_i32_0 : i32, i32
  }
  func.func @transform_4(%arg0: i32) -> (i32, i32) {
    %c0_i32 = arith.constant 0 : i32
    %c0_i32_0 = arith.constant 0 : i32
    return %arg0, %c0_i32 : i32, i32
  }
}

module attributes {stable_mosaic.version = 11 : i64} {
  func.func @conv_stats_kernel(%arg0: i32, %arg1: memref<4x32x256xbf16, #tpu.memory_space<vmem>>, %arg2: memref<256x128xbf16, #tpu.memory_space<vmem>>, %arg3: memref<1x2x128xf32, #tpu.memory_space<vmem>>) attributes {dimension_semantics = [#tpu.dimension_semantics<parallel>], iteration_bounds = array<i64: 2>, scalar_prefetch = 0 : i64, scratch_operands = 0 : i64, tpu.core_type = #tpu.core_type<tc>, window_params = [{transform_indices = @transform_0, window_bounds = array<i64: 4, 32, 256>}, {pipeline_mode = #tpu.pipeline_mode<synchronous>, transform_indices = @transform_1, window_bounds = array<i64: 256, 128>}, {transform_indices = @transform_2, window_bounds = array<i64: 1, 2, 128>}]} {
    %cst = arith.constant 0.000000e+00 : f32
    %0 = vector.broadcast %cst : f32 to vector<1x128xf32>
    %cst_0 = arith.constant 0.000000e+00 : f32
    %1 = vector.broadcast %cst_0 : f32 to vector<1x128xf32>
    %c0 = arith.constant 0 : index
    %c0_1 = arith.constant 0 : index
    %c0_2 = arith.constant 0 : index
    %2 = vector.load %arg1[%c0, %c0_1, %c0_2] : memref<4x32x256xbf16, #tpu.memory_space<vmem>>, vector<1x32x256xbf16>
    %3 = vector.shape_cast %2 : vector<1x32x256xbf16> to vector<32x256xbf16>
    %c0_3 = arith.constant 0 : index
    %c0_4 = arith.constant 0 : index
    %4 = vector.load %arg2[%c0_3, %c0_4] : memref<256x128xbf16, #tpu.memory_space<vmem>>, vector<256x128xbf16>
    %cst_5 = arith.constant dense<0.000000e+00> : vector<32x128xf32>
    %5 = tpu.matmul %3, %4, %cst_5 {dimension_numbers = #tpu.dot_dimension_numbers<[1], [0], [0], [1], [0, 0, 1, 1], [], []>} : vector<32x256xbf16>, vector<256x128xbf16>, vector<32x128xf32> -> vector<32x128xf32>
    %cst_6 = arith.constant dense<0.000000e+00> : vector<128xf32>
    %6 = vector.multi_reduction <add>, %5, %cst_6 [0] : vector<32x128xf32> to vector<128xf32>
    %7 = vector.shape_cast %6 : vector<128xf32> to vector<1x128xf32>
    %8 = arith.addf %0, %7 : vector<1x128xf32>
    %9 = arith.mulf %5, %5 : vector<32x128xf32>
    %cst_7 = arith.constant dense<0.000000e+00> : vector<128xf32>
    %10 = vector.multi_reduction <add>, %9, %cst_7 [0] : vector<32x128xf32> to vector<128xf32>
    %11 = vector.shape_cast %10 : vector<128xf32> to vector<1x128xf32>
    %12 = arith.addf %1, %11 : vector<1x128xf32>
    %c1 = arith.constant 1 : index
    %c0_8 = arith.constant 0 : index
    %c0_9 = arith.constant 0 : index
    %13 = vector.load %arg1[%c1, %c0_8, %c0_9] : memref<4x32x256xbf16, #tpu.memory_space<vmem>>, vector<1x32x256xbf16>
    %14 = vector.shape_cast %13 : vector<1x32x256xbf16> to vector<32x256xbf16>
    %c0_10 = arith.constant 0 : index
    %c0_11 = arith.constant 0 : index
    %15 = vector.load %arg2[%c0_10, %c0_11] : memref<256x128xbf16, #tpu.memory_space<vmem>>, vector<256x128xbf16>
    %cst_12 = arith.constant dense<0.000000e+00> : vector<32x128xf32>
    %16 = tpu.matmul %14, %15, %cst_12 {dimension_numbers = #tpu.dot_dimension_numbers<[1], [0], [0], [1], [0, 0, 1, 1], [], []>} : vector<32x256xbf16>, vector<256x128xbf16>, vector<32x128xf32> -> vector<32x128xf32>
    %cst_13 = arith.constant dense<0.000000e+00> : vector<128xf32>
    %17 = vector.multi_reduction <add>, %16, %cst_13 [0] : vector<32x128xf32> to vector<128xf32>
    %18 = vector.shape_cast %17 : vector<128xf32> to vector<1x128xf32>
    %19 = arith.addf %8, %18 : vector<1x128xf32>
    %20 = arith.mulf %16, %16 : vector<32x128xf32>
    %cst_14 = arith.constant dense<0.000000e+00> : vector<128xf32>
    %21 = vector.multi_reduction <add>, %20, %cst_14 [0] : vector<32x128xf32> to vector<128xf32>
    %22 = vector.shape_cast %21 : vector<128xf32> to vector<1x128xf32>
    %23 = arith.addf %12, %22 : vector<1x128xf32>
    %c2 = arith.constant 2 : index
    %c0_15 = arith.constant 0 : index
    %c0_16 = arith.constant 0 : index
    %24 = vector.load %arg1[%c2, %c0_15, %c0_16] : memref<4x32x256xbf16, #tpu.memory_space<vmem>>, vector<1x32x256xbf16>
    %25 = vector.shape_cast %24 : vector<1x32x256xbf16> to vector<32x256xbf16>
    %c0_17 = arith.constant 0 : index
    %c0_18 = arith.constant 0 : index
    %26 = vector.load %arg2[%c0_17, %c0_18] : memref<256x128xbf16, #tpu.memory_space<vmem>>, vector<256x128xbf16>
    %cst_19 = arith.constant dense<0.000000e+00> : vector<32x128xf32>
    %27 = tpu.matmul %25, %26, %cst_19 {dimension_numbers = #tpu.dot_dimension_numbers<[1], [0], [0], [1], [0, 0, 1, 1], [], []>} : vector<32x256xbf16>, vector<256x128xbf16>, vector<32x128xf32> -> vector<32x128xf32>
    %cst_20 = arith.constant dense<0.000000e+00> : vector<128xf32>
    %28 = vector.multi_reduction <add>, %27, %cst_20 [0] : vector<32x128xf32> to vector<128xf32>
    %29 = vector.shape_cast %28 : vector<128xf32> to vector<1x128xf32>
    %30 = arith.addf %19, %29 : vector<1x128xf32>
    %31 = arith.mulf %27, %27 : vector<32x128xf32>
    %cst_21 = arith.constant dense<0.000000e+00> : vector<128xf32>
    %32 = vector.multi_reduction <add>, %31, %cst_21 [0] : vector<32x128xf32> to vector<128xf32>
    %33 = vector.shape_cast %32 : vector<128xf32> to vector<1x128xf32>
    %34 = arith.addf %23, %33 : vector<1x128xf32>
    %c3 = arith.constant 3 : index
    %c0_22 = arith.constant 0 : index
    %c0_23 = arith.constant 0 : index
    %35 = vector.load %arg1[%c3, %c0_22, %c0_23] : memref<4x32x256xbf16, #tpu.memory_space<vmem>>, vector<1x32x256xbf16>
    %36 = vector.shape_cast %35 : vector<1x32x256xbf16> to vector<32x256xbf16>
    %c0_24 = arith.constant 0 : index
    %c0_25 = arith.constant 0 : index
    %37 = vector.load %arg2[%c0_24, %c0_25] : memref<256x128xbf16, #tpu.memory_space<vmem>>, vector<256x128xbf16>
    %cst_26 = arith.constant dense<0.000000e+00> : vector<32x128xf32>
    %38 = tpu.matmul %36, %37, %cst_26 {dimension_numbers = #tpu.dot_dimension_numbers<[1], [0], [0], [1], [0, 0, 1, 1], [], []>} : vector<32x256xbf16>, vector<256x128xbf16>, vector<32x128xf32> -> vector<32x128xf32>
    %cst_27 = arith.constant dense<0.000000e+00> : vector<128xf32>
    %39 = vector.multi_reduction <add>, %38, %cst_27 [0] : vector<32x128xf32> to vector<128xf32>
    %40 = vector.shape_cast %39 : vector<128xf32> to vector<1x128xf32>
    %41 = arith.addf %30, %40 : vector<1x128xf32>
    %42 = arith.mulf %38, %38 : vector<32x128xf32>
    %cst_28 = arith.constant dense<0.000000e+00> : vector<128xf32>
    %43 = vector.multi_reduction <add>, %42, %cst_28 [0] : vector<32x128xf32> to vector<128xf32>
    %44 = vector.shape_cast %43 : vector<128xf32> to vector<1x128xf32>
    %45 = arith.addf %34, %44 : vector<1x128xf32>
    %46 = tpu.concatenate %41, %45 in 0 : vector<1x128xf32>, vector<1x128xf32> -> vector<2x128xf32>
    %47 = vector.shape_cast %46 : vector<2x128xf32> to vector<1x2x128xf32>
    %c0_29 = arith.constant 0 : index
    %c0_30 = arith.constant 0 : index
    %c0_31 = arith.constant 0 : index
    %48 = vector.load %arg3[%c0_29, %c0_30, %c0_31] : memref<1x2x128xf32, #tpu.memory_space<vmem>>, vector<1x2x128xf32>
    tpu.vector_store %arg3[%c0_29, %c0_30, %c0_31], %47 {strides = array<i32>} : memref<1x2x128xf32, #tpu.memory_space<vmem>>, vector<1x2x128xf32>,
    return
  }
  func.func @transform_0(%arg0: i32) -> (i32, i32, i32) {
    %c0_i32 = arith.constant 0 : i32
    %c0_i32_0 = arith.constant 0 : i32
    %c0_i32_1 = arith.constant 0 : i32
    return %c0_i32, %arg0, %c0_i32_0 : i32, i32, i32
  }
  func.func @transform_1(%arg0: i32) -> (i32, i32) {
    %c0_i32 = arith.constant 0 : i32
    %c0_i32_0 = arith.constant 0 : i32
    %c0_i32_1 = arith.constant 0 : i32
    return %c0_i32, %c0_i32_0 : i32, i32
  }
  func.func @transform_2(%arg0: i32) -> (i32, i32, i32) {
    %c0_i32 = arith.constant 0 : i32
    %c0_i32_0 = arith.constant 0 : i32
    %c0_i32_1 = arith.constant 0 : i32
    return %arg0, %c0_i32, %c0_i32_0 : i32, i32, i32
  }
}

module attributes {stable_mosaic.version = 11 : i64} {
  func.func @conv_bn_relu_pool_kernel(%arg0: i32, %arg1: memref<4x32x256xbf16, #tpu.memory_space<vmem>>, %arg2: memref<256x128xbf16, #tpu.memory_space<vmem>>, %arg3: memref<1x128xf32, #tpu.memory_space<vmem>>, %arg4: memref<1x128xf32, #tpu.memory_space<vmem>>, %arg5: memref<32x128xbf16, #tpu.memory_space<vmem>>) attributes {dimension_semantics = [#tpu.dimension_semantics<parallel>], iteration_bounds = array<i64: 2>, scalar_prefetch = 0 : i64, scratch_operands = 0 : i64, tpu.core_type = #tpu.core_type<tc>, window_params = [{transform_indices = @transform_0, window_bounds = array<i64: 4, 32, 256>}, {pipeline_mode = #tpu.pipeline_mode<synchronous>, transform_indices = @transform_1, window_bounds = array<i64: 256, 128>}, {pipeline_mode = #tpu.pipeline_mode<synchronous>, transform_indices = @transform_2, window_bounds = array<i64: 1, 128>}, {pipeline_mode = #tpu.pipeline_mode<synchronous>, transform_indices = @transform_3, window_bounds = array<i64: 1, 128>}, {transform_indices = @transform_4, window_bounds = array<i64: 32, 128>}]} {
    %c0 = arith.constant 0 : index
    %c0_0 = arith.constant 0 : index
    %c0_1 = arith.constant 0 : index
    %0 = vector.load %arg1[%c0, %c0_0, %c0_1] : memref<4x32x256xbf16, #tpu.memory_space<vmem>>, vector<1x32x256xbf16>
    %1 = vector.shape_cast %0 : vector<1x32x256xbf16> to vector<32x256xbf16>
    %c0_2 = arith.constant 0 : index
    %c0_3 = arith.constant 0 : index
    %2 = vector.load %arg2[%c0_2, %c0_3] : memref<256x128xbf16, #tpu.memory_space<vmem>>, vector<256x128xbf16>
    %cst = arith.constant dense<0.000000e+00> : vector<32x128xf32>
    %3 = tpu.matmul %1, %2, %cst {dimension_numbers = #tpu.dot_dimension_numbers<[1], [0], [0], [1], [0, 0, 1, 1], [], []>} : vector<32x256xbf16>, vector<256x128xbf16>, vector<32x128xf32> -> vector<32x128xf32>
    %c0_4 = arith.constant 0 : index
    %c0_5 = arith.constant 0 : index
    %4 = vector.load %arg3[%c0_4, %c0_5] : memref<1x128xf32, #tpu.memory_space<vmem>>, vector<1x128xf32>
    %5 = vector.broadcast %4 : vector<1x128xf32> to vector<32x128xf32>
    %6 = arith.mulf %3, %5 : vector<32x128xf32>
    %c0_6 = arith.constant 0 : index
    %c0_7 = arith.constant 0 : index
    %7 = vector.load %arg4[%c0_6, %c0_7] : memref<1x128xf32, #tpu.memory_space<vmem>>, vector<1x128xf32>
    %8 = vector.broadcast %7 : vector<1x128xf32> to vector<32x128xf32>
    %9 = arith.addf %6, %8 : vector<32x128xf32>
    %cst_8 = arith.constant 0.000000e+00 : f32
    %10 = vector.broadcast %cst_8 : f32 to vector<32x128xf32>
    %11 = arith.maximumf %9, %10 : vector<32x128xf32>
    %c1 = arith.constant 1 : index
    %c0_9 = arith.constant 0 : index
    %c0_10 = arith.constant 0 : index
    %12 = vector.load %arg1[%c1, %c0_9, %c0_10] : memref<4x32x256xbf16, #tpu.memory_space<vmem>>, vector<1x32x256xbf16>
    %13 = vector.shape_cast %12 : vector<1x32x256xbf16> to vector<32x256xbf16>
    %c0_11 = arith.constant 0 : index
    %c0_12 = arith.constant 0 : index
    %14 = vector.load %arg2[%c0_11, %c0_12] : memref<256x128xbf16, #tpu.memory_space<vmem>>, vector<256x128xbf16>
    %cst_13 = arith.constant dense<0.000000e+00> : vector<32x128xf32>
    %15 = tpu.matmul %13, %14, %cst_13 {dimension_numbers = #tpu.dot_dimension_numbers<[1], [0], [0], [1], [0, 0, 1, 1], [], []>} : vector<32x256xbf16>, vector<256x128xbf16>, vector<32x128xf32> -> vector<32x128xf32>
    %c0_14 = arith.constant 0 : index
    %c0_15 = arith.constant 0 : index
    %16 = vector.load %arg3[%c0_14, %c0_15] : memref<1x128xf32, #tpu.memory_space<vmem>>, vector<1x128xf32>
    %17 = vector.broadcast %16 : vector<1x128xf32> to vector<32x128xf32>
    %18 = arith.mulf %15, %17 : vector<32x128xf32>
    %c0_16 = arith.constant 0 : index
    %c0_17 = arith.constant 0 : index
    %19 = vector.load %arg4[%c0_16, %c0_17] : memref<1x128xf32, #tpu.memory_space<vmem>>, vector<1x128xf32>
    %20 = vector.broadcast %19 : vector<1x128xf32> to vector<32x128xf32>
    %21 = arith.addf %18, %20 : vector<32x128xf32>
    %cst_18 = arith.constant 0.000000e+00 : f32
    %22 = vector.broadcast %cst_18 : f32 to vector<32x128xf32>
    %23 = arith.maximumf %21, %22 : vector<32x128xf32>
    %24 = arith.maximumf %11, %23 : vector<32x128xf32>
    %c2 = arith.constant 2 : index
    %c0_19 = arith.constant 0 : index
    %c0_20 = arith.constant 0 : index
    %25 = vector.load %arg1[%c2, %c0_19, %c0_20] : memref<4x32x256xbf16, #tpu.memory_space<vmem>>, vector<1x32x256xbf16>
    %26 = vector.shape_cast %25 : vector<1x32x256xbf16> to vector<32x256xbf16>
    %c0_21 = arith.constant 0 : index
    %c0_22 = arith.constant 0 : index
    %27 = vector.load %arg2[%c0_21, %c0_22] : memref<256x128xbf16, #tpu.memory_space<vmem>>, vector<256x128xbf16>
    %cst_23 = arith.constant dense<0.000000e+00> : vector<32x128xf32>
    %28 = tpu.matmul %26, %27, %cst_23 {dimension_numbers = #tpu.dot_dimension_numbers<[1], [0], [0], [1], [0, 0, 1, 1], [], []>} : vector<32x256xbf16>, vector<256x128xbf16>, vector<32x128xf32> -> vector<32x128xf32>
    %c0_24 = arith.constant 0 : index
    %c0_25 = arith.constant 0 : index
    %29 = vector.load %arg3[%c0_24, %c0_25] : memref<1x128xf32, #tpu.memory_space<vmem>>, vector<1x128xf32>
    %30 = vector.broadcast %29 : vector<1x128xf32> to vector<32x128xf32>
    %31 = arith.mulf %28, %30 : vector<32x128xf32>
    %c0_26 = arith.constant 0 : index
    %c0_27 = arith.constant 0 : index
    %32 = vector.load %arg4[%c0_26, %c0_27] : memref<1x128xf32, #tpu.memory_space<vmem>>, vector<1x128xf32>
    %33 = vector.broadcast %32 : vector<1x128xf32> to vector<32x128xf32>
    %34 = arith.addf %31, %33 : vector<32x128xf32>
    %cst_28 = arith.constant 0.000000e+00 : f32
    %35 = vector.broadcast %cst_28 : f32 to vector<32x128xf32>
    %36 = arith.maximumf %34, %35 : vector<32x128xf32>
    %37 = arith.maximumf %24, %36 : vector<32x128xf32>
    %c3 = arith.constant 3 : index
    %c0_29 = arith.constant 0 : index
    %c0_30 = arith.constant 0 : index
    %38 = vector.load %arg1[%c3, %c0_29, %c0_30] : memref<4x32x256xbf16, #tpu.memory_space<vmem>>, vector<1x32x256xbf16>
    %39 = vector.shape_cast %38 : vector<1x32x256xbf16> to vector<32x256xbf16>
    %c0_31 = arith.constant 0 : index
    %c0_32 = arith.constant 0 : index
    %40 = vector.load %arg2[%c0_31, %c0_32] : memref<256x128xbf16, #tpu.memory_space<vmem>>, vector<256x128xbf16>
    %cst_33 = arith.constant dense<0.000000e+00> : vector<32x128xf32>
    %41 = tpu.matmul %39, %40, %cst_33 {dimension_numbers = #tpu.dot_dimension_numbers<[1], [0], [0], [1], [0, 0, 1, 1], [], []>} : vector<32x256xbf16>, vector<256x128xbf16>, vector<32x128xf32> -> vector<32x128xf32>
    %c0_34 = arith.constant 0 : index
    %c0_35 = arith.constant 0 : index
    %42 = vector.load %arg3[%c0_34, %c0_35] : memref<1x128xf32, #tpu.memory_space<vmem>>, vector<1x128xf32>
    %43 = vector.broadcast %42 : vector<1x128xf32> to vector<32x128xf32>
    %44 = arith.mulf %41, %43 : vector<32x128xf32>
    %c0_36 = arith.constant 0 : index
    %c0_37 = arith.constant 0 : index
    %45 = vector.load %arg4[%c0_36, %c0_37] : memref<1x128xf32, #tpu.memory_space<vmem>>, vector<1x128xf32>
    %46 = vector.broadcast %45 : vector<1x128xf32> to vector<32x128xf32>
    %47 = arith.addf %44, %46 : vector<32x128xf32>
    %cst_38 = arith.constant 0.000000e+00 : f32
    %48 = vector.broadcast %cst_38 : f32 to vector<32x128xf32>
    %49 = arith.maximumf %47, %48 : vector<32x128xf32>
    %50 = arith.maximumf %37, %49 : vector<32x128xf32>
    %51 = arith.truncf %50 : vector<32x128xf32> to vector<32x128xbf16>
    %c0_39 = arith.constant 0 : index
    %c0_40 = arith.constant 0 : index
    %52 = vector.load %arg5[%c0_39, %c0_40] : memref<32x128xbf16, #tpu.memory_space<vmem>>, vector<32x128xbf16>
    tpu.vector_store %arg5[%c0_39, %c0_40], %51 {strides = array<i32>} : memref<32x128xbf16, #tpu.memory_space<vmem>>, vector<32x128xbf16>,
    return
  }
  func.func @transform_0(%arg0: i32) -> (i32, i32, i32) {
    %c0_i32 = arith.constant 0 : i32
    %c0_i32_0 = arith.constant 0 : i32
    %c0_i32_1 = arith.constant 0 : i32
    return %c0_i32, %arg0, %c0_i32_0 : i32, i32, i32
  }
  func.func @transform_1(%arg0: i32) -> (i32, i32) {
    %c0_i32 = arith.constant 0 : i32
    %c0_i32_0 = arith.constant 0 : i32
    %c0_i32_1 = arith.constant 0 : i32
    return %c0_i32, %c0_i32_0 : i32, i32
  }
  func.func @transform_2(%arg0: i32) -> (i32, i32) {
    %c0_i32 = arith.constant 0 : i32
    %c0_i32_0 = arith.constant 0 : i32
    %c0_i32_1 = arith.constant 0 : i32
    return %c0_i32, %c0_i32_0 : i32, i32
  }
  func.func @transform_3(%arg0: i32) -> (i32, i32) {
    %c0_i32 = arith.constant 0 : i32
    %c0_i32_0 = arith.constant 0 : i32
    %c0_i32_1 = arith.constant 0 : i32
    return %c0_i32, %c0_i32_0 : i32, i32
  }
  func.func @transform_4(%arg0: i32) -> (i32, i32) {
    %c0_i32 = arith.constant 0 : i32
    %c0_i32_0 = arith.constant 0 : i32
    return %arg0, %c0_i32 : i32, i32
  }
}

module attributes {stable_mosaic.version = 11 : i64} {
  func.func @mlp_kernel(%arg0: i32, %arg1: memref<8x512xbf16, #tpu.memory_space<vmem>>, %arg2: memref<512x128xbf16, #tpu.memory_space<vmem>>, %arg3: memref<1x128xf32, #tpu.memory_space<vmem>>, %arg4: memref<128x128xbf16, #tpu.memory_space<vmem>>, %arg5: memref<1x128xf32, #tpu.memory_space<vmem>>, %arg6: memref<128x128xbf16, #tpu.memory_space<vmem>>, %arg7: memref<1x128xf32, #tpu.memory_space<vmem>>, %arg8: memref<8x128xf32, #tpu.memory_space<vmem>>) attributes {dimension_semantics = [#tpu.dimension_semantics<parallel>], iteration_bounds = array<i64: 1>, scalar_prefetch = 0 : i64, scratch_operands = 0 : i64, tpu.core_type = #tpu.core_type<tc>, window_params = [{transform_indices = @transform_0, window_bounds = array<i64: 8, 512>}, {pipeline_mode = #tpu.pipeline_mode<synchronous>, transform_indices = @transform_1, window_bounds = array<i64: 512, 128>}, {pipeline_mode = #tpu.pipeline_mode<synchronous>, transform_indices = @transform_2, window_bounds = array<i64: 1, 128>}, {pipeline_mode = #tpu.pipeline_mode<synchronous>, transform_indices = @transform_3, window_bounds = array<i64: 128, 128>}, {pipeline_mode = #tpu.pipeline_mode<synchronous>, transform_indices = @transform_4, window_bounds = array<i64: 1, 128>}, {pipeline_mode = #tpu.pipeline_mode<synchronous>, transform_indices = @transform_5, window_bounds = array<i64: 128, 128>}, {pipeline_mode = #tpu.pipeline_mode<synchronous>, transform_indices = @transform_6, window_bounds = array<i64: 1, 128>}, {transform_indices = @transform_7, window_bounds = array<i64: 8, 128>}]} {
    %c0 = arith.constant 0 : index
    %c0_0 = arith.constant 0 : index
    %0 = vector.load %arg1[%c0, %c0_0] : memref<8x512xbf16, #tpu.memory_space<vmem>>, vector<8x512xbf16>
    %c0_1 = arith.constant 0 : index
    %c0_2 = arith.constant 0 : index
    %1 = vector.load %arg2[%c0_1, %c0_2] : memref<512x128xbf16, #tpu.memory_space<vmem>>, vector<512x128xbf16>
    %cst = arith.constant dense<0.000000e+00> : vector<8x128xf32>
    %2 = tpu.matmul %0, %1, %cst {dimension_numbers = #tpu.dot_dimension_numbers<[1], [0], [0], [1], [0, 0, 1, 1], [], []>} : vector<8x512xbf16>, vector<512x128xbf16>, vector<8x128xf32> -> vector<8x128xf32>
    %c0_3 = arith.constant 0 : index
    %c0_4 = arith.constant 0 : index
    %3 = vector.load %arg3[%c0_3, %c0_4] : memref<1x128xf32, #tpu.memory_space<vmem>>, vector<1x128xf32>
    %4 = vector.broadcast %3 : vector<1x128xf32> to vector<8x128xf32>
    %5 = arith.addf %2, %4 : vector<8x128xf32>
    %cst_5 = arith.constant 0.000000e+00 : f32
    %6 = vector.broadcast %cst_5 : f32 to vector<8x128xf32>
    %7 = arith.maximumf %5, %6 : vector<8x128xf32>
    %8 = arith.truncf %7 : vector<8x128xf32> to vector<8x128xbf16>
    %c0_6 = arith.constant 0 : index
    %c0_7 = arith.constant 0 : index
    %9 = vector.load %arg4[%c0_6, %c0_7] : memref<128x128xbf16, #tpu.memory_space<vmem>>, vector<128x128xbf16>
    %cst_8 = arith.constant dense<0.000000e+00> : vector<8x128xf32>
    %10 = tpu.matmul %8, %9, %cst_8 {dimension_numbers = #tpu.dot_dimension_numbers<[1], [0], [0], [1], [0, 0, 1, 1], [], []>} : vector<8x128xbf16>, vector<128x128xbf16>, vector<8x128xf32> -> vector<8x128xf32>
    %c0_9 = arith.constant 0 : index
    %c0_10 = arith.constant 0 : index
    %11 = vector.load %arg5[%c0_9, %c0_10] : memref<1x128xf32, #tpu.memory_space<vmem>>, vector<1x128xf32>
    %12 = vector.broadcast %11 : vector<1x128xf32> to vector<8x128xf32>
    %13 = arith.addf %10, %12 : vector<8x128xf32>
    %cst_11 = arith.constant 0.000000e+00 : f32
    %14 = vector.broadcast %cst_11 : f32 to vector<8x128xf32>
    %15 = arith.maximumf %13, %14 : vector<8x128xf32>
    %16 = arith.truncf %15 : vector<8x128xf32> to vector<8x128xbf16>
    %c0_12 = arith.constant 0 : index
    %c0_13 = arith.constant 0 : index
    %17 = vector.load %arg6[%c0_12, %c0_13] : memref<128x128xbf16, #tpu.memory_space<vmem>>, vector<128x128xbf16>
    %cst_14 = arith.constant dense<0.000000e+00> : vector<8x128xf32>
    %18 = tpu.matmul %16, %17, %cst_14 {dimension_numbers = #tpu.dot_dimension_numbers<[1], [0], [0], [1], [0, 0, 1, 1], [], []>} : vector<8x128xbf16>, vector<128x128xbf16>, vector<8x128xf32> -> vector<8x128xf32>
    %c0_15 = arith.constant 0 : index
    %c0_16 = arith.constant 0 : index
    %19 = vector.load %arg7[%c0_15, %c0_16] : memref<1x128xf32, #tpu.memory_space<vmem>>, vector<1x128xf32>
    %20 = vector.broadcast %19 : vector<1x128xf32> to vector<8x128xf32>
    %21 = arith.addf %18, %20 : vector<8x128xf32>
    %c0_17 = arith.constant 0 : index
    %c0_18 = arith.constant 0 : index
    %22 = vector.load %arg8[%c0_17, %c0_18] : memref<8x128xf32, #tpu.memory_space<vmem>>, vector<8x128xf32>
    tpu.vector_store %arg8[%c0_17, %c0_18], %21 {strides = array<i32>} : memref<8x128xf32, #tpu.memory_space<vmem>>, vector<8x128xf32>,
    return
  }
  func.func @transform_0(%arg0: i32) -> (i32, i32) {
    %c0_i32 = arith.constant 0 : i32
    %c0_i32_0 = arith.constant 0 : i32
    return %arg0, %c0_i32 : i32, i32
  }
  func.func @transform_1(%arg0: i32) -> (i32, i32) {
    %c0_i32 = arith.constant 0 : i32
    %c0_i32_0 = arith.constant 0 : i32
    %c0_i32_1 = arith.constant 0 : i32
    return %c0_i32, %c0_i32_0 : i32, i32
  }
  func.func @transform_2(%arg0: i32) -> (i32, i32) {
    %c0_i32 = arith.constant 0 : i32
    %c0_i32_0 = arith.constant 0 : i32
    %c0_i32_1 = arith.constant 0 : i32
    return %c0_i32, %c0_i32_0 : i32, i32
  }
  func.func @transform_3(%arg0: i32) -> (i32, i32) {
    %c0_i32 = arith.constant 0 : i32
    %c0_i32_0 = arith.constant 0 : i32
    %c0_i32_1 = arith.constant 0 : i32
    return %c0_i32, %c0_i32_0 : i32, i32
  }
  func.func @transform_4(%arg0: i32) -> (i32, i32) {
    %c0_i32 = arith.constant 0 : i32
    %c0_i32_0 = arith.constant 0 : i32
    %c0_i32_1 = arith.constant 0 : i32
    return %c0_i32, %c0_i32_0 : i32, i32
  }
  func.func @transform_5(%arg0: i32) -> (i32, i32) {
    %c0_i32 = arith.constant 0 : i32
    %c0_i32_0 = arith.constant 0 : i32
    %c0_i32_1 = arith.constant 0 : i32
    return %c0_i32, %c0_i32_0 : i32, i32
  }
  func.func @transform_6(%arg0: i32) -> (i32, i32) {
    %c0_i32 = arith.constant 0 : i32
    %c0_i32_0 = arith.constant 0 : i32
    %c0_i32_1 = arith.constant 0 : i32
    return %c0_i32, %c0_i32_0 : i32, i32
  }
  func.func @transform_7(%arg0: i32) -> (i32, i32) {
    %c0_i32 = arith.constant 0 : i32
    %c0_i32_0 = arith.constant 0 : i32
    return %arg0, %c0_i32 : i32, i32
  }
}

</mosaic_0001>

<llo_original>
// kernel: cnn_forward.5
$region0: #{cnn_forward.5}
  #allocation0 [shape = 'u32[]', space=smem, size = 0x4, offset = 0x4, fixed_abs, tag = 'smem constant byte address 0x4 - core index']
  #allocation1 [shape = 'u32[144,128]{1,0:T(1,128)}', space=vmem, size = 0x12000, scoped, tag = 'internal scratch']
  %s0 = inlined_call_operand.vmem [shape: bf16[4,400,128], index: 0, kind: input, shape index: {}]
  %s1 = inlined_call_operand.vmem [shape: bf16[128,128], index: 1, kind: input, shape index: {}]
  %s2 = inlined_call_operand.vmem [shape: f32[2,2,128], index: 2, kind: output, shape index: {}]
  %s3 = sld [smem:[#allocation0]]
  $region82: #{cnn_forward.5} parent=0
    _
  %s5 = ssub.s32 1, %s3
  %s6 = scalar_select 0, %s5, %s3
  $region1: #{cnn_forward.5} parent=0
    #allocation2 [shape = 'u8[409600]{0}', space=vmem, size = 0x64000, scoped, tag = 'input window, operand 0']
    loop: start=0, step=1, limit=4
    $region2: #{cnn_forward.5} parent=1 // loop_pre_header
      _
    $region3: #{cnn_forward.5} parent=1 // loop_header
      %s8 = sphi 0, %s12
      %p9 = scmp.ge.s32.totalorder %s8, 4
      %s18 = sphi 0, %s20
      %s21 = sphi 0, %s18
      %s22 = sphi 0, %s21
      %s38 = sphi 0, %s22
      %s42 = sphi 0, %s42
      %s44 = sphi 0, %s42
      %s45 = sphi 0, %s44
      %s59 = sphi 0, %s45
      %s65 = sphi 0, %s67
      %s68 = sphi 0, %s65
      %s69 = sphi 0, %s68
      %s85 = sphi 0, %s69
    $region4: #{cnn_forward.5} parent=1 // loop_header_branch
      %11 = sbr.rel (%p9) target = $region8
    $region5: #{cnn_forward.5} parent=1 // loop_body
      %s13 = ssub.s32 %s8, 1
      %s14 = ssub.s32 %s8, 2
      %s15 = sadd.s32 %s8, 1
      %s16 = ssub.s32 %s8, %s15
      %p17 = scmp.eq.s32.totalorder %s16, 0
      %s19 = sadd.s32 %s18, 1
      %s20 = scalar_select %p17, %s18, %s19
      %p23 = pneg %p17
      %p24 = scmp.eq.s32.totalorder %s8, 1
      %p25 = por %p23, %p24
      %p26 = scmp.ne.s32.totalorder %s18, %s21
      %p27 = scmp.eq.s32.totalorder %s8, 0
      %p28 = por %p26, %p27
      %p29 = scmp.ne.s32.totalorder %s18, %s21
      %p30 = scmp.eq.s32.totalorder %s13, 1
      %p31 = por %p29, %p30
      %p32 = scmp.ne.s32.totalorder %s21, %s22
      %p33 = scmp.eq.s32.totalorder %s13, 0
      %p34 = por %p32, %p33
      %p35 = scmp.ne.s32.totalorder %s21, %s22
      %p36 = scmp.eq.s32.totalorder %s14, 1
      %p37 = por %p35, %p36
      %p39 = scmp.ne.s32.totalorder %s22, %s38
      %p40 = scmp.eq.s32.totalorder %s14, 0
      %p41 = por %p39, %p40
      %s43 = sadd.s32 %s42, 1
      %p46 = scmp.eq.s32.totalorder %s8, 1
      %p47 = scmp.ne.s32.totalorder %s42, %s44
      %p48 = scmp.eq.s32.totalorder %s8, 0
      %p49 = por %p47, %p48
      %p50 = scmp.ne.s32.totalorder %s42, %s44
      %p51 = scmp.eq.s32.totalorder %s13, 1
      %p52 = por %p50, %p51
      %p53 = scmp.ne.s32.totalorder %s44, %s45
      %p54 = scmp.eq.s32.totalorder %s13, 0
      %p55 = por %p53, %p54
      %p56 = scmp.ne.s32.totalorder %s44, %s45
      %p57 = scmp.eq.s32.totalorder %s14, 1
      %p58 = por %p56, %p57
      %p60 = scmp.ne.s32.totalorder %s45, %s59
      %p61 = scmp.eq.s32.totalorder %s14, 0
      %p62 = por %p60, %p61
      %s63 = ssub.s32 %s8, %s15
      %p64 = scmp.eq.s32.totalorder %s63, 0
      %s66 = sadd.s32 %s65, 1
      %s67 = scalar_select %p64, %s65, %s66
      %p70 = pneg %p64
      %p71 = scmp.eq.s32.totalorder %s8, 1
      %p72 = por %p70, %p71
      %p73 = scmp.ne.s32.totalorder %s65, %s68
      %p74 = scmp.eq.s32.totalorder %s8, 0
      %p75 = por %p73, %p74
      %p76 = scmp.ne.s32.totalorder %s65, %s68
      %p77 = scmp.eq.s32.totalorder %s13, 1
      %p78 = por %p76, %p77
      %p79 = scmp.ne.s32.totalorder %s68, %s69
      %p80 = scmp.eq.s32.totalorder %s13, 0
      %p81 = por %p79, %p80
      %p82 = scmp.ne.s32.totalorder %s68, %s69
      %p83 = scmp.eq.s32.totalorder %s14, 1
      %p84 = por %p82, %p83
      %p86 = scmp.ne.s32.totalorder %s69, %s85
      %p87 = scmp.eq.s32.totalorder %s14, 0
      %p88 = por %p86, %p87
      %p89 = scmp.le.s32.totalorder 1, %s8
      %p90 = scmp.lt.s32.totalorder %s8, 3
      %p91 = pnand %p89, %p90
      %p92 = pneg %p91
      // Predicated region
      $region9: #{cnn_forward.5} parent=5 // pred_check
        _
      $region10: #{cnn_forward.5} parent=5 // pred_check_branch
        %94 = sbr.rel (%p91) target = $region12
      $region11: #{cnn_forward.5} parent=5 // pred_region
        %s95 = ssub.s32 %s8, 1
        // Predicated region
        $region13: #{cnn_forward.5} parent=11 // pred_check
          %p96 = pneg %p55
        $region14: #{cnn_forward.5} parent=11 // pred_check_branch
          %98 = sbr.rel (%p96) target = $region16
        $region15: #{cnn_forward.5} parent=11 // pred_region
          _
        $region16: #{cnn_forward.5} parent=11 // pred_fallthru
          _
      $region12: #{cnn_forward.5} parent=5 // pred_fallthru
        _
      %p99 = scmp.lt.s32.totalorder %s8, 2
      // Predicated region
      $region17: #{cnn_forward.5} parent=5 // pred_check
        %p100 = pneg %p99
      $region18: #{cnn_forward.5} parent=5 // pred_check_branch
        %102 = sbr.rel (%p100) target = $region20
      $region19: #{cnn_forward.5} parent=5 // pred_region
        // Predicated region
        $region21: #{cnn_forward.5} parent=19 // pred_check
          %p103 = pneg %p28
        $region22: #{cnn_forward.5} parent=19 // pred_check_branch
          %105 = sbr.rel (%p103) target = $region24
        $region23: #{cnn_forward.5} parent=19 // pred_region
          %s106 = sand.u32 %s18, 1
          %s107 = sand.u32 %s18, 1
          %s108 = smul.addr %s107, 400
          %s109 = scalar_lea.vmem [#allocation2], %s108
          %s110 = smul.u32 25, %s8
          %s111 = smul.addr %s110, 4
          %s112 = scalar_lea.vmem %s0, %s111
          // Predicated region
          $region25: #{cnn_forward.5} parent=23 // pred_check
            _
          $region26: #{cnn_forward.5} parent=23 // pred_check_branch
            %114 = sbr.rel (0) target = $region28
          $region27: #{cnn_forward.5} parent=23 // pred_region
            // Predicated region
            $region29: #{cnn_forward.5} parent=27 // pred_check
              _
            $region30: #{cnn_forward.5} parent=27 // pred_check_branch
              %116 = sbr.rel target = $region32
            $region31: #{cnn_forward.5} parent=27 // pred_region
              // Predicated region
              $region44: #{cnn_forward.5} parent=31 // pred_check
                _
              $region45: #{cnn_forward.5} parent=31 // pred_check_branch
                %329 = sbr.rel (0) target = $region47
              $region46: #{cnn_forward.5} parent=31 // pred_region
                loop: start=0, step=1, limit=1
                $region48: #{cnn_forward.5} parent=46 // loop_pre_header
                  _
                $region49: #{cnn_forward.5} parent=46 // loop_header
                  %s331 = sphi 0, %s335
                  %p332 = scmp.ge.s32.totalorder %s331, 1
                  %s336 = sphi %s112, %s112
                  %s337 = sphi %s109, %s109
                $region50: #{cnn_forward.5} parent=46 // loop_header_branch
                  %334 = sbr.rel (%p332) target = $region54
                $region51: #{cnn_forward.5} parent=46 // loop_body
                  _
                $region52: #{cnn_forward.5} parent=46 // loop_footer
                  %s335 = sadd.s32 1, %s331
                $region53: #{cnn_forward.5} parent=46 // loop_footer_branch
                  %330 = sbr.rel target = $region49
                $region54: #{cnn_forward.5} parent=46 // loop_exit
                  _
                loop: start=0, step=1, limit=1
                $region55: #{cnn_forward.5} parent=46 // loop_pre_header
                  _
                $region56: #{cnn_forward.5} parent=46 // loop_header
                  %s340 = sphi 0, %s344
                  %p341 = scmp.ge.s32.totalorder %s340, 1
                  %s345 = sphi %s112, %s112
                  %s346 = sphi %s109, %s109
                $region57: #{cnn_forward.5} parent=46 // loop_header_branch
                  %343 = sbr.rel (%p341) target = $region61
                $region58: #{cnn_forward.5} parent=46 // loop_body
                  %v347 = vld [vmem:[%s345] sm:$0xf]
                  %348 = vst [vmem:[%s346] sm:$0xf] %v347
                  %v349 = vld [vmem:[%s345 + $0x4] sm:$0xf]
                  %350 = vst [vmem:[%s346 + $0x4] sm:$0xf] %v349
                  %v351 = vld [vmem:[%s345 + $0x8] sm:$0xf]
                  %352 = vst [vmem:[%s346 + $0x8] sm:$0xf] %v351
                  %v353 = vld [vmem:[%s345 + $0xc] sm:$0xf]
                  %354 = vst [vmem:[%s346 + $0xc] sm:$0xf] %v353
                  %v355 = vld [vmem:[%s345 + $0x10] sm:$0xf]
                  %356 = vst [vmem:[%s346 + $0x10] sm:$0xf] %v355
                  %v357 = vld [vmem:[%s345 + $0x14] sm:$0xf]
                  %358 = vst [vmem:[%s346 + $0x14] sm:$0xf] %v357
                  %v359 = vld [vmem:[%s345 + $0x18] sm:$0xf]
                  %360 = vst [vmem:[%s346 + $0x18] sm:$0xf] %v359
                  %v361 = vld [vmem:[%s345 + $0x1c] sm:$0xf]
                  %362 = vst [vmem:[%s346 + $0x1c] sm:$0xf] %v361
                  %v363 = vld [vmem:[%s345 + $0x20] sm:$0xf]
                  %364 = vst [vmem:[%s346 + $0x20] sm:$0xf] %v363
                  %v365 = vld [vmem:[%s345 + $0x24] sm:$0xf]
                  %366 = vst [vmem:[%s346 + $0x24] sm:$0xf] %v365
                  %v367 = vld [vmem:[%s345 + $0x28] sm:$0xf]
                  %368 = vst [vmem:[%s346 + $0x28] sm:$0xf] %v367
                  %v369 = vld [vmem:[%s345 + $0x2c] sm:$0xf]
                  %370 = vst [vmem:[%s346 + $0x2c] sm:$0xf] %v369
                  %v371 = vld [vmem:[%s345 + $0x30] sm:$0xf]
                  %372 = vst [vmem:[%s346 + $0x30] sm:$0xf] %v371
                  %v373 = vld [vmem:[%s345 + $0x34] sm:$0xf]
                  %374 = vst [vmem:[%s346 + $0x34] sm:$0xf] %v373
                  %v375 = vld [vmem:[%s345 + $0x38] sm:$0xf]
                  %376 = vst [vmem:[%s346 + $0x38] sm:$0xf] %v375
                  %v377 = vld [vmem:[%s345 + $0x3c] sm:$0xf]
                  %378 = vst [vmem:[%s346 + $0x3c] sm:$0xf] %v377
                  %v379 = vld [vmem:[%s345 + $0x40] sm:$0xf]
                  %380 = vst [vmem:[%s346 + $0x40] sm:$0xf] %v379
                  %v381 = vld [vmem:[%s345 + $0x44] sm:$0xf]
                  %382 = vst [vmem:[%s346 + $0x44] sm:$0xf] %v381
                  %v383 = vld [vmem:[%s345 + $0x48] sm:$0xf]
                  %384 = vst [vmem:[%s346 + $0x48] sm:$0xf] %v383
                  %v385 = vld [vmem:[%s345 + $0x4c] sm:$0xf]
                  %386 = vst [vmem:[%s346 + $0x4c] sm:$0xf] %v385
                  %v387 = vld [vmem:[%s345 + $0x50] sm:$0xf]
                  %388 = vst [vmem:[%s346 + $0x50] sm:$0xf] %v387
                  %v389 = vld [vmem:[%s345 + $0x54] sm:$0xf]
                  %390 = vst [vmem:[%s346 + $0x54] sm:$0xf] %v389
                  %v391 = vld [vmem:[%s345 + $0x58] sm:$0xf]
                  %392 = vst [vmem:[%s346 + $0x58] sm:$0xf] %v391
                  %v393 = vld [vmem:[%s345 + $0x5c] sm:$0xf]
                  %394 = vst [vmem:[%s346 + $0x5c] sm:$0xf] %v393
                  %v395 = vld [vmem:[%s345 + $0x60] sm:$0xf]
                  %396 = vst [vmem:[%s346 + $0x60] sm:$0xf] %v395
                  %v397 = vld [vmem:[%s345 + $0xc8] sm:$0xf]
                  %398 = vst [vmem:[%s346 + $0x64] sm:$0xf] %v397
                  %v399 = vld [vmem:[%s345 + $0xcc] sm:$0xf]
                  %400 = vst [vmem:[%s346 + $0x68] sm:$0xf] %v399
                  %v401 = vld [vmem:[%s345 + $0xd0] sm:$0xf]
                  %402 = vst [vmem:[%s346 + $0x6c] sm:$0xf] %v401
                  %v403 = vld [vmem:[%s345 + $0xd4] sm:$0xf]
                  %404 = vst [vmem:[%s346 + $0x70] sm:$0xf] %v403
                  %v405 = vld [vmem:[%s345 + $0xd8] sm:$0xf]
                  %406 = vst [vmem:[%s346 + $0x74] sm:$0xf] %v405
                  %v407 = vld [vmem:[%s345 + $0xdc] sm:$0xf]
                  %408 = vst [vmem:[%s346 + $0x78] sm:$0xf] %v407
                  %v409 = vld [vmem:[%s345 + $0xe0] sm:$0xf]
                  %410 = vst [vmem:[%s346 + $0x7c] sm:$0xf] %v409
                  %v411 = vld [vmem:[%s345 + $0xe4] sm:$0xf]
                  %412 = vst [vmem:[%s346 + $0x80] sm:$0xf] %v411
                  %v413 = vld [vmem:[%s345 + $0xe8] sm:$0xf]
                  %414 = vst [vmem:[%s346 + $0x84] sm:$0xf] %v413
                  %v415 = vld [vmem:[%s345 + $0xec] sm:$0xf]
                  %416 = vst [vmem:[%s346 + $0x88] sm:$0xf] %v415
                  %v417 = vld [vmem:[%s345 + $0xf0] sm:$0xf]
                  %418 = vst [vmem:[%s346 + $0x8c] sm:$0xf] %v417
                  %v419 = vld [vmem:[%s345 + $0xf4] sm:$0xf]
                  %420 = vst [vmem:[%s346 + $0x90] sm:$0xf] %v419
                  %v421 = vld [vmem:[%s345 + $0xf8] sm:$0xf]
                  %422 = vst [vmem:[%s346 + $0x94] sm:$0xf] %v421
                  %v423 = vld [vmem:[%s345 + $0xfc] sm:$0xf]
                  %424 = vst [vmem:[%s346 + $0x98] sm:$0xf] %v423
                  %v425 = vld [vmem:[%s345 + $0x100] sm:$0xf]
                  %426 = vst [vmem:[%s346 + $0x9c] sm:$0xf] %v425
                  %v427 = vld [vmem:[%s345 + $0x104] sm:$0xf]
                  %428 = vst [vmem:[%s346 + $0xa0] sm:$0xf] %v427
                  %v429 = vld [vmem:[%s345 + $0x108] sm:$0xf]
                  %430 = vst [vmem:[%s346 + $0xa4] sm:$0xf] %v429
                  %v431 = vld [vmem:[%s345 + $0x10c] sm:$0xf]
                  %432 = vst [vmem:[%s346 + $0xa8] sm:$0xf] %v431
                  %v433 = vld [vmem:[%s345 + $0x110] sm:$0xf]
                  %434 = vst [vmem:[%s346 + $0xac] sm:$0xf] %v433
                  %v435 = vld [vmem:[%s345 + $0x114] sm:$0xf]
                  %436 = vst [vmem:[%s346 + $0xb0] sm:$0xf] %v435
                  %v437 = vld [vmem:[%s345 + $0x118] sm:$0xf]
                  %438 = vst [vmem:[%s346 + $0xb4] sm:$0xf] %v437
                  %v439 = vld [vmem:[%s345 + $0x11c] sm:$0xf]
                  %440 = vst [vmem:[%s346 + $0xb8] sm:$0xf] %v439
                  %v441 = vld [vmem:[%s345 + $0x120] sm:$0xf]
                  %442 = vst [vmem:[%s346 + $0xbc] sm:$0xf] %v441
                  %v443 = vld [vmem:[%s345 + $0x124] sm:$0xf]
                  %444 = vst [vmem:[%s346 + $0xc0] sm:$0xf] %v443
                  %v445 = vld [vmem:[%s345 + $0x128] sm:$0xf]
                  %446 = vst [vmem:[%s346 + $0xc4] sm:$0xf] %v445
                  %v447 = vld [vmem:[%s345 + $0x190] sm:$0xf]
                  %448 = vst [vmem:[%s346 + $0xc8] sm:$0xf] %v447
                  %v449 = vld [vmem:[%s345 + $0x194] sm:$0xf]
                  %450 = vst [vmem:[%s346 + $0xcc] sm:$0xf] %v449
                  %v451 = vld [vmem:[%s345 + $0x198] sm:$0xf]
                  %452 = vst [vmem:[%s346 + $0xd0] sm:$0xf] %v451
                  %v453 = vld [vmem:[%s345 + $0x19c] sm:$0xf]
                  %454 = vst [vmem:[%s346 + $0xd4] sm:$0xf] %v453
                  %v455 = vld [vmem:[%s345 + $0x1a0] sm:$0xf]
                  %456 = vst [vmem:[%s346 + $0xd8] sm:$0xf] %v455
                  %v457 = vld [vmem:[%s345 + $0x1a4] sm:$0xf]
                  %458 = vst [vmem:[%s346 + $0xdc] sm:$0xf] %v457
                  %v459 = vld [vmem:[%s345 + $0x1a8] sm:$0xf]
                  %460 = vst [vmem:[%s346 + $0xe0] sm:$0xf] %v459
                  %v461 = vld [vmem:[%s345 + $0x1ac] sm:$0xf]
                  %462 = vst [vmem:[%s346 + $0xe4] sm:$0xf] %v461
                  %v463 = vld [vmem:[%s345 + $0x1b0] sm:$0xf]
                  %464 = vst [vmem:[%s346 + $0xe8] sm:$0xf] %v463
                  %v465 = vld [vmem:[%s345 + $0x1b4] sm:$0xf]
                  %466 = vst [vmem:[%s346 + $0xec] sm:$0xf] %v465
                  %v467 = vld [vmem:[%s345 + $0x1b8] sm:$0xf]
                  %468 = vst [vmem:[%s346 + $0xf0] sm:$0xf] %v467
                  %v469 = vld [vmem:[%s345 + $0x1bc] sm:$0xf]
                  %470 = vst [vmem:[%s346 + $0xf4] sm:$0xf] %v469
                  %v471 = vld [vmem:[%s345 + $0x1c0] sm:$0xf]
                  %472 = vst [vmem:[%s346 + $0xf8] sm:$0xf] %v471
                  %v473 = vld [vmem:[%s345 + $0x1c4] sm:$0xf]
                  %474 = vst [vmem:[%s346 + $0xfc] sm:$0xf] %v473
                  %v475 = vld [vmem:[%s345 + $0x1c8] sm:$0xf]
                  %476 = vst [vmem:[%s346 + $0x100] sm:$0xf] %v475
                  %v477 = vld [vmem:[%s345 + $0x1cc] sm:$0xf]
                  %478 = vst [vmem:[%s346 + $0x104] sm:$0xf] %v477
                  %v479 = vld [vmem:[%s345 + $0x1d0] sm:$0xf]
                  %480 = vst [vmem:[%s346 + $0x108] sm:$0xf] %v479
                  %v481 = vld [vmem:[%s345 + $0x1d4] sm:$0xf]
                  %482 = vst [vmem:[%s346 + $0x10c] sm:$0xf] %v481
                  %v483 = vld [vmem:[%s345 + $0x1d8] sm:$0xf]
                  %484 = vst [vmem:[%s346 + $0x110] sm:$0xf] %v483
                  %v485 = vld [vmem:[%s345 + $0x1dc] sm:$0xf]
                  %486 = vst [vmem:[%s346 + $0x114] sm:$0xf] %v485
                  %v487 = vld [vmem:[%s345 + $0x1e0] sm:$0xf]
                  %488 = vst [vmem:[%s346 + $0x118] sm:$0xf] %v487
                  %v489 = vld [vmem:[%s345 + $0x1e4] sm:$0xf]
                  %490 = vst [vmem:[%s346 + $0x11c] sm:$0xf] %v489
                  %v491 = vld [vmem:[%s345 + $0x1e8] sm:$0xf]
                  %492 = vst [vmem:[%s346 + $0x120] sm:$0xf] %v491
                  %v493 = vld [vmem:[%s345 + $0x1ec] sm:$0xf]
                  %494 = vst [vmem:[%s346 + $0x124] sm:$0xf] %v493
                  %v495 = vld [vmem:[%s345 + $0x1f0] sm:$0xf]
                  %496 = vst [vmem:[%s346 + $0x128] sm:$0xf] %v495
                  %v497 = vld [vmem:[%s345 + $0x258] sm:$0xf]
                  %498 = vst [vmem:[%s346 + $0x12c] sm:$0xf] %v497
                  %v499 = vld [vmem:[%s345 + $0x25c] sm:$0xf]
                  %500 = vst [vmem:[%s346 + $0x130] sm:$0xf] %v499
                  %v501 = vld [vmem:[%s345 + $0x260] sm:$0xf]
                  %502 = vst [vmem:[%s346 + $0x134] sm:$0xf] %v501
                  %v503 = vld [vmem:[%s345 + $0x264] sm:$0xf]
                  %504 = vst [vmem:[%s346 + $0x138] sm:$0xf] %v503
                  %v505 = vld [vmem:[%s345 + $0x268] sm:$0xf]
                  %506 = vst [vmem:[%s346 + $0x13c] sm:$0xf] %v505
                  %v507 = vld [vmem:[%s345 + $0x26c] sm:$0xf]
                  %508 = vst [vmem:[%s346 + $0x140] sm:$0xf] %v507
                  %v509 = vld [vmem:[%s345 + $0x270] sm:$0xf]
                  %510 = vst [vmem:[%s346 + $0x144] sm:$0xf] %v509
                  %v511 = vld [vmem:[%s345 + $0x274] sm:$0xf]
                  %512 = vst [vmem:[%s346 + $0x148] sm:$0xf] %v511
                  %v513 = vld [vmem:[%s345 + $0x278] sm:$0xf]
                  %514 = vst [vmem:[%s346 + $0x14c] sm:$0xf] %v513
                  %v515 = vld [vmem:[%s345 + $0x27c] sm:$0xf]
                  %516 = vst [vmem:[%s346 + $0x150] sm:$0xf] %v515
                  %v517 = vld [vmem:[%s345 + $0x280] sm:$0xf]
                  %518 = vst [vmem:[%s346 + $0x154] sm:$0xf] %v517
                  %v519 = vld [vmem:[%s345 + $0x284] sm:$0xf]
                  %520 = vst [vmem:[%s346 + $0x158] sm:$0xf] %v519
                  %v521 = vld [vmem:[%s345 + $0x288] sm:$0xf]
                  %522 = vst [vmem:[%s346 + $0x15c] sm:$0xf] %v521
                  %v523 = vld [vmem:[%s345 + $0x28c] sm:$0xf]
                  %524 = vst [vmem:[%s346 + $0x160] sm:$0xf] %v523
                  %v525 = vld [vmem:[%s345 + $0x290] sm:$0xf]
                  %526 = vst [vmem:[%s346 + $0x164] sm:$0xf] %v525
                  %v527 = vld [vmem:[%s345 + $0x294] sm:$0xf]
                  %528 = vst [vmem:[%s346 + $0x168] sm:$0xf] %v527
                  %v529 = vld [vmem:[%s345 + $0x298] sm:$0xf]
                  %530 = vst [vmem:[%s346 + $0x16c] sm:$0xf] %v529
                  %v531 = vld [vmem:[%s345 + $0x29c] sm:$0xf]
                  %532 = vst [vmem:[%s346 + $0x170] sm:$0xf] %v531
                  %v533 = vld [vmem:[%s345 + $0x2a0] sm:$0xf]
                  %534 = vst [vmem:[%s346 + $0x174] sm:$0xf] %v533
                  %v535 = vld [vmem:[%s345 + $0x2a4] sm:$0xf]
                  %536 = vst [vmem:[%s346 + $0x178] sm:$0xf] %v535
                  %v537 = vld [vmem:[%s345 + $0x2a8] sm:$0xf]
                  %538 = vst [vmem:[%s346 + $0x17c] sm:$0xf] %v537
                  %v539 = vld [vmem:[%s345 + $0x2ac] sm:$0xf]
                  %540 = vst [vmem:[%s346 + $0x180] sm:$0xf] %v539
                  %v541 = vld [vmem:[%s345 + $0x2b0] sm:$0xf]
                  %542 = vst [vmem:[%s346 + $0x184] sm:$0xf] %v541
                  %v543 = vld [vmem:[%s345 + $0x2b4] sm:$0xf]
                  %544 = vst [vmem:[%s346 + $0x188] sm:$0xf] %v543
                  %v545 = vld [vmem:[%s345 + $0x2b8] sm:$0xf]
                  %546 = vst [vmem:[%s346 + $0x18c] sm:$0xf] %v545
                $region59: #{cnn_forward.5} parent=46 // loop_footer
                  %s344 = sadd.s32 1, %s340
                $region60: #{cnn_forward.5} parent=46 // loop_footer_branch
                  %339 = sbr.rel target = $region56
                $region61: #{cnn_forward.5} parent=46 // loop_exit
                  _
              $region47: #{cnn_forward.5} parent=31 // pred_fallthru
                _
            $region32: #{cnn_forward.5} parent=27 // pred_fallthru
              _
            // Predicated region
            $region33: #{cnn_forward.5} parent=27 // pred_check
              _
            $region34: #{cnn_forward.5} parent=27 // pred_check_branch
              %118 = sbr.rel (0) target = $region36
            $region35: #{cnn_forward.5} parent=27 // pred_region
              loop: start=0, step=1, limit=1
              $region37: #{cnn_forward.5} parent=35 // loop_pre_header
                _
              $region38: #{cnn_forward.5} parent=35 // loop_header
                %s121 = sphi 0, %s125
                %p122 = scmp.ge.s32.totalorder %s121, 1
                %s126 = sphi %s112, %s112
                %s127 = sphi %s109, %s109
              $region39: #{cnn_forward.5} parent=35 // loop_header_branch
                %124 = sbr.rel (%p122) target = $region43
              $region40: #{cnn_forward.5} parent=35 // loop_body
                %v128 = vld [vmem:[%s126] sm:$0xf]
                %129 = vst [vmem:[%s127] sm:$0xf] %v128
                %v130 = vld [vmem:[%s126 + $0x4] sm:$0xf]
                %131 = vst [vmem:[%s127 + $0x4] sm:$0xf] %v130
                %v132 = vld [vmem:[%s126 + $0x8] sm:$0xf]
                %133 = vst [vmem:[%s127 + $0x8] sm:$0xf] %v132
                %v134 = vld [vmem:[%s126 + $0xc] sm:$0xf]
                %135 = vst [vmem:[%s127 + $0xc] sm:$0xf] %v134
                %v136 = vld [vmem:[%s126 + $0x10] sm:$0xf]
                %137 = vst [vmem:[%s127 + $0x10] sm:$0xf] %v136
                %v138 = vld [vmem:[%s126 + $0x14] sm:$0xf]
                %139 = vst [vmem:[%s127 + $0x14] sm:$0xf] %v138
                %v140 = vld [vmem:[%s126 + $0x18] sm:$0xf]
                %141 = vst [vmem:[%s127 + $0x18] sm:$0xf] %v140
                %v142 = vld [vmem:[%s126 + $0x1c] sm:$0xf]
                %143 = vst [vmem:[%s127 + $0x1c] sm:$0xf] %v142
                %v144 = vld [vmem:[%s126 + $0x20] sm:$0xf]
                %145 = vst [vmem:[%s127 + $0x20] sm:$0xf] %v144
                %v146 = vld [vmem:[%s126 + $0x24] sm:$0xf]
                %147 = vst [vmem:[%s127 + $0x24] sm:$0xf] %v146
                %v148 = vld [vmem:[%s126 + $0x28] sm:$0xf]
                %149 = vst [vmem:[%s127 + $0x28] sm:$0xf] %v148
                %v150 = vld [vmem:[%s126 + $0x2c] sm:$0xf]
                %151 = vst [vmem:[%s127 + $0x2c] sm:$0xf] %v150
                %v152 = vld [vmem:[%s126 + $0x30] sm:$0xf]
                %153 = vst [vmem:[%s127 + $0x30] sm:$0xf] %v152
                %v154 = vld [vmem:[%s126 + $0x34] sm:$0xf]
                %155 = vst [vmem:[%s127 + $0x34] sm:$0xf] %v154
                %v156 = vld [vmem:[%s126 + $0x38] sm:$0xf]
                %157 = vst [vmem:[%s127 + $0x38] sm:$0xf] %v156
                %v158 = vld [vmem:[%s126 + $0x3c] sm:$0xf]
                %159 = vst [vmem:[%s127 + $0x3c] sm:$0xf] %v158
                %v160 = vld [vmem:[%s126 + $0x40] sm:$0xf]
                %161 = vst [vmem:[%s127 + $0x40] sm:$0xf] %v160
                %v162 = vld [vmem:[%s126 + $0x44] sm:$0xf]
                %163 = vst [vmem:[%s127 + $0x44] sm:$0xf] %v162
                %v164 = vld [vmem:[%s126 + $0x48] sm:$0xf]
                %165 = vst [vmem:[%s127 + $0x48] sm:$0xf] %v164
                %v166 = vld [vmem:[%s126 + $0x4c] sm:$0xf]
                %167 = vst [vmem:[%s127 + $0x4c] sm:$0xf] %v166
                %v168 = vld [vmem:[%s126 + $0x50] sm:$0xf]
                %169 = vst [vmem:[%s127 + $0x50] sm:$0xf] %v168
                %v170 = vld [vmem:[%s126 + $0x54] sm:$0xf]
                %171 = vst [vmem:[%s127 + $0x54] sm:$0xf] %v170
                %v172 = vld [vmem:[%s126 + $0x58] sm:$0xf]
                %173 = vst [vmem:[%s127 + $0x58] sm:$0xf] %v172
                %v174 = vld [vmem:[%s126 + $0x5c] sm:$0xf]
                %175 = vst [vmem:[%s127 + $0x5c] sm:$0xf] %v174
                %v176 = vld [vmem:[%s126 + $0x60] sm:$0xf]
                %177 = vst [vmem:[%s127 + $0x60] sm:$0xf] %v176
                %v178 = vld [vmem:[%s126 + $0xc8] sm:$0xf]
                %179 = vst [vmem:[%s127 + $0x64] sm:$0xf] %v178
                %v180 = vld [vmem:[%s126 + $0xcc] sm:$0xf]
                %181 = vst [vmem:[%s127 + $0x68] sm:$0xf] %v180
                %v182 = vld [vmem:[%s126 + $0xd0] sm:$0xf]
                %183 = vst [vmem:[%s127 + $0x6c] sm:$0xf] %v182
                %v184 = vld [vmem:[%s126 + $0xd4] sm:$0xf]
                %185 = vst [vmem:[%s127 + $0x70] sm:$0xf] %v184
                %v186 = vld [vmem:[%s126 + $0xd8] sm:$0xf]
                %187 = vst [vmem:[%s127 + $0x74] sm:$0xf] %v186
                %v188 = vld [vmem:[%s126 + $0xdc] sm:$0xf]
                %189 = vst [vmem:[%s127 + $0x78] sm:$0xf] %v188
                %v190 = vld [vmem:[%s126 + $0xe0] sm:$0xf]
                %191 = vst [vmem:[%s127 + $0x7c] sm:$0xf] %v190
                %v192 = vld [vmem:[%s126 + $0xe4] sm:$0xf]
                %193 = vst [vmem:[%s127 + $0x80] sm:$0xf] %v192
                %v194 = vld [vmem:[%s126 + $0xe8] sm:$0xf]
                %195 = vst [vmem:[%s127 + $0x84] sm:$0xf] %v194
                %v196 = vld [vmem:[%s126 + $0xec] sm:$0xf]
                %197 = vst [vmem:[%s127 + $0x88] sm:$0xf] %v196
                %v198 = vld [vmem:[%s126 + $0xf0] sm:$0xf]
                %199 = vst [vmem:[%s127 + $0x8c] sm:$0xf] %v198
                %v200 = vld [vmem:[%s126 + $0xf4] sm:$0xf]
                %201 = vst [vmem:[%s127 + $0x90] sm:$0xf] %v200
                %v202 = vld [vmem:[%s126 + $0xf8] sm:$0xf]
                %203 = vst [vmem:[%s127 + $0x94] sm:$0xf] %v202
                %v204 = vld [vmem:[%s126 + $0xfc] sm:$0xf]
                %205 = vst [vmem:[%s127 + $0x98] sm:$0xf] %v204
                %v206 = vld [vmem:[%s126 + $0x100] sm:$0xf]
                %207 = vst [vmem:[%s127 + $0x9c] sm:$0xf] %v206
                %v208 = vld [vmem:[%s126 + $0x104] sm:$0xf]
                %209 = vst [vmem:[%s127 + $0xa0] sm:$0xf] %v208
                %v210 = vld [vmem:[%s126 + $0x108] sm:$0xf]
                %211 = vst [vmem:[%s127 + $0xa4] sm:$0xf] %v210
                %v212 = vld [vmem:[%s126 + $0x10c] sm:$0xf]
                %213 = vst [vmem:[%s127 + $0xa8] sm:$0xf] %v212
                %v214 = vld [vmem:[%s126 + $0x110] sm:$0xf]
                %215 = vst [vmem:[%s127 + $0xac] sm:$0xf] %v214
                %v216 = vld [vmem:[%s126 + $0x114] sm:$0xf]
                %217 = vst [vmem:[%s127 + $0xb0] sm:$0xf] %v216
                %v218 = vld [vmem:[%s126 + $0x118] sm:$0xf]
                %219 = vst [vmem:[%s127 + $0xb4] sm:$0xf] %v218
                %v220 = vld [vmem:[%s126 + $0x11c] sm:$0xf]
                %221 = vst [vmem:[%s127 + $0xb8] sm:$0xf] %v220
                %v222 = vld [vmem:[%s126 + $0x120] sm:$0xf]
                %223 = vst [vmem:[%s127 + $0xbc] sm:$0xf] %v222
                %v224 = vld [vmem:[%s126 + $0x124] sm:$0xf]
                %225 = vst [vmem:[%s127 + $0xc0] sm:$0xf] %v224
                %v226 = vld [vmem:[%s126 + $0x128] sm:$0xf]
                %227 = vst [vmem:[%s127 + $0xc4] sm:$0xf] %v226
                %v228 = vld [vmem:[%s126 + $0x190] sm:$0xf]
                %229 = vst [vmem:[%s127 + $0xc8] sm:$0xf] %v228
                %v230 = vld [vmem:[%s126 + $0x194] sm:$0xf]
                %231 = vst [vmem:[%s127 + $0xcc] sm:$0xf] %v230
                %v232 = vld [vmem:[%s126 + $0x198] sm:$0xf]
                %233 = vst [vmem:[%s127 + $0xd0] sm:$0xf] %v232
                %v234 = vld [vmem:[%s126 + $0x19c] sm:$0xf]
                %235 = vst [vmem:[%s127 + $0xd4] sm:$0xf] %v234
                %v236 = vld [vmem:[%s126 + $0x1a0] sm:$0xf]
                %237 = vst [vmem:[%s127 + $0xd8] sm:$0xf] %v236
                %v238 = vld [vmem:[%s126 + $0x1a4] sm:$0xf]
                %239 = vst [vmem:[%s127 + $0xdc] sm:$0xf] %v238
                %v240 = vld [vmem:[%s126 + $0x1a8] sm:$0xf]
                %241 = vst [vmem:[%s127 + $0xe0] sm:$0xf] %v240
                %v242 = vld [vmem:[%s126 + $0x1ac] sm:$0xf]
                %243 = vst [vmem:[%s127 + $0xe4] sm:$0xf] %v242
                %v244 = vld [vmem:[%s126 + $0x1b0] sm:$0xf]
                %245 = vst [vmem:[%s127 + $0xe8] sm:$0xf] %v244
                %v246 = vld [vmem:[%s126 + $0x1b4] sm:$0xf]
                %247 = vst [vmem:[%s127 + $0xec] sm:$0xf] %v246
                %v248 = vld [vmem:[%s126 + $0x1b8] sm:$0xf]
                %249 = vst [vmem:[%s127 + $0xf0] sm:$0xf] %v248
                %v250 = vld [vmem:[%s126 + $0x1bc] sm:$0xf]
                %251 = vst [vmem:[%s127 + $0xf4] sm:$0xf] %v250
                %v252 = vld [vmem:[%s126 + $0x1c0] sm:$0xf]
                %253 = vst [vmem:[%s127 + $0xf8] sm:$0xf] %v252
                %v254 = vld [vmem:[%s126 + $0x1c4] sm:$0xf]
                %255 = vst [vmem:[%s127 + $0xfc] sm:$0xf] %v254
                %v256 = vld [vmem:[%s126 + $0x1c8] sm:$0xf]
                %257 = vst [vmem:[%s127 + $0x100] sm:$0xf] %v256
                %v258 = vld [vmem:[%s126 + $0x1cc] sm:$0xf]
                %259 = vst [vmem:[%s127 + $0x104] sm:$0xf] %v258
                %v260 = vld [vmem:[%s126 + $0x1d0] sm:$0xf]
                %261 = vst [vmem:[%s127 + $0x108] sm:$0xf] %v260
                %v262 = vld [vmem:[%s126 + $0x1d4] sm:$0xf]
                %263 = vst [vmem:[%s127 + $0x10c] sm:$0xf] %v262
                %v264 = vld [vmem:[%s126 + $0x1d8] sm:$0xf]
                %265 = vst [vmem:[%s127 + $0x110] sm:$0xf] %v264
                %v266 = vld [vmem:[%s126 + $0x1dc] sm:$0xf]
                %267 = vst [vmem:[%s127 + $0x114] sm:$0xf] %v266
                %v268 = vld [vmem:[%s126 + $0x1e0] sm:$0xf]
                %269 = vst [vmem:[%s127 + $0x118] sm:$0xf] %v268
                %v270 = vld [vmem:[%s126 + $0x1e4] sm:$0xf]
                %271 = vst [vmem:[%s127 + $0x11c] sm:$0xf] %v270
                %v272 = vld [vmem:[%s126 + $0x1e8] sm:$0xf]
                %273 = vst [vmem:[%s127 + $0x120] sm:$0xf] %v272
                %v274 = vld [vmem:[%s126 + $0x1ec] sm:$0xf]
                %275 = vst [vmem:[%s127 + $0x124] sm:$0xf] %v274
                %v276 = vld [vmem:[%s126 + $0x1f0] sm:$0xf]
                %277 = vst [vmem:[%s127 + $0x128] sm:$0xf] %v276
                %v278 = vld [vmem:[%s126 + $0x258] sm:$0xf]
                %279 = vst [vmem:[%s127 + $0x12c] sm:$0xf] %v278
                %v280 = vld [vmem:[%s126 + $0x25c] sm:$0xf]
                %281 = vst [vmem:[%s127 + $0x130] sm:$0xf] %v280
                %v282 = vld [vmem:[%s126 + $0x260] sm:$0xf]
                %283 = vst [vmem:[%s127 + $0x134] sm:$0xf] %v282
                %v284 = vld [vmem:[%s126 + $0x264] sm:$0xf]
                %285 = vst [vmem:[%s127 + $0x138] sm:$0xf] %v284
                %v286 = vld [vmem:[%s126 + $0x268] sm:$0xf]
                %287 = vst [vmem:[%s127 + $0x13c] sm:$0xf] %v286
                %v288 = vld [vmem:[%s126 + $0x26c] sm:$0xf]
                %289 = vst [vmem:[%s127 + $0x140] sm:$0xf] %v288
                %v290 = vld [vmem:[%s126 + $0x270] sm:$0xf]
                %291 = vst [vmem:[%s127 + $0x144] sm:$0xf] %v290
                %v292 = vld [vmem:[%s126 + $0x274] sm:$0xf]
                %293 = vst [vmem:[%s127 + $0x148] sm:$0xf] %v292
                %v294 = vld [vmem:[%s126 + $0x278] sm:$0xf]
                %295 = vst [vmem:[%s127 + $0x14c] sm:$0xf] %v294
                %v296 = vld [vmem:[%s126 + $0x27c] sm:$0xf]
                %297 = vst [vmem:[%s127 + $0x150] sm:$0xf] %v296
                %v298 = vld [vmem:[%s126 + $0x280] sm:$0xf]
                %299 = vst [vmem:[%s127 + $0x154] sm:$0xf] %v298
                %v300 = vld [vmem:[%s126 + $0x284] sm:$0xf]
                %301 = vst [vmem:[%s127 + $0x158] sm:$0xf] %v300
                %v302 = vld [vmem:[%s126 + $0x288] sm:$0xf]
                %303 = vst [vmem:[%s127 + $0x15c] sm:$0xf] %v302
                %v304 = vld [vmem:[%s126 + $0x28c] sm:$0xf]
                %305 = vst [vmem:[%s127 + $0x160] sm:$0xf] %v304
                %v306 = vld [vmem:[%s126 + $0x290] sm:$0xf]
                %307 = vst [vmem:[%s127 + $0x164] sm:$0xf] %v306
                %v308 = vld [vmem:[%s126 + $0x294] sm:$0xf]
                %309 = vst [vmem:[%s127 + $0x168] sm:$0xf] %v308
                %v310 = vld [vmem:[%s126 + $0x298] sm:$0xf]
                %311 = vst [vmem:[%s127 + $0x16c] sm:$0xf] %v310
                %v312 = vld [vmem:[%s126 + $0x29c] sm:$0xf]
                %313 = vst [vmem:[%s127 + $0x170] sm:$0xf] %v312
                %v314 = vld [vmem:[%s126 + $0x2a0] sm:$0xf]
                %315 = vst [vmem:[%s127 + $0x174] sm:$0xf] %v314
                %v316 = vld [vmem:[%s126 + $0x2a4] sm:$0xf]
                %317 = vst [vmem:[%s127 + $0x178] sm:$0xf] %v316
                %v318 = vld [vmem:[%s126 + $0x2a8] sm:$0xf]
                %319 = vst [vmem:[%s127 + $0x17c] sm:$0xf] %v318
                %v320 = vld [vmem:[%s126 + $0x2ac] sm:$0xf]
                %321 = vst [vmem:[%s127 + $0x180] sm:$0xf] %v320
                %v322 = vld [vmem:[%s126 + $0x2b0] sm:$0xf]
                %323 = vst [vmem:[%s127 + $0x184] sm:$0xf] %v322
                %v324 = vld [vmem:[%s126 + $0x2b4] sm:$0xf]
                %325 = vst [vmem:[%s127 + $0x188] sm:$0xf] %v324
                %v326 = vld [vmem:[%s126 + $0x2b8] sm:$0xf]
                %327 = vst [vmem:[%s127 + $0x18c] sm:$0xf] %v326
              $region41: #{cnn_forward.5} parent=35 // loop_footer
                %s125 = sadd.s32 1, %s121
              $region42: #{cnn_forward.5} parent=35 // loop_footer_branch
                %120 = sbr.rel target = $region38
              $region43: #{cnn_forward.5} parent=35 // loop_exit
                _
            $region36: #{cnn_forward.5} parent=27 // pred_fallthru
              _
          $region28: #{cnn_forward.5} parent=23 // pred_fallthru
            _
          %547 = vnop
        $region24: #{cnn_forward.5} parent=19 // pred_fallthru
          _
      $region20: #{cnn_forward.5} parent=5 // pred_fallthru
        _
      %p548 = scmp.le.s32.totalorder 1, %s8
      %p549 = scmp.lt.s32.totalorder %s8, 3
      %p550 = pnand %p548, %p549
      %p551 = pneg %p550
      // Predicated region
      $region62: #{cnn_forward.5} parent=5 // pred_check
        _
      $region63: #{cnn_forward.5} parent=5 // pred_check_branch
        %553 = sbr.rel (%p550) target = $region65
      $region64: #{cnn_forward.5} parent=5 // pred_region
        %s554 = ssub.s32 %s8, 1
        %s555 = sand.u32 %s21, 1
        %s556 = sand.u32 %s21, 1
        %s557 = smul.addr %s556, 400
        %s558 = scalar_lea.vmem [#allocation2], %s557
        // Predicated region
        $region66: #{cnn_forward.5} parent=64 // pred_check
          %p559 = pneg %p34
        $region67: #{cnn_forward.5} parent=64 // pred_check_branch
          %561 = sbr.rel (%p559) target = $region69
        $region68: #{cnn_forward.5} parent=64 // pred_region
          _
        $region69: #{cnn_forward.5} parent=64 // pred_fallthru
          _
        %s562 = sand.u32 %s21, 1
        %s563 = sand.u32 %s21, 1
        %s564 = smul.addr %s563, 400
        %s565 = scalar_lea.vmem [#allocation2], %s564
        %p566 = pneg %p34
        %p567 = pneg %p31
        %p568 = pneg %p55
        %p569 = pneg %p52
        %p570 = pneg %p81
        %p571 = pneg %p78
        %p572 = scmp.lt.s32.totalorder %s13, 1
        %s573 = scalar_select %p572, %s13, 1
        %s574 = smul.addr %s573, 2
        %s575 = scalar_lea.vmem %s2, %s574
        %s576 = smul.u32 25, %s13
        %p577 = scmp.lt.s32.totalorder %s13, 1
        %s578 = scalar_select %p577, %s13, 1
        %s579 = smul.addr %s578, 2
        %s580 = scalar_lea.vmem %s2, %s579
        %v582 = vld [vmem:[%s558] sm:$0xf]
        %v583 = vld [vmem:[%s558 + $0x4] sm:$0xf]
        %v584 = vld [vmem:[%s558 + $0x8] sm:$0xf]
        %v585 = vld [vmem:[%s558 + $0xc] sm:$0xf]
        %v586 = vld [vmem:[%s558 + $0x10] sm:$0xf]
        %v587 = vld [vmem:[%s558 + $0x14] sm:$0xf]
        %v588 = vld [vmem:[%s558 + $0x18] sm:$0xf]
        %v589 = vld [vmem:[%s558 + $0x1c] sm:$0xf]
        %v590 = vld [vmem:[%s558 + $0x20] sm:$0xf]
        %v591 = vld [vmem:[%s558 + $0x24] sm:$0xf]
        %v592 = vld [vmem:[%s558 + $0x28] sm:$0xf]
        %v593 = vld [vmem:[%s558 + $0x2c] sm:$0xf]
        %v594 = vld [vmem:[%s558 + $0x30] sm:$0xf]
        %v595 = vld [vmem:[%s558 + $0x34] sm:$0xf]
        %v596 = vld [vmem:[%s558 + $0x38] sm:$0xf]
        %v597 = vld [vmem:[%s558 + $0x3c] sm:$0xf]
        %v598 = vld [vmem:[%s558 + $0x40] sm:$0xf]
        %v599 = vld [vmem:[%s558 + $0x44] sm:$0xf]
        %v600 = vld [vmem:[%s558 + $0x48] sm:$0xf]
        %v601 = vld [vmem:[%s558 + $0x4c] sm:$0xf]
        %v602 = vld [vmem:[%s558 + $0x50] sm:$0xf]
        %v603 = vld [vmem:[%s558 + $0x54] sm:$0xf]
        %v604 = vld [vmem:[%s558 + $0x58] sm:$0xf]
        %v605 = vld [vmem:[%s558 + $0x5c] sm:$0xf]
        %v606 = vld [vmem:[%s558 + $0x60] sm:$0xf]
        %v607 = vld [vmem:[%s1] sm:$0xf]
        %v608 = vld [vmem:[%s1 + $0x4] sm:$0xf]
        %v609 = vld [vmem:[%s1 + $0x8] sm:$0xf]
        %v610 = vld [vmem:[%s1 + $0xc] sm:$0xf]
        %v611 = vld [vmem:[%s1 + $0x10] sm:$0xf]
        %v612 = vld [vmem:[%s1 + $0x14] sm:$0xf]
        %v613 = vld [vmem:[%s1 + $0x18] sm:$0xf]
        %v614 = vld [vmem:[%s1 + $0x1c] sm:$0xf]
        %v615 = vld [vmem:[%s1 + $0x20] sm:$0xf]
        %v616 = vld [vmem:[%s1 + $0x24] sm:$0xf]
        %v617 = vld [vmem:[%s1 + $0x28] sm:$0xf]
        %v618 = vld [vmem:[%s1 + $0x2c] sm:$0xf]
        %v619 = vld [vmem:[%s1 + $0x30] sm:$0xf]
        %v620 = vld [vmem:[%s1 + $0x34] sm:$0xf]
        %v621 = vld [vmem:[%s1 + $0x38] sm:$0xf]
        %v622 = vld [vmem:[%s1 + $0x3c] sm:$0xf]
        %v648 = vunpack.c.l.b16 %v582
        %v649 = vunpack.c.l.b16 %v583
        %v650 = vunpack.c.l.b16 %v584
        %v651 = vunpack.c.l.b16 %v585
        %v652 = vunpack.c.l.b16 %v586
        %v653 = vunpack.c.l.b16 %v587
        %v654 = vunpack.c.l.b16 %v588
        %v655 = vunpack.c.l.b16 %v589
        %v656 = vunpack.c.l.b16 %v590
        %v657 = vunpack.c.l.b16 %v591
        %v658 = vunpack.c.l.b16 %v592
        %v659 = vunpack.c.l.b16 %v593
        %v660 = vunpack.c.l.b16 %v594
        %v661 = vunpack.c.l.b16 %v595
        %v662 = vunpack.c.l.b16 %v596
        %v663 = vunpack.c.l.b16 %v597
        %v664 = vunpack.c.l.b16 %v598
        %v665 = vunpack.c.l.b16 %v599
        %v666 = vunpack.c.l.b16 %v600
        %v667 = vunpack.c.l.b16 %v601
        %v668 = vunpack.c.l.b16 %v602
        %v669 = vunpack.c.l.b16 %v603
        %v670 = vunpack.c.l.b16 %v604
        %v671 = vunpack.c.l.b16 %v605
        %v672 = vunpack.c.l.b16 %v606
        %v673 = vpack.c.b16 %v649, %v648
        %v674 = vpack.c.b16 %v651, %v650
        %v675 = vpack.c.b16 %v653, %v652
        %v676 = vpack.c.b16 %v655, %v654
        %v677 = vpack.c.b16 %v657, %v656
        %v678 = vpack.c.b16 %v659, %v658
        %v679 = vpack.c.b16 %v661, %v660
        %v680 = vpack.c.b16 %v663, %v662
        %v681 = vpack.c.b16 %v665, %v664
        %v682 = vpack.c.b16 %v667, %v666
        %v683 = vpack.c.b16 %v669, %v668
        %v684 = vpack.c.b16 %v671, %v670
        %v685 = vpack.c.b16 %v672, %v672
        %v715 = vunpack.c.l.b16 %v607
        %v716 = vunpack.c.l.b16 %v608
        %v717 = vunpack.c.l.b16 %v609
        %v718 = vunpack.c.l.b16 %v610
        %v719 = vunpack.c.l.b16 %v611
        %v720 = vunpack.c.l.b16 %v612
        %v721 = vunpack.c.l.b16 %v613
        %v722 = vunpack.c.l.b16 %v614
        %v723 = vunpack.c.l.b16 %v615
        %v724 = vunpack.c.l.b16 %v616
        %v725 = vunpack.c.l.b16 %v617
        %v726 = vunpack.c.l.b16 %v618
        %v727 = vunpack.c.l.b16 %v619
        %v728 = vunpack.c.l.b16 %v620
        %v729 = vunpack.c.l.b16 %v621
        %v730 = vunpack.c.l.b16 %v622
        %v731 = vpack.c.b16 %v716, %v715
        %v732 = vpack.c.b16 %v718, %v717
        %v733 = vpack.c.b16 %v720, %v719
        %v734 = vpack.c.b16 %v722, %v721
        %v735 = vpack.c.b16 %v724, %v723
        %v736 = vpack.c.b16 %v726, %v725
        %v737 = vpack.c.b16 %v728, %v727
        %v738 = vpack.c.b16 %v730, %v729
        %747 = vmatprep.subr.bf16.mxu0 0
        %748 = vmatpush1.bf16.msra.mxu0 %v731
        %749 = vmatprep.subr.bf16.mxu0 0
        %750 = vmatpush1.bf16.msra.mxu0 %v732
        %751 = vmatprep.subr.bf16.mxu0 0
        %752 = vmatpush1.bf16.msra.mxu0 %v733
        %753 = vmatprep.subr.bf16.mxu0 0
        %754 = vmatpush1.bf16.msra.mxu0 %v734
        %755 = vmatprep.subr.bf16.mxu0 0
        %756 = vmatpush1.bf16.msra.mxu0 %v735
        %757 = vmatprep.subr.bf16.mxu0 0
        %758 = vmatpush1.bf16.msra.mxu0 %v736
        %759 = vmatprep.subr.bf16.mxu0 0
        %760 = vmatpush1.bf16.msra.mxu0 %v737
        %761 = vmatprep.subr.bf16.mxu0 0
        %762 = vmatpush1.bf16.msra.mxu0 %v738
        %763 = vmatprep.subr.bf16.mxu0 0
        %764 = vmatpush1.bf16.msra.mxu0 0
        %765 = vmatprep.subr.bf16.mxu0 0
        %766 = vmatpush1.bf16.msra.mxu0 0
        %767 = vmatprep.subr.bf16.mxu0 0
        %768 = vmatpush1.bf16.msra.mxu0 0
        %769 = vmatprep.subr.bf16.mxu0 0
        %770 = vmatpush1.bf16.msra.mxu0 0
        %771 = vmatprep.subr.bf16.mxu0 0
        %772 = vmatpush1.bf16.msra.mxu0 0
        %773 = vmatprep.subr.bf16.mxu0 0
        %774 = vmatpush1.bf16.msra.mxu0 0
        %775 = vmatprep.subr.bf16.mxu0 0
        %776 = vmatpush1.bf16.msra.mxu0 0
        %777 = vmatprep.subr.bf16.mxu0 0
        %778 = vmatpush1.bf16.msra.mxu0 0
        %779 = vmatprep.mubr.bf16.mxu0 0
        %780 = vmatmul.mubr.bf16.gmra.mrb[0].mxu0 %v673
        %v781 = vpop.f32.mrb[0].mxu0
        %v782 = vadd.f32 0.0, %v781
        %v783 = vpop.f32.mrb[0].mxu0
        %v784 = vpop.f32.mrb[0].mxu0
        %v785 = vadd.f32 0.0, %v784
        %v786 = vpop.f32.mrb[0].mxu0
        %787 = vmatprep.mubr.bf16.mxu0 0
        %788 = vmatmul.mubr.bf16.gmra.mrb[0].mxu0 %v674
        %v789 = vpop.f32.mrb[0].mxu0
        %v790 = vadd.f32 0.0, %v789
        %v791 = vpop.f32.mrb[0].mxu0
        %v792 = vpop.f32.mrb[0].mxu0
        %v793 = vadd.f32 0.0, %v792
        %v794 = vpop.f32.mrb[0].mxu0
        %795 = vmatprep.mubr.bf16.mxu0 0
        %796 = vmatmul.mubr.bf16.gmra.mrb[0].mxu0 %v675
        %v797 = vpop.f32.mrb[0].mxu0
        %v798 = vadd.f32 0.0, %v797
        %v799 = vpop.f32.mrb[0].mxu0
        %v800 = vpop.f32.mrb[0].mxu0
        %v801 = vadd.f32 0.0, %v800
        %v802 = vpop.f32.mrb[0].mxu0
        %803 = vmatprep.mubr.bf16.mxu0 0
        %804 = vmatmul.mubr.bf16.gmra.mrb[0].mxu0 %v676
        %v805 = vpop.f32.mrb[0].mxu0
        %v806 = vadd.f32 0.0, %v805
        %v807 = vpop.f32.mrb[0].mxu0
        %v808 = vpop.f32.mrb[0].mxu0
        %v809 = vadd.f32 0.0, %v808
        %v810 = vpop.f32.mrb[0].mxu0
        %811 = vmatprep.mubr.bf16.mxu0 0
        %812 = vmatmul.mubr.bf16.gmra.mrb[0].mxu0 %v677
        %v813 = vpop.f32.mrb[0].mxu0
        %v814 = vadd.f32 0.0, %v813
        %v815 = vpop.f32.mrb[0].mxu0
        %v816 = vpop.f32.mrb[0].mxu0
        %v817 = vadd.f32 0.0, %v816
        %v818 = vpop.f32.mrb[0].mxu0
        %819 = vmatprep.mubr.bf16.mxu0 0
        %820 = vmatmul.mubr.bf16.gmra.mrb[0].mxu0 %v678
        %v821 = vpop.f32.mrb[0].mxu0
        %v822 = vadd.f32 0.0, %v821
        %v823 = vpop.f32.mrb[0].mxu0
        %v824 = vpop.f32.mrb[0].mxu0
        %v825 = vadd.f32 0.0, %v824
        %v826 = vpop.f32.mrb[0].mxu0
        %827 = vmatprep.mubr.bf16.mxu0 0
        %828 = vmatmul.mubr.bf16.gmra.mrb[0].mxu0 %v679
        %v829 = vpop.f32.mrb[0].mxu0
        %v830 = vadd.f32 0.0, %v829
        %v831 = vpop.f32.mrb[0].mxu0
        %v832 = vpop.f32.mrb[0].mxu0
        %v833 = vadd.f32 0.0, %v832
        %v834 = vpop.f32.mrb[0].mxu0
        %835 = vmatprep.mubr.bf16.mxu0 0
        %836 = vmatmul.mubr.bf16.gmra.mrb[0].mxu0 %v680
        %v837 = vpop.f32.mrb[0].mxu0
        %v838 = vadd.f32 0.0, %v837
        %v839 = vpop.f32.mrb[0].mxu0
        %v840 = vpop.f32.mrb[0].mxu0
        %v841 = vadd.f32 0.0, %v840
        %v842 = vpop.f32.mrb[0].mxu0
        %843 = vmatprep.mubr.bf16.mxu0 0
        %844 = vmatmul.mubr.bf16.gmra.mrb[0].mxu0 %v681
        %v845 = vpop.f32.mrb[0].mxu0
        %v846 = vadd.f32 0.0, %v845
        %v847 = vpop.f32.mrb[0].mxu0
        %v848 = vpop.f32.mrb[0].mxu0
        %v849 = vadd.f32 0.0, %v848
        %v850 = vpop.f32.mrb[0].mxu0
        %851 = vmatprep.mubr.bf16.mxu0 0
        %852 = vmatmul.mubr.bf16.gmra.mrb[0].mxu0 %v682
        %v853 = vpop.f32.mrb[0].mxu0
        %v854 = vadd.f32 0.0, %v853
        %v855 = vpop.f32.mrb[0].mxu0
        %v856 = vpop.f32.mrb[0].mxu0
        %v857 = vadd.f32 0.0, %v856
        %v858 = vpop.f32.mrb[0].mxu0
        %859 = vmatprep.mubr.bf16.mxu0 0
        %860 = vmatmul.mubr.bf16.gmra.mrb[0].mxu0 %v683
        %v861 = vpop.f32.mrb[0].mxu0
        %v862 = vadd.f32 0.0, %v861
        %v863 = vpop.f32.mrb[0].mxu0
        %v864 = vpop.f32.mrb[0].mxu0
        %v865 = vadd.f32 0.0, %v864
        %v866 = vpop.f32.mrb[0].mxu0
        %867 = vmatprep.mubr.bf16.mxu0 0
        %868 = vmatmul.mubr.bf16.gmra.mrb[0].mxu0 %v684
        %v869 = vpop.f32.mrb[0].mxu0
        %v870 = vadd.f32 0.0, %v869
        %v871 = vpop.f32.mrb[0].mxu0
        %v872 = vpop.f32.mrb[0].mxu0
        %v873 = vadd.f32 0.0, %v872
        %v874 = vpop.f32.mrb[0].mxu0
        %875 = vmatprep.mubr.bf16.mxu0 0
        %876 = vmatmul.mubr.bf16.gmra.mrb[0].mxu0 %v685
        %v877 = vpop.f32.mrb[0].mxu0
        %v878 = vadd.f32 0.0, %v877
        %v879 = vpop.f32.mrb[0].mxu0
        %v880 = vpop.f32.mrb[0].mxu0
        %v881 = vpop.f32.mrb[0].mxu0
        %882 = vdwg.mxu0
        %v883 = vadd.f32 %v782, %v785
        %v884 = vadd.f32 %v883, %v790
        %v885 = vadd.f32 %v884, %v793
        %v886 = vadd.f32 %v885, %v798
        %v887 = vadd.f32 %v886, %v801
        %v888 = vadd.f32 %v887, %v806
        %v889 = vadd.f32 %v888, %v809
        %v890 = vadd.f32 %v889, %v814
        %v891 = vadd.f32 %v890, %v817
        %v892 = vadd.f32 %v891, %v822
        %v893 = vadd.f32 %v892, %v825
        %v894 = vadd.f32 %v893, %v830
        %v895 = vadd.f32 %v894, %v833
        %v896 = vadd.f32 %v895, %v838
        %v897 = vadd.f32 %v896, %v841
        %v898 = vadd.f32 %v897, %v846
        %v899 = vadd.f32 %v898, %v849
        %v900 = vadd.f32 %v899, %v854
        %v901 = vadd.f32 %v900, %v857
        %v902 = vadd.f32 %v901, %v862
        %v903 = vadd.f32 %v902, %v865
        %v904 = vadd.f32 %v903, %v870
        %v905 = vadd.f32 %v904, %v873
        %v906 = vadd.f32 %v905, %v878
        %v907 = vrot.slane %v906, 4
        %v908 = vadd.f32 %v906, %v907
        %v909 = vrot.slane %v908, 2
        %v910 = vadd.f32 %v908, %v909
        %v911 = vrot.slane %v910, 1
        %v912 = vadd.f32 %v910, %v911
        %v913 = vadd.f32 %v912, 0.0
        %v914 = vmul.f32 %v782, %v782
        %v915 = vmul.f32 %v785, %v785
        %v916 = vmul.f32 %v790, %v790
        %v917 = vmul.f32 %v793, %v793
        %v918 = vmul.f32 %v798, %v798
        %v919 = vmul.f32 %v801, %v801
        %v920 = vmul.f32 %v806, %v806
        %v921 = vmul.f32 %v809, %v809
        %v922 = vmul.f32 %v814, %v814
        %v923 = vmul.f32 %v817, %v817
        %v924 = vmul.f32 %v822, %v822
        %v925 = vmul.f32 %v825, %v825
        %v926 = vmul.f32 %v830, %v830
        %v927 = vmul.f32 %v833, %v833
        %v928 = vmul.f32 %v838, %v838
        %v929 = vmul.f32 %v841, %v841
        %v930 = vmul.f32 %v846, %v846
        %v931 = vmul.f32 %v849, %v849
        %v932 = vmul.f32 %v854, %v854
        %v933 = vmul.f32 %v857, %v857
        %v934 = vmul.f32 %v862, %v862
        %v935 = vmul.f32 %v865, %v865
        %v936 = vmul.f32 %v870, %v870
        %v937 = vmul.f32 %v873, %v873
        %v938 = vmul.f32 %v878, %v878
        %v939 = vadd.f32 %v914, %v915
        %v940 = vadd.f32 %v939, %v916
        %v941 = vadd.f32 %v940, %v917
        %v942 = vadd.f32 %v941, %v918
        %v943 = vadd.f32 %v942, %v919
        %v944 = vadd.f32 %v943, %v920
        %v945 = vadd.f32 %v944, %v921
        %v946 = vadd.f32 %v945, %v922
        %v947 = vadd.f32 %v946, %v923
        %v948 = vadd.f32 %v947, %v924
        %v949 = vadd.f32 %v948, %v925
        %v950 = vadd.f32 %v949, %v926
        %v951 = vadd.f32 %v950, %v927
        %v952 = vadd.f32 %v951, %v928
        %v953 = vadd.f32 %v952, %v929
        %v954 = vadd.f32 %v953, %v930
        %v955 = vadd.f32 %v954, %v931
        %v956 = vadd.f32 %v955, %v932
        %v957 = vadd.f32 %v956, %v933
        %v958 = vadd.f32 %v957, %v934
        %v959 = vadd.f32 %v958, %v935
        %v960 = vadd.f32 %v959, %v936
        %v961 = vadd.f32 %v960, %v937
        %v962 = vadd.f32 %v961, %v938
        %v963 = vrot.slane %v962, 4
        %v964 = vadd.f32 %v962, %v963
        %v965 = vrot.slane %v964, 2
        %v966 = vadd.f32 %v964, %v965
        %v967 = vrot.slane %v966, 1
        %v968 = vadd.f32 %v966, %v967
        %v969 = vadd.f32 %v968, 0.0
        %s970 = scalar_lea.vmem %s558, 100 [#allocation2]
        %v971 = vld [vmem:[%s970] sm:$0xf]
        %v972 = vld [vmem:[%s970 + $0x4] sm:$0xf]
        %v973 = vld [vmem:[%s970 + $0x8] sm:$0xf]
        %v974 = vld [vmem:[%s970 + $0xc] sm:$0xf]
        %v975 = vld [vmem:[%s970 + $0x10] sm:$0xf]
        %v976 = vld [vmem:[%s970 + $0x14] sm:$0xf]
        %v977 = vld [vmem:[%s970 + $0x18] sm:$0xf]
        %v978 = vld [vmem:[%s970 + $0x1c] sm:$0xf]
        %v979 = vld [vmem:[%s970 + $0x20] sm:$0xf]
        %v980 = vld [vmem:[%s970 + $0x24] sm:$0xf]
        %v981 = vld [vmem:[%s970 + $0x28] sm:$0xf]
        %v982 = vld [vmem:[%s970 + $0x2c] sm:$0xf]
        %v983 = vld [vmem:[%s970 + $0x30] sm:$0xf]
        %v984 = vld [vmem:[%s970 + $0x34] sm:$0xf]
        %v985 = vld [vmem:[%s970 + $0x38] sm:$0xf]
        %v986 = vld [vmem:[%s970 + $0x3c] sm:$0xf]
        %v987 = vld [vmem:[%s970 + $0x40] sm:$0xf]
        %v988 = vld [vmem:[%s970 + $0x44] sm:$0xf]
        %v989 = vld [vmem:[%s970 + $0x48] sm:$0xf]
        %v990 = vld [vmem:[%s970 + $0x4c] sm:$0xf]
        %v991 = vld [vmem:[%s970 + $0x50] sm:$0xf]
        %v992 = vld [vmem:[%s970 + $0x54] sm:$0xf]
        %v993 = vld [vmem:[%s970 + $0x58] sm:$0xf]
        %v994 = vld [vmem:[%s970 + $0x5c] sm:$0xf]
        %v995 = vld [vmem:[%s970 + $0x60] sm:$0xf]
        %v1021 = vunpack.c.l.b16 %v971
        %v1022 = vunpack.c.l.b16 %v972
        %v1023 = vunpack.c.l.b16 %v973
        %v1024 = vunpack.c.l.b16 %v974
        %v1025 = vunpack.c.l.b16 %v975
        %v1026 = vunpack.c.l.b16 %v976
        %v1027 = vunpack.c.l.b16 %v977
        %v1028 = vunpack.c.l.b16 %v978
        %v1029 = vunpack.c.l.b16 %v979
        %v1030 = vunpack.c.l.b16 %v980
        %v1031 = vunpack.c.l.b16 %v981
        %v1032 = vunpack.c.l.b16 %v982
        %v1033 = vunpack.c.l.b16 %v983
        %v1034 = vunpack.c.l.b16 %v984
        %v1035 = vunpack.c.l.b16 %v985
        %v1036 = vunpack.c.l.b16 %v986
        %v1037 = vunpack.c.l.b16 %v987
        %v1038 = vunpack.c.l.b16 %v988
        %v1039 = vunpack.c.l.b16 %v989
        %v1040 = vunpack.c.l.b16 %v990
        %v1041 = vunpack.c.l.b16 %v991
        %v1042 = vunpack.c.l.b16 %v992
        %v1043 = vunpack.c.l.b16 %v993
        %v1044 = vunpack.c.l.b16 %v994
        %v1045 = vunpack.c.l.b16 %v995
        %v1046 = vpack.c.b16 %v1022, %v1021
        %v1047 = vpack.c.b16 %v1024, %v1023
        %v1048 = vpack.c.b16 %v1026, %v1025
        %v1049 = vpack.c.b16 %v1028, %v1027
        %v1050 = vpack.c.b16 %v1030, %v1029
        %v1051 = vpack.c.b16 %v1032, %v1031
        %v1052 = vpack.c.b16 %v1034, %v1033
        %v1053 = vpack.c.b16 %v1036, %v1035
        %v1054 = vpack.c.b16 %v1038, %v1037
        %v1055 = vpack.c.b16 %v1040, %v1039
        %v1056 = vpack.c.b16 %v1042, %v1041
        %v1057 = vpack.c.b16 %v1044, %v1043
        %v1058 = vpack.c.b16 %v1045, %v1045
        %1072 = vmatprep.subr.bf16.mxu0 0
        %1073 = vmatpush1.bf16.msra.mxu0 %v731
        %1074 = vmatprep.subr.bf16.mxu0 0
        %1075 = vmatpush1.bf16.msra.mxu0 %v732
        %1076 = vmatprep.subr.bf16.mxu0 0
        %1077 = vmatpush1.bf16.msra.mxu0 %v733
        %1078 = vmatprep.subr.bf16.mxu0 0
        %1079 = vmatpush1.bf16.msra.mxu0 %v734
        %1080 = vmatprep.subr.bf16.mxu0 0
        %1081 = vmatpush1.bf16.msra.mxu0 %v735
        %1082 = vmatprep.subr.bf16.mxu0 0
        %1083 = vmatpush1.bf16.msra.mxu0 %v736
        %1084 = vmatprep.subr.bf16.mxu0 0
        %1085 = vmatpush1.bf16.msra.mxu0 %v737
        %1086 = vmatprep.subr.bf16.mxu0 0
        %1087 = vmatpush1.bf16.msra.mxu0 %v738
        %1088 = vmatprep.subr.bf16.mxu0 0
        %1089 = vmatpush1.bf16.msra.mxu0 0
        %1090 = vmatprep.subr.bf16.mxu0 0
        %1091 = vmatpush1.bf16.msra.mxu0 0
        %1092 = vmatprep.subr.bf16.mxu0 0
        %1093 = vmatpush1.bf16.msra.mxu0 0
        %1094 = vmatprep.subr.bf16.mxu0 0
        %1095 = vmatpush1.bf16.msra.mxu0 0
        %1096 = vmatprep.subr.bf16.mxu0 0
        %1097 = vmatpush1.bf16.msra.mxu0 0
        %1098 = vmatprep.subr.bf16.mxu0 0
        %1099 = vmatpush1.bf16.msra.mxu0 0
        %1100 = vmatprep.subr.bf16.mxu0 0
        %1101 = vmatpush1.bf16.msra.mxu0 0
        %1102 = vmatprep.subr.bf16.mxu0 0
        %1103 = vmatpush1.bf16.msra.mxu0 0
        %1104 = vmatprep.mubr.bf16.mxu0 0
        %1105 = vmatmul.mubr.bf16.gmra.mrb[0].mxu0 %v1046
        %v1106 = vpop.f32.mrb[0].mxu0
        %v1107 = vadd.f32 0.0, %v1106
        %v1108 = vpop.f32.mrb[0].mxu0
        %v1109 = vpop.f32.mrb[0].mxu0
        %v1110 = vadd.f32 0.0, %v1109
        %v1111 = vpop.f32.mrb[0].mxu0
        %1112 = vmatprep.mubr.bf16.mxu0 0
        %1113 = vmatmul.mubr.bf16.gmra.mrb[0].mxu0 %v1047
        %v1114 = vpop.f32.mrb[0].mxu0
        %v1115 = vadd.f32 0.0, %v1114
        %v1116 = vpop.f32.mrb[0].mxu0
        %v1117 = vpop.f32.mrb[0].mxu0
        %v1118 = vadd.f32 0.0, %v1117
        %v1119 = vpop.f32.mrb[0].mxu0
        %1120 = vmatprep.mubr.bf16.mxu0 0
        %1121 = vmatmul.mubr.bf16.gmra.mrb[0].mxu0 %v1048
        %v1122 = vpop.f32.mrb[0].mxu0
        %v1123 = vadd.f32 0.0, %v1122
        %v1124 = vpop.f32.mrb[0].mxu0
        %v1125 = vpop.f32.mrb[0].mxu0
        %v1126 = vadd.f32 0.0, %v1125
        %v1127 = vpop.f32.mrb[0].mxu0
        %1128 = vmatprep.mubr.bf16.mxu0 0
        %1129 = vmatmul.mubr.bf16.gmra.mrb[0].mxu0 %v1049
        %v1130 = vpop.f32.mrb[0].mxu0
        %v1131 = vadd.f32 0.0, %v1130
        %v1132 = vpop.f32.mrb[0].mxu0
        %v1133 = vpop.f32.mrb[0].mxu0
        %v1134 = vadd.f32 0.0, %v1133
        %v1135 = vpop.f32.mrb[0].mxu0
        %1136 = vmatprep.mubr.bf16.mxu0 0
        %1137 = vmatmul.mubr.bf16.gmra.mrb[0].mxu0 %v1050
        %v1138 = vpop.f32.mrb[0].mxu0
        %v1139 = vadd.f32 0.0, %v1138
        %v1140 = vpop.f32.mrb[0].mxu0
        %v1141 = vpop.f32.mrb[0].mxu0
        %v1142 = vadd.f32 0.0, %v1141
        %v1143 = vpop.f32.mrb[0].mxu0
        %1144 = vmatprep.mubr.bf16.mxu0 0
        %1145 = vmatmul.mubr.bf16.gmra.mrb[0].mxu0 %v1051
        %v1146 = vpop.f32.mrb[0].mxu0
        %v1147 = vadd.f32 0.0, %v1146
        %v1148 = vpop.f32.mrb[0].mxu0
        %v1149 = vpop.f32.mrb[0].mxu0
        %v1150 = vadd.f32 0.0, %v1149
        %v1151 = vpop.f32.mrb[0].mxu0
        %1152 = vmatprep.mubr.bf16.mxu0 0
        %1153 = vmatmul.mubr.bf16.gmra.mrb[0].mxu0 %v1052
        %v1154 = vpop.f32.mrb[0].mxu0
        %v1155 = vadd.f32 0.0, %v1154
        %v1156 = vpop.f32.mrb[0].mxu0
        %v1157 = vpop.f32.mrb[0].mxu0
        %v1158 = vadd.f32 0.0, %v1157
        %v1159 = vpop.f32.mrb[0].mxu0
        %1160 = vmatprep.mubr.bf16.mxu0 0
        %1161 = vmatmul.mubr.bf16.gmra.mrb[0].mxu0 %v1053
        %v1162 = vpop.f32.mrb[0].mxu0
        %v1163 = vadd.f32 0.0, %v1162
        %v1164 = vpop.f32.mrb[0].mxu0
        %v1165 = vpop.f32.mrb[0].mxu0
        %v1166 = vadd.f32 0.0, %v1165
        %v1167 = vpop.f32.mrb[0].mxu0
        %1168 = vmatprep.mubr.bf16.mxu0 0
        %1169 = vmatmul.mubr.bf16.gmra.mrb[0].mxu0 %v1054
        %v1170 = vpop.f32.mrb[0].mxu0
        %v1171 = vadd.f32 0.0, %v1170
        %v1172 = vpop.f32.mrb[0].mxu0
        %v1173 = vpop.f32.mrb[0].mxu0
        %v1174 = vadd.f32 0.0, %v1173
        %v1175 = vpop.f32.mrb[0].mxu0
        %1176 = vmatprep.mubr.bf16.mxu0 0
        %1177 = vmatmul.mubr.bf16.gmra.mrb[0].mxu0 %v1055
        %v1178 = vpop.f32.mrb[0].mxu0
        %v1179 = vadd.f32 0.0, %v1178
        %v1180 = vpop.f32.mrb[0].mxu0
        %v1181 = vpop.f32.mrb[0].mxu0
        %v1182 = vadd.f32 0.0, %v1181
        %v1183 = vpop.f32.mrb[0].mxu0
        %1184 = vmatprep.mubr.bf16.mxu0 0
        %1185 = vmatmul.mubr.bf16.gmra.mrb[0].mxu0 %v1056
        %v1186 = vpop.f32.mrb[0].mxu0
        %v1187 = vadd.f32 0.0, %v1186
        %v1188 = vpop.f32.mrb[0].mxu0
        %v1189 = vpop.f32.mrb[0].mxu0
        %v1190 = vadd.f32 0.0, %v1189
        %v1191 = vpop.f32.mrb[0].mxu0
        %1192 = vmatprep.mubr.bf16.mxu0 0
        %1193 = vmatmul.mubr.bf16.gmra.mrb[0].mxu0 %v1057
        %v1194 = vpop.f32.mrb[0].mxu0
        %v1195 = vadd.f32 0.0, %v1194
        %v1196 = vpop.f32.mrb[0].mxu0
        %v1197 = vpop.f32.mrb[0].mxu0
        %v1198 = vadd.f32 0.0, %v1197
        %v1199 = vpop.f32.mrb[0].mxu0
        %1200 = vmatprep.mubr.bf16.mxu0 0
        %1201 = vmatmul.mubr.bf16.gmra.mrb[0].mxu0 %v1058
        %v1202 = vpop.f32.mrb[0].mxu0
        %v1203 = vadd.f32 0.0, %v1202
        %v1204 = vpop.f32.mrb[0].mxu0
        %v1205 = vpop.f32.mrb[0].mxu0
        %v1206 = vpop.f32.mrb[0].mxu0
        %1207 = vdwg.mxu0
        %v1208 = vadd.f32 %v1107, %v1110
        %v1209 = vadd.f32 %v1208, %v1115
        %v1210 = vadd.f32 %v1209, %v1118
        %v1211 = vadd.f32 %v1210, %v1123
        %v1212 = vadd.f32 %v1211, %v1126
        %v1213 = vadd.f32 %v1212, %v1131
        %v1214 = vadd.f32 %v1213, %v1134
        %v1215 = vadd.f32 %v1214, %v1139
        %v1216 = vadd.f32 %v1215, %v1142
        %v1217 = vadd.f32 %v1216, %v1147
        %v1218 = vadd.f32 %v1217, %v1150
        %v1219 = vadd.f32 %v1218, %v1155
        %v1220 = vadd.f32 %v1219, %v1158
        %v1221 = vadd.f32 %v1220, %v1163
        %v1222 = vadd.f32 %v1221, %v1166
        %v1223 = vadd.f32 %v1222, %v1171
        %v1224 = vadd.f32 %v1223, %v1174
        %v1225 = vadd.f32 %v1224, %v1179
        %v1226 = vadd.f32 %v1225, %v1182
        %v1227 = vadd.f32 %v1226, %v1187
        %v1228 = vadd.f32 %v1227, %v1190
        %v1229 = vadd.f32 %v1228, %v1195
        %v1230 = vadd.f32 %v1229, %v1198
        %v1231 = vadd.f32 %v1230, %v1203
        %v1232 = vrot.slane %v1231, 4
        %v1233 = vadd.f32 %v1231, %v1232
        %v1234 = vrot.slane %v1233, 2
        %v1235 = vadd.f32 %v1233, %v1234
        %v1236 = vrot.slane %v1235, 1
        %v1237 = vadd.f32 %v1235, %v1236
        %v1238 = vadd.f32 %v913, %v1237
        %v1239 = vmul.f32 %v1107, %v1107
        %v1240 = vmul.f32 %v1110, %v1110
        %v1241 = vmul.f32 %v1115, %v1115
        %v1242 = vmul.f32 %v1118, %v1118
        %v1243 = vmul.f32 %v1123, %v1123
        %v1244 = vmul.f32 %v1126, %v1126
        %v1245 = vmul.f32 %v1131, %v1131
        %v1246 = vmul.f32 %v1134, %v1134
        %v1247 = vmul.f32 %v1139, %v1139
        %v1248 = vmul.f32 %v1142, %v1142
        %v1249 = vmul.f32 %v1147, %v1147
        %v1250 = vmul.f32 %v1150, %v1150
        %v1251 = vmul.f32 %v1155, %v1155
        %v1252 = vmul.f32 %v1158, %v1158
        %v1253 = vmul.f32 %v1163, %v1163
        %v1254 = vmul.f32 %v1166, %v1166
        %v1255 = vmul.f32 %v1171, %v1171
        %v1256 = vmul.f32 %v1174, %v1174
        %v1257 = vmul.f32 %v1179, %v1179
        %v1258 = vmul.f32 %v1182, %v1182
        %v1259 = vmul.f32 %v1187, %v1187
        %v1260 = vmul.f32 %v1190, %v1190
        %v1261 = vmul.f32 %v1195, %v1195
        %v1262 = vmul.f32 %v1198, %v1198
        %v1263 = vmul.f32 %v1203, %v1203
        %v1264 = vadd.f32 %v1239, %v1240
        %v1265 = vadd.f32 %v1264, %v1241
        %v1266 = vadd.f32 %v1265, %v1242
        %v1267 = vadd.f32 %v1266, %v1243
        %v1268 = vadd.f32 %v1267, %v1244
        %v1269 = vadd.f32 %v1268, %v1245
        %v1270 = vadd.f32 %v1269, %v1246
        %v1271 = vadd.f32 %v1270, %v1247
        %v1272 = vadd.f32 %v1271, %v1248
        %v1273 = vadd.f32 %v1272, %v1249
        %v1274 = vadd.f32 %v1273, %v1250
        %v1275 = vadd.f32 %v1274, %v1251
        %v1276 = vadd.f32 %v1275, %v1252
        %v1277 = vadd.f32 %v1276, %v1253
        %v1278 = vadd.f32 %v1277, %v1254
        %v1279 = vadd.f32 %v1278, %v1255
        %v1280 = vadd.f32 %v1279, %v1256
        %v1281 = vadd.f32 %v1280, %v1257
        %v1282 = vadd.f32 %v1281, %v1258
        %v1283 = vadd.f32 %v1282, %v1259
        %v1284 = vadd.f32 %v1283, %v1260
        %v1285 = vadd.f32 %v1284, %v1261
        %v1286 = vadd.f32 %v1285, %v1262
        %v1287 = vadd.f32 %v1286, %v1263
        %v1288 = vrot.slane %v1287, 4
        %v1289 = vadd.f32 %v1287, %v1288
        %v1290 = vrot.slane %v1289, 2
        %v1291 = vadd.f32 %v1289, %v1290
        %v1292 = vrot.slane %v1291, 1
        %v1293 = vadd.f32 %v1291, %v1292
        %v1294 = vadd.f32 %v969, %v1293
        %s1295 = scalar_lea.vmem %s558, 200 [#allocation2]
        %v1296 = vld [vmem:[%s1295] sm:$0xf]
        %v1297 = vld [vmem:[%s1295 + $0x4] sm:$0xf]
        %v1298 = vld [vmem:[%s1295 + $0x8] sm:$0xf]
        %v1299 = vld [vmem:[%s1295 + $0xc] sm:$0xf]
        %v1300 = vld [vmem:[%s1295 + $0x10] sm:$0xf]
        %v1301 = vld [vmem:[%s1295 + $0x14] sm:$0xf]
        %v1302 = vld [vmem:[%s1295 + $0x18] sm:$0xf]
        %v1303 = vld [vmem:[%s1295 + $0x1c] sm:$0xf]
        %v1304 = vld [vmem:[%s1295 + $0x20] sm:$0xf]
        %v1305 = vld [vmem:[%s1295 + $0x24] sm:$0xf]
        %v1306 = vld [vmem:[%s1295 + $0x28] sm:$0xf]
        %v1307 = vld [vmem:[%s1295 + $0x2c] sm:$0xf]
        %v1308 = vld [vmem:[%s1295 + $0x30] sm:$0xf]
        %v1309 = vld [vmem:[%s1295 + $0x34] sm:$0xf]
        %v1310 = vld [vmem:[%s1295 + $0x38] sm:$0xf]
        %v1311 = vld [vmem:[%s1295 + $0x3c] sm:$0xf]
        %v1312 = vld [vmem:[%s1295 + $0x40] sm:$0xf]
        %v1313 = vld [vmem:[%s1295 + $0x44] sm:$0xf]
        %v1314 = vld [vmem:[%s1295 + $0x48] sm:$0xf]
        %v1315 = vld [vmem:[%s1295 + $0x4c] sm:$0xf]
        %v1316 = vld [vmem:[%s1295 + $0x50] sm:$0xf]
        %v1317 = vld [vmem:[%s1295 + $0x54] sm:$0xf]
        %v1318 = vld [vmem:[%s1295 + $0x58] sm:$0xf]
        %v1319 = vld [vmem:[%s1295 + $0x5c] sm:$0xf]
        %v1320 = vld [vmem:[%s1295 + $0x60] sm:$0xf]
        %v1346 = vunpack.c.l.b16 %v1296
        %v1347 = vunpack.c.l.b16 %v1297
        %v1348 = vunpack.c.l.b16 %v1298
        %v1349 = vunpack.c.l.b16 %v1299
        %v1350 = vunpack.c.l.b16 %v1300
        %v1351 = vunpack.c.l.b16 %v1301
        %v1352 = vunpack.c.l.b16 %v1302
        %v1353 = vunpack.c.l.b16 %v1303
        %v1354 = vunpack.c.l.b16 %v1304
        %v1355 = vunpack.c.l.b16 %v1305
        %v1356 = vunpack.c.l.b16 %v1306
        %v1357 = vunpack.c.l.b16 %v1307
        %v1358 = vunpack.c.l.b16 %v1308
        %v1359 = vunpack.c.l.b16 %v1309
        %v1360 = vunpack.c.l.b16 %v1310
        %v1361 = vunpack.c.l.b16 %v1311
        %v1362 = vunpack.c.l.b16 %v1312
        %v1363 = vunpack.c.l.b16 %v1313
        %v1364 = vunpack.c.l.b16 %v1314
        %v1365 = vunpack.c.l.b16 %v1315
        %v1366 = vunpack.c.l.b16 %v1316
        %v1367 = vunpack.c.l.b16 %v1317
        %v1368 = vunpack.c.l.b16 %v1318
        %v1369 = vunpack.c.l.b16 %v1319
        %v1370 = vunpack.c.l.b16 %v1320
        %v1371 = vpack.c.b16 %v1347, %v1346
        %v1372 = vpack.c.b16 %v1349, %v1348
        %v1373 = vpack.c.b16 %v1351, %v1350
        %v1374 = vpack.c.b16 %v1353, %v1352
        %v1375 = vpack.c.b16 %v1355, %v1354
        %v1376 = vpack.c.b16 %v1357, %v1356
        %v1377 = vpack.c.b16 %v1359, %v1358
        %v1378 = vpack.c.b16 %v1361, %v1360
        %v1379 = vpack.c.b16 %v1363, %v1362
        %v1380 = vpack.c.b16 %v1365, %v1364
        %v1381 = vpack.c.b16 %v1367, %v1366
        %v1382 = vpack.c.b16 %v1369, %v1368
        %v1383 = vpack.c.b16 %v1370, %v1370
        %1397 = vmatprep.subr.bf16.mxu0 0
        %1398 = vmatpush1.bf16.msra.mxu0 %v731
        %1399 = vmatprep.subr.bf16.mxu0 0
        %1400 = vmatpush1.bf16.msra.mxu0 %v732
        %1401 = vmatprep.subr.bf16.mxu0 0
        %1402 = vmatpush1.bf16.msra.mxu0 %v733
        %1403 = vmatprep.subr.bf16.mxu0 0
        %1404 = vmatpush1.bf16.msra.mxu0 %v734
        %1405 = vmatprep.subr.bf16.mxu0 0
        %1406 = vmatpush1.bf16.msra.mxu0 %v735
        %1407 = vmatprep.subr.bf16.mxu0 0
        %1408 = vmatpush1.bf16.msra.mxu0 %v736
        %1409 = vmatprep.subr.bf16.mxu0 0
        %1410 = vmatpush1.bf16.msra.mxu0 %v737
        %1411 = vmatprep.subr.bf16.mxu0 0
        %1412 = vmatpush1.bf16.msra.mxu0 %v738
        %1413 = vmatprep.subr.bf16.mxu0 0
        %1414 = vmatpush1.bf16.msra.mxu0 0
        %1415 = vmatprep.subr.bf16.mxu0 0
        %1416 = vmatpush1.bf16.msra.mxu0 0
        %1417 = vmatprep.subr.bf16.mxu0 0
        %1418 = vmatpush1.bf16.msra.mxu0 0
        %1419 = vmatprep.subr.bf16.mxu0 0
        %1420 = vmatpush1.bf16.msra.mxu0 0
        %1421 = vmatprep.subr.bf16.mxu0 0
        %1422 = vmatpush1.bf16.msra.mxu0 0
        %1423 = vmatprep.subr.bf16.mxu0 0
        %1424 = vmatpush1.bf16.msra.mxu0 0
        %1425 = vmatprep.subr.bf16.mxu0 0
        %1426 = vmatpush1.bf16.msra.mxu0 0
        %1427 = vmatprep.subr.bf16.mxu0 0
        %1428 = vmatpush1.bf16.msra.mxu0 0
        %1429 = vmatprep.mubr.bf16.mxu0 0
        %1430 = vmatmul.mubr.bf16.gmra.mrb[0].mxu0 %v1371
        %v1431 = vpop.f32.mrb[0].mxu0
        %v1432 = vadd.f32 0.0, %v1431
        %v1433 = vpop.f32.mrb[0].mxu0
        %v1434 = vpop.f32.mrb[0].mxu0
        %v1435 = vadd.f32 0.0, %v1434
        %v1436 = vpop.f32.mrb[0].mxu0
        %1437 = vmatprep.mubr.bf16.mxu0 0
        %1438 = vmatmul.mubr.bf16.gmra.mrb[0].mxu0 %v1372
        %v1439 = vpop.f32.mrb[0].mxu0
        %v1440 = vadd.f32 0.0, %v1439
        %v1441 = vpop.f32.mrb[0].mxu0
        %v1442 = vpop.f32.mrb[0].mxu0
        %v1443 = vadd.f32 0.0, %v1442
        %v1444 = vpop.f32.mrb[0].mxu0
        %1445 = vmatprep.mubr.bf16.mxu0 0
        %1446 = vmatmul.mubr.bf16.gmra.mrb[0].mxu0 %v1373
        %v1447 = vpop.f32.mrb[0].mxu0
        %v1448 = vadd.f32 0.0, %v1447
        %v1449 = vpop.f32.mrb[0].mxu0
        %v1450 = vpop.f32.mrb[0].mxu0
        %v1451 = vadd.f32 0.0, %v1450
        %v1452 = vpop.f32.mrb[0].mxu0
        %1453 = vmatprep.mubr.bf16.mxu0 0
        %1454 = vmatmul.mubr.bf16.gmra.mrb[0].mxu0 %v1374
        %v1455 = vpop.f32.mrb[0].mxu0
        %v1456 = vadd.f32 0.0, %v1455
        %v1457 = vpop.f32.mrb[0].mxu0
        %v1458 = vpop.f32.mrb[0].mxu0
        %v1459 = vadd.f32 0.0, %v1458
        %v1460 = vpop.f32.mrb[0].mxu0
        %1461 = vmatprep.mubr.bf16.mxu0 0
        %1462 = vmatmul.mubr.bf16.gmra.mrb[0].mxu0 %v1375
        %v1463 = vpop.f32.mrb[0].mxu0
        %v1464 = vadd.f32 0.0, %v1463
        %v1465 = vpop.f32.mrb[0].mxu0
        %v1466 = vpop.f32.mrb[0].mxu0
        %v1467 = vadd.f32 0.0, %v1466
        %v1468 = vpop.f32.mrb[0].mxu0
        %1469 = vmatprep.mubr.bf16.mxu0 0
        %1470 = vmatmul.mubr.bf16.gmra.mrb[0].mxu0 %v1376
        %v1471 = vpop.f32.mrb[0].mxu0
        %v1472 = vadd.f32 0.0, %v1471
        %v1473 = vpop.f32.mrb[0].mxu0
        %v1474 = vpop.f32.mrb[0].mxu0
        %v1475 = vadd.f32 0.0, %v1474
        %v1476 = vpop.f32.mrb[0].mxu0
        %1477 = vmatprep.mubr.bf16.mxu0 0
        %1478 = vmatmul.mubr.bf16.gmra.mrb[0].mxu0 %v1377
        %v1479 = vpop.f32.mrb[0].mxu0
        %v1480 = vadd.f32 0.0, %v1479
        %v1481 = vpop.f32.mrb[0].mxu0
        %v1482 = vpop.f32.mrb[0].mxu0
        %v1483 = vadd.f32 0.0, %v1482
        %v1484 = vpop.f32.mrb[0].mxu0
        %1485 = vmatprep.mubr.bf16.mxu0 0
        %1486 = vmatmul.mubr.bf16.gmra.mrb[0].mxu0 %v1378
        %v1487 = vpop.f32.mrb[0].mxu0
        %v1488 = vadd.f32 0.0, %v1487
        %v1489 = vpop.f32.mrb[0].mxu0
        %v1490 = vpop.f32.mrb[0].mxu0
        %v1491 = vadd.f32 0.0, %v1490
        %v1492 = vpop.f32.mrb[0].mxu0
        %1493 = vmatprep.mubr.bf16.mxu0 0
        %1494 = vmatmul.mubr.bf16.gmra.mrb[0].mxu0 %v1379
        %v1495 = vpop.f32.mrb[0].mxu0
        %v1496 = vadd.f32 0.0, %v1495
        %v1497 = vpop.f32.mrb[0].mxu0
        %v1498 = vpop.f32.mrb[0].mxu0
        %v1499 = vadd.f32 0.0, %v1498
        %v1500 = vpop.f32.mrb[0].mxu0
        %1501 = vmatprep.mubr.bf16.mxu0 0
        %1502 = vmatmul.mubr.bf16.gmra.mrb[0].mxu0 %v1380
        %v1503 = vpop.f32.mrb[0].mxu0
        %v1504 = vadd.f32 0.0, %v1503
        %v1505 = vpop.f32.mrb[0].mxu0
        %v1506 = vpop.f32.mrb[0].mxu0
        %v1507 = vadd.f32 0.0, %v1506
        %v1508 = vpop.f32.mrb[0].mxu0
        %1509 = vmatprep.mubr.bf16.mxu0 0
        %1510 = vmatmul.mubr.bf16.gmra.mrb[0].mxu0 %v1381
        %v1511 = vpop.f32.mrb[0].mxu0
        %v1512 = vadd.f32 0.0, %v1511
        %v1513 = vpop.f32.mrb[0].mxu0
        %v1514 = vpop.f32.mrb[0].mxu0
        %v1515 = vadd.f32 0.0, %v1514
        %v1516 = vpop.f32.mrb[0].mxu0
        %1517 = vmatprep.mubr.bf16.mxu0 0
        %1518 = vmatmul.mubr.bf16.gmra.mrb[0].mxu0 %v1382
        %v1519 = vpop.f32.mrb[0].mxu0
        %v1520 = vadd.f32 0.0, %v1519
        %v1521 = vpop.f32.mrb[0].mxu0
        %v1522 = vpop.f32.mrb[0].mxu0
        %v1523 = vadd.f32 0.0, %v1522
        %v1524 = vpop.f32.mrb[0].mxu0
        %1525 = vmatprep.mubr.bf16.mxu0 0
        %1526 = vmatmul.mubr.bf16.gmra.mrb[0].mxu0 %v1383
        %v1527 = vpop.f32.mrb[0].mxu0
        %v1528 = vadd.f32 0.0, %v1527
        %v1529 = vpop.f32.mrb[0].mxu0
        %v1530 = vpop.f32.mrb[0].mxu0
        %v1531 = vpop.f32.mrb[0].mxu0
        %1532 = vdwg.mxu0
        %v1533 = vadd.f32 %v1432, %v1435
        %v1534 = vadd.f32 %v1533, %v1440
        %v1535 = vadd.f32 %v1534, %v1443
        %v1536 = vadd.f32 %v1535, %v1448
        %v1537 = vadd.f32 %v1536, %v1451
        %v1538 = vadd.f32 %v1537, %v1456
        %v1539 = vadd.f32 %v1538, %v1459
        %v1540 = vadd.f32 %v1539, %v1464
        %v1541 = vadd.f32 %v1540, %v1467
        %v1542 = vadd.f32 %v1541, %v1472
        %v1543 = vadd.f32 %v1542, %v1475
        %v1544 = vadd.f32 %v1543, %v1480
        %v1545 = vadd.f32 %v1544, %v1483
        %v1546 = vadd.f32 %v1545, %v1488
        %v1547 = vadd.f32 %v1546, %v1491
        %v1548 = vadd.f32 %v1547, %v1496
        %v1549 = vadd.f32 %v1548, %v1499
        %v1550 = vadd.f32 %v1549, %v1504
        %v1551 = vadd.f32 %v1550, %v1507
        %v1552 = vadd.f32 %v1551, %v1512
        %v1553 = vadd.f32 %v1552, %v1515
        %v1554 = vadd.f32 %v1553, %v1520
        %v1555 = vadd.f32 %v1554, %v1523
        %v1556 = vadd.f32 %v1555, %v1528
        %v1557 = vrot.slane %v1556, 4
        %v1558 = vadd.f32 %v1556, %v1557
        %v1559 = vrot.slane %v1558, 2
        %v1560 = vadd.f32 %v1558, %v1559
        %v1561 = vrot.slane %v1560, 1
        %v1562 = vadd.f32 %v1560, %v1561
        %v1563 = vadd.f32 %v1238, %v1562
        %v1564 = vmul.f32 %v1432, %v1432
        %v1565 = vmul.f32 %v1435, %v1435
        %v1566 = vmul.f32 %v1440, %v1440
        %v1567 = vmul.f32 %v1443, %v1443
        %v1568 = vmul.f32 %v1448, %v1448
        %v1569 = vmul.f32 %v1451, %v1451
        %v1570 = vmul.f32 %v1456, %v1456
        %v1571 = vmul.f32 %v1459, %v1459
        %v1572 = vmul.f32 %v1464, %v1464
        %v1573 = vmul.f32 %v1467, %v1467
        %v1574 = vmul.f32 %v1472, %v1472
        %v1575 = vmul.f32 %v1475, %v1475
        %v1576 = vmul.f32 %v1480, %v1480
        %v1577 = vmul.f32 %v1483, %v1483
        %v1578 = vmul.f32 %v1488, %v1488
        %v1579 = vmul.f32 %v1491, %v1491
        %v1580 = vmul.f32 %v1496, %v1496
        %v1581 = vmul.f32 %v1499, %v1499
        %v1582 = vmul.f32 %v1504, %v1504
        %v1583 = vmul.f32 %v1507, %v1507
        %v1584 = vmul.f32 %v1512, %v1512
        %v1585 = vmul.f32 %v1515, %v1515
        %v1586 = vmul.f32 %v1520, %v1520
        %v1587 = vmul.f32 %v1523, %v1523
        %v1588 = vmul.f32 %v1528, %v1528
        %v1589 = vadd.f32 %v1564, %v1565
        %v1590 = vadd.f32 %v1589, %v1566
        %v1591 = vadd.f32 %v1590, %v1567
        %v1592 = vadd.f32 %v1591, %v1568
        %v1593 = vadd.f32 %v1592, %v1569
        %v1594 = vadd.f32 %v1593, %v1570
        %v1595 = vadd.f32 %v1594, %v1571
        %v1596 = vadd.f32 %v1595, %v1572
        %v1597 = vadd.f32 %v1596, %v1573
        %v1598 = vadd.f32 %v1597, %v1574
        %v1599 = vadd.f32 %v1598, %v1575
        %v1600 = vadd.f32 %v1599, %v1576
        %v1601 = vadd.f32 %v1600, %v1577
        %v1602 = vadd.f32 %v1601, %v1578
        %v1603 = vadd.f32 %v1602, %v1579
        %v1604 = vadd.f32 %v1603, %v1580
        %v1605 = vadd.f32 %v1604, %v1581
        %v1606 = vadd.f32 %v1605, %v1582
        %v1607 = vadd.f32 %v1606, %v1583
        %v1608 = vadd.f32 %v1607, %v1584
        %v1609 = vadd.f32 %v1608, %v1585
        %v1610 = vadd.f32 %v1609, %v1586
        %v1611 = vadd.f32 %v1610, %v1587
        %v1612 = vadd.f32 %v1611, %v1588
        %v1613 = vrot.slane %v1612, 4
        %v1614 = vadd.f32 %v1612, %v1613
        %v1615 = vrot.slane %v1614, 2
        %v1616 = vadd.f32 %v1614, %v1615
        %v1617 = vrot.slane %v1616, 1
        %v1618 = vadd.f32 %v1616, %v1617
        %v1619 = vadd.f32 %v1294, %v1618
        %s1620 = scalar_lea.vmem %s558, 300 [#allocation2]
        %v1621 = vld [vmem:[%s1620] sm:$0xf]
        %v1622 = vld [vmem:[%s1620 + $0x4] sm:$0xf]
        %v1623 = vld [vmem:[%s1620 + $0x8] sm:$0xf]
        %v1624 = vld [vmem:[%s1620 + $0xc] sm:$0xf]
        %v1625 = vld [vmem:[%s1620 + $0x10] sm:$0xf]
        %v1626 = vld [vmem:[%s1620 + $0x14] sm:$0xf]
        %v1627 = vld [vmem:[%s1620 + $0x18] sm:$0xf]
        %v1628 = vld [vmem:[%s1620 + $0x1c] sm:$0xf]
        %v1629 = vld [vmem:[%s1620 + $0x20] sm:$0xf]
        %v1630 = vld [vmem:[%s1620 + $0x24] sm:$0xf]
        %v1631 = vld [vmem:[%s1620 + $0x28] sm:$0xf]
        %v1632 = vld [vmem:[%s1620 + $0x2c] sm:$0xf]
        %v1633 = vld [vmem:[%s1620 + $0x30] sm:$0xf]
        %v1634 = vld [vmem:[%s1620 + $0x34] sm:$0xf]
        %v1635 = vld [vmem:[%s1620 + $0x38] sm:$0xf]
        %v1636 = vld [vmem:[%s1620 + $0x3c] sm:$0xf]
        %v1637 = vld [vmem:[%s1620 + $0x40] sm:$0xf]
        %v1638 = vld [vmem:[%s1620 + $0x44] sm:$0xf]
        %v1639 = vld [vmem:[%s1620 + $0x48] sm:$0xf]
        %v1640 = vld [vmem:[%s1620 + $0x4c] sm:$0xf]
        %v1641 = vld [vmem:[%s1620 + $0x50] sm:$0xf]
        %v1642 = vld [vmem:[%s1620 + $0x54] sm:$0xf]
        %v1643 = vld [vmem:[%s1620 + $0x58] sm:$0xf]
        %v1644 = vld [vmem:[%s1620 + $0x5c] sm:$0xf]
        %v1645 = vld [vmem:[%s1620 + $0x60] sm:$0xf]
        %v1671 = vunpack.c.l.b16 %v1621
        %v1672 = vunpack.c.l.b16 %v1622
        %v1673 = vunpack.c.l.b16 %v1623
        %v1674 = vunpack.c.l.b16 %v1624
        %v1675 = vunpack.c.l.b16 %v1625
        %v1676 = vunpack.c.l.b16 %v1626
        %v1677 = vunpack.c.l.b16 %v1627
        %v1678 = vunpack.c.l.b16 %v1628
        %v1679 = vunpack.c.l.b16 %v1629
        %v1680 = vunpack.c.l.b16 %v1630
        %v1681 = vunpack.c.l.b16 %v1631
        %v1682 = vunpack.c.l.b16 %v1632
        %v1683 = vunpack.c.l.b16 %v1633
        %v1684 = vunpack.c.l.b16 %v1634
        %v1685 = vunpack.c.l.b16 %v1635
        %v1686 = vunpack.c.l.b16 %v1636
        %v1687 = vunpack.c.l.b16 %v1637
        %v1688 = vunpack.c.l.b16 %v1638
        %v1689 = vunpack.c.l.b16 %v1639
        %v1690 = vunpack.c.l.b16 %v1640
        %v1691 = vunpack.c.l.b16 %v1641
        %v1692 = vunpack.c.l.b16 %v1642
        %v1693 = vunpack.c.l.b16 %v1643
        %v1694 = vunpack.c.l.b16 %v1644
        %v1695 = vunpack.c.l.b16 %v1645
        %v1696 = vpack.c.b16 %v1672, %v1671
        %v1697 = vpack.c.b16 %v1674, %v1673
        %v1698 = vpack.c.b16 %v1676, %v1675
        %v1699 = vpack.c.b16 %v1678, %v1677
        %v1700 = vpack.c.b16 %v1680, %v1679
        %v1701 = vpack.c.b16 %v1682, %v1681
        %v1702 = vpack.c.b16 %v1684, %v1683
        %v1703 = vpack.c.b16 %v1686, %v1685
        %v1704 = vpack.c.b16 %v1688, %v1687
        %v1705 = vpack.c.b16 %v1690, %v1689
        %v1706 = vpack.c.b16 %v1692, %v1691
        %v1707 = vpack.c.b16 %v1694, %v1693
        %v1708 = vpack.c.b16 %v1695, %v1695
        %1722 = vmatprep.subr.bf16.mxu0 0
        %1723 = vmatpush1.bf16.msra.mxu0 %v731
        %1724 = vmatprep.subr.bf16.mxu0 0
        %1725 = vmatpush1.bf16.msra.mxu0 %v732
        %1726 = vmatprep.subr.bf16.mxu0 0
        %1727 = vmatpush1.bf16.msra.mxu0 %v733
        %1728 = vmatprep.subr.bf16.mxu0 0
        %1729 = vmatpush1.bf16.msra.mxu0 %v734
        %1730 = vmatprep.subr.bf16.mxu0 0
        %1731 = vmatpush1.bf16.msra.mxu0 %v735
        %1732 = vmatprep.subr.bf16.mxu0 0
        %1733 = vmatpush1.bf16.msra.mxu0 %v736
        %1734 = vmatprep.subr.bf16.mxu0 0
        %1735 = vmatpush1.bf16.msra.mxu0 %v737
        %1736 = vmatprep.subr.bf16.mxu0 0
        %1737 = vmatpush1.bf16.msra.mxu0 %v738
        %1738 = vmatprep.subr.bf16.mxu0 0
        %1739 = vmatpush1.bf16.msra.mxu0 0
        %1740 = vmatprep.subr.bf16.mxu0 0
        %1741 = vmatpush1.bf16.msra.mxu0 0
        %1742 = vmatprep.subr.bf16.mxu0 0
        %1743 = vmatpush1.bf16.msra.mxu0 0
        %1744 = vmatprep.subr.bf16.mxu0 0
        %1745 = vmatpush1.bf16.msra.mxu0 0
        %1746 = vmatprep.subr.bf16.mxu0 0
        %1747 = vmatpush1.bf16.msra.mxu0 0
        %1748 = vmatprep.subr.bf16.mxu0 0
        %1749 = vmatpush1.bf16.msra.mxu0 0
        %1750 = vmatprep.subr.bf16.mxu0 0
        %1751 = vmatpush1.bf16.msra.mxu0 0
        %1752 = vmatprep.subr.bf16.mxu0 0
        %1753 = vmatpush1.bf16.msra.mxu0 0
        %1754 = vmatprep.mubr.bf16.mxu0 0
        %1755 = vmatmul.mubr.bf16.gmra.mrb[0].mxu0 %v1696
        %v1756 = vpop.f32.mrb[0].mxu0
        %v1757 = vadd.f32 0.0, %v1756
        %v1758 = vpop.f32.mrb[0].mxu0
        %v1759 = vpop.f32.mrb[0].mxu0
        %v1760 = vadd.f32 0.0, %v1759
        %v1761 = vpop.f32.mrb[0].mxu0
        %1762 = vmatprep.mubr.bf16.mxu0 0
        %1763 = vmatmul.mubr.bf16.gmra.mrb[0].mxu0 %v1697
        %v1764 = vpop.f32.mrb[0].mxu0
        %v1765 = vadd.f32 0.0, %v1764
        %v1766 = vpop.f32.mrb[0].mxu0
        %v1767 = vpop.f32.mrb[0].mxu0
        %v1768 = vadd.f32 0.0, %v1767
        %v1769 = vpop.f32.mrb[0].mxu0
        %1770 = vmatprep.mubr.bf16.mxu0 0
        %1771 = vmatmul.mubr.bf16.gmra.mrb[0].mxu0 %v1698
        %v1772 = vpop.f32.mrb[0].mxu0
        %v1773 = vadd.f32 0.0, %v1772
        %v1774 = vpop.f32.mrb[0].mxu0
        %v1775 = vpop.f32.mrb[0].mxu0
        %v1776 = vadd.f32 0.0, %v1775
        %v1777 = vpop.f32.mrb[0].mxu0
        %1778 = vmatprep.mubr.bf16.mxu0 0
        %1779 = vmatmul.mubr.bf16.gmra.mrb[0].mxu0 %v1699
        %v1780 = vpop.f32.mrb[0].mxu0
        %v1781 = vadd.f32 0.0, %v1780
        %v1782 = vpop.f32.mrb[0].mxu0
        %v1783 = vpop.f32.mrb[0].mxu0
        %v1784 = vadd.f32 0.0, %v1783
        %v1785 = vpop.f32.mrb[0].mxu0
        %1786 = vmatprep.mubr.bf16.mxu0 0
        %1787 = vmatmul.mubr.bf16.gmra.mrb[0].mxu0 %v1700
        %v1788 = vpop.f32.mrb[0].mxu0
        %v1789 = vadd.f32 0.0, %v1788
        %v1790 = vpop.f32.mrb[0].mxu0
        %v1791 = vpop.f32.mrb[0].mxu0
        %v1792 = vadd.f32 0.0, %v1791
        %v1793 = vpop.f32.mrb[0].mxu0
        %1794 = vmatprep.mubr.bf16.mxu0 0
        %1795 = vmatmul.mubr.bf16.gmra.mrb[0].mxu0 %v1701
        %v1796 = vpop.f32.mrb[0].mxu0
        %v1797 = vadd.f32 0.0, %v1796
        %v1798 = vpop.f32.mrb[0].mxu0
        %v1799 = vpop.f32.mrb[0].mxu0
        %v1800 = vadd.f32 0.0, %v1799
        %v1801 = vpop.f32.mrb[0].mxu0
        %1802 = vmatprep.mubr.bf16.mxu0 0
        %1803 = vmatmul.mubr.bf16.gmra.mrb[0].mxu0 %v1702
        %v1804 = vpop.f32.mrb[0].mxu0
        %v1805 = vadd.f32 0.0, %v1804
        %v1806 = vpop.f32.mrb[0].mxu0
        %v1807 = vpop.f32.mrb[0].mxu0
        %v1808 = vadd.f32 0.0, %v1807
        %v1809 = vpop.f32.mrb[0].mxu0
        %1810 = vmatprep.mubr.bf16.mxu0 0
        %1811 = vmatmul.mubr.bf16.gmra.mrb[0].mxu0 %v1703
        %v1812 = vpop.f32.mrb[0].mxu0
        %v1813 = vadd.f32 0.0, %v1812
        %v1814 = vpop.f32.mrb[0].mxu0
        %v1815 = vpop.f32.mrb[0].mxu0
        %v1816 = vadd.f32 0.0, %v1815
        %v1817 = vpop.f32.mrb[0].mxu0
        %1818 = vmatprep.mubr.bf16.mxu0 0
        %1819 = vmatmul.mubr.bf16.gmra.mrb[0].mxu0 %v1704
        %v1820 = vpop.f32.mrb[0].mxu0
        %v1821 = vadd.f32 0.0, %v1820
        %v1822 = vpop.f32.mrb[0].mxu0
        %v1823 = vpop.f32.mrb[0].mxu0
        %v1824 = vadd.f32 0.0, %v1823
        %v1825 = vpop.f32.mrb[0].mxu0
        %1826 = vmatprep.mubr.bf16.mxu0 0
        %1827 = vmatmul.mubr.bf16.gmra.mrb[0].mxu0 %v1705
        %v1828 = vpop.f32.mrb[0].mxu0
        %v1829 = vadd.f32 0.0, %v1828
        %v1830 = vpop.f32.mrb[0].mxu0
        %v1831 = vpop.f32.mrb[0].mxu0
        %v1832 = vadd.f32 0.0, %v1831
        %v1833 = vpop.f32.mrb[0].mxu0
        %1834 = vmatprep.mubr.bf16.mxu0 0
        %1835 = vmatmul.mubr.bf16.gmra.mrb[0].mxu0 %v1706
        %v1836 = vpop.f32.mrb[0].mxu0
        %v1837 = vadd.f32 0.0, %v1836
        %v1838 = vpop.f32.mrb[0].mxu0
        %v1839 = vpop.f32.mrb[0].mxu0
        %v1840 = vadd.f32 0.0, %v1839
        %v1841 = vpop.f32.mrb[0].mxu0
        %1842 = vmatprep.mubr.bf16.mxu0 0
        %1843 = vmatmul.mubr.bf16.gmra.mrb[0].mxu0 %v1707
        %v1844 = vpop.f32.mrb[0].mxu0
        %v1845 = vadd.f32 0.0, %v1844
        %v1846 = vpop.f32.mrb[0].mxu0
        %v1847 = vpop.f32.mrb[0].mxu0
        %v1848 = vadd.f32 0.0, %v1847
        %v1849 = vpop.f32.mrb[0].mxu0
        %1850 = vmatprep.mubr.bf16.mxu0 0
        %1851 = vmatmul.mubr.bf16.gmra.mrb[0].mxu0 %v1708
        %v1852 = vpop.f32.mrb[0].mxu0
        %v1853 = vadd.f32 0.0, %v1852
        %v1854 = vpop.f32.mrb[0].mxu0
        %v1855 = vpop.f32.mrb[0].mxu0
        %v1856 = vpop.f32.mrb[0].mxu0
        %1857 = vdwg.mxu0
        %v1858 = vadd.f32 %v1757, %v1760
        %v1859 = vadd.f32 %v1858, %v1765
        %v1860 = vadd.f32 %v1859, %v1768
        %v1861 = vadd.f32 %v1860, %v1773
        %v1862 = vadd.f32 %v1861, %v1776
        %v1863 = vadd.f32 %v1862, %v1781
        %v1864 = vadd.f32 %v1863, %v1784
        %v1865 = vadd.f32 %v1864, %v1789
        %v1866 = vadd.f32 %v1865, %v1792
        %v1867 = vadd.f32 %v1866, %v1797
        %v1868 = vadd.f32 %v1867, %v1800
        %v1869 = vadd.f32 %v1868, %v1805
        %v1870 = vadd.f32 %v1869, %v1808
        %v1871 = vadd.f32 %v1870, %v1813
        %v1872 = vadd.f32 %v1871, %v1816
        %v1873 = vadd.f32 %v1872, %v1821
        %v1874 = vadd.f32 %v1873, %v1824
        %v1875 = vadd.f32 %v1874, %v1829
        %v1876 = vadd.f32 %v1875, %v1832
        %v1877 = vadd.f32 %v1876, %v1837
        %v1878 = vadd.f32 %v1877, %v1840
        %v1879 = vadd.f32 %v1878, %v1845
        %v1880 = vadd.f32 %v1879, %v1848
        %v1881 = vadd.f32 %v1880, %v1853
        %v1882 = vrot.slane %v1881, 4
        %v1883 = vadd.f32 %v1881, %v1882
        %v1884 = vrot.slane %v1883, 2
        %v1885 = vadd.f32 %v1883, %v1884
        %v1886 = vrot.slane %v1885, 1
        %v1887 = vadd.f32 %v1885, %v1886
        %v1888 = vadd.f32 %v1563, %v1887
        %v1889 = vmul.f32 %v1757, %v1757
        %v1890 = vmul.f32 %v1760, %v1760
        %v1891 = vmul.f32 %v1765, %v1765
        %v1892 = vmul.f32 %v1768, %v1768
        %v1893 = vmul.f32 %v1773, %v1773
        %v1894 = vmul.f32 %v1776, %v1776
        %v1895 = vmul.f32 %v1781, %v1781
        %v1896 = vmul.f32 %v1784, %v1784
        %v1897 = vmul.f32 %v1789, %v1789
        %v1898 = vmul.f32 %v1792, %v1792
        %v1899 = vmul.f32 %v1797, %v1797
        %v1900 = vmul.f32 %v1800, %v1800
        %v1901 = vmul.f32 %v1805, %v1805
        %v1902 = vmul.f32 %v1808, %v1808
        %v1903 = vmul.f32 %v1813, %v1813
        %v1904 = vmul.f32 %v1816, %v1816
        %v1905 = vmul.f32 %v1821, %v1821
        %v1906 = vmul.f32 %v1824, %v1824
        %v1907 = vmul.f32 %v1829, %v1829
        %v1908 = vmul.f32 %v1832, %v1832
        %v1909 = vmul.f32 %v1837, %v1837
        %v1910 = vmul.f32 %v1840, %v1840
        %v1911 = vmul.f32 %v1845, %v1845
        %v1912 = vmul.f32 %v1848, %v1848
        %v1913 = vmul.f32 %v1853, %v1853
        %v1914 = vadd.f32 %v1889, %v1890
        %v1915 = vadd.f32 %v1914, %v1891
        %v1916 = vadd.f32 %v1915, %v1892
        %v1917 = vadd.f32 %v1916, %v1893
        %v1918 = vadd.f32 %v1917, %v1894
        %v1919 = vadd.f32 %v1918, %v1895
        %v1920 = vadd.f32 %v1919, %v1896
        %v1921 = vadd.f32 %v1920, %v1897
        %v1922 = vadd.f32 %v1921, %v1898
        %v1923 = vadd.f32 %v1922, %v1899
        %v1924 = vadd.f32 %v1923, %v1900
        %v1925 = vadd.f32 %v1924, %v1901
        %v1926 = vadd.f32 %v1925, %v1902
        %v1927 = vadd.f32 %v1926, %v1903
        %v1928 = vadd.f32 %v1927, %v1904
        %v1929 = vadd.f32 %v1928, %v1905
        %v1930 = vadd.f32 %v1929, %v1906
        %v1931 = vadd.f32 %v1930, %v1907
        %v1932 = vadd.f32 %v1931, %v1908
        %v1933 = vadd.f32 %v1932, %v1909
        %v1934 = vadd.f32 %v1933, %v1910
        %v1935 = vadd.f32 %v1934, %v1911
        %v1936 = vadd.f32 %v1935, %v1912
        %v1937 = vadd.f32 %v1936, %v1913
        %v1938 = vrot.slane %v1937, 4
        %v1939 = vadd.f32 %v1937, %v1938
        %v1940 = vrot.slane %v1939, 2
        %v1941 = vadd.f32 %v1939, %v1940
        %v1942 = vrot.slane %v1941, 1
        %v1943 = vadd.f32 %v1941, %v1942
        %v1944 = vadd.f32 %v1619, %v1943
        %vm1945 = vcmask 1040384
        %v1946 = vsel %vm1945, %v1888, %v1944
        %1947 = vst [vmem:[%s580] sm:$0x3] %v1946
        %p1948 = scmp.lt.s32.totalorder %s13, 1
        %s1949 = scalar_select %p1948, %s13, 1
        %s1950 = smul.addr %s1949, 2
        %s1951 = scalar_lea.vmem %s2, %s1950
        // Predicated region
        $region70: #{cnn_forward.5} parent=64 // pred_check
          %p1952 = pneg %p78
        $region71: #{cnn_forward.5} parent=64 // pred_check_branch
          %1954 = sbr.rel (%p1952) target = $region73
        $region72: #{cnn_forward.5} parent=64 // pred_region
          _
        $region73: #{cnn_forward.5} parent=64 // pred_fallthru
          _
      $region65: #{cnn_forward.5} parent=5 // pred_fallthru
        _
      %p1955 = scmp.le.s32.totalorder 2, %s8
      // Predicated region
      $region74: #{cnn_forward.5} parent=5 // pred_check
        %p1956 = pneg %p1955
      $region75: #{cnn_forward.5} parent=5 // pred_check_branch
        %1958 = sbr.rel (%p1956) target = $region77
      $region76: #{cnn_forward.5} parent=5 // pred_region
        %s1959 = ssub.s32 %s8, 2
        // Predicated region
        $region78: #{cnn_forward.5} parent=76 // pred_check
          %p1960 = pneg %p84
        $region79: #{cnn_forward.5} parent=76 // pred_check_branch
          %1962 = sbr.rel (%p1960) target = $region81
        $region80: #{cnn_forward.5} parent=76 // pred_region
          %p1963 = scmp.lt.s32.totalorder %s14, 1
          %s1964 = scalar_select %p1963, %s14, 1
          %s1965 = smul.addr %s1964, 2
          %s1966 = scalar_lea.vmem %s2, %s1965
        $region81: #{cnn_forward.5} parent=76 // pred_fallthru
          _
      $region77: #{cnn_forward.5} parent=5 // pred_fallthru
        _
    $region6: #{cnn_forward.5} parent=1 // loop_footer
      %s12 = sadd.s32 1, %s8
    $region7: #{cnn_forward.5} parent=1 // loop_footer_branch
      %7 = sbr.rel target = $region3
    $region8: #{cnn_forward.5} parent=1 // loop_exit
      _

// kernel: cnn_forward.6
$region0: #{cnn_forward.6}
  #allocation0 [shape = 'u32[]', space=smem, size = 0x4, offset = 0x4, fixed_abs, tag = 'smem constant byte address 0x4 - core index']
  #allocation1 [shape = 'u32[144,128]{1,0:T(1,128)}', space=vmem, size = 0x12000, scoped, tag = 'internal scratch']
  %s0 = inlined_call_operand.vmem [shape: bf16[4,400,128], index: 0, kind: input, shape index: {}]
  %s1 = inlined_call_operand.vmem [shape: bf16[128,128], index: 1, kind: input, shape index: {}]
  %s2 = inlined_call_operand.vmem [shape: f32[1,128], index: 2, kind: input, shape index: {}]
  %s3 = inlined_call_operand.vmem [shape: f32[1,128], index: 3, kind: input, shape index: {}]
  %s4 = inlined_call_operand.vmem [shape: bf16[400,128], index: 4, kind: output, shape index: {}]
  %s5 = sld [smem:[#allocation0]]
  $region90: #{cnn_forward.6} parent=0
    _
  %s7 = ssub.s32 1, %s5
  %s8 = scalar_select 0, %s7, %s5
  $region1: #{cnn_forward.6} parent=0
    #allocation2 [shape = 'u8[409600]{0}', space=vmem, size = 0x64000, scoped, tag = 'input window, operand 0']
    loop: start=0, step=1, limit=4
    $region2: #{cnn_forward.6} parent=1 // loop_pre_header
      _
    $region3: #{cnn_forward.6} parent=1 // loop_header
      %s10 = sphi 0, %s14
      %p11 = scmp.ge.s32.totalorder %s10, 4
      %s20 = sphi 0, %s22
      %s23 = sphi 0, %s20
      %s24 = sphi 0, %s23
      %s40 = sphi 0, %s24
      %s44 = sphi 0, %s44
      %s46 = sphi 0, %s44
      %s47 = sphi 0, %s46
      %s61 = sphi 0, %s47
      %s65 = sphi 0, %s65
      %s67 = sphi 0, %s65
      %s68 = sphi 0, %s67
      %s82 = sphi 0, %s68
      %s86 = sphi 0, %s86
      %s88 = sphi 0, %s86
      %s89 = sphi 0, %s88
      %s103 = sphi 0, %s89
      %s109 = sphi 0, %s111
      %s112 = sphi 0, %s109
      %s113 = sphi 0, %s112
      %s129 = sphi 0, %s113
    $region4: #{cnn_forward.6} parent=1 // loop_header_branch
      %13 = sbr.rel (%p11) target = $region8
    $region5: #{cnn_forward.6} parent=1 // loop_body
      %s15 = ssub.s32 %s10, 1
      %s16 = ssub.s32 %s10, 2
      %s17 = sadd.s32 %s10, 1
      %s18 = ssub.s32 %s10, %s17
      %p19 = scmp.eq.s32.totalorder %s18, 0
      %s21 = sadd.s32 %s20, 1
      %s22 = scalar_select %p19, %s20, %s21
      %p25 = pneg %p19
      %p26 = scmp.eq.s32.totalorder %s10, 1
      %p27 = por %p25, %p26
      %p28 = scmp.ne.s32.totalorder %s20, %s23
      %p29 = scmp.eq.s32.totalorder %s10, 0
      %p30 = por %p28, %p29
      %p31 = scmp.ne.s32.totalorder %s20, %s23
      %p32 = scmp.eq.s32.totalorder %s15, 1
      %p33 = por %p31, %p32
      %p34 = scmp.ne.s32.totalorder %s23, %s24
      %p35 = scmp.eq.s32.totalorder %s15, 0
      %p36 = por %p34, %p35
      %p37 = scmp.ne.s32.totalorder %s23, %s24
      %p38 = scmp.eq.s32.totalorder %s16, 1
      %p39 = por %p37, %p38
      %p41 = scmp.ne.s32.totalorder %s24, %s40
      %p42 = scmp.eq.s32.totalorder %s16, 0
      %p43 = por %p41, %p42
      %s45 = sadd.s32 %s44, 1
      %p48 = scmp.eq.s32.totalorder %s10, 1
      %p49 = scmp.ne.s32.totalorder %s44, %s46
      %p50 = scmp.eq.s32.totalorder %s10, 0
      %p51 = por %p49, %p50
      %p52 = scmp.ne.s32.totalorder %s44, %s46
      %p53 = scmp.eq.s32.totalorder %s15, 1
      %p54 = por %p52, %p53
      %p55 = scmp.ne.s32.totalorder %s46, %s47
      %p56 = scmp.eq.s32.totalorder %s15, 0
      %p57 = por %p55, %p56
      %p58 = scmp.ne.s32.totalorder %s46, %s47
      %p59 = scmp.eq.s32.totalorder %s16, 1
      %p60 = por %p58, %p59
      %p62 = scmp.ne.s32.totalorder %s47, %s61
      %p63 = scmp.eq.s32.totalorder %s16, 0
      %p64 = por %p62, %p63
      %s66 = sadd.s32 %s65, 1
      %p69 = scmp.eq.s32.totalorder %s10, 1
      %p70 = scmp.ne.s32.totalorder %s65, %s67
      %p71 = scmp.eq.s32.totalorder %s10, 0
      %p72 = por %p70, %p71
      %p73 = scmp.ne.s32.totalorder %s65, %s67
      %p74 = scmp.eq.s32.totalorder %s15, 1
      %p75 = por %p73, %p74
      %p76 = scmp.ne.s32.totalorder %s67, %s68
      %p77 = scmp.eq.s32.totalorder %s15, 0
      %p78 = por %p76, %p77
      %p79 = scmp.ne.s32.totalorder %s67, %s68
      %p80 = scmp.eq.s32.totalorder %s16, 1
      %p81 = por %p79, %p80
      %p83 = scmp.ne.s32.totalorder %s68, %s82
      %p84 = scmp.eq.s32.totalorder %s16, 0
      %p85 = por %p83, %p84
      %s87 = sadd.s32 %s86, 1
      %p90 = scmp.eq.s32.totalorder %s10, 1
      %p91 = scmp.ne.s32.totalorder %s86, %s88
      %p92 = scmp.eq.s32.totalorder %s10, 0
      %p93 = por %p91, %p92
      %p94 = scmp.ne.s32.totalorder %s86, %s88
      %p95 = scmp.eq.s32.totalorder %s15, 1
      %p96 = por %p94, %p95
      %p97 = scmp.ne.s32.totalorder %s88, %s89
      %p98 = scmp.eq.s32.totalorder %s15, 0
      %p99 = por %p97, %p98
      %p100 = scmp.ne.s32.totalorder %s88, %s89
      %p101 = scmp.eq.s32.totalorder %s16, 1
      %p102 = por %p100, %p101
      %p104 = scmp.ne.s32.totalorder %s89, %s103
      %p105 = scmp.eq.s32.totalorder %s16, 0
      %p106 = por %p104, %p105
      %s107 = ssub.s32 %s10, %s17
      %p108 = scmp.eq.s32.totalorder %s107, 0
      %s110 = sadd.s32 %s109, 1
      %s111 = scalar_select %p108, %s109, %s110
      %p114 = pneg %p108
      %p115 = scmp.eq.s32.totalorder %s10, 1
      %p116 = por %p114, %p115
      %p117 = scmp.ne.s32.totalorder %s109, %s112
      %p118 = scmp.eq.s32.totalorder %s10, 0
      %p119 = por %p117, %p118
      %p120 = scmp.ne.s32.totalorder %s109, %s112
      %p121 = scmp.eq.s32.totalorder %s15, 1
      %p122 = por %p120, %p121
      %p123 = scmp.ne.s32.totalorder %s112, %s113
      %p124 = scmp.eq.s32.totalorder %s15, 0
      %p125 = por %p123, %p124
      %p126 = scmp.ne.s32.totalorder %s112, %s113
      %p127 = scmp.eq.s32.totalorder %s16, 1
      %p128 = por %p126, %p127
      %p130 = scmp.ne.s32.totalorder %s113, %s129
      %p131 = scmp.eq.s32.totalorder %s16, 0
      %p132 = por %p130, %p131
      %p133 = scmp.le.s32.totalorder 1, %s10
      %p134 = scmp.lt.s32.totalorder %s10, 3
      %p135 = pnand %p133, %p134
      %p136 = pneg %p135
      // Predicated region
      $region9: #{cnn_forward.6} parent=5 // pred_check
        _
      $region10: #{cnn_forward.6} parent=5 // pred_check_branch
        %138 = sbr.rel (%p135) target = $region12
      $region11: #{cnn_forward.6} parent=5 // pred_region
        %s139 = ssub.s32 %s10, 1
        // Predicated region
        $region13: #{cnn_forward.6} parent=11 // pred_check
          %p140 = pneg %p57
        $region14: #{cnn_forward.6} parent=11 // pred_check_branch
          %142 = sbr.rel (%p140) target = $region16
        $region15: #{cnn_forward.6} parent=11 // pred_region
          _
        $region16: #{cnn_forward.6} parent=11 // pred_fallthru
          _
        // Predicated region
        $region17: #{cnn_forward.6} parent=11 // pred_check
          %p143 = pneg %p78
        $region18: #{cnn_forward.6} parent=11 // pred_check_branch
          %145 = sbr.rel (%p143) target = $region20
        $region19: #{cnn_forward.6} parent=11 // pred_region
          _
        $region20: #{cnn_forward.6} parent=11 // pred_fallthru
          _
        // Predicated region
        $region21: #{cnn_forward.6} parent=11 // pred_check
          %p146 = pneg %p99
        $region22: #{cnn_forward.6} parent=11 // pred_check_branch
          %148 = sbr.rel (%p146) target = $region24
        $region23: #{cnn_forward.6} parent=11 // pred_region
          _
        $region24: #{cnn_forward.6} parent=11 // pred_fallthru
          _
      $region12: #{cnn_forward.6} parent=5 // pred_fallthru
        _
      %p149 = scmp.lt.s32.totalorder %s10, 2
      // Predicated region
      $region25: #{cnn_forward.6} parent=5 // pred_check
        %p150 = pneg %p149
      $region26: #{cnn_forward.6} parent=5 // pred_check_branch
        %152 = sbr.rel (%p150) target = $region28
      $region27: #{cnn_forward.6} parent=5 // pred_region
        // Predicated region
        $region29: #{cnn_forward.6} parent=27 // pred_check
          %p153 = pneg %p30
        $region30: #{cnn_forward.6} parent=27 // pred_check_branch
          %155 = sbr.rel (%p153) target = $region32
        $region31: #{cnn_forward.6} parent=27 // pred_region
          %s156 = sand.u32 %s20, 1
          %s157 = sand.u32 %s20, 1
          %s158 = smul.addr %s157, 400
          %s159 = scalar_lea.vmem [#allocation2], %s158
          %s160 = smul.u32 25, %s10
          %s161 = smul.addr %s160, 4
          %s162 = scalar_lea.vmem %s0, %s161
          // Predicated region
          $region33: #{cnn_forward.6} parent=31 // pred_check
            _
          $region34: #{cnn_forward.6} parent=31 // pred_check_branch
            %164 = sbr.rel (0) target = $region36
          $region35: #{cnn_forward.6} parent=31 // pred_region
            // Predicated region
            $region37: #{cnn_forward.6} parent=35 // pred_check
              _
            $region38: #{cnn_forward.6} parent=35 // pred_check_branch
              %166 = sbr.rel target = $region40
            $region39: #{cnn_forward.6} parent=35 // pred_region
              // Predicated region
              $region52: #{cnn_forward.6} parent=39 // pred_check
                _
              $region53: #{cnn_forward.6} parent=39 // pred_check_branch
                %379 = sbr.rel (0) target = $region55
              $region54: #{cnn_forward.6} parent=39 // pred_region
                loop: start=0, step=1, limit=1
                $region56: #{cnn_forward.6} parent=54 // loop_pre_header
                  _
                $region57: #{cnn_forward.6} parent=54 // loop_header
                  %s381 = sphi 0, %s385
                  %p382 = scmp.ge.s32.totalorder %s381, 1
                  %s386 = sphi %s162, %s162
                  %s387 = sphi %s159, %s159
                $region58: #{cnn_forward.6} parent=54 // loop_header_branch
                  %384 = sbr.rel (%p382) target = $region62
                $region59: #{cnn_forward.6} parent=54 // loop_body
                  _
                $region60: #{cnn_forward.6} parent=54 // loop_footer
                  %s385 = sadd.s32 1, %s381
                $region61: #{cnn_forward.6} parent=54 // loop_footer_branch
                  %380 = sbr.rel target = $region57
                $region62: #{cnn_forward.6} parent=54 // loop_exit
                  _
                loop: start=0, step=1, limit=1
                $region63: #{cnn_forward.6} parent=54 // loop_pre_header
                  _
                $region64: #{cnn_forward.6} parent=54 // loop_header
                  %s390 = sphi 0, %s394
                  %p391 = scmp.ge.s32.totalorder %s390, 1
                  %s395 = sphi %s162, %s162
                  %s396 = sphi %s159, %s159
                $region65: #{cnn_forward.6} parent=54 // loop_header_branch
                  %393 = sbr.rel (%p391) target = $region69
                $region66: #{cnn_forward.6} parent=54 // loop_body
                  %v397 = vld [vmem:[%s395] sm:$0xf]
                  %398 = vst [vmem:[%s396] sm:$0xf] %v397
                  %v399 = vld [vmem:[%s395 + $0x4] sm:$0xf]
                  %400 = vst [vmem:[%s396 + $0x4] sm:$0xf] %v399
                  %v401 = vld [vmem:[%s395 + $0x8] sm:$0xf]
                  %402 = vst [vmem:[%s396 + $0x8] sm:$0xf] %v401
                  %v403 = vld [vmem:[%s395 + $0xc] sm:$0xf]
                  %404 = vst [vmem:[%s396 + $0xc] sm:$0xf] %v403
                  %v405 = vld [vmem:[%s395 + $0x10] sm:$0xf]
                  %406 = vst [vmem:[%s396 + $0x10] sm:$0xf] %v405
                  %v407 = vld [vmem:[%s395 + $0x14] sm:$0xf]
                  %408 = vst [vmem:[%s396 + $0x14] sm:$0xf] %v407
                  %v409 = vld [vmem:[%s395 + $0x18] sm:$0xf]
                  %410 = vst [vmem:[%s396 + $0x18] sm:$0xf] %v409
                  %v411 = vld [vmem:[%s395 + $0x1c] sm:$0xf]
                  %412 = vst [vmem:[%s396 + $0x1c] sm:$0xf] %v411
                  %v413 = vld [vmem:[%s395 + $0x20] sm:$0xf]
                  %414 = vst [vmem:[%s396 + $0x20] sm:$0xf] %v413
                  %v415 = vld [vmem:[%s395 + $0x24] sm:$0xf]
                  %416 = vst [vmem:[%s396 + $0x24] sm:$0xf] %v415
                  %v417 = vld [vmem:[%s395 + $0x28] sm:$0xf]
                  %418 = vst [vmem:[%s396 + $0x28] sm:$0xf] %v417
                  %v419 = vld [vmem:[%s395 + $0x2c] sm:$0xf]
                  %420 = vst [vmem:[%s396 + $0x2c] sm:$0xf] %v419
                  %v421 = vld [vmem:[%s395 + $0x30] sm:$0xf]
                  %422 = vst [vmem:[%s396 + $0x30] sm:$0xf] %v421
                  %v423 = vld [vmem:[%s395 + $0x34] sm:$0xf]
                  %424 = vst [vmem:[%s396 + $0x34] sm:$0xf] %v423
                  %v425 = vld [vmem:[%s395 + $0x38] sm:$0xf]
                  %426 = vst [vmem:[%s396 + $0x38] sm:$0xf] %v425
                  %v427 = vld [vmem:[%s395 + $0x3c] sm:$0xf]
                  %428 = vst [vmem:[%s396 + $0x3c] sm:$0xf] %v427
                  %v429 = vld [vmem:[%s395 + $0x40] sm:$0xf]
                  %430 = vst [vmem:[%s396 + $0x40] sm:$0xf] %v429
                  %v431 = vld [vmem:[%s395 + $0x44] sm:$0xf]
                  %432 = vst [vmem:[%s396 + $0x44] sm:$0xf] %v431
                  %v433 = vld [vmem:[%s395 + $0x48] sm:$0xf]
                  %434 = vst [vmem:[%s396 + $0x48] sm:$0xf] %v433
                  %v435 = vld [vmem:[%s395 + $0x4c] sm:$0xf]
                  %436 = vst [vmem:[%s396 + $0x4c] sm:$0xf] %v435
                  %v437 = vld [vmem:[%s395 + $0x50] sm:$0xf]
                  %438 = vst [vmem:[%s396 + $0x50] sm:$0xf] %v437
                  %v439 = vld [vmem:[%s395 + $0x54] sm:$0xf]
                  %440 = vst [vmem:[%s396 + $0x54] sm:$0xf] %v439
                  %v441 = vld [vmem:[%s395 + $0x58] sm:$0xf]
                  %442 = vst [vmem:[%s396 + $0x58] sm:$0xf] %v441
                  %v443 = vld [vmem:[%s395 + $0x5c] sm:$0xf]
                  %444 = vst [vmem:[%s396 + $0x5c] sm:$0xf] %v443
                  %v445 = vld [vmem:[%s395 + $0x60] sm:$0xf]
                  %446 = vst [vmem:[%s396 + $0x60] sm:$0xf] %v445
                  %v447 = vld [vmem:[%s395 + $0xc8] sm:$0xf]
                  %448 = vst [vmem:[%s396 + $0x64] sm:$0xf] %v447
                  %v449 = vld [vmem:[%s395 + $0xcc] sm:$0xf]
                  %450 = vst [vmem:[%s396 + $0x68] sm:$0xf] %v449
                  %v451 = vld [vmem:[%s395 + $0xd0] sm:$0xf]
                  %452 = vst [vmem:[%s396 + $0x6c] sm:$0xf] %v451
                  %v453 = vld [vmem:[%s395 + $0xd4] sm:$0xf]
                  %454 = vst [vmem:[%s396 + $0x70] sm:$0xf] %v453
                  %v455 = vld [vmem:[%s395 + $0xd8] sm:$0xf]
                  %456 = vst [vmem:[%s396 + $0x74] sm:$0xf] %v455
                  %v457 = vld [vmem:[%s395 + $0xdc] sm:$0xf]
                  %458 = vst [vmem:[%s396 + $0x78] sm:$0xf] %v457
                  %v459 = vld [vmem:[%s395 + $0xe0] sm:$0xf]
                  %460 = vst [vmem:[%s396 + $0x7c] sm:$0xf] %v459
                  %v461 = vld [vmem:[%s395 + $0xe4] sm:$0xf]
                  %462 = vst [vmem:[%s396 + $0x80] sm:$0xf] %v461
                  %v463 = vld [vmem:[%s395 + $0xe8] sm:$0xf]
                  %464 = vst [vmem:[%s396 + $0x84] sm:$0xf] %v463
                  %v465 = vld [vmem:[%s395 + $0xec] sm:$0xf]
                  %466 = vst [vmem:[%s396 + $0x88] sm:$0xf] %v465
                  %v467 = vld [vmem:[%s395 + $0xf0] sm:$0xf]
                  %468 = vst [vmem:[%s396 + $0x8c] sm:$0xf] %v467
                  %v469 = vld [vmem:[%s395 + $0xf4] sm:$0xf]
                  %470 = vst [vmem:[%s396 + $0x90] sm:$0xf] %v469
                  %v471 = vld [vmem:[%s395 + $0xf8] sm:$0xf]
                  %472 = vst [vmem:[%s396 + $0x94] sm:$0xf] %v471
                  %v473 = vld [vmem:[%s395 + $0xfc] sm:$0xf]
                  %474 = vst [vmem:[%s396 + $0x98] sm:$0xf] %v473
                  %v475 = vld [vmem:[%s395 + $0x100] sm:$0xf]
                  %476 = vst [vmem:[%s396 + $0x9c] sm:$0xf] %v475
                  %v477 = vld [vmem:[%s395 + $0x104] sm:$0xf]
                  %478 = vst [vmem:[%s396 + $0xa0] sm:$0xf] %v477
                  %v479 = vld [vmem:[%s395 + $0x108] sm:$0xf]
                  %480 = vst [vmem:[%s396 + $0xa4] sm:$0xf] %v479
                  %v481 = vld [vmem:[%s395 + $0x10c] sm:$0xf]
                  %482 = vst [vmem:[%s396 + $0xa8] sm:$0xf] %v481
                  %v483 = vld [vmem:[%s395 + $0x110] sm:$0xf]
                  %484 = vst [vmem:[%s396 + $0xac] sm:$0xf] %v483
                  %v485 = vld [vmem:[%s395 + $0x114] sm:$0xf]
                  %486 = vst [vmem:[%s396 + $0xb0] sm:$0xf] %v485
                  %v487 = vld [vmem:[%s395 + $0x118] sm:$0xf]
                  %488 = vst [vmem:[%s396 + $0xb4] sm:$0xf] %v487
                  %v489 = vld [vmem:[%s395 + $0x11c] sm:$0xf]
                  %490 = vst [vmem:[%s396 + $0xb8] sm:$0xf] %v489
                  %v491 = vld [vmem:[%s395 + $0x120] sm:$0xf]
                  %492 = vst [vmem:[%s396 + $0xbc] sm:$0xf] %v491
                  %v493 = vld [vmem:[%s395 + $0x124] sm:$0xf]
                  %494 = vst [vmem:[%s396 + $0xc0] sm:$0xf] %v493
                  %v495 = vld [vmem:[%s395 + $0x128] sm:$0xf]
                  %496 = vst [vmem:[%s396 + $0xc4] sm:$0xf] %v495
                  %v497 = vld [vmem:[%s395 + $0x190] sm:$0xf]
                  %498 = vst [vmem:[%s396 + $0xc8] sm:$0xf] %v497
                  %v499 = vld [vmem:[%s395 + $0x194] sm:$0xf]
                  %500 = vst [vmem:[%s396 + $0xcc] sm:$0xf] %v499
                  %v501 = vld [vmem:[%s395 + $0x198] sm:$0xf]
                  %502 = vst [vmem:[%s396 + $0xd0] sm:$0xf] %v501
                  %v503 = vld [vmem:[%s395 + $0x19c] sm:$0xf]
                  %504 = vst [vmem:[%s396 + $0xd4] sm:$0xf] %v503
                  %v505 = vld [vmem:[%s395 + $0x1a0] sm:$0xf]
                  %506 = vst [vmem:[%s396 + $0xd8] sm:$0xf] %v505
                  %v507 = vld [vmem:[%s395 + $0x1a4] sm:$0xf]
                  %508 = vst [vmem:[%s396 + $0xdc] sm:$0xf] %v507
                  %v509 = vld [vmem:[%s395 + $0x1a8] sm:$0xf]
                  %510 = vst [vmem:[%s396 + $0xe0] sm:$0xf] %v509
                  %v511 = vld [vmem:[%s395 + $0x1ac] sm:$0xf]
                  %512 = vst [vmem:[%s396 + $0xe4] sm:$0xf] %v511
                  %v513 = vld [vmem:[%s395 + $0x1b0] sm:$0xf]
                  %514 = vst [vmem:[%s396 + $0xe8] sm:$0xf] %v513
                  %v515 = vld [vmem:[%s395 + $0x1b4] sm:$0xf]
                  %516 = vst [vmem:[%s396 + $0xec] sm:$0xf] %v515
                  %v517 = vld [vmem:[%s395 + $0x1b8] sm:$0xf]
                  %518 = vst [vmem:[%s396 + $0xf0] sm:$0xf] %v517
                  %v519 = vld [vmem:[%s395 + $0x1bc] sm:$0xf]
                  %520 = vst [vmem:[%s396 + $0xf4] sm:$0xf] %v519
                  %v521 = vld [vmem:[%s395 + $0x1c0] sm:$0xf]
                  %522 = vst [vmem:[%s396 + $0xf8] sm:$0xf] %v521
                  %v523 = vld [vmem:[%s395 + $0x1c4] sm:$0xf]
                  %524 = vst [vmem:[%s396 + $0xfc] sm:$0xf] %v523
                  %v525 = vld [vmem:[%s395 + $0x1c8] sm:$0xf]
                  %526 = vst [vmem:[%s396 + $0x100] sm:$0xf] %v525
                  %v527 = vld [vmem:[%s395 + $0x1cc] sm:$0xf]
                  %528 = vst [vmem:[%s396 + $0x104] sm:$0xf] %v527
                  %v529 = vld [vmem:[%s395 + $0x1d0] sm:$0xf]
                  %530 = vst [vmem:[%s396 + $0x108] sm:$0xf] %v529
                  %v531 = vld [vmem:[%s395 + $0x1d4] sm:$0xf]
                  %532 = vst [vmem:[%s396 + $0x10c] sm:$0xf] %v531
                  %v533 = vld [vmem:[%s395 + $0x1d8] sm:$0xf]
                  %534 = vst [vmem:[%s396 + $0x110] sm:$0xf] %v533
                  %v535 = vld [vmem:[%s395 + $0x1dc] sm:$0xf]
                  %536 = vst [vmem:[%s396 + $0x114] sm:$0xf] %v535
                  %v537 = vld [vmem:[%s395 + $0x1e0] sm:$0xf]
                  %538 = vst [vmem:[%s396 + $0x118] sm:$0xf] %v537
                  %v539 = vld [vmem:[%s395 + $0x1e4] sm:$0xf]
                  %540 = vst [vmem:[%s396 + $0x11c] sm:$0xf] %v539
                  %v541 = vld [vmem:[%s395 + $0x1e8] sm:$0xf]
                  %542 = vst [vmem:[%s396 + $0x120] sm:$0xf] %v541
                  %v543 = vld [vmem:[%s395 + $0x1ec] sm:$0xf]
                  %544 = vst [vmem:[%s396 + $0x124] sm:$0xf] %v543
                  %v545 = vld [vmem:[%s395 + $0x1f0] sm:$0xf]
                  %546 = vst [vmem:[%s396 + $0x128] sm:$0xf] %v545
                  %v547 = vld [vmem:[%s395 + $0x258] sm:$0xf]
                  %548 = vst [vmem:[%s396 + $0x12c] sm:$0xf] %v547
                  %v549 = vld [vmem:[%s395 + $0x25c] sm:$0xf]
                  %550 = vst [vmem:[%s396 + $0x130] sm:$0xf] %v549
                  %v551 = vld [vmem:[%s395 + $0x260] sm:$0xf]
                  %552 = vst [vmem:[%s396 + $0x134] sm:$0xf] %v551
                  %v553 = vld [vmem:[%s395 + $0x264] sm:$0xf]
                  %554 = vst [vmem:[%s396 + $0x138] sm:$0xf] %v553
                  %v555 = vld [vmem:[%s395 + $0x268] sm:$0xf]
                  %556 = vst [vmem:[%s396 + $0x13c] sm:$0xf] %v555
                  %v557 = vld [vmem:[%s395 + $0x26c] sm:$0xf]
                  %558 = vst [vmem:[%s396 + $0x140] sm:$0xf] %v557
                  %v559 = vld [vmem:[%s395 + $0x270] sm:$0xf]
                  %560 = vst [vmem:[%s396 + $0x144] sm:$0xf] %v559
                  %v561 = vld [vmem:[%s395 + $0x274] sm:$0xf]
                  %562 = vst [vmem:[%s396 + $0x148] sm:$0xf] %v561
                  %v563 = vld [vmem:[%s395 + $0x278] sm:$0xf]
                  %564 = vst [vmem:[%s396 + $0x14c] sm:$0xf] %v563
                  %v565 = vld [vmem:[%s395 + $0x27c] sm:$0xf]
                  %566 = vst [vmem:[%s396 + $0x150] sm:$0xf] %v565
                  %v567 = vld [vmem:[%s395 + $0x280] sm:$0xf]
                  %568 = vst [vmem:[%s396 + $0x154] sm:$0xf] %v567
                  %v569 = vld [vmem:[%s395 + $0x284] sm:$0xf]
                  %570 = vst [vmem:[%s396 + $0x158] sm:$0xf] %v569
                  %v571 = vld [vmem:[%s395 + $0x288] sm:$0xf]
                  %572 = vst [vmem:[%s396 + $0x15c] sm:$0xf] %v571
                  %v573 = vld [vmem:[%s395 + $0x28c] sm:$0xf]
                  %574 = vst [vmem:[%s396 + $0x160] sm:$0xf] %v573
                  %v575 = vld [vmem:[%s395 + $0x290] sm:$0xf]
                  %576 = vst [vmem:[%s396 + $0x164] sm:$0xf] %v575
                  %v577 = vld [vmem:[%s395 + $0x294] sm:$0xf]
                  %578 = vst [vmem:[%s396 + $0x168] sm:$0xf] %v577
                  %v579 = vld [vmem:[%s395 + $0x298] sm:$0xf]
                  %580 = vst [vmem:[%s396 + $0x16c] sm:$0xf] %v579
                  %v581 = vld [vmem:[%s395 + $0x29c] sm:$0xf]
                  %582 = vst [vmem:[%s396 + $0x170] sm:$0xf] %v581
                  %v583 = vld [vmem:[%s395 + $0x2a0] sm:$0xf]
                  %584 = vst [vmem:[%s396 + $0x174] sm:$0xf] %v583
                  %v585 = vld [vmem:[%s395 + $0x2a4] sm:$0xf]
                  %586 = vst [vmem:[%s396 + $0x178] sm:$0xf] %v585
                  %v587 = vld [vmem:[%s395 + $0x2a8] sm:$0xf]
                  %588 = vst [vmem:[%s396 + $0x17c] sm:$0xf] %v587
                  %v589 = vld [vmem:[%s395 + $0x2ac] sm:$0xf]
                  %590 = vst [vmem:[%s396 + $0x180] sm:$0xf] %v589
                  %v591 = vld [vmem:[%s395 + $0x2b0] sm:$0xf]
                  %592 = vst [vmem:[%s396 + $0x184] sm:$0xf] %v591
                  %v593 = vld [vmem:[%s395 + $0x2b4] sm:$0xf]
                  %594 = vst [vmem:[%s396 + $0x188] sm:$0xf] %v593
                  %v595 = vld [vmem:[%s395 + $0x2b8] sm:$0xf]
                  %596 = vst [vmem:[%s396 + $0x18c] sm:$0xf] %v595
                $region67: #{cnn_forward.6} parent=54 // loop_footer
                  %s394 = sadd.s32 1, %s390
                $region68: #{cnn_forward.6} parent=54 // loop_footer_branch
                  %389 = sbr.rel target = $region64
                $region69: #{cnn_forward.6} parent=54 // loop_exit
                  _
              $region55: #{cnn_forward.6} parent=39 // pred_fallthru
                _
            $region40: #{cnn_forward.6} parent=35 // pred_fallthru
              _
            // Predicated region
            $region41: #{cnn_forward.6} parent=35 // pred_check
              _
            $region42: #{cnn_forward.6} parent=35 // pred_check_branch
              %168 = sbr.rel (0) target = $region44
            $region43: #{cnn_forward.6} parent=35 // pred_region
              loop: start=0, step=1, limit=1
              $region45: #{cnn_forward.6} parent=43 // loop_pre_header
                _
              $region46: #{cnn_forward.6} parent=43 // loop_header
                %s171 = sphi 0, %s175
                %p172 = scmp.ge.s32.totalorder %s171, 1
                %s176 = sphi %s162, %s162
                %s177 = sphi %s159, %s159
              $region47: #{cnn_forward.6} parent=43 // loop_header_branch
                %174 = sbr.rel (%p172) target = $region51
              $region48: #{cnn_forward.6} parent=43 // loop_body
                %v178 = vld [vmem:[%s176] sm:$0xf]
                %179 = vst [vmem:[%s177] sm:$0xf] %v178
                %v180 = vld [vmem:[%s176 + $0x4] sm:$0xf]
                %181 = vst [vmem:[%s177 + $0x4] sm:$0xf] %v180
                %v182 = vld [vmem:[%s176 + $0x8] sm:$0xf]
                %183 = vst [vmem:[%s177 + $0x8] sm:$0xf] %v182
                %v184 = vld [vmem:[%s176 + $0xc] sm:$0xf]
                %185 = vst [vmem:[%s177 + $0xc] sm:$0xf] %v184
                %v186 = vld [vmem:[%s176 + $0x10] sm:$0xf]
                %187 = vst [vmem:[%s177 + $0x10] sm:$0xf] %v186
                %v188 = vld [vmem:[%s176 + $0x14] sm:$0xf]
                %189 = vst [vmem:[%s177 + $0x14] sm:$0xf] %v188
                %v190 = vld [vmem:[%s176 + $0x18] sm:$0xf]
                %191 = vst [vmem:[%s177 + $0x18] sm:$0xf] %v190
                %v192 = vld [vmem:[%s176 + $0x1c] sm:$0xf]
                %193 = vst [vmem:[%s177 + $0x1c] sm:$0xf] %v192
                %v194 = vld [vmem:[%s176 + $0x20] sm:$0xf]
                %195 = vst [vmem:[%s177 + $0x20] sm:$0xf] %v194
                %v196 = vld [vmem:[%s176 + $0x24] sm:$0xf]
                %197 = vst [vmem:[%s177 + $0x24] sm:$0xf] %v196
                %v198 = vld [vmem:[%s176 + $0x28] sm:$0xf]
                %199 = vst [vmem:[%s177 + $0x28] sm:$0xf] %v198
                %v200 = vld [vmem:[%s176 + $0x2c] sm:$0xf]
                %201 = vst [vmem:[%s177 + $0x2c] sm:$0xf] %v200
                %v202 = vld [vmem:[%s176 + $0x30] sm:$0xf]
                %203 = vst [vmem:[%s177 + $0x30] sm:$0xf] %v202
                %v204 = vld [vmem:[%s176 + $0x34] sm:$0xf]
                %205 = vst [vmem:[%s177 + $0x34] sm:$0xf] %v204
                %v206 = vld [vmem:[%s176 + $0x38] sm:$0xf]
                %207 = vst [vmem:[%s177 + $0x38] sm:$0xf] %v206
                %v208 = vld [vmem:[%s176 + $0x3c] sm:$0xf]
                %209 = vst [vmem:[%s177 + $0x3c] sm:$0xf] %v208
                %v210 = vld [vmem:[%s176 + $0x40] sm:$0xf]
                %211 = vst [vmem:[%s177 + $0x40] sm:$0xf] %v210
                %v212 = vld [vmem:[%s176 + $0x44] sm:$0xf]
                %213 = vst [vmem:[%s177 + $0x44] sm:$0xf] %v212
                %v214 = vld [vmem:[%s176 + $0x48] sm:$0xf]
                %215 = vst [vmem:[%s177 + $0x48] sm:$0xf] %v214
                %v216 = vld [vmem:[%s176 + $0x4c] sm:$0xf]
                %217 = vst [vmem:[%s177 + $0x4c] sm:$0xf] %v216
                %v218 = vld [vmem:[%s176 + $0x50] sm:$0xf]
                %219 = vst [vmem:[%s177 + $0x50] sm:$0xf] %v218
                %v220 = vld [vmem:[%s176 + $0x54] sm:$0xf]
                %221 = vst [vmem:[%s177 + $0x54] sm:$0xf] %v220
                %v222 = vld [vmem:[%s176 + $0x58] sm:$0xf]
                %223 = vst [vmem:[%s177 + $0x58] sm:$0xf] %v222
                %v224 = vld [vmem:[%s176 + $0x5c] sm:$0xf]
                %225 = vst [vmem:[%s177 + $0x5c] sm:$0xf] %v224
                %v226 = vld [vmem:[%s176 + $0x60] sm:$0xf]
                %227 = vst [vmem:[%s177 + $0x60] sm:$0xf] %v226
                %v228 = vld [vmem:[%s176 + $0xc8] sm:$0xf]
                %229 = vst [vmem:[%s177 + $0x64] sm:$0xf] %v228
                %v230 = vld [vmem:[%s176 + $0xcc] sm:$0xf]
                %231 = vst [vmem:[%s177 + $0x68] sm:$0xf] %v230
                %v232 = vld [vmem:[%s176 + $0xd0] sm:$0xf]
                %233 = vst [vmem:[%s177 + $0x6c] sm:$0xf] %v232
                %v234 = vld [vmem:[%s176 + $0xd4] sm:$0xf]
                %235 = vst [vmem:[%s177 + $0x70] sm:$0xf] %v234
                %v236 = vld [vmem:[%s176 + $0xd8] sm:$0xf]
                %237 = vst [vmem:[%s177 + $0x74] sm:$0xf] %v236
                %v238 = vld [vmem:[%s176 + $0xdc] sm:$0xf]
                %239 = vst [vmem:[%s177 + $0x78] sm:$0xf] %v238
                %v240 = vld [vmem:[%s176 + $0xe0] sm:$0xf]
                %241 = vst [vmem:[%s177 + $0x7c] sm:$0xf] %v240
                %v242 = vld [vmem:[%s176 + $0xe4] sm:$0xf]
                %243 = vst [vmem:[%s177 + $0x80] sm:$0xf] %v242
                %v244 = vld [vmem:[%s176 + $0xe8] sm:$0xf]
                %245 = vst [vmem:[%s177 + $0x84] sm:$0xf] %v244
                %v246 = vld [vmem:[%s176 + $0xec] sm:$0xf]
                %247 = vst [vmem:[%s177 + $0x88] sm:$0xf] %v246
                %v248 = vld [vmem:[%s176 + $0xf0] sm:$0xf]
                %249 = vst [vmem:[%s177 + $0x8c] sm:$0xf] %v248
                %v250 = vld [vmem:[%s176 + $0xf4] sm:$0xf]
                %251 = vst [vmem:[%s177 + $0x90] sm:$0xf] %v250
                %v252 = vld [vmem:[%s176 + $0xf8] sm:$0xf]
                %253 = vst [vmem:[%s177 + $0x94] sm:$0xf] %v252
                %v254 = vld [vmem:[%s176 + $0xfc] sm:$0xf]
                %255 = vst [vmem:[%s177 + $0x98] sm:$0xf] %v254
                %v256 = vld [vmem:[%s176 + $0x100] sm:$0xf]
                %257 = vst [vmem:[%s177 + $0x9c] sm:$0xf] %v256
                %v258 = vld [vmem:[%s176 + $0x104] sm:$0xf]
                %259 = vst [vmem:[%s177 + $0xa0] sm:$0xf] %v258
                %v260 = vld [vmem:[%s176 + $0x108] sm:$0xf]
                %261 = vst [vmem:[%s177 + $0xa4] sm:$0xf] %v260
                %v262 = vld [vmem:[%s176 + $0x10c] sm:$0xf]
                %263 = vst [vmem:[%s177 + $0xa8] sm:$0xf] %v262
                %v264 = vld [vmem:[%s176 + $0x110] sm:$0xf]
                %265 = vst [vmem:[%s177 + $0xac] sm:$0xf] %v264
                %v266 = vld [vmem:[%s176 + $0x114] sm:$0xf]
                %267 = vst [vmem:[%s177 + $0xb0] sm:$0xf] %v266
                %v268 = vld [vmem:[%s176 + $0x118] sm:$0xf]
                %269 = vst [vmem:[%s177 + $0xb4] sm:$0xf] %v268
                %v270 = vld [vmem:[%s176 + $0x11c] sm:$0xf]
                %271 = vst [vmem:[%s177 + $0xb8] sm:$0xf] %v270
                %v272 = vld [vmem:[%s176 + $0x120] sm:$0xf]
                %273 = vst [vmem:[%s177 + $0xbc] sm:$0xf] %v272
                %v274 = vld [vmem:[%s176 + $0x124] sm:$0xf]
                %275 = vst [vmem:[%s177 + $0xc0] sm:$0xf] %v274
                %v276 = vld [vmem:[%s176 + $0x128] sm:$0xf]
                %277 = vst [vmem:[%s177 + $0xc4] sm:$0xf] %v276
                %v278 = vld [vmem:[%s176 + $0x190] sm:$0xf]
                %279 = vst [vmem:[%s177 + $0xc8] sm:$0xf] %v278
                %v280 = vld [vmem:[%s176 + $0x194] sm:$0xf]
                %281 = vst [vmem:[%s177 + $0xcc] sm:$0xf] %v280
                %v282 = vld [vmem:[%s176 + $0x198] sm:$0xf]
                %283 = vst [vmem:[%s177 + $0xd0] sm:$0xf] %v282
                %v284 = vld [vmem:[%s176 + $0x19c] sm:$0xf]
                %285 = vst [vmem:[%s177 + $0xd4] sm:$0xf] %v284
                %v286 = vld [vmem:[%s176 + $0x1a0] sm:$0xf]
                %287 = vst [vmem:[%s177 + $0xd8] sm:$0xf] %v286
                %v288 = vld [vmem:[%s176 + $0x1a4] sm:$0xf]
                %289 = vst [vmem:[%s177 + $0xdc] sm:$0xf] %v288
                %v290 = vld [vmem:[%s176 + $0x1a8] sm:$0xf]
                %291 = vst [vmem:[%s177 + $0xe0] sm:$0xf] %v290
                %v292 = vld [vmem:[%s176 + $0x1ac] sm:$0xf]
                %293 = vst [vmem:[%s177 + $0xe4] sm:$0xf] %v292
                %v294 = vld [vmem:[%s176 + $0x1b0] sm:$0xf]
                %295 = vst [vmem:[%s177 + $0xe8] sm:$0xf] %v294
                %v296 = vld [vmem:[%s176 + $0x1b4] sm:$0xf]
                %297 = vst [vmem:[%s177 + $0xec] sm:$0xf] %v296
                %v298 = vld [vmem:[%s176 + $0x1b8] sm:$0xf]
                %299 = vst [vmem:[%s177 + $0xf0] sm:$0xf] %v298
                %v300 = vld [vmem:[%s176 + $0x1bc] sm:$0xf]
                %301 = vst [vmem:[%s177 + $0xf4] sm:$0xf] %v300
                %v302 = vld [vmem:[%s176 + $0x1c0] sm:$0xf]
                %303 = vst [vmem:[%s177 + $0xf8] sm:$0xf] %v302
                %v304 = vld [vmem:[%s176 + $0x1c4] sm:$0xf]
                %305 = vst [vmem:[%s177 + $0xfc] sm:$0xf] %v304
                %v306 = vld [vmem:[%s176 + $0x1c8] sm:$0xf]
                %307 = vst [vmem:[%s177 + $0x100] sm:$0xf] %v306
                %v308 = vld [vmem:[%s176 + $0x1cc] sm:$0xf]
                %309 = vst [vmem:[%s177 + $0x104] sm:$0xf] %v308
                %v310 = vld [vmem:[%s176 + $0x1d0] sm:$0xf]
                %311 = vst [vmem:[%s177 + $0x108] sm:$0xf] %v310
                %v312 = vld [vmem:[%s176 + $0x1d4] sm:$0xf]
                %313 = vst [vmem:[%s177 + $0x10c] sm:$0xf] %v312
                %v314 = vld [vmem:[%s176 + $0x1d8] sm:$0xf]
                %315 = vst [vmem:[%s177 + $0x110] sm:$0xf] %v314
                %v316 = vld [vmem:[%s176 + $0x1dc] sm:$0xf]
                %317 = vst [vmem:[%s177 + $0x114] sm:$0xf] %v316
                %v318 = vld [vmem:[%s176 + $0x1e0] sm:$0xf]
                %319 = vst [vmem:[%s177 + $0x118] sm:$0xf] %v318
                %v320 = vld [vmem:[%s176 + $0x1e4] sm:$0xf]
                %321 = vst [vmem:[%s177 + $0x11c] sm:$0xf] %v320
                %v322 = vld [vmem:[%s176 + $0x1e8] sm:$0xf]
                %323 = vst [vmem:[%s177 + $0x120] sm:$0xf] %v322
                %v324 = vld [vmem:[%s176 + $0x1ec] sm:$0xf]
                %325 = vst [vmem:[%s177 + $0x124] sm:$0xf] %v324
                %v326 = vld [vmem:[%s176 + $0x1f0] sm:$0xf]
                %327 = vst [vmem:[%s177 + $0x128] sm:$0xf] %v326
                %v328 = vld [vmem:[%s176 + $0x258] sm:$0xf]
                %329 = vst [vmem:[%s177 + $0x12c] sm:$0xf] %v328
                %v330 = vld [vmem:[%s176 + $0x25c] sm:$0xf]
                %331 = vst [vmem:[%s177 + $0x130] sm:$0xf] %v330
                %v332 = vld [vmem:[%s176 + $0x260] sm:$0xf]
                %333 = vst [vmem:[%s177 + $0x134] sm:$0xf] %v332
                %v334 = vld [vmem:[%s176 + $0x264] sm:$0xf]
                %335 = vst [vmem:[%s177 + $0x138] sm:$0xf] %v334
                %v336 = vld [vmem:[%s176 + $0x268] sm:$0xf]
                %337 = vst [vmem:[%s177 + $0x13c] sm:$0xf] %v336
                %v338 = vld [vmem:[%s176 + $0x26c] sm:$0xf]
                %339 = vst [vmem:[%s177 + $0x140] sm:$0xf] %v338
                %v340 = vld [vmem:[%s176 + $0x270] sm:$0xf]
                %341 = vst [vmem:[%s177 + $0x144] sm:$0xf] %v340
                %v342 = vld [vmem:[%s176 + $0x274] sm:$0xf]
                %343 = vst [vmem:[%s177 + $0x148] sm:$0xf] %v342
                %v344 = vld [vmem:[%s176 + $0x278] sm:$0xf]
                %345 = vst [vmem:[%s177 + $0x14c] sm:$0xf] %v344
                %v346 = vld [vmem:[%s176 + $0x27c] sm:$0xf]
                %347 = vst [vmem:[%s177 + $0x150] sm:$0xf] %v346
                %v348 = vld [vmem:[%s176 + $0x280] sm:$0xf]
                %349 = vst [vmem:[%s177 + $0x154] sm:$0xf] %v348
                %v350 = vld [vmem:[%s176 + $0x284] sm:$0xf]
                %351 = vst [vmem:[%s177 + $0x158] sm:$0xf] %v350
                %v352 = vld [vmem:[%s176 + $0x288] sm:$0xf]
                %353 = vst [vmem:[%s177 + $0x15c] sm:$0xf] %v352
                %v354 = vld [vmem:[%s176 + $0x28c] sm:$0xf]
                %355 = vst [vmem:[%s177 + $0x160] sm:$0xf] %v354
                %v356 = vld [vmem:[%s176 + $0x290] sm:$0xf]
                %357 = vst [vmem:[%s177 + $0x164] sm:$0xf] %v356
                %v358 = vld [vmem:[%s176 + $0x294] sm:$0xf]
                %359 = vst [vmem:[%s177 + $0x168] sm:$0xf] %v358
                %v360 = vld [vmem:[%s176 + $0x298] sm:$0xf]
                %361 = vst [vmem:[%s177 + $0x16c] sm:$0xf] %v360
                %v362 = vld [vmem:[%s176 + $0x29c] sm:$0xf]
                %363 = vst [vmem:[%s177 + $0x170] sm:$0xf] %v362
                %v364 = vld [vmem:[%s176 + $0x2a0] sm:$0xf]
                %365 = vst [vmem:[%s177 + $0x174] sm:$0xf] %v364
                %v366 = vld [vmem:[%s176 + $0x2a4] sm:$0xf]
                %367 = vst [vmem:[%s177 + $0x178] sm:$0xf] %v366
                %v368 = vld [vmem:[%s176 + $0x2a8] sm:$0xf]
                %369 = vst [vmem:[%s177 + $0x17c] sm:$0xf] %v368
                %v370 = vld [vmem:[%s176 + $0x2ac] sm:$0xf]
                %371 = vst [vmem:[%s177 + $0x180] sm:$0xf] %v370
                %v372 = vld [vmem:[%s176 + $0x2b0] sm:$0xf]
                %373 = vst [vmem:[%s177 + $0x184] sm:$0xf] %v372
                %v374 = vld [vmem:[%s176 + $0x2b4] sm:$0xf]
                %375 = vst [vmem:[%s177 + $0x188] sm:$0xf] %v374
                %v376 = vld [vmem:[%s176 + $0x2b8] sm:$0xf]
                %377 = vst [vmem:[%s177 + $0x18c] sm:$0xf] %v376
              $region49: #{cnn_forward.6} parent=43 // loop_footer
                %s175 = sadd.s32 1, %s171
              $region50: #{cnn_forward.6} parent=43 // loop_footer_branch
                %170 = sbr.rel target = $region46
              $region51: #{cnn_forward.6} parent=43 // loop_exit
                _
            $region44: #{cnn_forward.6} parent=35 // pred_fallthru
              _
          $region36: #{cnn_forward.6} parent=31 // pred_fallthru
            _
          %597 = vnop
        $region32: #{cnn_forward.6} parent=27 // pred_fallthru
          _
      $region28: #{cnn_forward.6} parent=5 // pred_fallthru
        _
      %p598 = scmp.le.s32.totalorder 1, %s10
      %p599 = scmp.lt.s32.totalorder %s10, 3
      %p600 = pnand %p598, %p599
      %p601 = pneg %p600
      // Predicated region
      $region70: #{cnn_forward.6} parent=5 // pred_check
        _
      $region71: #{cnn_forward.6} parent=5 // pred_check_branch
        %603 = sbr.rel (%p600) target = $region73
      $region72: #{cnn_forward.6} parent=5 // pred_region
        %s604 = ssub.s32 %s10, 1
        %s605 = sand.u32 %s23, 1
        %s606 = sand.u32 %s23, 1
        %s607 = smul.addr %s606, 400
        %s608 = scalar_lea.vmem [#allocation2], %s607
        // Predicated region
        $region74: #{cnn_forward.6} parent=72 // pred_check
          %p609 = pneg %p36
        $region75: #{cnn_forward.6} parent=72 // pred_check_branch
          %611 = sbr.rel (%p609) target = $region77
        $region76: #{cnn_forward.6} parent=72 // pred_region
          _
        $region77: #{cnn_forward.6} parent=72 // pred_fallthru
          _
        %s612 = sand.u32 %s23, 1
        %s613 = sand.u32 %s23, 1
        %s614 = smul.addr %s613, 400
        %s615 = scalar_lea.vmem [#allocation2], %s614
        %p616 = pneg %p36
        %p617 = pneg %p33
        %p618 = pneg %p57
        %p619 = pneg %p54
        %p620 = pneg %p78
        %p621 = pneg %p75
        %p622 = pneg %p99
        %p623 = pneg %p96
        %p624 = pneg %p125
        %p625 = pneg %p122
        %s626 = smul.u32 25, %s15
        %p627 = scmp.lt.s32.totalorder %s626, 49
        %s628 = scalar_select %p627, %s626, 49
        %s629 = smul.addr %s628, 4
        %s630 = scalar_lea.vmem %s4, %s629
        %s631 = smul.u32 25, %s15
        %s632 = smul.u32 25, %s15
        %p633 = scmp.lt.s32.totalorder %s632, 49
        %s634 = scalar_select %p633, %s632, 49
        %s635 = smul.addr %s634, 4
        %s636 = scalar_lea.vmem %s4, %s635
        %s637 = smul.u32 25, %s15
        %v639 = vld [vmem:[%s608] sm:$0xf]
        %v640 = vld [vmem:[%s608 + $0x4] sm:$0xf]
        %v641 = vld [vmem:[%s608 + $0x8] sm:$0xf]
        %v642 = vld [vmem:[%s608 + $0xc] sm:$0xf]
        %v643 = vld [vmem:[%s608 + $0x10] sm:$0xf]
        %v644 = vld [vmem:[%s608 + $0x14] sm:$0xf]
        %v645 = vld [vmem:[%s608 + $0x18] sm:$0xf]
        %v646 = vld [vmem:[%s608 + $0x1c] sm:$0xf]
        %v647 = vld [vmem:[%s608 + $0x20] sm:$0xf]
        %v648 = vld [vmem:[%s608 + $0x24] sm:$0xf]
        %v649 = vld [vmem:[%s608 + $0x28] sm:$0xf]
        %v650 = vld [vmem:[%s608 + $0x2c] sm:$0xf]
        %v651 = vld [vmem:[%s608 + $0x30] sm:$0xf]
        %v652 = vld [vmem:[%s608 + $0x34] sm:$0xf]
        %v653 = vld [vmem:[%s608 + $0x38] sm:$0xf]
        %v654 = vld [vmem:[%s608 + $0x3c] sm:$0xf]
        %v655 = vld [vmem:[%s608 + $0x40] sm:$0xf]
        %v656 = vld [vmem:[%s608 + $0x44] sm:$0xf]
        %v657 = vld [vmem:[%s608 + $0x48] sm:$0xf]
        %v658 = vld [vmem:[%s608 + $0x4c] sm:$0xf]
        %v659 = vld [vmem:[%s608 + $0x50] sm:$0xf]
        %v660 = vld [vmem:[%s608 + $0x54] sm:$0xf]
        %v661 = vld [vmem:[%s608 + $0x58] sm:$0xf]
        %v662 = vld [vmem:[%s608 + $0x5c] sm:$0xf]
        %v663 = vld [vmem:[%s608 + $0x60] sm:$0xf]
        %v664 = vld [vmem:[%s1] sm:$0xf]
        %v665 = vld [vmem:[%s1 + $0x4] sm:$0xf]
        %v666 = vld [vmem:[%s1 + $0x8] sm:$0xf]
        %v667 = vld [vmem:[%s1 + $0xc] sm:$0xf]
        %v668 = vld [vmem:[%s1 + $0x10] sm:$0xf]
        %v669 = vld [vmem:[%s1 + $0x14] sm:$0xf]
        %v670 = vld [vmem:[%s1 + $0x18] sm:$0xf]
        %v671 = vld [vmem:[%s1 + $0x1c] sm:$0xf]
        %v672 = vld [vmem:[%s1 + $0x20] sm:$0xf]
        %v673 = vld [vmem:[%s1 + $0x24] sm:$0xf]
        %v674 = vld [vmem:[%s1 + $0x28] sm:$0xf]
        %v675 = vld [vmem:[%s1 + $0x2c] sm:$0xf]
        %v676 = vld [vmem:[%s1 + $0x30] sm:$0xf]
        %v677 = vld [vmem:[%s1 + $0x34] sm:$0xf]
        %v678 = vld [vmem:[%s1 + $0x38] sm:$0xf]
        %v679 = vld [vmem:[%s1 + $0x3c] sm:$0xf]
        %v705 = vunpack.c.l.b16 %v639
        %v706 = vunpack.c.l.b16 %v640
        %v707 = vunpack.c.l.b16 %v641
        %v708 = vunpack.c.l.b16 %v642
        %v709 = vunpack.c.l.b16 %v643
        %v710 = vunpack.c.l.b16 %v644
        %v711 = vunpack.c.l.b16 %v645
        %v712 = vunpack.c.l.b16 %v646
        %v713 = vunpack.c.l.b16 %v647
        %v714 = vunpack.c.l.b16 %v648
        %v715 = vunpack.c.l.b16 %v649
        %v716 = vunpack.c.l.b16 %v650
        %v717 = vunpack.c.l.b16 %v651
        %v718 = vunpack.c.l.b16 %v652
        %v719 = vunpack.c.l.b16 %v653
        %v720 = vunpack.c.l.b16 %v654
        %v721 = vunpack.c.l.b16 %v655
        %v722 = vunpack.c.l.b16 %v656
        %v723 = vunpack.c.l.b16 %v657
        %v724 = vunpack.c.l.b16 %v658
        %v725 = vunpack.c.l.b16 %v659
        %v726 = vunpack.c.l.b16 %v660
        %v727 = vunpack.c.l.b16 %v661
        %v728 = vunpack.c.l.b16 %v662
        %v729 = vunpack.c.l.b16 %v663
        %v730 = vpack.c.b16 %v706, %v705
        %v731 = vpack.c.b16 %v708, %v707
        %v732 = vpack.c.b16 %v710, %v709
        %v733 = vpack.c.b16 %v712, %v711
        %v734 = vpack.c.b16 %v714, %v713
        %v735 = vpack.c.b16 %v716, %v715
        %v736 = vpack.c.b16 %v718, %v717
        %v737 = vpack.c.b16 %v720, %v719
        %v738 = vpack.c.b16 %v722, %v721
        %v739 = vpack.c.b16 %v724, %v723
        %v740 = vpack.c.b16 %v726, %v725
        %v741 = vpack.c.b16 %v728, %v727
        %v742 = vpack.c.b16 %v729, %v729
        %v772 = vunpack.c.l.b16 %v664
        %v773 = vunpack.c.l.b16 %v665
        %v774 = vunpack.c.l.b16 %v666
        %v775 = vunpack.c.l.b16 %v667
        %v776 = vunpack.c.l.b16 %v668
        %v777 = vunpack.c.l.b16 %v669
        %v778 = vunpack.c.l.b16 %v670
        %v779 = vunpack.c.l.b16 %v671
        %v780 = vunpack.c.l.b16 %v672
        %v781 = vunpack.c.l.b16 %v673
        %v782 = vunpack.c.l.b16 %v674
        %v783 = vunpack.c.l.b16 %v675
        %v784 = vunpack.c.l.b16 %v676
        %v785 = vunpack.c.l.b16 %v677
        %v786 = vunpack.c.l.b16 %v678
        %v787 = vunpack.c.l.b16 %v679
        %v788 = vpack.c.b16 %v773, %v772
        %v789 = vpack.c.b16 %v775, %v774
        %v790 = vpack.c.b16 %v777, %v776
        %v791 = vpack.c.b16 %v779, %v778
        %v792 = vpack.c.b16 %v781, %v780
        %v793 = vpack.c.b16 %v783, %v782
        %v794 = vpack.c.b16 %v785, %v784
        %v795 = vpack.c.b16 %v787, %v786
        %804 = vmatprep.subr.bf16.mxu0 0
        %805 = vmatpush1.bf16.msra.mxu0 %v788
        %806 = vmatprep.subr.bf16.mxu0 0
        %807 = vmatpush1.bf16.msra.mxu0 %v789
        %808 = vmatprep.subr.bf16.mxu0 0
        %809 = vmatpush1.bf16.msra.mxu0 %v790
        %810 = vmatprep.subr.bf16.mxu0 0
        %811 = vmatpush1.bf16.msra.mxu0 %v791
        %812 = vmatprep.subr.bf16.mxu0 0
        %813 = vmatpush1.bf16.msra.mxu0 %v792
        %814 = vmatprep.subr.bf16.mxu0 0
        %815 = vmatpush1.bf16.msra.mxu0 %v793
        %816 = vmatprep.subr.bf16.mxu0 0
        %817 = vmatpush1.bf16.msra.mxu0 %v794
        %818 = vmatprep.subr.bf16.mxu0 0
        %819 = vmatpush1.bf16.msra.mxu0 %v795
        %820 = vmatprep.subr.bf16.mxu0 0
        %821 = vmatpush1.bf16.msra.mxu0 0
        %822 = vmatprep.subr.bf16.mxu0 0
        %823 = vmatpush1.bf16.msra.mxu0 0
        %824 = vmatprep.subr.bf16.mxu0 0
        %825 = vmatpush1.bf16.msra.mxu0 0
        %826 = vmatprep.subr.bf16.mxu0 0
        %827 = vmatpush1.bf16.msra.mxu0 0
        %828 = vmatprep.subr.bf16.mxu0 0
        %829 = vmatpush1.bf16.msra.mxu0 0
        %830 = vmatprep.subr.bf16.mxu0 0
        %831 = vmatpush1.bf16.msra.mxu0 0
        %832 = vmatprep.subr.bf16.mxu0 0
        %833 = vmatpush1.bf16.msra.mxu0 0
        %834 = vmatprep.subr.bf16.mxu0 0
        %835 = vmatpush1.bf16.msra.mxu0 0
        %836 = vmatprep.mubr.bf16.mxu0 0
        %837 = vmatmul.mubr.bf16.gmra.mrb[0].mxu0 %v730
        %v838 = vpop.f32.mrb[0].mxu0
        %v839 = vadd.f32 0.0, %v838
        %v840 = vpop.f32.mrb[0].mxu0
        %v841 = vpop.f32.mrb[0].mxu0
        %v842 = vadd.f32 0.0, %v841
        %v843 = vpop.f32.mrb[0].mxu0
        %844 = vmatprep.mubr.bf16.mxu0 0
        %845 = vmatmul.mubr.bf16.gmra.mrb[0].mxu0 %v731
        %v846 = vpop.f32.mrb[0].mxu0
        %v847 = vadd.f32 0.0, %v846
        %v848 = vpop.f32.mrb[0].mxu0
        %v849 = vpop.f32.mrb[0].mxu0
        %v850 = vadd.f32 0.0, %v849
        %v851 = vpop.f32.mrb[0].mxu0
        %852 = vmatprep.mubr.bf16.mxu0 0
        %853 = vmatmul.mubr.bf16.gmra.mrb[0].mxu0 %v732
        %v854 = vpop.f32.mrb[0].mxu0
        %v855 = vadd.f32 0.0, %v854
        %v856 = vpop.f32.mrb[0].mxu0
        %v857 = vpop.f32.mrb[0].mxu0
        %v858 = vadd.f32 0.0, %v857
        %v859 = vpop.f32.mrb[0].mxu0
        %860 = vmatprep.mubr.bf16.mxu0 0
        %861 = vmatmul.mubr.bf16.gmra.mrb[0].mxu0 %v733
        %v862 = vpop.f32.mrb[0].mxu0
        %v863 = vadd.f32 0.0, %v862
        %v864 = vpop.f32.mrb[0].mxu0
        %v865 = vpop.f32.mrb[0].mxu0
        %v866 = vadd.f32 0.0, %v865
        %v867 = vpop.f32.mrb[0].mxu0
        %868 = vmatprep.mubr.bf16.mxu0 0
        %869 = vmatmul.mubr.bf16.gmra.mrb[0].mxu0 %v734
        %v870 = vpop.f32.mrb[0].mxu0
        %v871 = vadd.f32 0.0, %v870
        %v872 = vpop.f32.mrb[0].mxu0
        %v873 = vpop.f32.mrb[0].mxu0
        %v874 = vadd.f32 0.0, %v873
        %v875 = vpop.f32.mrb[0].mxu0
        %876 = vmatprep.mubr.bf16.mxu0 0
        %877 = vmatmul.mubr.bf16.gmra.mrb[0].mxu0 %v735
        %v878 = vpop.f32.mrb[0].mxu0
        %v879 = vadd.f32 0.0, %v878
        %v880 = vpop.f32.mrb[0].mxu0
        %v881 = vpop.f32.mrb[0].mxu0
        %v882 = vadd.f32 0.0, %v881
        %v883 = vpop.f32.mrb[0].mxu0
        %884 = vmatprep.mubr.bf16.mxu0 0
        %885 = vmatmul.mubr.bf16.gmra.mrb[0].mxu0 %v736
        %v886 = vpop.f32.mrb[0].mxu0
        %v887 = vadd.f32 0.0, %v886
        %v888 = vpop.f32.mrb[0].mxu0
        %v889 = vpop.f32.mrb[0].mxu0
        %v890 = vadd.f32 0.0, %v889
        %v891 = vpop.f32.mrb[0].mxu0
        %892 = vmatprep.mubr.bf16.mxu0 0
        %893 = vmatmul.mubr.bf16.gmra.mrb[0].mxu0 %v737
        %v894 = vpop.f32.mrb[0].mxu0
        %v895 = vadd.f32 0.0, %v894
        %v896 = vpop.f32.mrb[0].mxu0
        %v897 = vpop.f32.mrb[0].mxu0
        %v898 = vadd.f32 0.0, %v897
        %v899 = vpop.f32.mrb[0].mxu0
        %900 = vmatprep.mubr.bf16.mxu0 0
        %901 = vmatmul.mubr.bf16.gmra.mrb[0].mxu0 %v738
        %v902 = vpop.f32.mrb[0].mxu0
        %v903 = vadd.f32 0.0, %v902
        %v904 = vpop.f32.mrb[0].mxu0
        %v905 = vpop.f32.mrb[0].mxu0
        %v906 = vadd.f32 0.0, %v905
        %v907 = vpop.f32.mrb[0].mxu0
        %908 = vmatprep.mubr.bf16.mxu0 0
        %909 = vmatmul.mubr.bf16.gmra.mrb[0].mxu0 %v739
        %v910 = vpop.f32.mrb[0].mxu0
        %v911 = vadd.f32 0.0, %v910
        %v912 = vpop.f32.mrb[0].mxu0
        %v913 = vpop.f32.mrb[0].mxu0
        %v914 = vadd.f32 0.0, %v913
        %v915 = vpop.f32.mrb[0].mxu0
        %916 = vmatprep.mubr.bf16.mxu0 0
        %917 = vmatmul.mubr.bf16.gmra.mrb[0].mxu0 %v740
        %v918 = vpop.f32.mrb[0].mxu0
        %v919 = vadd.f32 0.0, %v918
        %v920 = vpop.f32.mrb[0].mxu0
        %v921 = vpop.f32.mrb[0].mxu0
        %v922 = vadd.f32 0.0, %v921
        %v923 = vpop.f32.mrb[0].mxu0
        %924 = vmatprep.mubr.bf16.mxu0 0
        %925 = vmatmul.mubr.bf16.gmra.mrb[0].mxu0 %v741
        %v926 = vpop.f32.mrb[0].mxu0
        %v927 = vadd.f32 0.0, %v926
        %v928 = vpop.f32.mrb[0].mxu0
        %v929 = vpop.f32.mrb[0].mxu0
        %v930 = vadd.f32 0.0, %v929
        %v931 = vpop.f32.mrb[0].mxu0
        %932 = vmatprep.mubr.bf16.mxu0 0
        %933 = vmatmul.mubr.bf16.gmra.mrb[0].mxu0 %v742
        %v934 = vpop.f32.mrb[0].mxu0
        %v935 = vadd.f32 0.0, %v934
        %v936 = vpop.f32.mrb[0].mxu0
        %v937 = vpop.f32.mrb[0].mxu0
        %v938 = vpop.f32.mrb[0].mxu0
        %939 = vdwg.mxu0
        %v940 = vld [vmem:[%s2] sm:$0x1]
        %v942 = vlaneseq
        %v943 = vshrl.u32 %v942, 7
        %v944 = vsub.s32 0, %v943
        %v945 = vrot.slane %v940, %v944
        %v947 = vmul.f32 %v839, %v945
        %v948 = vmul.f32 %v842, %v945
        %v949 = vmul.f32 %v847, %v945
        %v950 = vmul.f32 %v850, %v945
        %v951 = vmul.f32 %v855, %v945
        %v952 = vmul.f32 %v858, %v945
        %v953 = vmul.f32 %v863, %v945
        %v954 = vmul.f32 %v866, %v945
        %v955 = vmul.f32 %v871, %v945
        %v956 = vmul.f32 %v874, %v945
        %v957 = vmul.f32 %v879, %v945
        %v958 = vmul.f32 %v882, %v945
        %v959 = vmul.f32 %v887, %v945
        %v960 = vmul.f32 %v890, %v945
        %v961 = vmul.f32 %v895, %v945
        %v962 = vmul.f32 %v898, %v945
        %v963 = vmul.f32 %v903, %v945
        %v964 = vmul.f32 %v906, %v945
        %v965 = vmul.f32 %v911, %v945
        %v966 = vmul.f32 %v914, %v945
        %v967 = vmul.f32 %v919, %v945
        %v968 = vmul.f32 %v922, %v945
        %v969 = vmul.f32 %v927, %v945
        %v970 = vmul.f32 %v930, %v945
        %v971 = vmul.f32 %v935, %v945
        %v972 = vld [vmem:[%s3] sm:$0x1]
        %v974 = vlaneseq
        %v975 = vshrl.u32 %v974, 7
        %v976 = vsub.s32 0, %v975
        %v977 = vrot.slane %v972, %v976
        %v979 = vadd.f32 %v947, %v977
        %v980 = vadd.f32 %v948, %v977
        %v981 = vadd.f32 %v949, %v977
        %v982 = vadd.f32 %v950, %v977
        %v983 = vadd.f32 %v951, %v977
        %v984 = vadd.f32 %v952, %v977
        %v985 = vadd.f32 %v953, %v977
        %v986 = vadd.f32 %v954, %v977
        %v987 = vadd.f32 %v955, %v977
        %v988 = vadd.f32 %v956, %v977
        %v989 = vadd.f32 %v957, %v977
        %v990 = vadd.f32 %v958, %v977
        %v991 = vadd.f32 %v959, %v977
        %v992 = vadd.f32 %v960, %v977
        %v993 = vadd.f32 %v961, %v977
        %v994 = vadd.f32 %v962, %v977
        %v995 = vadd.f32 %v963, %v977
        %v996 = vadd.f32 %v964, %v977
        %v997 = vadd.f32 %v965, %v977
        %v998 = vadd.f32 %v966, %v977
        %v999 = vadd.f32 %v967, %v977
        %v1000 = vadd.f32 %v968, %v977
        %v1001 = vadd.f32 %v969, %v977
        %v1002 = vadd.f32 %v970, %v977
        %v1003 = vadd.f32 %v971, %v977
        %v1004 = vmax.f32 %v979, 0.0
        %v1005 = vmax.f32 %v980, 0.0
        %v1006 = vmax.f32 %v981, 0.0
        %v1007 = vmax.f32 %v982, 0.0
        %v1008 = vmax.f32 %v983, 0.0
        %v1009 = vmax.f32 %v984, 0.0
        %v1010 = vmax.f32 %v985, 0.0
        %v1011 = vmax.f32 %v986, 0.0
        %v1012 = vmax.f32 %v987, 0.0
        %v1013 = vmax.f32 %v988, 0.0
        %v1014 = vmax.f32 %v989, 0.0
        %v1015 = vmax.f32 %v990, 0.0
        %v1016 = vmax.f32 %v991, 0.0
        %v1017 = vmax.f32 %v992, 0.0
        %v1018 = vmax.f32 %v993, 0.0
        %v1019 = vmax.f32 %v994, 0.0
        %v1020 = vmax.f32 %v995, 0.0
        %v1021 = vmax.f32 %v996, 0.0
        %v1022 = vmax.f32 %v997, 0.0
        %v1023 = vmax.f32 %v998, 0.0
        %v1024 = vmax.f32 %v999, 0.0
        %v1025 = vmax.f32 %v1000, 0.0
        %v1026 = vmax.f32 %v1001, 0.0
        %v1027 = vmax.f32 %v1002, 0.0
        %v1028 = vmax.f32 %v1003, 0.0
        %s1029 = scalar_lea.vmem %s608, 100 [#allocation2]
        %v1030 = vld [vmem:[%s1029] sm:$0xf]
        %v1031 = vld [vmem:[%s1029 + $0x4] sm:$0xf]
        %v1032 = vld [vmem:[%s1029 + $0x8] sm:$0xf]
        %v1033 = vld [vmem:[%s1029 + $0xc] sm:$0xf]
        %v1034 = vld [vmem:[%s1029 + $0x10] sm:$0xf]
        %v1035 = vld [vmem:[%s1029 + $0x14] sm:$0xf]
        %v1036 = vld [vmem:[%s1029 + $0x18] sm:$0xf]
        %v1037 = vld [vmem:[%s1029 + $0x1c] sm:$0xf]
        %v1038 = vld [vmem:[%s1029 + $0x20] sm:$0xf]
        %v1039 = vld [vmem:[%s1029 + $0x24] sm:$0xf]
        %v1040 = vld [vmem:[%s1029 + $0x28] sm:$0xf]
        %v1041 = vld [vmem:[%s1029 + $0x2c] sm:$0xf]
        %v1042 = vld [vmem:[%s1029 + $0x30] sm:$0xf]
        %v1043 = vld [vmem:[%s1029 + $0x34] sm:$0xf]
        %v1044 = vld [vmem:[%s1029 + $0x38] sm:$0xf]
        %v1045 = vld [vmem:[%s1029 + $0x3c] sm:$0xf]
        %v1046 = vld [vmem:[%s1029 + $0x40] sm:$0xf]
        %v1047 = vld [vmem:[%s1029 + $0x44] sm:$0xf]
        %v1048 = vld [vmem:[%s1029 + $0x48] sm:$0xf]
        %v1049 = vld [vmem:[%s1029 + $0x4c] sm:$0xf]
        %v1050 = vld [vmem:[%s1029 + $0x50] sm:$0xf]
        %v1051 = vld [vmem:[%s1029 + $0x54] sm:$0xf]
        %v1052 = vld [vmem:[%s1029 + $0x58] sm:$0xf]
        %v1053 = vld [vmem:[%s1029 + $0x5c] sm:$0xf]
        %v1054 = vld [vmem:[%s1029 + $0x60] sm:$0xf]
        %v1080 = vunpack.c.l.b16 %v1030
        %v1081 = vunpack.c.l.b16 %v1031
        %v1082 = vunpack.c.l.b16 %v1032
        %v1083 = vunpack.c.l.b16 %v1033
        %v1084 = vunpack.c.l.b16 %v1034
        %v1085 = vunpack.c.l.b16 %v1035
        %v1086 = vunpack.c.l.b16 %v1036
        %v1087 = vunpack.c.l.b16 %v1037
        %v1088 = vunpack.c.l.b16 %v1038
        %v1089 = vunpack.c.l.b16 %v1039
        %v1090 = vunpack.c.l.b16 %v1040
        %v1091 = vunpack.c.l.b16 %v1041
        %v1092 = vunpack.c.l.b16 %v1042
        %v1093 = vunpack.c.l.b16 %v1043
        %v1094 = vunpack.c.l.b16 %v1044
        %v1095 = vunpack.c.l.b16 %v1045
        %v1096 = vunpack.c.l.b16 %v1046
        %v1097 = vunpack.c.l.b16 %v1047
        %v1098 = vunpack.c.l.b16 %v1048
        %v1099 = vunpack.c.l.b16 %v1049
        %v1100 = vunpack.c.l.b16 %v1050
        %v1101 = vunpack.c.l.b16 %v1051
        %v1102 = vunpack.c.l.b16 %v1052
        %v1103 = vunpack.c.l.b16 %v1053
        %v1104 = vunpack.c.l.b16 %v1054
        %v1105 = vpack.c.b16 %v1081, %v1080
        %v1106 = vpack.c.b16 %v1083, %v1082
        %v1107 = vpack.c.b16 %v1085, %v1084
        %v1108 = vpack.c.b16 %v1087, %v1086
        %v1109 = vpack.c.b16 %v1089, %v1088
        %v1110 = vpack.c.b16 %v1091, %v1090
        %v1111 = vpack.c.b16 %v1093, %v1092
        %v1112 = vpack.c.b16 %v1095, %v1094
        %v1113 = vpack.c.b16 %v1097, %v1096
        %v1114 = vpack.c.b16 %v1099, %v1098
        %v1115 = vpack.c.b16 %v1101, %v1100
        %v1116 = vpack.c.b16 %v1103, %v1102
        %v1117 = vpack.c.b16 %v1104, %v1104
        %1131 = vmatprep.subr.bf16.mxu0 0
        %1132 = vmatpush1.bf16.msra.mxu0 %v788
        %1133 = vmatprep.subr.bf16.mxu0 0
        %1134 = vmatpush1.bf16.msra.mxu0 %v789
        %1135 = vmatprep.subr.bf16.mxu0 0
        %1136 = vmatpush1.bf16.msra.mxu0 %v790
        %1137 = vmatprep.subr.bf16.mxu0 0
        %1138 = vmatpush1.bf16.msra.mxu0 %v791
        %1139 = vmatprep.subr.bf16.mxu0 0
        %1140 = vmatpush1.bf16.msra.mxu0 %v792
        %1141 = vmatprep.subr.bf16.mxu0 0
        %1142 = vmatpush1.bf16.msra.mxu0 %v793
        %1143 = vmatprep.subr.bf16.mxu0 0
        %1144 = vmatpush1.bf16.msra.mxu0 %v794
        %1145 = vmatprep.subr.bf16.mxu0 0
        %1146 = vmatpush1.bf16.msra.mxu0 %v795
        %1147 = vmatprep.subr.bf16.mxu0 0
        %1148 = vmatpush1.bf16.msra.mxu0 0
        %1149 = vmatprep.subr.bf16.mxu0 0
        %1150 = vmatpush1.bf16.msra.mxu0 0
        %1151 = vmatprep.subr.bf16.mxu0 0
        %1152 = vmatpush1.bf16.msra.mxu0 0
        %1153 = vmatprep.subr.bf16.mxu0 0
        %1154 = vmatpush1.bf16.msra.mxu0 0
        %1155 = vmatprep.subr.bf16.mxu0 0
        %1156 = vmatpush1.bf16.msra.mxu0 0
        %1157 = vmatprep.subr.bf16.mxu0 0
        %1158 = vmatpush1.bf16.msra.mxu0 0
        %1159 = vmatprep.subr.bf16.mxu0 0
        %1160 = vmatpush1.bf16.msra.mxu0 0
        %1161 = vmatprep.subr.bf16.mxu0 0
        %1162 = vmatpush1.bf16.msra.mxu0 0
        %1163 = vmatprep.mubr.bf16.mxu0 0
        %1164 = vmatmul.mubr.bf16.gmra.mrb[0].mxu0 %v1105
        %v1165 = vpop.f32.mrb[0].mxu0
        %v1166 = vadd.f32 0.0, %v1165
        %v1167 = vpop.f32.mrb[0].mxu0
        %v1168 = vpop.f32.mrb[0].mxu0
        %v1169 = vadd.f32 0.0, %v1168
        %v1170 = vpop.f32.mrb[0].mxu0
        %1171 = vmatprep.mubr.bf16.mxu0 0
        %1172 = vmatmul.mubr.bf16.gmra.mrb[0].mxu0 %v1106
        %v1173 = vpop.f32.mrb[0].mxu0
        %v1174 = vadd.f32 0.0, %v1173
        %v1175 = vpop.f32.mrb[0].mxu0
        %v1176 = vpop.f32.mrb[0].mxu0
        %v1177 = vadd.f32 0.0, %v1176
        %v1178 = vpop.f32.mrb[0].mxu0
        %1179 = vmatprep.mubr.bf16.mxu0 0
        %1180 = vmatmul.mubr.bf16.gmra.mrb[0].mxu0 %v1107
        %v1181 = vpop.f32.mrb[0].mxu0
        %v1182 = vadd.f32 0.0, %v1181
        %v1183 = vpop.f32.mrb[0].mxu0
        %v1184 = vpop.f32.mrb[0].mxu0
        %v1185 = vadd.f32 0.0, %v1184
        %v1186 = vpop.f32.mrb[0].mxu0
        %1187 = vmatprep.mubr.bf16.mxu0 0
        %1188 = vmatmul.mubr.bf16.gmra.mrb[0].mxu0 %v1108
        %v1189 = vpop.f32.mrb[0].mxu0
        %v1190 = vadd.f32 0.0, %v1189
        %v1191 = vpop.f32.mrb[0].mxu0
        %v1192 = vpop.f32.mrb[0].mxu0
        %v1193 = vadd.f32 0.0, %v1192
        %v1194 = vpop.f32.mrb[0].mxu0
        %1195 = vmatprep.mubr.bf16.mxu0 0
        %1196 = vmatmul.mubr.bf16.gmra.mrb[0].mxu0 %v1109
        %v1197 = vpop.f32.mrb[0].mxu0
        %v1198 = vadd.f32 0.0, %v1197
        %v1199 = vpop.f32.mrb[0].mxu0
        %v1200 = vpop.f32.mrb[0].mxu0
        %v1201 = vadd.f32 0.0, %v1200
        %v1202 = vpop.f32.mrb[0].mxu0
        %1203 = vmatprep.mubr.bf16.mxu0 0
        %1204 = vmatmul.mubr.bf16.gmra.mrb[0].mxu0 %v1110
        %v1205 = vpop.f32.mrb[0].mxu0
        %v1206 = vadd.f32 0.0, %v1205
        %v1207 = vpop.f32.mrb[0].mxu0
        %v1208 = vpop.f32.mrb[0].mxu0
        %v1209 = vadd.f32 0.0, %v1208
        %v1210 = vpop.f32.mrb[0].mxu0
        %1211 = vmatprep.mubr.bf16.mxu0 0
        %1212 = vmatmul.mubr.bf16.gmra.mrb[0].mxu0 %v1111
        %v1213 = vpop.f32.mrb[0].mxu0
        %v1214 = vadd.f32 0.0, %v1213
        %v1215 = vpop.f32.mrb[0].mxu0
        %v1216 = vpop.f32.mrb[0].mxu0
        %v1217 = vadd.f32 0.0, %v1216
        %v1218 = vpop.f32.mrb[0].mxu0
        %1219 = vmatprep.mubr.bf16.mxu0 0
        %1220 = vmatmul.mubr.bf16.gmra.mrb[0].mxu0 %v1112
        %v1221 = vpop.f32.mrb[0].mxu0
        %v1222 = vadd.f32 0.0, %v1221
        %v1223 = vpop.f32.mrb[0].mxu0
        %v1224 = vpop.f32.mrb[0].mxu0
        %v1225 = vadd.f32 0.0, %v1224
        %v1226 = vpop.f32.mrb[0].mxu0
        %1227 = vmatprep.mubr.bf16.mxu0 0
        %1228 = vmatmul.mubr.bf16.gmra.mrb[0].mxu0 %v1113
        %v1229 = vpop.f32.mrb[0].mxu0
        %v1230 = vadd.f32 0.0, %v1229
        %v1231 = vpop.f32.mrb[0].mxu0
        %v1232 = vpop.f32.mrb[0].mxu0
        %v1233 = vadd.f32 0.0, %v1232
        %v1234 = vpop.f32.mrb[0].mxu0
        %1235 = vmatprep.mubr.bf16.mxu0 0
        %1236 = vmatmul.mubr.bf16.gmra.mrb[0].mxu0 %v1114
        %v1237 = vpop.f32.mrb[0].mxu0
        %v1238 = vadd.f32 0.0, %v1237
        %v1239 = vpop.f32.mrb[0].mxu0
        %v1240 = vpop.f32.mrb[0].mxu0
        %v1241 = vadd.f32 0.0, %v1240
        %v1242 = vpop.f32.mrb[0].mxu0
        %1243 = vmatprep.mubr.bf16.mxu0 0
        %1244 = vmatmul.mubr.bf16.gmra.mrb[0].mxu0 %v1115
        %v1245 = vpop.f32.mrb[0].mxu0
        %v1246 = vadd.f32 0.0, %v1245
        %v1247 = vpop.f32.mrb[0].mxu0
        %v1248 = vpop.f32.mrb[0].mxu0
        %v1249 = vadd.f32 0.0, %v1248
        %v1250 = vpop.f32.mrb[0].mxu0
        %1251 = vmatprep.mubr.bf16.mxu0 0
        %1252 = vmatmul.mubr.bf16.gmra.mrb[0].mxu0 %v1116
        %v1253 = vpop.f32.mrb[0].mxu0
        %v1254 = vadd.f32 0.0, %v1253
        %v1255 = vpop.f32.mrb[0].mxu0
        %v1256 = vpop.f32.mrb[0].mxu0
        %v1257 = vadd.f32 0.0, %v1256
        %v1258 = vpop.f32.mrb[0].mxu0
        %1259 = vmatprep.mubr.bf16.mxu0 0
        %1260 = vmatmul.mubr.bf16.gmra.mrb[0].mxu0 %v1117
        %v1261 = vpop.f32.mrb[0].mxu0
        %v1262 = vadd.f32 0.0, %v1261
        %v1263 = vpop.f32.mrb[0].mxu0
        %v1264 = vpop.f32.mrb[0].mxu0
        %v1265 = vpop.f32.mrb[0].mxu0
        %1266 = vdwg.mxu0
        %v1267 = vmul.f32 %v1166, %v945
        %v1268 = vmul.f32 %v1169, %v945
        %v1269 = vmul.f32 %v1174, %v945
        %v1270 = vmul.f32 %v1177, %v945
        %v1271 = vmul.f32 %v1182, %v945
        %v1272 = vmul.f32 %v1185, %v945
        %v1273 = vmul.f32 %v1190, %v945
        %v1274 = vmul.f32 %v1193, %v945
        %v1275 = vmul.f32 %v1198, %v945
        %v1276 = vmul.f32 %v1201, %v945
        %v1277 = vmul.f32 %v1206, %v945
        %v1278 = vmul.f32 %v1209, %v945
        %v1279 = vmul.f32 %v1214, %v945
        %v1280 = vmul.f32 %v1217, %v945
        %v1281 = vmul.f32 %v1222, %v945
        %v1282 = vmul.f32 %v1225, %v945
        %v1283 = vmul.f32 %v1230, %v945
        %v1284 = vmul.f32 %v1233, %v945
        %v1285 = vmul.f32 %v1238, %v945
        %v1286 = vmul.f32 %v1241, %v945
        %v1287 = vmul.f32 %v1246, %v945
        %v1288 = vmul.f32 %v1249, %v945
        %v1289 = vmul.f32 %v1254, %v945
        %v1290 = vmul.f32 %v1257, %v945
        %v1291 = vmul.f32 %v1262, %v945
        %v1292 = vadd.f32 %v1267, %v977
        %v1293 = vadd.f32 %v1268, %v977
        %v1294 = vadd.f32 %v1269, %v977
        %v1295 = vadd.f32 %v1270, %v977
        %v1296 = vadd.f32 %v1271, %v977
        %v1297 = vadd.f32 %v1272, %v977
        %v1298 = vadd.f32 %v1273, %v977
        %v1299 = vadd.f32 %v1274, %v977
        %v1300 = vadd.f32 %v1275, %v977
        %v1301 = vadd.f32 %v1276, %v977
        %v1302 = vadd.f32 %v1277, %v977
        %v1303 = vadd.f32 %v1278, %v977
        %v1304 = vadd.f32 %v1279, %v977
        %v1305 = vadd.f32 %v1280, %v977
        %v1306 = vadd.f32 %v1281, %v977
        %v1307 = vadd.f32 %v1282, %v977
        %v1308 = vadd.f32 %v1283, %v977
        %v1309 = vadd.f32 %v1284, %v977
        %v1310 = vadd.f32 %v1285, %v977
        %v1311 = vadd.f32 %v1286, %v977
        %v1312 = vadd.f32 %v1287, %v977
        %v1313 = vadd.f32 %v1288, %v977
        %v1314 = vadd.f32 %v1289, %v977
        %v1315 = vadd.f32 %v1290, %v977
        %v1316 = vadd.f32 %v1291, %v977
        %v1317 = vmax.f32 %v1292, 0.0
        %v1318 = vmax.f32 %v1293, 0.0
        %v1319 = vmax.f32 %v1294, 0.0
        %v1320 = vmax.f32 %v1295, 0.0
        %v1321 = vmax.f32 %v1296, 0.0
        %v1322 = vmax.f32 %v1297, 0.0
        %v1323 = vmax.f32 %v1298, 0.0
        %v1324 = vmax.f32 %v1299, 0.0
        %v1325 = vmax.f32 %v1300, 0.0
        %v1326 = vmax.f32 %v1301, 0.0
        %v1327 = vmax.f32 %v1302, 0.0
        %v1328 = vmax.f32 %v1303, 0.0
        %v1329 = vmax.f32 %v1304, 0.0
        %v1330 = vmax.f32 %v1305, 0.0
        %v1331 = vmax.f32 %v1306, 0.0
        %v1332 = vmax.f32 %v1307, 0.0
        %v1333 = vmax.f32 %v1308, 0.0
        %v1334 = vmax.f32 %v1309, 0.0
        %v1335 = vmax.f32 %v1310, 0.0
        %v1336 = vmax.f32 %v1311, 0.0
        %v1337 = vmax.f32 %v1312, 0.0
        %v1338 = vmax.f32 %v1313, 0.0
        %v1339 = vmax.f32 %v1314, 0.0
        %v1340 = vmax.f32 %v1315, 0.0
        %v1341 = vmax.f32 %v1316, 0.0
        %v1342 = vmax.f32 %v1004, %v1317
        %v1343 = vmax.f32 %v1005, %v1318
        %v1344 = vmax.f32 %v1006, %v1319
        %v1345 = vmax.f32 %v1007, %v1320
        %v1346 = vmax.f32 %v1008, %v1321
        %v1347 = vmax.f32 %v1009, %v1322
        %v1348 = vmax.f32 %v1010, %v1323
        %v1349 = vmax.f32 %v1011, %v1324
        %v1350 = vmax.f32 %v1012, %v1325
        %v1351 = vmax.f32 %v1013, %v1326
        %v1352 = vmax.f32 %v1014, %v1327
        %v1353 = vmax.f32 %v1015, %v1328
        %v1354 = vmax.f32 %v1016, %v1329
        %v1355 = vmax.f32 %v1017, %v1330
        %v1356 = vmax.f32 %v1018, %v1331
        %v1357 = vmax.f32 %v1019, %v1332
        %v1358 = vmax.f32 %v1020, %v1333
        %v1359 = vmax.f32 %v1021, %v1334
        %v1360 = vmax.f32 %v1022, %v1335
        %v1361 = vmax.f32 %v1023, %v1336
        %v1362 = vmax.f32 %v1024, %v1337
        %v1363 = vmax.f32 %v1025, %v1338
        %v1364 = vmax.f32 %v1026, %v1339
        %v1365 = vmax.f32 %v1027, %v1340
        %v1366 = vmax.f32 %v1028, %v1341
        %s1367 = scalar_lea.vmem %s608, 200 [#allocation2]
        %v1368 = vld [vmem:[%s1367] sm:$0xf]
        %v1369 = vld [vmem:[%s1367 + $0x4] sm:$0xf]
        %v1370 = vld [vmem:[%s1367 + $0x8] sm:$0xf]
        %v1371 = vld [vmem:[%s1367 + $0xc] sm:$0xf]
        %v1372 = vld [vmem:[%s1367 + $0x10] sm:$0xf]
        %v1373 = vld [vmem:[%s1367 + $0x14] sm:$0xf]
        %v1374 = vld [vmem:[%s1367 + $0x18] sm:$0xf]
        %v1375 = vld [vmem:[%s1367 + $0x1c] sm:$0xf]
        %v1376 = vld [vmem:[%s1367 + $0x20] sm:$0xf]
        %v1377 = vld [vmem:[%s1367 + $0x24] sm:$0xf]
        %v1378 = vld [vmem:[%s1367 + $0x28] sm:$0xf]
        %v1379 = vld [vmem:[%s1367 + $0x2c] sm:$0xf]
        %v1380 = vld [vmem:[%s1367 + $0x30] sm:$0xf]
        %v1381 = vld [vmem:[%s1367 + $0x34] sm:$0xf]
        %v1382 = vld [vmem:[%s1367 + $0x38] sm:$0xf]
        %v1383 = vld [vmem:[%s1367 + $0x3c] sm:$0xf]
        %v1384 = vld [vmem:[%s1367 + $0x40] sm:$0xf]
        %v1385 = vld [vmem:[%s1367 + $0x44] sm:$0xf]
        %v1386 = vld [vmem:[%s1367 + $0x48] sm:$0xf]
        %v1387 = vld [vmem:[%s1367 + $0x4c] sm:$0xf]
        %v1388 = vld [vmem:[%s1367 + $0x50] sm:$0xf]
        %v1389 = vld [vmem:[%s1367 + $0x54] sm:$0xf]
        %v1390 = vld [vmem:[%s1367 + $0x58] sm:$0xf]
        %v1391 = vld [vmem:[%s1367 + $0x5c] sm:$0xf]
        %v1392 = vld [vmem:[%s1367 + $0x60] sm:$0xf]
        %v1418 = vunpack.c.l.b16 %v1368
        %v1419 = vunpack.c.l.b16 %v1369
        %v1420 = vunpack.c.l.b16 %v1370
        %v1421 = vunpack.c.l.b16 %v1371
        %v1422 = vunpack.c.l.b16 %v1372
        %v1423 = vunpack.c.l.b16 %v1373
        %v1424 = vunpack.c.l.b16 %v1374
        %v1425 = vunpack.c.l.b16 %v1375
        %v1426 = vunpack.c.l.b16 %v1376
        %v1427 = vunpack.c.l.b16 %v1377
        %v1428 = vunpack.c.l.b16 %v1378
        %v1429 = vunpack.c.l.b16 %v1379
        %v1430 = vunpack.c.l.b16 %v1380
        %v1431 = vunpack.c.l.b16 %v1381
        %v1432 = vunpack.c.l.b16 %v1382
        %v1433 = vunpack.c.l.b16 %v1383
        %v1434 = vunpack.c.l.b16 %v1384
        %v1435 = vunpack.c.l.b16 %v1385
        %v1436 = vunpack.c.l.b16 %v1386
        %v1437 = vunpack.c.l.b16 %v1387
        %v1438 = vunpack.c.l.b16 %v1388
        %v1439 = vunpack.c.l.b16 %v1389
        %v1440 = vunpack.c.l.b16 %v1390
        %v1441 = vunpack.c.l.b16 %v1391
        %v1442 = vunpack.c.l.b16 %v1392
        %v1443 = vpack.c.b16 %v1419, %v1418
        %v1444 = vpack.c.b16 %v1421, %v1420
        %v1445 = vpack.c.b16 %v1423, %v1422
        %v1446 = vpack.c.b16 %v1425, %v1424
        %v1447 = vpack.c.b16 %v1427, %v1426
        %v1448 = vpack.c.b16 %v1429, %v1428
        %v1449 = vpack.c.b16 %v1431, %v1430
        %v1450 = vpack.c.b16 %v1433, %v1432
        %v1451 = vpack.c.b16 %v1435, %v1434
        %v1452 = vpack.c.b16 %v1437, %v1436
        %v1453 = vpack.c.b16 %v1439, %v1438
        %v1454 = vpack.c.b16 %v1441, %v1440
        %v1455 = vpack.c.b16 %v1442, %v1442
        %1469 = vmatprep.subr.bf16.mxu0 0
        %1470 = vmatpush1.bf16.msra.mxu0 %v788
        %1471 = vmatprep.subr.bf16.mxu0 0
        %1472 = vmatpush1.bf16.msra.mxu0 %v789
        %1473 = vmatprep.subr.bf16.mxu0 0
        %1474 = vmatpush1.bf16.msra.mxu0 %v790
        %1475 = vmatprep.subr.bf16.mxu0 0
        %1476 = vmatpush1.bf16.msra.mxu0 %v791
        %1477 = vmatprep.subr.bf16.mxu0 0
        %1478 = vmatpush1.bf16.msra.mxu0 %v792
        %1479 = vmatprep.subr.bf16.mxu0 0
        %1480 = vmatpush1.bf16.msra.mxu0 %v793
        %1481 = vmatprep.subr.bf16.mxu0 0
        %1482 = vmatpush1.bf16.msra.mxu0 %v794
        %1483 = vmatprep.subr.bf16.mxu0 0
        %1484 = vmatpush1.bf16.msra.mxu0 %v795
        %1485 = vmatprep.subr.bf16.mxu0 0
        %1486 = vmatpush1.bf16.msra.mxu0 0
        %1487 = vmatprep.subr.bf16.mxu0 0
        %1488 = vmatpush1.bf16.msra.mxu0 0
        %1489 = vmatprep.subr.bf16.mxu0 0
        %1490 = vmatpush1.bf16.msra.mxu0 0
        %1491 = vmatprep.subr.bf16.mxu0 0
        %1492 = vmatpush1.bf16.msra.mxu0 0
        %1493 = vmatprep.subr.bf16.mxu0 0
        %1494 = vmatpush1.bf16.msra.mxu0 0
        %1495 = vmatprep.subr.bf16.mxu0 0
        %1496 = vmatpush1.bf16.msra.mxu0 0
        %1497 = vmatprep.subr.bf16.mxu0 0
        %1498 = vmatpush1.bf16.msra.mxu0 0
        %1499 = vmatprep.subr.bf16.mxu0 0
        %1500 = vmatpush1.bf16.msra.mxu0 0
        %1501 = vmatprep.mubr.bf16.mxu0 0
        %1502 = vmatmul.mubr.bf16.gmra.mrb[0].mxu0 %v1443
        %v1503 = vpop.f32.mrb[0].mxu0
        %v1504 = vadd.f32 0.0, %v1503
        %v1505 = vpop.f32.mrb[0].mxu0
        %v1506 = vpop.f32.mrb[0].mxu0
        %v1507 = vadd.f32 0.0, %v1506
        %v1508 = vpop.f32.mrb[0].mxu0
        %1509 = vmatprep.mubr.bf16.mxu0 0
        %1510 = vmatmul.mubr.bf16.gmra.mrb[0].mxu0 %v1444
        %v1511 = vpop.f32.mrb[0].mxu0
        %v1512 = vadd.f32 0.0, %v1511
        %v1513 = vpop.f32.mrb[0].mxu0
        %v1514 = vpop.f32.mrb[0].mxu0
        %v1515 = vadd.f32 0.0, %v1514
        %v1516 = vpop.f32.mrb[0].mxu0
        %1517 = vmatprep.mubr.bf16.mxu0 0
        %1518 = vmatmul.mubr.bf16.gmra.mrb[0].mxu0 %v1445
        %v1519 = vpop.f32.mrb[0].mxu0
        %v1520 = vadd.f32 0.0, %v1519
        %v1521 = vpop.f32.mrb[0].mxu0
        %v1522 = vpop.f32.mrb[0].mxu0
        %v1523 = vadd.f32 0.0, %v1522
        %v1524 = vpop.f32.mrb[0].mxu0
        %1525 = vmatprep.mubr.bf16.mxu0 0
        %1526 = vmatmul.mubr.bf16.gmra.mrb[0].mxu0 %v1446
        %v1527 = vpop.f32.mrb[0].mxu0
        %v1528 = vadd.f32 0.0, %v1527
        %v1529 = vpop.f32.mrb[0].mxu0
        %v1530 = vpop.f32.mrb[0].mxu0
        %v1531 = vadd.f32 0.0, %v1530
        %v1532 = vpop.f32.mrb[0].mxu0
        %1533 = vmatprep.mubr.bf16.mxu0 0
        %1534 = vmatmul.mubr.bf16.gmra.mrb[0].mxu0 %v1447
        %v1535 = vpop.f32.mrb[0].mxu0
        %v1536 = vadd.f32 0.0, %v1535
        %v1537 = vpop.f32.mrb[0].mxu0
        %v1538 = vpop.f32.mrb[0].mxu0
        %v1539 = vadd.f32 0.0, %v1538
        %v1540 = vpop.f32.mrb[0].mxu0
        %1541 = vmatprep.mubr.bf16.mxu0 0
        %1542 = vmatmul.mubr.bf16.gmra.mrb[0].mxu0 %v1448
        %v1543 = vpop.f32.mrb[0].mxu0
        %v1544 = vadd.f32 0.0, %v1543
        %v1545 = vpop.f32.mrb[0].mxu0
        %v1546 = vpop.f32.mrb[0].mxu0
        %v1547 = vadd.f32 0.0, %v1546
        %v1548 = vpop.f32.mrb[0].mxu0
        %1549 = vmatprep.mubr.bf16.mxu0 0
        %1550 = vmatmul.mubr.bf16.gmra.mrb[0].mxu0 %v1449
        %v1551 = vpop.f32.mrb[0].mxu0
        %v1552 = vadd.f32 0.0, %v1551
        %v1553 = vpop.f32.mrb[0].mxu0
        %v1554 = vpop.f32.mrb[0].mxu0
        %v1555 = vadd.f32 0.0, %v1554
        %v1556 = vpop.f32.mrb[0].mxu0
        %1557 = vmatprep.mubr.bf16.mxu0 0
        %1558 = vmatmul.mubr.bf16.gmra.mrb[0].mxu0 %v1450
        %v1559 = vpop.f32.mrb[0].mxu0
        %v1560 = vadd.f32 0.0, %v1559
        %v1561 = vpop.f32.mrb[0].mxu0
        %v1562 = vpop.f32.mrb[0].mxu0
        %v1563 = vadd.f32 0.0, %v1562
        %v1564 = vpop.f32.mrb[0].mxu0
        %1565 = vmatprep.mubr.bf16.mxu0 0
        %1566 = vmatmul.mubr.bf16.gmra.mrb[0].mxu0 %v1451
        %v1567 = vpop.f32.mrb[0].mxu0
        %v1568 = vadd.f32 0.0, %v1567
        %v1569 = vpop.f32.mrb[0].mxu0
        %v1570 = vpop.f32.mrb[0].mxu0
        %v1571 = vadd.f32 0.0, %v1570
        %v1572 = vpop.f32.mrb[0].mxu0
        %1573 = vmatprep.mubr.bf16.mxu0 0
        %1574 = vmatmul.mubr.bf16.gmra.mrb[0].mxu0 %v1452
        %v1575 = vpop.f32.mrb[0].mxu0
        %v1576 = vadd.f32 0.0, %v1575
        %v1577 = vpop.f32.mrb[0].mxu0
        %v1578 = vpop.f32.mrb[0].mxu0
        %v1579 = vadd.f32 0.0, %v1578
        %v1580 = vpop.f32.mrb[0].mxu0
        %1581 = vmatprep.mubr.bf16.mxu0 0
        %1582 = vmatmul.mubr.bf16.gmra.mrb[0].mxu0 %v1453
        %v1583 = vpop.f32.mrb[0].mxu0
        %v1584 = vadd.f32 0.0, %v1583
        %v1585 = vpop.f32.mrb[0].mxu0
        %v1586 = vpop.f32.mrb[0].mxu0
        %v1587 = vadd.f32 0.0, %v1586
        %v1588 = vpop.f32.mrb[0].mxu0
        %1589 = vmatprep.mubr.bf16.mxu0 0
        %1590 = vmatmul.mubr.bf16.gmra.mrb[0].mxu0 %v1454
        %v1591 = vpop.f32.mrb[0].mxu0
        %v1592 = vadd.f32 0.0, %v1591
        %v1593 = vpop.f32.mrb[0].mxu0
        %v1594 = vpop.f32.mrb[0].mxu0
        %v1595 = vadd.f32 0.0, %v1594
        %v1596 = vpop.f32.mrb[0].mxu0
        %1597 = vmatprep.mubr.bf16.mxu0 0
        %1598 = vmatmul.mubr.bf16.gmra.mrb[0].mxu0 %v1455
        %v1599 = vpop.f32.mrb[0].mxu0
        %v1600 = vadd.f32 0.0, %v1599
        %v1601 = vpop.f32.mrb[0].mxu0
        %v1602 = vpop.f32.mrb[0].mxu0
        %v1603 = vpop.f32.mrb[0].mxu0
        %1604 = vdwg.mxu0
        %v1605 = vmul.f32 %v1504, %v945
        %v1606 = vmul.f32 %v1507, %v945
        %v1607 = vmul.f32 %v1512, %v945
        %v1608 = vmul.f32 %v1515, %v945
        %v1609 = vmul.f32 %v1520, %v945
        %v1610 = vmul.f32 %v1523, %v945
        %v1611 = vmul.f32 %v1528, %v945
        %v1612 = vmul.f32 %v1531, %v945
        %v1613 = vmul.f32 %v1536, %v945
        %v1614 = vmul.f32 %v1539, %v945
        %v1615 = vmul.f32 %v1544, %v945
        %v1616 = vmul.f32 %v1547, %v945
        %v1617 = vmul.f32 %v1552, %v945
        %v1618 = vmul.f32 %v1555, %v945
        %v1619 = vmul.f32 %v1560, %v945
        %v1620 = vmul.f32 %v1563, %v945
        %v1621 = vmul.f32 %v1568, %v945
        %v1622 = vmul.f32 %v1571, %v945
        %v1623 = vmul.f32 %v1576, %v945
        %v1624 = vmul.f32 %v1579, %v945
        %v1625 = vmul.f32 %v1584, %v945
        %v1626 = vmul.f32 %v1587, %v945
        %v1627 = vmul.f32 %v1592, %v945
        %v1628 = vmul.f32 %v1595, %v945
        %v1629 = vmul.f32 %v1600, %v945
        %v1630 = vadd.f32 %v1605, %v977
        %v1631 = vadd.f32 %v1606, %v977
        %v1632 = vadd.f32 %v1607, %v977
        %v1633 = vadd.f32 %v1608, %v977
        %v1634 = vadd.f32 %v1609, %v977
        %v1635 = vadd.f32 %v1610, %v977
        %v1636 = vadd.f32 %v1611, %v977
        %v1637 = vadd.f32 %v1612, %v977
        %v1638 = vadd.f32 %v1613, %v977
        %v1639 = vadd.f32 %v1614, %v977
        %v1640 = vadd.f32 %v1615, %v977
        %v1641 = vadd.f32 %v1616, %v977
        %v1642 = vadd.f32 %v1617, %v977
        %v1643 = vadd.f32 %v1618, %v977
        %v1644 = vadd.f32 %v1619, %v977
        %v1645 = vadd.f32 %v1620, %v977
        %v1646 = vadd.f32 %v1621, %v977
        %v1647 = vadd.f32 %v1622, %v977
        %v1648 = vadd.f32 %v1623, %v977
        %v1649 = vadd.f32 %v1624, %v977
        %v1650 = vadd.f32 %v1625, %v977
        %v1651 = vadd.f32 %v1626, %v977
        %v1652 = vadd.f32 %v1627, %v977
        %v1653 = vadd.f32 %v1628, %v977
        %v1654 = vadd.f32 %v1629, %v977
        %v1655 = vmax.f32 %v1630, 0.0
        %v1656 = vmax.f32 %v1631, 0.0
        %v1657 = vmax.f32 %v1632, 0.0
        %v1658 = vmax.f32 %v1633, 0.0
        %v1659 = vmax.f32 %v1634, 0.0
        %v1660 = vmax.f32 %v1635, 0.0
        %v1661 = vmax.f32 %v1636, 0.0
        %v1662 = vmax.f32 %v1637, 0.0
        %v1663 = vmax.f32 %v1638, 0.0
        %v1664 = vmax.f32 %v1639, 0.0
        %v1665 = vmax.f32 %v1640, 0.0
        %v1666 = vmax.f32 %v1641, 0.0
        %v1667 = vmax.f32 %v1642, 0.0
        %v1668 = vmax.f32 %v1643, 0.0
        %v1669 = vmax.f32 %v1644, 0.0
        %v1670 = vmax.f32 %v1645, 0.0
        %v1671 = vmax.f32 %v1646, 0.0
        %v1672 = vmax.f32 %v1647, 0.0
        %v1673 = vmax.f32 %v1648, 0.0
        %v1674 = vmax.f32 %v1649, 0.0
        %v1675 = vmax.f32 %v1650, 0.0
        %v1676 = vmax.f32 %v1651, 0.0
        %v1677 = vmax.f32 %v1652, 0.0
        %v1678 = vmax.f32 %v1653, 0.0
        %v1679 = vmax.f32 %v1654, 0.0
        %v1680 = vmax.f32 %v1342, %v1655
        %v1681 = vmax.f32 %v1343, %v1656
        %v1682 = vmax.f32 %v1344, %v1657
        %v1683 = vmax.f32 %v1345, %v1658
        %v1684 = vmax.f32 %v1346, %v1659
        %v1685 = vmax.f32 %v1347, %v1660
        %v1686 = vmax.f32 %v1348, %v1661
        %v1687 = vmax.f32 %v1349, %v1662
        %v1688 = vmax.f32 %v1350, %v1663
        %v1689 = vmax.f32 %v1351, %v1664
        %v1690 = vmax.f32 %v1352, %v1665
        %v1691 = vmax.f32 %v1353, %v1666
        %v1692 = vmax.f32 %v1354, %v1667
        %v1693 = vmax.f32 %v1355, %v1668
        %v1694 = vmax.f32 %v1356, %v1669
        %v1695 = vmax.f32 %v1357, %v1670
        %v1696 = vmax.f32 %v1358, %v1671
        %v1697 = vmax.f32 %v1359, %v1672
        %v1698 = vmax.f32 %v1360, %v1673
        %v1699 = vmax.f32 %v1361, %v1674
        %v1700 = vmax.f32 %v1362, %v1675
        %v1701 = vmax.f32 %v1363, %v1676
        %v1702 = vmax.f32 %v1364, %v1677
        %v1703 = vmax.f32 %v1365, %v1678
        %v1704 = vmax.f32 %v1366, %v1679
        %s1705 = scalar_lea.vmem %s608, 300 [#allocation2]
        %v1706 = vld [vmem:[%s1705] sm:$0xf]
        %v1707 = vld [vmem:[%s1705 + $0x4] sm:$0xf]
        %v1708 = vld [vmem:[%s1705 + $0x8] sm:$0xf]
        %v1709 = vld [vmem:[%s1705 + $0xc] sm:$0xf]
        %v1710 = vld [vmem:[%s1705 + $0x10] sm:$0xf]
        %v1711 = vld [vmem:[%s1705 + $0x14] sm:$0xf]
        %v1712 = vld [vmem:[%s1705 + $0x18] sm:$0xf]
        %v1713 = vld [vmem:[%s1705 + $0x1c] sm:$0xf]
        %v1714 = vld [vmem:[%s1705 + $0x20] sm:$0xf]
        %v1715 = vld [vmem:[%s1705 + $0x24] sm:$0xf]
        %v1716 = vld [vmem:[%s1705 + $0x28] sm:$0xf]
        %v1717 = vld [vmem:[%s1705 + $0x2c] sm:$0xf]
        %v1718 = vld [vmem:[%s1705 + $0x30] sm:$0xf]
        %v1719 = vld [vmem:[%s1705 + $0x34] sm:$0xf]
        %v1720 = vld [vmem:[%s1705 + $0x38] sm:$0xf]
        %v1721 = vld [vmem:[%s1705 + $0x3c] sm:$0xf]
        %v1722 = vld [vmem:[%s1705 + $0x40] sm:$0xf]
        %v1723 = vld [vmem:[%s1705 + $0x44] sm:$0xf]
        %v1724 = vld [vmem:[%s1705 + $0x48] sm:$0xf]
        %v1725 = vld [vmem:[%s1705 + $0x4c] sm:$0xf]
        %v1726 = vld [vmem:[%s1705 + $0x50] sm:$0xf]
        %v1727 = vld [vmem:[%s1705 + $0x54] sm:$0xf]
        %v1728 = vld [vmem:[%s1705 + $0x58] sm:$0xf]
        %v1729 = vld [vmem:[%s1705 + $0x5c] sm:$0xf]
        %v1730 = vld [vmem:[%s1705 + $0x60] sm:$0xf]
        %v1756 = vunpack.c.l.b16 %v1706
        %v1757 = vunpack.c.l.b16 %v1707
        %v1758 = vunpack.c.l.b16 %v1708
        %v1759 = vunpack.c.l.b16 %v1709
        %v1760 = vunpack.c.l.b16 %v1710
        %v1761 = vunpack.c.l.b16 %v1711
        %v1762 = vunpack.c.l.b16 %v1712
        %v1763 = vunpack.c.l.b16 %v1713
        %v1764 = vunpack.c.l.b16 %v1714
        %v1765 = vunpack.c.l.b16 %v1715
        %v1766 = vunpack.c.l.b16 %v1716
        %v1767 = vunpack.c.l.b16 %v1717
        %v1768 = vunpack.c.l.b16 %v1718
        %v1769 = vunpack.c.l.b16 %v1719
        %v1770 = vunpack.c.l.b16 %v1720
        %v1771 = vunpack.c.l.b16 %v1721
        %v1772 = vunpack.c.l.b16 %v1722
        %v1773 = vunpack.c.l.b16 %v1723
        %v1774 = vunpack.c.l.b16 %v1724
        %v1775 = vunpack.c.l.b16 %v1725
        %v1776 = vunpack.c.l.b16 %v1726
        %v1777 = vunpack.c.l.b16 %v1727
        %v1778 = vunpack.c.l.b16 %v1728
        %v1779 = vunpack.c.l.b16 %v1729
        %v1780 = vunpack.c.l.b16 %v1730
        %v1781 = vpack.c.b16 %v1757, %v1756
        %v1782 = vpack.c.b16 %v1759, %v1758
        %v1783 = vpack.c.b16 %v1761, %v1760
        %v1784 = vpack.c.b16 %v1763, %v1762
        %v1785 = vpack.c.b16 %v1765, %v1764
        %v1786 = vpack.c.b16 %v1767, %v1766
        %v1787 = vpack.c.b16 %v1769, %v1768
        %v1788 = vpack.c.b16 %v1771, %v1770
        %v1789 = vpack.c.b16 %v1773, %v1772
        %v1790 = vpack.c.b16 %v1775, %v1774
        %v1791 = vpack.c.b16 %v1777, %v1776
        %v1792 = vpack.c.b16 %v1779, %v1778
        %v1793 = vpack.c.b16 %v1780, %v1780
        %1807 = vmatprep.subr.bf16.mxu0 0
        %1808 = vmatpush1.bf16.msra.mxu0 %v788
        %1809 = vmatprep.subr.bf16.mxu0 0
        %1810 = vmatpush1.bf16.msra.mxu0 %v789
        %1811 = vmatprep.subr.bf16.mxu0 0
        %1812 = vmatpush1.bf16.msra.mxu0 %v790
        %1813 = vmatprep.subr.bf16.mxu0 0
        %1814 = vmatpush1.bf16.msra.mxu0 %v791
        %1815 = vmatprep.subr.bf16.mxu0 0
        %1816 = vmatpush1.bf16.msra.mxu0 %v792
        %1817 = vmatprep.subr.bf16.mxu0 0
        %1818 = vmatpush1.bf16.msra.mxu0 %v793
        %1819 = vmatprep.subr.bf16.mxu0 0
        %1820 = vmatpush1.bf16.msra.mxu0 %v794
        %1821 = vmatprep.subr.bf16.mxu0 0
        %1822 = vmatpush1.bf16.msra.mxu0 %v795
        %1823 = vmatprep.subr.bf16.mxu0 0
        %1824 = vmatpush1.bf16.msra.mxu0 0
        %1825 = vmatprep.subr.bf16.mxu0 0
        %1826 = vmatpush1.bf16.msra.mxu0 0
        %1827 = vmatprep.subr.bf16.mxu0 0
        %1828 = vmatpush1.bf16.msra.mxu0 0
        %1829 = vmatprep.subr.bf16.mxu0 0
        %1830 = vmatpush1.bf16.msra.mxu0 0
        %1831 = vmatprep.subr.bf16.mxu0 0
        %1832 = vmatpush1.bf16.msra.mxu0 0
        %1833 = vmatprep.subr.bf16.mxu0 0
        %1834 = vmatpush1.bf16.msra.mxu0 0
        %1835 = vmatprep.subr.bf16.mxu0 0
        %1836 = vmatpush1.bf16.msra.mxu0 0
        %1837 = vmatprep.subr.bf16.mxu0 0
        %1838 = vmatpush1.bf16.msra.mxu0 0
        %1839 = vmatprep.mubr.bf16.mxu0 0
        %1840 = vmatmul.mubr.bf16.gmra.mrb[0].mxu0 %v1781
        %v1841 = vpop.f32.mrb[0].mxu0
        %v1842 = vadd.f32 0.0, %v1841
        %v1843 = vpop.f32.mrb[0].mxu0
        %v1844 = vpop.f32.mrb[0].mxu0
        %v1845 = vadd.f32 0.0, %v1844
        %v1846 = vpop.f32.mrb[0].mxu0
        %1847 = vmatprep.mubr.bf16.mxu0 0
        %1848 = vmatmul.mubr.bf16.gmra.mrb[0].mxu0 %v1782
        %v1849 = vpop.f32.mrb[0].mxu0
        %v1850 = vadd.f32 0.0, %v1849
        %v1851 = vpop.f32.mrb[0].mxu0
        %v1852 = vpop.f32.mrb[0].mxu0
        %v1853 = vadd.f32 0.0, %v1852
        %v1854 = vpop.f32.mrb[0].mxu0
        %1855 = vmatprep.mubr.bf16.mxu0 0
        %1856 = vmatmul.mubr.bf16.gmra.mrb[0].mxu0 %v1783
        %v1857 = vpop.f32.mrb[0].mxu0
        %v1858 = vadd.f32 0.0, %v1857
        %v1859 = vpop.f32.mrb[0].mxu0
        %v1860 = vpop.f32.mrb[0].mxu0
        %v1861 = vadd.f32 0.0, %v1860
        %v1862 = vpop.f32.mrb[0].mxu0
        %1863 = vmatprep.mubr.bf16.mxu0 0
        %1864 = vmatmul.mubr.bf16.gmra.mrb[0].mxu0 %v1784
        %v1865 = vpop.f32.mrb[0].mxu0
        %v1866 = vadd.f32 0.0, %v1865
        %v1867 = vpop.f32.mrb[0].mxu0
        %v1868 = vpop.f32.mrb[0].mxu0
        %v1869 = vadd.f32 0.0, %v1868
        %v1870 = vpop.f32.mrb[0].mxu0
        %1871 = vmatprep.mubr.bf16.mxu0 0
        %1872 = vmatmul.mubr.bf16.gmra.mrb[0].mxu0 %v1785
        %v1873 = vpop.f32.mrb[0].mxu0
        %v1874 = vadd.f32 0.0, %v1873
        %v1875 = vpop.f32.mrb[0].mxu0
        %v1876 = vpop.f32.mrb[0].mxu0
        %v1877 = vadd.f32 0.0, %v1876
        %v1878 = vpop.f32.mrb[0].mxu0
        %1879 = vmatprep.mubr.bf16.mxu0 0
        %1880 = vmatmul.mubr.bf16.gmra.mrb[0].mxu0 %v1786
        %v1881 = vpop.f32.mrb[0].mxu0
        %v1882 = vadd.f32 0.0, %v1881
        %v1883 = vpop.f32.mrb[0].mxu0
        %v1884 = vpop.f32.mrb[0].mxu0
        %v1885 = vadd.f32 0.0, %v1884
        %v1886 = vpop.f32.mrb[0].mxu0
        %1887 = vmatprep.mubr.bf16.mxu0 0
        %1888 = vmatmul.mubr.bf16.gmra.mrb[0].mxu0 %v1787
        %v1889 = vpop.f32.mrb[0].mxu0
        %v1890 = vadd.f32 0.0, %v1889
        %v1891 = vpop.f32.mrb[0].mxu0
        %v1892 = vpop.f32.mrb[0].mxu0
        %v1893 = vadd.f32 0.0, %v1892
        %v1894 = vpop.f32.mrb[0].mxu0
        %1895 = vmatprep.mubr.bf16.mxu0 0
        %1896 = vmatmul.mubr.bf16.gmra.mrb[0].mxu0 %v1788
        %v1897 = vpop.f32.mrb[0].mxu0
        %v1898 = vadd.f32 0.0, %v1897
        %v1899 = vpop.f32.mrb[0].mxu0
        %v1900 = vpop.f32.mrb[0].mxu0
        %v1901 = vadd.f32 0.0, %v1900
        %v1902 = vpop.f32.mrb[0].mxu0
        %1903 = vmatprep.mubr.bf16.mxu0 0
        %1904 = vmatmul.mubr.bf16.gmra.mrb[0].mxu0 %v1789
        %v1905 = vpop.f32.mrb[0].mxu0
        %v1906 = vadd.f32 0.0, %v1905
        %v1907 = vpop.f32.mrb[0].mxu0
        %v1908 = vpop.f32.mrb[0].mxu0
        %v1909 = vadd.f32 0.0, %v1908
        %v1910 = vpop.f32.mrb[0].mxu0
        %1911 = vmatprep.mubr.bf16.mxu0 0
        %1912 = vmatmul.mubr.bf16.gmra.mrb[0].mxu0 %v1790
        %v1913 = vpop.f32.mrb[0].mxu0
        %v1914 = vadd.f32 0.0, %v1913
        %v1915 = vpop.f32.mrb[0].mxu0
        %v1916 = vpop.f32.mrb[0].mxu0
        %v1917 = vadd.f32 0.0, %v1916
        %v1918 = vpop.f32.mrb[0].mxu0
        %1919 = vmatprep.mubr.bf16.mxu0 0
        %1920 = vmatmul.mubr.bf16.gmra.mrb[0].mxu0 %v1791
        %v1921 = vpop.f32.mrb[0].mxu0
        %v1922 = vadd.f32 0.0, %v1921
        %v1923 = vpop.f32.mrb[0].mxu0
        %v1924 = vpop.f32.mrb[0].mxu0
        %v1925 = vadd.f32 0.0, %v1924
        %v1926 = vpop.f32.mrb[0].mxu0
        %1927 = vmatprep.mubr.bf16.mxu0 0
        %1928 = vmatmul.mubr.bf16.gmra.mrb[0].mxu0 %v1792
        %v1929 = vpop.f32.mrb[0].mxu0
        %v1930 = vadd.f32 0.0, %v1929
        %v1931 = vpop.f32.mrb[0].mxu0
        %v1932 = vpop.f32.mrb[0].mxu0
        %v1933 = vadd.f32 0.0, %v1932
        %v1934 = vpop.f32.mrb[0].mxu0
        %1935 = vmatprep.mubr.bf16.mxu0 0
        %1936 = vmatmul.mubr.bf16.gmra.mrb[0].mxu0 %v1793
        %v1937 = vpop.f32.mrb[0].mxu0
        %v1938 = vadd.f32 0.0, %v1937
        %v1939 = vpop.f32.mrb[0].mxu0
        %v1940 = vpop.f32.mrb[0].mxu0
        %v1941 = vpop.f32.mrb[0].mxu0
        %1942 = vdwg.mxu0
        %v1943 = vmul.f32 %v1842, %v945
        %v1944 = vmul.f32 %v1845, %v945
        %v1945 = vmul.f32 %v1850, %v945
        %v1946 = vmul.f32 %v1853, %v945
        %v1947 = vmul.f32 %v1858, %v945
        %v1948 = vmul.f32 %v1861, %v945
        %v1949 = vmul.f32 %v1866, %v945
        %v1950 = vmul.f32 %v1869, %v945
        %v1951 = vmul.f32 %v1874, %v945
        %v1952 = vmul.f32 %v1877, %v945
        %v1953 = vmul.f32 %v1882, %v945
        %v1954 = vmul.f32 %v1885, %v945
        %v1955 = vmul.f32 %v1890, %v945
        %v1956 = vmul.f32 %v1893, %v945
        %v1957 = vmul.f32 %v1898, %v945
        %v1958 = vmul.f32 %v1901, %v945
        %v1959 = vmul.f32 %v1906, %v945
        %v1960 = vmul.f32 %v1909, %v945
        %v1961 = vmul.f32 %v1914, %v945
        %v1962 = vmul.f32 %v1917, %v945
        %v1963 = vmul.f32 %v1922, %v945
        %v1964 = vmul.f32 %v1925, %v945
        %v1965 = vmul.f32 %v1930, %v945
        %v1966 = vmul.f32 %v1933, %v945
        %v1967 = vmul.f32 %v1938, %v945
        %v1968 = vadd.f32 %v1943, %v977
        %v1969 = vadd.f32 %v1944, %v977
        %v1970 = vadd.f32 %v1945, %v977
        %v1971 = vadd.f32 %v1946, %v977
        %v1972 = vadd.f32 %v1947, %v977
        %v1973 = vadd.f32 %v1948, %v977
        %v1974 = vadd.f32 %v1949, %v977
        %v1975 = vadd.f32 %v1950, %v977
        %v1976 = vadd.f32 %v1951, %v977
        %v1977 = vadd.f32 %v1952, %v977
        %v1978 = vadd.f32 %v1953, %v977
        %v1979 = vadd.f32 %v1954, %v977
        %v1980 = vadd.f32 %v1955, %v977
        %v1981 = vadd.f32 %v1956, %v977
        %v1982 = vadd.f32 %v1957, %v977
        %v1983 = vadd.f32 %v1958, %v977
        %v1984 = vadd.f32 %v1959, %v977
        %v1985 = vadd.f32 %v1960, %v977
        %v1986 = vadd.f32 %v1961, %v977
        %v1987 = vadd.f32 %v1962, %v977
        %v1988 = vadd.f32 %v1963, %v977
        %v1989 = vadd.f32 %v1964, %v977
        %v1990 = vadd.f32 %v1965, %v977
        %v1991 = vadd.f32 %v1966, %v977
        %v1992 = vadd.f32 %v1967, %v977
        %v1993 = vmax.f32 %v1968, 0.0
        %v1994 = vmax.f32 %v1969, 0.0
        %v1995 = vmax.f32 %v1970, 0.0
        %v1996 = vmax.f32 %v1971, 0.0
        %v1997 = vmax.f32 %v1972, 0.0
        %v1998 = vmax.f32 %v1973, 0.0
        %v1999 = vmax.f32 %v1974, 0.0
        %v2000 = vmax.f32 %v1975, 0.0
        %v2001 = vmax.f32 %v1976, 0.0
        %v2002 = vmax.f32 %v1977, 0.0
        %v2003 = vmax.f32 %v1978, 0.0
        %v2004 = vmax.f32 %v1979, 0.0
        %v2005 = vmax.f32 %v1980, 0.0
        %v2006 = vmax.f32 %v1981, 0.0
        %v2007 = vmax.f32 %v1982, 0.0
        %v2008 = vmax.f32 %v1983, 0.0
        %v2009 = vmax.f32 %v1984, 0.0
        %v2010 = vmax.f32 %v1985, 0.0
        %v2011 = vmax.f32 %v1986, 0.0
        %v2012 = vmax.f32 %v1987, 0.0
        %v2013 = vmax.f32 %v1988, 0.0
        %v2014 = vmax.f32 %v1989, 0.0
        %v2015 = vmax.f32 %v1990, 0.0
        %v2016 = vmax.f32 %v1991, 0.0
        %v2017 = vmax.f32 %v1992, 0.0
        %v2018 = vmax.f32 %v1680, %v1993
        %v2019 = vmax.f32 %v1681, %v1994
        %v2020 = vmax.f32 %v1682, %v1995
        %v2021 = vmax.f32 %v1683, %v1996
        %v2022 = vmax.f32 %v1684, %v1997
        %v2023 = vmax.f32 %v1685, %v1998
        %v2024 = vmax.f32 %v1686, %v1999
        %v2025 = vmax.f32 %v1687, %v2000
        %v2026 = vmax.f32 %v1688, %v2001
        %v2027 = vmax.f32 %v1689, %v2002
        %v2028 = vmax.f32 %v1690, %v2003
        %v2029 = vmax.f32 %v1691, %v2004
        %v2030 = vmax.f32 %v1692, %v2005
        %v2031 = vmax.f32 %v1693, %v2006
        %v2032 = vmax.f32 %v1694, %v2007
        %v2033 = vmax.f32 %v1695, %v2008
        %v2034 = vmax.f32 %v1696, %v2009
        %v2035 = vmax.f32 %v1697, %v2010
        %v2036 = vmax.f32 %v1698, %v2011
        %v2037 = vmax.f32 %v1699, %v2012
        %v2038 = vmax.f32 %v1700, %v2013
        %v2039 = vmax.f32 %v1701, %v2014
        %v2040 = vmax.f32 %v1702, %v2015
        %v2041 = vmax.f32 %v1703, %v2016
        %v2042 = vmax.f32 %v1704, %v2017
        %v2043 = vpack.c.bf16 %v2019, %v2018
        %v2044 = vpack.c.bf16 %v2021, %v2020
        %v2045 = vpack.c.bf16 %v2023, %v2022
        %v2046 = vpack.c.bf16 %v2025, %v2024
        %v2047 = vpack.c.bf16 %v2027, %v2026
        %v2048 = vpack.c.bf16 %v2029, %v2028
        %v2049 = vpack.c.bf16 %v2031, %v2030
        %v2050 = vpack.c.bf16 %v2033, %v2032
        %v2051 = vpack.c.bf16 %v2035, %v2034
        %v2052 = vpack.c.bf16 %v2037, %v2036
        %v2053 = vpack.c.bf16 %v2039, %v2038
        %v2054 = vpack.c.bf16 %v2041, %v2040
        %v2055 = vpack.c.bf16 %v2042, %v2042
        %v2069 = vunpack.c.l.b16 %v2043
        %v2070 = vunpack.c.h.b16 %v2043
        %v2071 = vunpack.c.l.b16 %v2044
        %v2072 = vunpack.c.h.b16 %v2044
        %v2073 = vunpack.c.l.b16 %v2045
        %v2074 = vunpack.c.h.b16 %v2045
        %v2075 = vunpack.c.l.b16 %v2046
        %v2076 = vunpack.c.h.b16 %v2046
        %v2077 = vunpack.c.l.b16 %v2047
        %v2078 = vunpack.c.h.b16 %v2047
        %v2079 = vunpack.c.l.b16 %v2048
        %v2080 = vunpack.c.h.b16 %v2048
        %v2081 = vunpack.c.l.b16 %v2049
        %v2082 = vunpack.c.h.b16 %v2049
        %v2083 = vunpack.c.l.b16 %v2050
        %v2084 = vunpack.c.h.b16 %v2050
        %v2085 = vunpack.c.l.b16 %v2051
        %v2086 = vunpack.c.h.b16 %v2051
        %v2087 = vunpack.c.l.b16 %v2052
        %v2088 = vunpack.c.h.b16 %v2052
        %v2089 = vunpack.c.l.b16 %v2053
        %v2090 = vunpack.c.h.b16 %v2053
        %v2091 = vunpack.c.l.b16 %v2054
        %v2092 = vunpack.c.h.b16 %v2054
        %v2093 = vunpack.c.l.b16 %v2055
        %v2094 = vpack.c.b16 %v2069, %v2069
        %v2095 = vpack.c.b16 %v2070, %v2070
        %v2096 = vpack.c.b16 %v2071, %v2071
        %v2097 = vpack.c.b16 %v2072, %v2072
        %v2098 = vpack.c.b16 %v2073, %v2073
        %v2099 = vpack.c.b16 %v2074, %v2074
        %v2100 = vpack.c.b16 %v2075, %v2075
        %v2101 = vpack.c.b16 %v2076, %v2076
        %v2102 = vpack.c.b16 %v2077, %v2077
        %v2103 = vpack.c.b16 %v2078, %v2078
        %v2104 = vpack.c.b16 %v2079, %v2079
        %v2105 = vpack.c.b16 %v2080, %v2080
        %v2106 = vpack.c.b16 %v2081, %v2081
        %v2107 = vpack.c.b16 %v2082, %v2082
        %v2108 = vpack.c.b16 %v2083, %v2083
        %v2109 = vpack.c.b16 %v2084, %v2084
        %v2110 = vpack.c.b16 %v2085, %v2085
        %v2111 = vpack.c.b16 %v2086, %v2086
        %v2112 = vpack.c.b16 %v2087, %v2087
        %v2113 = vpack.c.b16 %v2088, %v2088
        %v2114 = vpack.c.b16 %v2089, %v2089
        %v2115 = vpack.c.b16 %v2090, %v2090
        %v2116 = vpack.c.b16 %v2091, %v2091
        %v2117 = vpack.c.b16 %v2092, %v2092
        %v2118 = vpack.c.b16 %v2093, %v2093
        %2144 = vst [vmem:[%s636] sm:$0xf] %v2094
        %2145 = vst [vmem:[%s636 + $0x4] sm:$0xf] %v2095
        %2146 = vst [vmem:[%s636 + $0x8] sm:$0xf] %v2096
        %2147 = vst [vmem:[%s636 + $0xc] sm:$0xf] %v2097
        %2148 = vst [vmem:[%s636 + $0x10] sm:$0xf] %v2098
        %2149 = vst [vmem:[%s636 + $0x14] sm:$0xf] %v2099
        %2150 = vst [vmem:[%s636 + $0x18] sm:$0xf] %v2100
        %2151 = vst [vmem:[%s636 + $0x1c] sm:$0xf] %v2101
        %2152 = vst [vmem:[%s636 + $0x20] sm:$0xf] %v2102
        %2153 = vst [vmem:[%s636 + $0x24] sm:$0xf] %v2103
        %2154 = vst [vmem:[%s636 + $0x28] sm:$0xf] %v2104
        %2155 = vst [vmem:[%s636 + $0x2c] sm:$0xf] %v2105
        %2156 = vst [vmem:[%s636 + $0x30] sm:$0xf] %v2106
        %2157 = vst [vmem:[%s636 + $0x34] sm:$0xf] %v2107
        %2158 = vst [vmem:[%s636 + $0x38] sm:$0xf] %v2108
        %2159 = vst [vmem:[%s636 + $0x3c] sm:$0xf] %v2109
        %2160 = vst [vmem:[%s636 + $0x40] sm:$0xf] %v2110
        %2161 = vst [vmem:[%s636 + $0x44] sm:$0xf] %v2111
        %2162 = vst [vmem:[%s636 + $0x48] sm:$0xf] %v2112
        %2163 = vst [vmem:[%s636 + $0x4c] sm:$0xf] %v2113
        %2164 = vst [vmem:[%s636 + $0x50] sm:$0xf] %v2114
        %2165 = vst [vmem:[%s636 + $0x54] sm:$0xf] %v2115
        %2166 = vst [vmem:[%s636 + $0x58] sm:$0xf] %v2116
        %2167 = vst [vmem:[%s636 + $0x5c] sm:$0xf] %v2117
        %2168 = vst [vmem:[%s636 + $0x60] sm:$0xf] %v2118
        %s2169 = smul.u32 25, %s15
        %p2170 = scmp.lt.s32.totalorder %s2169, 49
        %s2171 = scalar_select %p2170, %s2169, 49
        %s2172 = smul.addr %s2171, 4
        %s2173 = scalar_lea.vmem %s4, %s2172
        // Predicated region
        $region78: #{cnn_forward.6} parent=72 // pred_check
          %p2174 = pneg %p122
        $region79: #{cnn_forward.6} parent=72 // pred_check_branch
          %2176 = sbr.rel (%p2174) target = $region81
        $region80: #{cnn_forward.6} parent=72 // pred_region
          %s2177 = smul.u32 25, %s15
        $region81: #{cnn_forward.6} parent=72 // pred_fallthru
          _
      $region73: #{cnn_forward.6} parent=5 // pred_fallthru
        _
      %p2178 = scmp.le.s32.totalorder 2, %s10
      // Predicated region
      $region82: #{cnn_forward.6} parent=5 // pred_check
        %p2179 = pneg %p2178
      $region83: #{cnn_forward.6} parent=5 // pred_check_branch
        %2181 = sbr.rel (%p2179) target = $region85
      $region84: #{cnn_forward.6} parent=5 // pred_region
        %s2182 = ssub.s32 %s10, 2
        // Predicated region
        $region86: #{cnn_forward.6} parent=84 // pred_check
          %p2183 = pneg %p128
        $region87: #{cnn_forward.6} parent=84 // pred_check_branch
          %2185 = sbr.rel (%p2183) target = $region89
        $region88: #{cnn_forward.6} parent=84 // pred_region
          %s2186 = smul.u32 25, %s16
          %p2187 = scmp.lt.s32.totalorder %s2186, 49
          %s2188 = scalar_select %p2187, %s2186, 49
          %s2189 = smul.addr %s2188, 4
          %s2190 = scalar_lea.vmem %s4, %s2189
        $region89: #{cnn_forward.6} parent=84 // pred_fallthru
          _
      $region85: #{cnn_forward.6} parent=5 // pred_fallthru
        _
    $region6: #{cnn_forward.6} parent=1 // loop_footer
      %s14 = sadd.s32 1, %s10
    $region7: #{cnn_forward.6} parent=1 // loop_footer_branch
      %9 = sbr.rel target = $region3
    $region8: #{cnn_forward.6} parent=1 // loop_exit
      _

// kernel: cnn_forward.7
$region0: #{cnn_forward.7}
  #allocation0 [shape = 'u32[]', space=smem, size = 0x4, offset = 0x4, fixed_abs, tag = 'smem constant byte address 0x4 - core index']
  #allocation1 [shape = 'u32[144,128]{1,0:T(1,128)}', space=vmem, size = 0x12000, scoped, tag = 'internal scratch']
  %s0 = inlined_call_operand.vmem [shape: bf16[4,64,256], index: 0, kind: input, shape index: {}]
  %s1 = inlined_call_operand.vmem [shape: bf16[256,128], index: 1, kind: input, shape index: {}]
  %s2 = inlined_call_operand.vmem [shape: f32[2,2,128], index: 2, kind: output, shape index: {}]
  %s3 = sld [smem:[#allocation0]]
  $region79: #{cnn_forward.7} parent=0
    _
  %s5 = ssub.s32 1, %s3
  %s6 = scalar_select 0, %s5, %s3
  $region1: #{cnn_forward.7} parent=0
    #allocation2 [shape = 'u8[131072]{0}', space=vmem, size = 0x20000, scoped, tag = 'input window, operand 0']
    loop: start=0, step=1, limit=4
    $region2: #{cnn_forward.7} parent=1 // loop_pre_header
      _
    $region3: #{cnn_forward.7} parent=1 // loop_header
      %s8 = sphi 0, %s12
      %p9 = scmp.ge.s32.totalorder %s8, 4
      %s18 = sphi 0, %s20
      %s21 = sphi 0, %s18
      %s22 = sphi 0, %s21
      %s38 = sphi 0, %s22
      %s42 = sphi 0, %s42
      %s44 = sphi 0, %s42
      %s45 = sphi 0, %s44
      %s59 = sphi 0, %s45
      %s65 = sphi 0, %s67
      %s68 = sphi 0, %s65
      %s69 = sphi 0, %s68
      %s85 = sphi 0, %s69
    $region4: #{cnn_forward.7} parent=1 // loop_header_branch
      %11 = sbr.rel (%p9) target = $region8
    $region5: #{cnn_forward.7} parent=1 // loop_body
      %s13 = ssub.s32 %s8, 1
      %s14 = ssub.s32 %s8, 2
      %s15 = sadd.s32 %s8, 1
      %s16 = ssub.s32 %s8, %s15
      %p17 = scmp.eq.s32.totalorder %s16, 0
      %s19 = sadd.s32 %s18, 1
      %s20 = scalar_select %p17, %s18, %s19
      %p23 = pneg %p17
      %p24 = scmp.eq.s32.totalorder %s8, 1
      %p25 = por %p23, %p24
      %p26 = scmp.ne.s32.totalorder %s18, %s21
      %p27 = scmp.eq.s32.totalorder %s8, 0
      %p28 = por %p26, %p27
      %p29 = scmp.ne.s32.totalorder %s18, %s21
      %p30 = scmp.eq.s32.totalorder %s13, 1
      %p31 = por %p29, %p30
      %p32 = scmp.ne.s32.totalorder %s21, %s22
      %p33 = scmp.eq.s32.totalorder %s13, 0
      %p34 = por %p32, %p33
      %p35 = scmp.ne.s32.totalorder %s21, %s22
      %p36 = scmp.eq.s32.totalorder %s14, 1
      %p37 = por %p35, %p36
      %p39 = scmp.ne.s32.totalorder %s22, %s38
      %p40 = scmp.eq.s32.totalorder %s14, 0
      %p41 = por %p39, %p40
      %s43 = sadd.s32 %s42, 1
      %p46 = scmp.eq.s32.totalorder %s8, 1
      %p47 = scmp.ne.s32.totalorder %s42, %s44
      %p48 = scmp.eq.s32.totalorder %s8, 0
      %p49 = por %p47, %p48
      %p50 = scmp.ne.s32.totalorder %s42, %s44
      %p51 = scmp.eq.s32.totalorder %s13, 1
      %p52 = por %p50, %p51
      %p53 = scmp.ne.s32.totalorder %s44, %s45
      %p54 = scmp.eq.s32.totalorder %s13, 0
      %p55 = por %p53, %p54
      %p56 = scmp.ne.s32.totalorder %s44, %s45
      %p57 = scmp.eq.s32.totalorder %s14, 1
      %p58 = por %p56, %p57
      %p60 = scmp.ne.s32.totalorder %s45, %s59
      %p61 = scmp.eq.s32.totalorder %s14, 0
      %p62 = por %p60, %p61
      %s63 = ssub.s32 %s8, %s15
      %p64 = scmp.eq.s32.totalorder %s63, 0
      %s66 = sadd.s32 %s65, 1
      %s67 = scalar_select %p64, %s65, %s66
      %p70 = pneg %p64
      %p71 = scmp.eq.s32.totalorder %s8, 1
      %p72 = por %p70, %p71
      %p73 = scmp.ne.s32.totalorder %s65, %s68
      %p74 = scmp.eq.s32.totalorder %s8, 0
      %p75 = por %p73, %p74
      %p76 = scmp.ne.s32.totalorder %s65, %s68
      %p77 = scmp.eq.s32.totalorder %s13, 1
      %p78 = por %p76, %p77
      %p79 = scmp.ne.s32.totalorder %s68, %s69
      %p80 = scmp.eq.s32.totalorder %s13, 0
      %p81 = por %p79, %p80
      %p82 = scmp.ne.s32.totalorder %s68, %s69
      %p83 = scmp.eq.s32.totalorder %s14, 1
      %p84 = por %p82, %p83
      %p86 = scmp.ne.s32.totalorder %s69, %s85
      %p87 = scmp.eq.s32.totalorder %s14, 0
      %p88 = por %p86, %p87
      %p89 = scmp.le.s32.totalorder 1, %s8
      %p90 = scmp.lt.s32.totalorder %s8, 3
      %p91 = pnand %p89, %p90
      %p92 = pneg %p91
      // Predicated region
      $region9: #{cnn_forward.7} parent=5 // pred_check
        _
      $region10: #{cnn_forward.7} parent=5 // pred_check_branch
        %94 = sbr.rel (%p91) target = $region12
      $region11: #{cnn_forward.7} parent=5 // pred_region
        %s95 = ssub.s32 %s8, 1
        // Predicated region
        $region13: #{cnn_forward.7} parent=11 // pred_check
          %p96 = pneg %p55
        $region14: #{cnn_forward.7} parent=11 // pred_check_branch
          %98 = sbr.rel (%p96) target = $region16
        $region15: #{cnn_forward.7} parent=11 // pred_region
          _
        $region16: #{cnn_forward.7} parent=11 // pred_fallthru
          _
      $region12: #{cnn_forward.7} parent=5 // pred_fallthru
        _
      %p99 = scmp.lt.s32.totalorder %s8, 2
      // Predicated region
      $region17: #{cnn_forward.7} parent=5 // pred_check
        %p100 = pneg %p99
      $region18: #{cnn_forward.7} parent=5 // pred_check_branch
        %102 = sbr.rel (%p100) target = $region20
      $region19: #{cnn_forward.7} parent=5 // pred_region
        // Predicated region
        $region21: #{cnn_forward.7} parent=19 // pred_check
          %p103 = pneg %p28
        $region22: #{cnn_forward.7} parent=19 // pred_check_branch
          %105 = sbr.rel (%p103) target = $region24
        $region23: #{cnn_forward.7} parent=19 // pred_region
          %s106 = sand.u32 %s18, 1
          %s107 = sand.u32 %s18, 1
          %s108 = smul.addr %s107, 128
          %s109 = scalar_lea.vmem [#allocation2], %s108
          %s110 = smul.u32 4, %s8
          %s111 = smul.addr %s110, 2
          %s112 = smul.addr %s111, 4
          %s113 = scalar_lea.vmem %s0, %s112
          // Predicated region
          $region25: #{cnn_forward.7} parent=23 // pred_check
            _
          $region26: #{cnn_forward.7} parent=23 // pred_check_branch
            %115 = sbr.rel (0) target = $region28
          $region27: #{cnn_forward.7} parent=23 // pred_region
            // Predicated region
            $region29: #{cnn_forward.7} parent=27 // pred_check
              _
            $region30: #{cnn_forward.7} parent=27 // pred_check_branch
              %117 = sbr.rel (0) target = $region32
            $region31: #{cnn_forward.7} parent=27 // pred_region
              // Predicated region
              $region44: #{cnn_forward.7} parent=31 // pred_check
                _
              $region45: #{cnn_forward.7} parent=31 // pred_check_branch
                %162 = sbr.rel (0) target = $region47
              $region46: #{cnn_forward.7} parent=31 // pred_region
                loop: start=0, step=1, limit=1
                $region48: #{cnn_forward.7} parent=46 // loop_pre_header
                  _
                $region49: #{cnn_forward.7} parent=46 // loop_header
                  %s164 = sphi 0, %s168
                  %p165 = scmp.ge.s32.totalorder %s164, 1
                  %s169 = sphi %s113, %s113
                  %s170 = sphi %s109, %s109
                $region50: #{cnn_forward.7} parent=46 // loop_header_branch
                  %167 = sbr.rel (%p165) target = $region54
                $region51: #{cnn_forward.7} parent=46 // loop_body
                  %v171 = vld [vmem:[%s169] sm:$0xff]
                  %172 = vst [vmem:[%s170] sm:$0xff] %v171
                  %v173 = vld [vmem:[%s169 + $0x8] sm:$0xff]
                  %174 = vst [vmem:[%s170 + $0x8] sm:$0xff] %v173
                  %v175 = vld [vmem:[%s169 + $0x10] sm:$0xff]
                  %176 = vst [vmem:[%s170 + $0x10] sm:$0xff] %v175
                  %v177 = vld [vmem:[%s169 + $0x18] sm:$0xff]
                  %178 = vst [vmem:[%s170 + $0x18] sm:$0xff] %v177
                  %v179 = vld [vmem:[%s169 + $0x40] sm:$0xff]
                  %180 = vst [vmem:[%s170 + $0x20] sm:$0xff] %v179
                  %v181 = vld [vmem:[%s169 + $0x48] sm:$0xff]
                  %182 = vst [vmem:[%s170 + $0x28] sm:$0xff] %v181
                  %v183 = vld [vmem:[%s169 + $0x50] sm:$0xff]
                  %184 = vst [vmem:[%s170 + $0x30] sm:$0xff] %v183
                  %v185 = vld [vmem:[%s169 + $0x58] sm:$0xff]
                  %186 = vst [vmem:[%s170 + $0x38] sm:$0xff] %v185
                  %v187 = vld [vmem:[%s169 + $0x80] sm:$0xff]
                  %188 = vst [vmem:[%s170 + $0x40] sm:$0xff] %v187
                  %v189 = vld [vmem:[%s169 + $0x88] sm:$0xff]
                  %190 = vst [vmem:[%s170 + $0x48] sm:$0xff] %v189
                  %v191 = vld [vmem:[%s169 + $0x90] sm:$0xff]
                  %192 = vst [vmem:[%s170 + $0x50] sm:$0xff] %v191
                  %v193 = vld [vmem:[%s169 + $0x98] sm:$0xff]
                  %194 = vst [vmem:[%s170 + $0x58] sm:$0xff] %v193
                  %v195 = vld [vmem:[%s169 + $0xc0] sm:$0xff]
                  %196 = vst [vmem:[%s170 + $0x60] sm:$0xff] %v195
                  %v197 = vld [vmem:[%s169 + $0xc8] sm:$0xff]
                  %198 = vst [vmem:[%s170 + $0x68] sm:$0xff] %v197
                  %v199 = vld [vmem:[%s169 + $0xd0] sm:$0xff]
                  %200 = vst [vmem:[%s170 + $0x70] sm:$0xff] %v199
                  %v201 = vld [vmem:[%s169 + $0xd8] sm:$0xff]
                  %202 = vst [vmem:[%s170 + $0x78] sm:$0xff] %v201
                $region52: #{cnn_forward.7} parent=46 // loop_footer
                  %s168 = sadd.s32 1, %s164
                $region53: #{cnn_forward.7} parent=46 // loop_footer_branch
                  %163 = sbr.rel target = $region49
                $region54: #{cnn_forward.7} parent=46 // loop_exit
                  _
              $region47: #{cnn_forward.7} parent=31 // pred_fallthru
                _
              // Predicated region
              $region55: #{cnn_forward.7} parent=31 // pred_check
                _
              $region56: #{cnn_forward.7} parent=31 // pred_check_branch
                %204 = sbr.rel target = $region58
              $region57: #{cnn_forward.7} parent=31 // pred_region
                _
              $region58: #{cnn_forward.7} parent=31 // pred_fallthru
                _
            $region32: #{cnn_forward.7} parent=27 // pred_fallthru
              _
            // Predicated region
            $region33: #{cnn_forward.7} parent=27 // pred_check
              _
            $region34: #{cnn_forward.7} parent=27 // pred_check_branch
              %119 = sbr.rel target = $region36
            $region35: #{cnn_forward.7} parent=27 // pred_region
              loop: start=0, step=1, limit=1
              $region37: #{cnn_forward.7} parent=35 // loop_pre_header
                _
              $region38: #{cnn_forward.7} parent=35 // loop_header
                %s122 = sphi 0, %s126
                %p123 = scmp.ge.s32.totalorder %s122, 1
                %s127 = sphi %s113, %s113
                %s128 = sphi %s109, %s109
              $region39: #{cnn_forward.7} parent=35 // loop_header_branch
                %125 = sbr.rel (%p123) target = $region43
              $region40: #{cnn_forward.7} parent=35 // loop_body
                %v129 = vld [vmem:[%s127] sm:$0xff]
                %130 = vst [vmem:[%s128] sm:$0xff] %v129
                %v131 = vld [vmem:[%s127 + $0x8] sm:$0xff]
                %132 = vst [vmem:[%s128 + $0x8] sm:$0xff] %v131
                %v133 = vld [vmem:[%s127 + $0x10] sm:$0xff]
                %134 = vst [vmem:[%s128 + $0x10] sm:$0xff] %v133
                %v135 = vld [vmem:[%s127 + $0x18] sm:$0xff]
                %136 = vst [vmem:[%s128 + $0x18] sm:$0xff] %v135
                %v137 = vld [vmem:[%s127 + $0x40] sm:$0xff]
                %138 = vst [vmem:[%s128 + $0x20] sm:$0xff] %v137
                %v139 = vld [vmem:[%s127 + $0x48] sm:$0xff]
                %140 = vst [vmem:[%s128 + $0x28] sm:$0xff] %v139
                %v141 = vld [vmem:[%s127 + $0x50] sm:$0xff]
                %142 = vst [vmem:[%s128 + $0x30] sm:$0xff] %v141
                %v143 = vld [vmem:[%s127 + $0x58] sm:$0xff]
                %144 = vst [vmem:[%s128 + $0x38] sm:$0xff] %v143
                %v145 = vld [vmem:[%s127 + $0x80] sm:$0xff]
                %146 = vst [vmem:[%s128 + $0x40] sm:$0xff] %v145
                %v147 = vld [vmem:[%s127 + $0x88] sm:$0xff]
                %148 = vst [vmem:[%s128 + $0x48] sm:$0xff] %v147
                %v149 = vld [vmem:[%s127 + $0x90] sm:$0xff]
                %150 = vst [vmem:[%s128 + $0x50] sm:$0xff] %v149
                %v151 = vld [vmem:[%s127 + $0x98] sm:$0xff]
                %152 = vst [vmem:[%s128 + $0x58] sm:$0xff] %v151
                %v153 = vld [vmem:[%s127 + $0xc0] sm:$0xff]
                %154 = vst [vmem:[%s128 + $0x60] sm:$0xff] %v153
                %v155 = vld [vmem:[%s127 + $0xc8] sm:$0xff]
                %156 = vst [vmem:[%s128 + $0x68] sm:$0xff] %v155
                %v157 = vld [vmem:[%s127 + $0xd0] sm:$0xff]
                %158 = vst [vmem:[%s128 + $0x70] sm:$0xff] %v157
                %v159 = vld [vmem:[%s127 + $0xd8] sm:$0xff]
                %160 = vst [vmem:[%s128 + $0x78] sm:$0xff] %v159
              $region41: #{cnn_forward.7} parent=35 // loop_footer
                %s126 = sadd.s32 1, %s122
              $region42: #{cnn_forward.7} parent=35 // loop_footer_branch
                %121 = sbr.rel target = $region38
              $region43: #{cnn_forward.7} parent=35 // loop_exit
                _
            $region36: #{cnn_forward.7} parent=27 // pred_fallthru
              _
          $region28: #{cnn_forward.7} parent=23 // pred_fallthru
            _
          %205 = vnop
        $region24: #{cnn_forward.7} parent=19 // pred_fallthru
          _
      $region20: #{cnn_forward.7} parent=5 // pred_fallthru
        _
      %p206 = scmp.le.s32.totalorder 1, %s8
      %p207 = scmp.lt.s32.totalorder %s8, 3
      %p208 = pnand %p206, %p207
      %p209 = pneg %p208
      // Predicated region
      $region59: #{cnn_forward.7} parent=5 // pred_check
        _
      $region60: #{cnn_forward.7} parent=5 // pred_check_branch
        %211 = sbr.rel (%p208) target = $region62
      $region61: #{cnn_forward.7} parent=5 // pred_region
        %s212 = ssub.s32 %s8, 1
        %s213 = sand.u32 %s21, 1
        %s214 = sand.u32 %s21, 1
        %s215 = smul.addr %s214, 128
        %s216 = scalar_lea.vmem [#allocation2], %s215
        // Predicated region
        $region63: #{cnn_forward.7} parent=61 // pred_check
          %p217 = pneg %p34
        $region64: #{cnn_forward.7} parent=61 // pred_check_branch
          %219 = sbr.rel (%p217) target = $region66
        $region65: #{cnn_forward.7} parent=61 // pred_region
          _
        $region66: #{cnn_forward.7} parent=61 // pred_fallthru
          _
        %s220 = sand.u32 %s21, 1
        %s221 = sand.u32 %s21, 1
        %s222 = smul.addr %s221, 128
        %s223 = scalar_lea.vmem [#allocation2], %s222
        %p224 = pneg %p34
        %p225 = pneg %p31
        %p226 = pneg %p55
        %p227 = pneg %p52
        %p228 = pneg %p81
        %p229 = pneg %p78
        %p230 = scmp.lt.s32.totalorder %s13, 1
        %s231 = scalar_select %p230, %s13, 1
        %s232 = smul.addr %s231, 2
        %s233 = scalar_lea.vmem %s2, %s232
        %s234 = smul.u32 4, %s13
        %p235 = scmp.lt.s32.totalorder %s13, 1
        %s236 = scalar_select %p235, %s13, 1
        %s237 = smul.addr %s236, 2
        %s238 = scalar_lea.vmem %s2, %s237
        %v240 = vld [vmem:[%s216] sm:$0xff]
        %v241 = vld [vmem:[%s216 + $0x8] sm:$0xff]
        %v242 = vld [vmem:[%s216 + $0x10] sm:$0xff]
        %v243 = vld [vmem:[%s216 + $0x18] sm:$0xff]
        %v244 = vld [vmem:[%s1] sm:$0xf]
        %v245 = vld [vmem:[%s1 + $0x4] sm:$0xf]
        %v246 = vld [vmem:[%s1 + $0x8] sm:$0xf]
        %v247 = vld [vmem:[%s1 + $0xc] sm:$0xf]
        %v248 = vld [vmem:[%s1 + $0x10] sm:$0xf]
        %v249 = vld [vmem:[%s1 + $0x14] sm:$0xf]
        %v250 = vld [vmem:[%s1 + $0x18] sm:$0xf]
        %v251 = vld [vmem:[%s1 + $0x1c] sm:$0xf]
        %v252 = vld [vmem:[%s1 + $0x20] sm:$0xf]
        %v253 = vld [vmem:[%s1 + $0x24] sm:$0xf]
        %v254 = vld [vmem:[%s1 + $0x28] sm:$0xf]
        %v255 = vld [vmem:[%s1 + $0x2c] sm:$0xf]
        %v256 = vld [vmem:[%s1 + $0x30] sm:$0xf]
        %v257 = vld [vmem:[%s1 + $0x34] sm:$0xf]
        %v258 = vld [vmem:[%s1 + $0x38] sm:$0xf]
        %v259 = vld [vmem:[%s1 + $0x3c] sm:$0xf]
        %v260 = vld [vmem:[%s1 + $0x40] sm:$0xf]
        %v261 = vld [vmem:[%s1 + $0x44] sm:$0xf]
        %v262 = vld [vmem:[%s1 + $0x48] sm:$0xf]
        %v263 = vld [vmem:[%s1 + $0x4c] sm:$0xf]
        %v264 = vld [vmem:[%s1 + $0x50] sm:$0xf]
        %v265 = vld [vmem:[%s1 + $0x54] sm:$0xf]
        %v266 = vld [vmem:[%s1 + $0x58] sm:$0xf]
        %v267 = vld [vmem:[%s1 + $0x5c] sm:$0xf]
        %v268 = vld [vmem:[%s1 + $0x60] sm:$0xf]
        %v269 = vld [vmem:[%s1 + $0x64] sm:$0xf]
        %v270 = vld [vmem:[%s1 + $0x68] sm:$0xf]
        %v271 = vld [vmem:[%s1 + $0x6c] sm:$0xf]
        %v272 = vld [vmem:[%s1 + $0x70] sm:$0xf]
        %v273 = vld [vmem:[%s1 + $0x74] sm:$0xf]
        %v274 = vld [vmem:[%s1 + $0x78] sm:$0xf]
        %v275 = vld [vmem:[%s1 + $0x7c] sm:$0xf]
        %v280 = vunpack.c.l.b16 %v240
        %v281 = vunpack.c.h.b16 %v240
        %v282 = vunpack.c.l.b16 %v241
        %v283 = vunpack.c.h.b16 %v241
        %v284 = vunpack.c.l.b16 %v242
        %v285 = vunpack.c.h.b16 %v242
        %v286 = vunpack.c.l.b16 %v243
        %v287 = vunpack.c.h.b16 %v243
        %v288 = vpack.c.b16 %v282, %v280
        %v289 = vpack.c.b16 %v283, %v281
        %v290 = vpack.c.b16 %v286, %v284
        %v291 = vpack.c.b16 %v287, %v285
        %v328 = vunpack.c.l.b16 %v244
        %v329 = vunpack.c.l.b16 %v245
        %v330 = vunpack.c.l.b16 %v246
        %v331 = vunpack.c.l.b16 %v247
        %v332 = vunpack.c.l.b16 %v248
        %v333 = vunpack.c.l.b16 %v249
        %v334 = vunpack.c.l.b16 %v250
        %v335 = vunpack.c.l.b16 %v251
        %v336 = vunpack.c.l.b16 %v252
        %v337 = vunpack.c.l.b16 %v253
        %v338 = vunpack.c.l.b16 %v254
        %v339 = vunpack.c.l.b16 %v255
        %v340 = vunpack.c.l.b16 %v256
        %v341 = vunpack.c.l.b16 %v257
        %v342 = vunpack.c.l.b16 %v258
        %v343 = vunpack.c.l.b16 %v259
        %v344 = vunpack.c.l.b16 %v260
        %v345 = vunpack.c.l.b16 %v261
        %v346 = vunpack.c.l.b16 %v262
        %v347 = vunpack.c.l.b16 %v263
        %v348 = vunpack.c.l.b16 %v264
        %v349 = vunpack.c.l.b16 %v265
        %v350 = vunpack.c.l.b16 %v266
        %v351 = vunpack.c.l.b16 %v267
        %v352 = vunpack.c.l.b16 %v268
        %v353 = vunpack.c.l.b16 %v269
        %v354 = vunpack.c.l.b16 %v270
        %v355 = vunpack.c.l.b16 %v271
        %v356 = vunpack.c.l.b16 %v272
        %v357 = vunpack.c.l.b16 %v273
        %v358 = vunpack.c.l.b16 %v274
        %v359 = vunpack.c.l.b16 %v275
        %v360 = vpack.c.b16 %v329, %v328
        %v361 = vpack.c.b16 %v331, %v330
        %v362 = vpack.c.b16 %v333, %v332
        %v363 = vpack.c.b16 %v335, %v334
        %v364 = vpack.c.b16 %v337, %v336
        %v365 = vpack.c.b16 %v339, %v338
        %v366 = vpack.c.b16 %v341, %v340
        %v367 = vpack.c.b16 %v343, %v342
        %v368 = vpack.c.b16 %v345, %v344
        %v369 = vpack.c.b16 %v347, %v346
        %v370 = vpack.c.b16 %v349, %v348
        %v371 = vpack.c.b16 %v351, %v350
        %v372 = vpack.c.b16 %v353, %v352
        %v373 = vpack.c.b16 %v355, %v354
        %v374 = vpack.c.b16 %v357, %v356
        %v375 = vpack.c.b16 %v359, %v358
        %392 = vmatprep.subr.bf16.mxu0 0
        %393 = vmatpush1.bf16.msra.mxu0 %v360
        %394 = vmatprep.subr.bf16.mxu0 0
        %395 = vmatpush1.bf16.msra.mxu0 %v361
        %396 = vmatprep.subr.bf16.mxu0 0
        %397 = vmatpush1.bf16.msra.mxu0 %v362
        %398 = vmatprep.subr.bf16.mxu0 0
        %399 = vmatpush1.bf16.msra.mxu0 %v363
        %400 = vmatprep.subr.bf16.mxu0 0
        %401 = vmatpush1.bf16.msra.mxu0 %v364
        %402 = vmatprep.subr.bf16.mxu0 0
        %403 = vmatpush1.bf16.msra.mxu0 %v365
        %404 = vmatprep.subr.bf16.mxu0 0
        %405 = vmatpush1.bf16.msra.mxu0 %v366
        %406 = vmatprep.subr.bf16.mxu0 0
        %407 = vmatpush1.bf16.msra.mxu0 %v367
        %408 = vmatprep.subr.bf16.mxu0 0
        %409 = vmatpush1.bf16.msra.mxu0 %v368
        %410 = vmatprep.subr.bf16.mxu0 0
        %411 = vmatpush1.bf16.msra.mxu0 %v369
        %412 = vmatprep.subr.bf16.mxu0 0
        %413 = vmatpush1.bf16.msra.mxu0 %v370
        %414 = vmatprep.subr.bf16.mxu0 0
        %415 = vmatpush1.bf16.msra.mxu0 %v371
        %416 = vmatprep.subr.bf16.mxu0 0
        %417 = vmatpush1.bf16.msra.mxu0 %v372
        %418 = vmatprep.subr.bf16.mxu0 0
        %419 = vmatpush1.bf16.msra.mxu0 %v373
        %420 = vmatprep.subr.bf16.mxu0 0
        %421 = vmatpush1.bf16.msra.mxu0 %v374
        %422 = vmatprep.subr.bf16.mxu0 0
        %423 = vmatpush1.bf16.msra.mxu0 %v375
        %424 = vmatprep.mubr.bf16.mxu0 %v289
        %425 = vmatmul.mubr.bf16.gmra.mrb[0].mxu0 %v288
        %v426 = vpop.f32.mrb[0].mxu0
        %v427 = vadd.f32 0.0, %v426
        %v428 = vpop.f32.mrb[0].mxu0
        %v429 = vpop.f32.mrb[0].mxu0
        %v430 = vadd.f32 0.0, %v429
        %v431 = vpop.f32.mrb[0].mxu0
        %432 = vmatprep.mubr.bf16.mxu0 %v291
        %433 = vmatmul.mubr.bf16.gmra.mrb[0].mxu0 %v290
        %v434 = vpop.f32.mrb[0].mxu0
        %v435 = vadd.f32 0.0, %v434
        %v436 = vpop.f32.mrb[0].mxu0
        %v437 = vpop.f32.mrb[0].mxu0
        %v438 = vadd.f32 0.0, %v437
        %v439 = vpop.f32.mrb[0].mxu0
        %440 = vdwg.mxu0
        %v441 = vadd.f32 %v427, %v430
        %v442 = vadd.f32 %v441, %v435
        %v443 = vadd.f32 %v442, %v438
        %v444 = vrot.slane %v443, 4
        %v445 = vadd.f32 %v443, %v444
        %v446 = vrot.slane %v445, 2
        %v447 = vadd.f32 %v445, %v446
        %v448 = vrot.slane %v447, 1
        %v449 = vadd.f32 %v447, %v448
        %v450 = vadd.f32 %v449, 0.0
        %v451 = vmul.f32 %v427, %v427
        %v452 = vmul.f32 %v430, %v430
        %v453 = vmul.f32 %v435, %v435
        %v454 = vmul.f32 %v438, %v438
        %v455 = vadd.f32 %v451, %v452
        %v456 = vadd.f32 %v455, %v453
        %v457 = vadd.f32 %v456, %v454
        %v458 = vrot.slane %v457, 4
        %v459 = vadd.f32 %v457, %v458
        %v460 = vrot.slane %v459, 2
        %v461 = vadd.f32 %v459, %v460
        %v462 = vrot.slane %v461, 1
        %v463 = vadd.f32 %v461, %v462
        %v464 = vadd.f32 %v463, 0.0
        %s465 = scalar_lea.vmem %s216, 32 [#allocation2]
        %v466 = vld [vmem:[%s465] sm:$0xff]
        %v467 = vld [vmem:[%s465 + $0x8] sm:$0xff]
        %v468 = vld [vmem:[%s465 + $0x10] sm:$0xff]
        %v469 = vld [vmem:[%s465 + $0x18] sm:$0xff]
        %v474 = vunpack.c.l.b16 %v466
        %v475 = vunpack.c.h.b16 %v466
        %v476 = vunpack.c.l.b16 %v467
        %v477 = vunpack.c.h.b16 %v467
        %v478 = vunpack.c.l.b16 %v468
        %v479 = vunpack.c.h.b16 %v468
        %v480 = vunpack.c.l.b16 %v469
        %v481 = vunpack.c.h.b16 %v469
        %v482 = vpack.c.b16 %v476, %v474
        %v483 = vpack.c.b16 %v477, %v475
        %v484 = vpack.c.b16 %v480, %v478
        %v485 = vpack.c.b16 %v481, %v479
        %490 = vmatprep.subr.bf16.mxu0 0
        %491 = vmatpush1.bf16.msra.mxu0 %v360
        %492 = vmatprep.subr.bf16.mxu0 0
        %493 = vmatpush1.bf16.msra.mxu0 %v361
        %494 = vmatprep.subr.bf16.mxu0 0
        %495 = vmatpush1.bf16.msra.mxu0 %v362
        %496 = vmatprep.subr.bf16.mxu0 0
        %497 = vmatpush1.bf16.msra.mxu0 %v363
        %498 = vmatprep.subr.bf16.mxu0 0
        %499 = vmatpush1.bf16.msra.mxu0 %v364
        %500 = vmatprep.subr.bf16.mxu0 0
        %501 = vmatpush1.bf16.msra.mxu0 %v365
        %502 = vmatprep.subr.bf16.mxu0 0
        %503 = vmatpush1.bf16.msra.mxu0 %v366
        %504 = vmatprep.subr.bf16.mxu0 0
        %505 = vmatpush1.bf16.msra.mxu0 %v367
        %506 = vmatprep.subr.bf16.mxu0 0
        %507 = vmatpush1.bf16.msra.mxu0 %v368
        %508 = vmatprep.subr.bf16.mxu0 0
        %509 = vmatpush1.bf16.msra.mxu0 %v369
        %510 = vmatprep.subr.bf16.mxu0 0
        %511 = vmatpush1.bf16.msra.mxu0 %v370
        %512 = vmatprep.subr.bf16.mxu0 0
        %513 = vmatpush1.bf16.msra.mxu0 %v371
        %514 = vmatprep.subr.bf16.mxu0 0
        %515 = vmatpush1.bf16.msra.mxu0 %v372
        %516 = vmatprep.subr.bf16.mxu0 0
        %517 = vmatpush1.bf16.msra.mxu0 %v373
        %518 = vmatprep.subr.bf16.mxu0 0
        %519 = vmatpush1.bf16.msra.mxu0 %v374
        %520 = vmatprep.subr.bf16.mxu0 0
        %521 = vmatpush1.bf16.msra.mxu0 %v375
        %522 = vmatprep.mubr.bf16.mxu0 %v483
        %523 = vmatmul.mubr.bf16.gmra.mrb[0].mxu0 %v482
        %v524 = vpop.f32.mrb[0].mxu0
        %v525 = vadd.f32 0.0, %v524
        %v526 = vpop.f32.mrb[0].mxu0
        %v527 = vpop.f32.mrb[0].mxu0
        %v528 = vadd.f32 0.0, %v527
        %v529 = vpop.f32.mrb[0].mxu0
        %530 = vmatprep.mubr.bf16.mxu0 %v485
        %531 = vmatmul.mubr.bf16.gmra.mrb[0].mxu0 %v484
        %v532 = vpop.f32.mrb[0].mxu0
        %v533 = vadd.f32 0.0, %v532
        %v534 = vpop.f32.mrb[0].mxu0
        %v535 = vpop.f32.mrb[0].mxu0
        %v536 = vadd.f32 0.0, %v535
        %v537 = vpop.f32.mrb[0].mxu0
        %538 = vdwg.mxu0
        %v539 = vadd.f32 %v525, %v528
        %v540 = vadd.f32 %v539, %v533
        %v541 = vadd.f32 %v540, %v536
        %v542 = vrot.slane %v541, 4
        %v543 = vadd.f32 %v541, %v542
        %v544 = vrot.slane %v543, 2
        %v545 = vadd.f32 %v543, %v544
        %v546 = vrot.slane %v545, 1
        %v547 = vadd.f32 %v545, %v546
        %v548 = vadd.f32 %v450, %v547
        %v549 = vmul.f32 %v525, %v525
        %v550 = vmul.f32 %v528, %v528
        %v551 = vmul.f32 %v533, %v533
        %v552 = vmul.f32 %v536, %v536
        %v553 = vadd.f32 %v549, %v550
        %v554 = vadd.f32 %v553, %v551
        %v555 = vadd.f32 %v554, %v552
        %v556 = vrot.slane %v555, 4
        %v557 = vadd.f32 %v555, %v556
        %v558 = vrot.slane %v557, 2
        %v559 = vadd.f32 %v557, %v558
        %v560 = vrot.slane %v559, 1
        %v561 = vadd.f32 %v559, %v560
        %v562 = vadd.f32 %v464, %v561
        %s563 = scalar_lea.vmem %s216, 64 [#allocation2]
        %v564 = vld [vmem:[%s563] sm:$0xff]
        %v565 = vld [vmem:[%s563 + $0x8] sm:$0xff]
        %v566 = vld [vmem:[%s563 + $0x10] sm:$0xff]
        %v567 = vld [vmem:[%s563 + $0x18] sm:$0xff]
        %v572 = vunpack.c.l.b16 %v564
        %v573 = vunpack.c.h.b16 %v564
        %v574 = vunpack.c.l.b16 %v565
        %v575 = vunpack.c.h.b16 %v565
        %v576 = vunpack.c.l.b16 %v566
        %v577 = vunpack.c.h.b16 %v566
        %v578 = vunpack.c.l.b16 %v567
        %v579 = vunpack.c.h.b16 %v567
        %v580 = vpack.c.b16 %v574, %v572
        %v581 = vpack.c.b16 %v575, %v573
        %v582 = vpack.c.b16 %v578, %v576
        %v583 = vpack.c.b16 %v579, %v577
        %588 = vmatprep.subr.bf16.mxu0 0
        %589 = vmatpush1.bf16.msra.mxu0 %v360
        %590 = vmatprep.subr.bf16.mxu0 0
        %591 = vmatpush1.bf16.msra.mxu0 %v361
        %592 = vmatprep.subr.bf16.mxu0 0
        %593 = vmatpush1.bf16.msra.mxu0 %v362
        %594 = vmatprep.subr.bf16.mxu0 0
        %595 = vmatpush1.bf16.msra.mxu0 %v363
        %596 = vmatprep.subr.bf16.mxu0 0
        %597 = vmatpush1.bf16.msra.mxu0 %v364
        %598 = vmatprep.subr.bf16.mxu0 0
        %599 = vmatpush1.bf16.msra.mxu0 %v365
        %600 = vmatprep.subr.bf16.mxu0 0
        %601 = vmatpush1.bf16.msra.mxu0 %v366
        %602 = vmatprep.subr.bf16.mxu0 0
        %603 = vmatpush1.bf16.msra.mxu0 %v367
        %604 = vmatprep.subr.bf16.mxu0 0
        %605 = vmatpush1.bf16.msra.mxu0 %v368
        %606 = vmatprep.subr.bf16.mxu0 0
        %607 = vmatpush1.bf16.msra.mxu0 %v369
        %608 = vmatprep.subr.bf16.mxu0 0
        %609 = vmatpush1.bf16.msra.mxu0 %v370
        %610 = vmatprep.subr.bf16.mxu0 0
        %611 = vmatpush1.bf16.msra.mxu0 %v371
        %612 = vmatprep.subr.bf16.mxu0 0
        %613 = vmatpush1.bf16.msra.mxu0 %v372
        %614 = vmatprep.subr.bf16.mxu0 0
        %615 = vmatpush1.bf16.msra.mxu0 %v373
        %616 = vmatprep.subr.bf16.mxu0 0
        %617 = vmatpush1.bf16.msra.mxu0 %v374
        %618 = vmatprep.subr.bf16.mxu0 0
        %619 = vmatpush1.bf16.msra.mxu0 %v375
        %620 = vmatprep.mubr.bf16.mxu0 %v581
        %621 = vmatmul.mubr.bf16.gmra.mrb[0].mxu0 %v580
        %v622 = vpop.f32.mrb[0].mxu0
        %v623 = vadd.f32 0.0, %v622
        %v624 = vpop.f32.mrb[0].mxu0
        %v625 = vpop.f32.mrb[0].mxu0
        %v626 = vadd.f32 0.0, %v625
        %v627 = vpop.f32.mrb[0].mxu0
        %628 = vmatprep.mubr.bf16.mxu0 %v583
        %629 = vmatmul.mubr.bf16.gmra.mrb[0].mxu0 %v582
        %v630 = vpop.f32.mrb[0].mxu0
        %v631 = vadd.f32 0.0, %v630
        %v632 = vpop.f32.mrb[0].mxu0
        %v633 = vpop.f32.mrb[0].mxu0
        %v634 = vadd.f32 0.0, %v633
        %v635 = vpop.f32.mrb[0].mxu0
        %636 = vdwg.mxu0
        %v637 = vadd.f32 %v623, %v626
        %v638 = vadd.f32 %v637, %v631
        %v639 = vadd.f32 %v638, %v634
        %v640 = vrot.slane %v639, 4
        %v641 = vadd.f32 %v639, %v640
        %v642 = vrot.slane %v641, 2
        %v643 = vadd.f32 %v641, %v642
        %v644 = vrot.slane %v643, 1
        %v645 = vadd.f32 %v643, %v644
        %v646 = vadd.f32 %v548, %v645
        %v647 = vmul.f32 %v623, %v623
        %v648 = vmul.f32 %v626, %v626
        %v649 = vmul.f32 %v631, %v631
        %v650 = vmul.f32 %v634, %v634
        %v651 = vadd.f32 %v647, %v648
        %v652 = vadd.f32 %v651, %v649
        %v653 = vadd.f32 %v652, %v650
        %v654 = vrot.slane %v653, 4
        %v655 = vadd.f32 %v653, %v654
        %v656 = vrot.slane %v655, 2
        %v657 = vadd.f32 %v655, %v656
        %v658 = vrot.slane %v657, 1
        %v659 = vadd.f32 %v657, %v658
        %v660 = vadd.f32 %v562, %v659
        %s661 = scalar_lea.vmem %s216, 96 [#allocation2]
        %v662 = vld [vmem:[%s661] sm:$0xff]
        %v663 = vld [vmem:[%s661 + $0x8] sm:$0xff]
        %v664 = vld [vmem:[%s661 + $0x10] sm:$0xff]
        %v665 = vld [vmem:[%s661 + $0x18] sm:$0xff]
        %v670 = vunpack.c.l.b16 %v662
        %v671 = vunpack.c.h.b16 %v662
        %v672 = vunpack.c.l.b16 %v663
        %v673 = vunpack.c.h.b16 %v663
        %v674 = vunpack.c.l.b16 %v664
        %v675 = vunpack.c.h.b16 %v664
        %v676 = vunpack.c.l.b16 %v665
        %v677 = vunpack.c.h.b16 %v665
        %v678 = vpack.c.b16 %v672, %v670
        %v679 = vpack.c.b16 %v673, %v671
        %v680 = vpack.c.b16 %v676, %v674
        %v681 = vpack.c.b16 %v677, %v675
        %686 = vmatprep.subr.bf16.mxu0 0
        %687 = vmatpush1.bf16.msra.mxu0 %v360
        %688 = vmatprep.subr.bf16.mxu0 0
        %689 = vmatpush1.bf16.msra.mxu0 %v361
        %690 = vmatprep.subr.bf16.mxu0 0
        %691 = vmatpush1.bf16.msra.mxu0 %v362
        %692 = vmatprep.subr.bf16.mxu0 0
        %693 = vmatpush1.bf16.msra.mxu0 %v363
        %694 = vmatprep.subr.bf16.mxu0 0
        %695 = vmatpush1.bf16.msra.mxu0 %v364
        %696 = vmatprep.subr.bf16.mxu0 0
        %697 = vmatpush1.bf16.msra.mxu0 %v365
        %698 = vmatprep.subr.bf16.mxu0 0
        %699 = vmatpush1.bf16.msra.mxu0 %v366
        %700 = vmatprep.subr.bf16.mxu0 0
        %701 = vmatpush1.bf16.msra.mxu0 %v367
        %702 = vmatprep.subr.bf16.mxu0 0
        %703 = vmatpush1.bf16.msra.mxu0 %v368
        %704 = vmatprep.subr.bf16.mxu0 0
        %705 = vmatpush1.bf16.msra.mxu0 %v369
        %706 = vmatprep.subr.bf16.mxu0 0
        %707 = vmatpush1.bf16.msra.mxu0 %v370
        %708 = vmatprep.subr.bf16.mxu0 0
        %709 = vmatpush1.bf16.msra.mxu0 %v371
        %710 = vmatprep.subr.bf16.mxu0 0
        %711 = vmatpush1.bf16.msra.mxu0 %v372
        %712 = vmatprep.subr.bf16.mxu0 0
        %713 = vmatpush1.bf16.msra.mxu0 %v373
        %714 = vmatprep.subr.bf16.mxu0 0
        %715 = vmatpush1.bf16.msra.mxu0 %v374
        %716 = vmatprep.subr.bf16.mxu0 0
        %717 = vmatpush1.bf16.msra.mxu0 %v375
        %718 = vmatprep.mubr.bf16.mxu0 %v679
        %719 = vmatmul.mubr.bf16.gmra.mrb[0].mxu0 %v678
        %v720 = vpop.f32.mrb[0].mxu0
        %v721 = vadd.f32 0.0, %v720
        %v722 = vpop.f32.mrb[0].mxu0
        %v723 = vpop.f32.mrb[0].mxu0
        %v724 = vadd.f32 0.0, %v723
        %v725 = vpop.f32.mrb[0].mxu0
        %726 = vmatprep.mubr.bf16.mxu0 %v681
        %727 = vmatmul.mubr.bf16.gmra.mrb[0].mxu0 %v680
        %v728 = vpop.f32.mrb[0].mxu0
        %v729 = vadd.f32 0.0, %v728
        %v730 = vpop.f32.mrb[0].mxu0
        %v731 = vpop.f32.mrb[0].mxu0
        %v732 = vadd.f32 0.0, %v731
        %v733 = vpop.f32.mrb[0].mxu0
        %734 = vdwg.mxu0
        %v735 = vadd.f32 %v721, %v724
        %v736 = vadd.f32 %v735, %v729
        %v737 = vadd.f32 %v736, %v732
        %v738 = vrot.slane %v737, 4
        %v739 = vadd.f32 %v737, %v738
        %v740 = vrot.slane %v739, 2
        %v741 = vadd.f32 %v739, %v740
        %v742 = vrot.slane %v741, 1
        %v743 = vadd.f32 %v741, %v742
        %v744 = vadd.f32 %v646, %v743
        %v745 = vmul.f32 %v721, %v721
        %v746 = vmul.f32 %v724, %v724
        %v747 = vmul.f32 %v729, %v729
        %v748 = vmul.f32 %v732, %v732
        %v749 = vadd.f32 %v745, %v746
        %v750 = vadd.f32 %v749, %v747
        %v751 = vadd.f32 %v750, %v748
        %v752 = vrot.slane %v751, 4
        %v753 = vadd.f32 %v751, %v752
        %v754 = vrot.slane %v753, 2
        %v755 = vadd.f32 %v753, %v754
        %v756 = vrot.slane %v755, 1
        %v757 = vadd.f32 %v755, %v756
        %v758 = vadd.f32 %v660, %v757
        %vm759 = vcmask 1040384
        %v760 = vsel %vm759, %v744, %v758
        %761 = vst [vmem:[%s238] sm:$0x3] %v760
        %p762 = scmp.lt.s32.totalorder %s13, 1
        %s763 = scalar_select %p762, %s13, 1
        %s764 = smul.addr %s763, 2
        %s765 = scalar_lea.vmem %s2, %s764
        // Predicated region
        $region67: #{cnn_forward.7} parent=61 // pred_check
          %p766 = pneg %p78
        $region68: #{cnn_forward.7} parent=61 // pred_check_branch
          %768 = sbr.rel (%p766) target = $region70
        $region69: #{cnn_forward.7} parent=61 // pred_region
          _
        $region70: #{cnn_forward.7} parent=61 // pred_fallthru
          _
      $region62: #{cnn_forward.7} parent=5 // pred_fallthru
        _
      %p769 = scmp.le.s32.totalorder 2, %s8
      // Predicated region
      $region71: #{cnn_forward.7} parent=5 // pred_check
        %p770 = pneg %p769
      $region72: #{cnn_forward.7} parent=5 // pred_check_branch
        %772 = sbr.rel (%p770) target = $region74
      $region73: #{cnn_forward.7} parent=5 // pred_region
        %s773 = ssub.s32 %s8, 2
        // Predicated region
        $region75: #{cnn_forward.7} parent=73 // pred_check
          %p774 = pneg %p84
        $region76: #{cnn_forward.7} parent=73 // pred_check_branch
          %776 = sbr.rel (%p774) target = $region78
        $region77: #{cnn_forward.7} parent=73 // pred_region
          %p777 = scmp.lt.s32.totalorder %s14, 1
          %s778 = scalar_select %p777, %s14, 1
          %s779 = smul.addr %s778, 2
          %s780 = scalar_lea.vmem %s2, %s779
        $region78: #{cnn_forward.7} parent=73 // pred_fallthru
          _
      $region74: #{cnn_forward.7} parent=5 // pred_fallthru
        _
    $region6: #{cnn_forward.7} parent=1 // loop_footer
      %s12 = sadd.s32 1, %s8
    $region7: #{cnn_forward.7} parent=1 // loop_footer_branch
      %7 = sbr.rel target = $region3
    $region8: #{cnn_forward.7} parent=1 // loop_exit
      _

// kernel: cnn_forward.8
$region0: #{cnn_forward.8}
  #allocation0 [shape = 'u32[]', space=smem, size = 0x4, offset = 0x4, fixed_abs, tag = 'smem constant byte address 0x4 - core index']
  #allocation1 [shape = 'u32[144,128]{1,0:T(1,128)}', space=vmem, size = 0x12000, scoped, tag = 'internal scratch']
  %s0 = inlined_call_operand.vmem [shape: bf16[4,64,256], index: 0, kind: input, shape index: {}]
  %s1 = inlined_call_operand.vmem [shape: bf16[256,128], index: 1, kind: input, shape index: {}]
  %s2 = inlined_call_operand.vmem [shape: f32[1,128], index: 2, kind: input, shape index: {}]
  %s3 = inlined_call_operand.vmem [shape: f32[1,128], index: 3, kind: input, shape index: {}]
  %s4 = inlined_call_operand.vmem [shape: bf16[64,128], index: 4, kind: output, shape index: {}]
  %s5 = sld [smem:[#allocation0]]
  $region87: #{cnn_forward.8} parent=0
    _
  %s7 = ssub.s32 1, %s5
  %s8 = scalar_select 0, %s7, %s5
  $region1: #{cnn_forward.8} parent=0
    #allocation2 [shape = 'u8[131072]{0}', space=vmem, size = 0x20000, scoped, tag = 'input window, operand 0']
    loop: start=0, step=1, limit=4
    $region2: #{cnn_forward.8} parent=1 // loop_pre_header
      _
    $region3: #{cnn_forward.8} parent=1 // loop_header
      %s10 = sphi 0, %s14
      %p11 = scmp.ge.s32.totalorder %s10, 4
      %s20 = sphi 0, %s22
      %s23 = sphi 0, %s20
      %s24 = sphi 0, %s23
      %s40 = sphi 0, %s24
      %s44 = sphi 0, %s44
      %s46 = sphi 0, %s44
      %s47 = sphi 0, %s46
      %s61 = sphi 0, %s47
      %s65 = sphi 0, %s65
      %s67 = sphi 0, %s65
      %s68 = sphi 0, %s67
      %s82 = sphi 0, %s68
      %s86 = sphi 0, %s86
      %s88 = sphi 0, %s86
      %s89 = sphi 0, %s88
      %s103 = sphi 0, %s89
      %s109 = sphi 0, %s111
      %s112 = sphi 0, %s109
      %s113 = sphi 0, %s112
      %s129 = sphi 0, %s113
    $region4: #{cnn_forward.8} parent=1 // loop_header_branch
      %13 = sbr.rel (%p11) target = $region8
    $region5: #{cnn_forward.8} parent=1 // loop_body
      %s15 = ssub.s32 %s10, 1
      %s16 = ssub.s32 %s10, 2
      %s17 = sadd.s32 %s10, 1
      %s18 = ssub.s32 %s10, %s17
      %p19 = scmp.eq.s32.totalorder %s18, 0
      %s21 = sadd.s32 %s20, 1
      %s22 = scalar_select %p19, %s20, %s21
      %p25 = pneg %p19
      %p26 = scmp.eq.s32.totalorder %s10, 1
      %p27 = por %p25, %p26
      %p28 = scmp.ne.s32.totalorder %s20, %s23
      %p29 = scmp.eq.s32.totalorder %s10, 0
      %p30 = por %p28, %p29
      %p31 = scmp.ne.s32.totalorder %s20, %s23
      %p32 = scmp.eq.s32.totalorder %s15, 1
      %p33 = por %p31, %p32
      %p34 = scmp.ne.s32.totalorder %s23, %s24
      %p35 = scmp.eq.s32.totalorder %s15, 0
      %p36 = por %p34, %p35
      %p37 = scmp.ne.s32.totalorder %s23, %s24
      %p38 = scmp.eq.s32.totalorder %s16, 1
      %p39 = por %p37, %p38
      %p41 = scmp.ne.s32.totalorder %s24, %s40
      %p42 = scmp.eq.s32.totalorder %s16, 0
      %p43 = por %p41, %p42
      %s45 = sadd.s32 %s44, 1
      %p48 = scmp.eq.s32.totalorder %s10, 1
      %p49 = scmp.ne.s32.totalorder %s44, %s46
      %p50 = scmp.eq.s32.totalorder %s10, 0
      %p51 = por %p49, %p50
      %p52 = scmp.ne.s32.totalorder %s44, %s46
      %p53 = scmp.eq.s32.totalorder %s15, 1
      %p54 = por %p52, %p53
      %p55 = scmp.ne.s32.totalorder %s46, %s47
      %p56 = scmp.eq.s32.totalorder %s15, 0
      %p57 = por %p55, %p56
      %p58 = scmp.ne.s32.totalorder %s46, %s47
      %p59 = scmp.eq.s32.totalorder %s16, 1
      %p60 = por %p58, %p59
      %p62 = scmp.ne.s32.totalorder %s47, %s61
      %p63 = scmp.eq.s32.totalorder %s16, 0
      %p64 = por %p62, %p63
      %s66 = sadd.s32 %s65, 1
      %p69 = scmp.eq.s32.totalorder %s10, 1
      %p70 = scmp.ne.s32.totalorder %s65, %s67
      %p71 = scmp.eq.s32.totalorder %s10, 0
      %p72 = por %p70, %p71
      %p73 = scmp.ne.s32.totalorder %s65, %s67
      %p74 = scmp.eq.s32.totalorder %s15, 1
      %p75 = por %p73, %p74
      %p76 = scmp.ne.s32.totalorder %s67, %s68
      %p77 = scmp.eq.s32.totalorder %s15, 0
      %p78 = por %p76, %p77
      %p79 = scmp.ne.s32.totalorder %s67, %s68
      %p80 = scmp.eq.s32.totalorder %s16, 1
      %p81 = por %p79, %p80
      %p83 = scmp.ne.s32.totalorder %s68, %s82
      %p84 = scmp.eq.s32.totalorder %s16, 0
      %p85 = por %p83, %p84
      %s87 = sadd.s32 %s86, 1
      %p90 = scmp.eq.s32.totalorder %s10, 1
      %p91 = scmp.ne.s32.totalorder %s86, %s88
      %p92 = scmp.eq.s32.totalorder %s10, 0
      %p93 = por %p91, %p92
      %p94 = scmp.ne.s32.totalorder %s86, %s88
      %p95 = scmp.eq.s32.totalorder %s15, 1
      %p96 = por %p94, %p95
      %p97 = scmp.ne.s32.totalorder %s88, %s89
      %p98 = scmp.eq.s32.totalorder %s15, 0
      %p99 = por %p97, %p98
      %p100 = scmp.ne.s32.totalorder %s88, %s89
      %p101 = scmp.eq.s32.totalorder %s16, 1
      %p102 = por %p100, %p101
      %p104 = scmp.ne.s32.totalorder %s89, %s103
      %p105 = scmp.eq.s32.totalorder %s16, 0
      %p106 = por %p104, %p105
      %s107 = ssub.s32 %s10, %s17
      %p108 = scmp.eq.s32.totalorder %s107, 0
      %s110 = sadd.s32 %s109, 1
      %s111 = scalar_select %p108, %s109, %s110
      %p114 = pneg %p108
      %p115 = scmp.eq.s32.totalorder %s10, 1
      %p116 = por %p114, %p115
      %p117 = scmp.ne.s32.totalorder %s109, %s112
      %p118 = scmp.eq.s32.totalorder %s10, 0
      %p119 = por %p117, %p118
      %p120 = scmp.ne.s32.totalorder %s109, %s112
      %p121 = scmp.eq.s32.totalorder %s15, 1
      %p122 = por %p120, %p121
      %p123 = scmp.ne.s32.totalorder %s112, %s113
      %p124 = scmp.eq.s32.totalorder %s15, 0
      %p125 = por %p123, %p124
      %p126 = scmp.ne.s32.totalorder %s112, %s113
      %p127 = scmp.eq.s32.totalorder %s16, 1
      %p128 = por %p126, %p127
      %p130 = scmp.ne.s32.totalorder %s113, %s129
      %p131 = scmp.eq.s32.totalorder %s16, 0
      %p132 = por %p130, %p131
      %p133 = scmp.le.s32.totalorder 1, %s10
      %p134 = scmp.lt.s32.totalorder %s10, 3
      %p135 = pnand %p133, %p134
      %p136 = pneg %p135
      // Predicated region
      $region9: #{cnn_forward.8} parent=5 // pred_check
        _
      $region10: #{cnn_forward.8} parent=5 // pred_check_branch
        %138 = sbr.rel (%p135) target = $region12
      $region11: #{cnn_forward.8} parent=5 // pred_region
        %s139 = ssub.s32 %s10, 1
        // Predicated region
        $region13: #{cnn_forward.8} parent=11 // pred_check
          %p140 = pneg %p57
        $region14: #{cnn_forward.8} parent=11 // pred_check_branch
          %142 = sbr.rel (%p140) target = $region16
        $region15: #{cnn_forward.8} parent=11 // pred_region
          _
        $region16: #{cnn_forward.8} parent=11 // pred_fallthru
          _
        // Predicated region
        $region17: #{cnn_forward.8} parent=11 // pred_check
          %p143 = pneg %p78
        $region18: #{cnn_forward.8} parent=11 // pred_check_branch
          %145 = sbr.rel (%p143) target = $region20
        $region19: #{cnn_forward.8} parent=11 // pred_region
          _
        $region20: #{cnn_forward.8} parent=11 // pred_fallthru
          _
        // Predicated region
        $region21: #{cnn_forward.8} parent=11 // pred_check
          %p146 = pneg %p99
        $region22: #{cnn_forward.8} parent=11 // pred_check_branch
          %148 = sbr.rel (%p146) target = $region24
        $region23: #{cnn_forward.8} parent=11 // pred_region
          _
        $region24: #{cnn_forward.8} parent=11 // pred_fallthru
          _
      $region12: #{cnn_forward.8} parent=5 // pred_fallthru
        _
      %p149 = scmp.lt.s32.totalorder %s10, 2
      // Predicated region
      $region25: #{cnn_forward.8} parent=5 // pred_check
        %p150 = pneg %p149
      $region26: #{cnn_forward.8} parent=5 // pred_check_branch
        %152 = sbr.rel (%p150) target = $region28
      $region27: #{cnn_forward.8} parent=5 // pred_region
        // Predicated region
        $region29: #{cnn_forward.8} parent=27 // pred_check
          %p153 = pneg %p30
        $region30: #{cnn_forward.8} parent=27 // pred_check_branch
          %155 = sbr.rel (%p153) target = $region32
        $region31: #{cnn_forward.8} parent=27 // pred_region
          %s156 = sand.u32 %s20, 1
          %s157 = sand.u32 %s20, 1
          %s158 = smul.addr %s157, 128
          %s159 = scalar_lea.vmem [#allocation2], %s158
          %s160 = smul.u32 4, %s10
          %s161 = smul.addr %s160, 2
          %s162 = smul.addr %s161, 4
          %s163 = scalar_lea.vmem %s0, %s162
          // Predicated region
          $region33: #{cnn_forward.8} parent=31 // pred_check
            _
          $region34: #{cnn_forward.8} parent=31 // pred_check_branch
            %165 = sbr.rel (0) target = $region36
          $region35: #{cnn_forward.8} parent=31 // pred_region
            // Predicated region
            $region37: #{cnn_forward.8} parent=35 // pred_check
              _
            $region38: #{cnn_forward.8} parent=35 // pred_check_branch
              %167 = sbr.rel (0) target = $region40
            $region39: #{cnn_forward.8} parent=35 // pred_region
              // Predicated region
              $region52: #{cnn_forward.8} parent=39 // pred_check
                _
              $region53: #{cnn_forward.8} parent=39 // pred_check_branch
                %212 = sbr.rel (0) target = $region55
              $region54: #{cnn_forward.8} parent=39 // pred_region
                loop: start=0, step=1, limit=1
                $region56: #{cnn_forward.8} parent=54 // loop_pre_header
                  _
                $region57: #{cnn_forward.8} parent=54 // loop_header
                  %s214 = sphi 0, %s218
                  %p215 = scmp.ge.s32.totalorder %s214, 1
                  %s219 = sphi %s163, %s163
                  %s220 = sphi %s159, %s159
                $region58: #{cnn_forward.8} parent=54 // loop_header_branch
                  %217 = sbr.rel (%p215) target = $region62
                $region59: #{cnn_forward.8} parent=54 // loop_body
                  %v221 = vld [vmem:[%s219] sm:$0xff]
                  %222 = vst [vmem:[%s220] sm:$0xff] %v221
                  %v223 = vld [vmem:[%s219 + $0x8] sm:$0xff]
                  %224 = vst [vmem:[%s220 + $0x8] sm:$0xff] %v223
                  %v225 = vld [vmem:[%s219 + $0x10] sm:$0xff]
                  %226 = vst [vmem:[%s220 + $0x10] sm:$0xff] %v225
                  %v227 = vld [vmem:[%s219 + $0x18] sm:$0xff]
                  %228 = vst [vmem:[%s220 + $0x18] sm:$0xff] %v227
                  %v229 = vld [vmem:[%s219 + $0x40] sm:$0xff]
                  %230 = vst [vmem:[%s220 + $0x20] sm:$0xff] %v229
                  %v231 = vld [vmem:[%s219 + $0x48] sm:$0xff]
                  %232 = vst [vmem:[%s220 + $0x28] sm:$0xff] %v231
                  %v233 = vld [vmem:[%s219 + $0x50] sm:$0xff]
                  %234 = vst [vmem:[%s220 + $0x30] sm:$0xff] %v233
                  %v235 = vld [vmem:[%s219 + $0x58] sm:$0xff]
                  %236 = vst [vmem:[%s220 + $0x38] sm:$0xff] %v235
                  %v237 = vld [vmem:[%s219 + $0x80] sm:$0xff]
                  %238 = vst [vmem:[%s220 + $0x40] sm:$0xff] %v237
                  %v239 = vld [vmem:[%s219 + $0x88] sm:$0xff]
                  %240 = vst [vmem:[%s220 + $0x48] sm:$0xff] %v239
                  %v241 = vld [vmem:[%s219 + $0x90] sm:$0xff]
                  %242 = vst [vmem:[%s220 + $0x50] sm:$0xff] %v241
                  %v243 = vld [vmem:[%s219 + $0x98] sm:$0xff]
                  %244 = vst [vmem:[%s220 + $0x58] sm:$0xff] %v243
                  %v245 = vld [vmem:[%s219 + $0xc0] sm:$0xff]
                  %246 = vst [vmem:[%s220 + $0x60] sm:$0xff] %v245
                  %v247 = vld [vmem:[%s219 + $0xc8] sm:$0xff]
                  %248 = vst [vmem:[%s220 + $0x68] sm:$0xff] %v247
                  %v249 = vld [vmem:[%s219 + $0xd0] sm:$0xff]
                  %250 = vst [vmem:[%s220 + $0x70] sm:$0xff] %v249
                  %v251 = vld [vmem:[%s219 + $0xd8] sm:$0xff]
                  %252 = vst [vmem:[%s220 + $0x78] sm:$0xff] %v251
                $region60: #{cnn_forward.8} parent=54 // loop_footer
                  %s218 = sadd.s32 1, %s214
                $region61: #{cnn_forward.8} parent=54 // loop_footer_branch
                  %213 = sbr.rel target = $region57
                $region62: #{cnn_forward.8} parent=54 // loop_exit
                  _
              $region55: #{cnn_forward.8} parent=39 // pred_fallthru
                _
              // Predicated region
              $region63: #{cnn_forward.8} parent=39 // pred_check
                _
              $region64: #{cnn_forward.8} parent=39 // pred_check_branch
                %254 = sbr.rel target = $region66
              $region65: #{cnn_forward.8} parent=39 // pred_region
                _
              $region66: #{cnn_forward.8} parent=39 // pred_fallthru
                _
            $region40: #{cnn_forward.8} parent=35 // pred_fallthru
              _
            // Predicated region
            $region41: #{cnn_forward.8} parent=35 // pred_check
              _
            $region42: #{cnn_forward.8} parent=35 // pred_check_branch
              %169 = sbr.rel target = $region44
            $region43: #{cnn_forward.8} parent=35 // pred_region
              loop: start=0, step=1, limit=1
              $region45: #{cnn_forward.8} parent=43 // loop_pre_header
                _
              $region46: #{cnn_forward.8} parent=43 // loop_header
                %s172 = sphi 0, %s176
                %p173 = scmp.ge.s32.totalorder %s172, 1
                %s177 = sphi %s163, %s163
                %s178 = sphi %s159, %s159
              $region47: #{cnn_forward.8} parent=43 // loop_header_branch
                %175 = sbr.rel (%p173) target = $region51
              $region48: #{cnn_forward.8} parent=43 // loop_body
                %v179 = vld [vmem:[%s177] sm:$0xff]
                %180 = vst [vmem:[%s178] sm:$0xff] %v179
                %v181 = vld [vmem:[%s177 + $0x8] sm:$0xff]
                %182 = vst [vmem:[%s178 + $0x8] sm:$0xff] %v181
                %v183 = vld [vmem:[%s177 + $0x10] sm:$0xff]
                %184 = vst [vmem:[%s178 + $0x10] sm:$0xff] %v183
                %v185 = vld [vmem:[%s177 + $0x18] sm:$0xff]
                %186 = vst [vmem:[%s178 + $0x18] sm:$0xff] %v185
                %v187 = vld [vmem:[%s177 + $0x40] sm:$0xff]
                %188 = vst [vmem:[%s178 + $0x20] sm:$0xff] %v187
                %v189 = vld [vmem:[%s177 + $0x48] sm:$0xff]
                %190 = vst [vmem:[%s178 + $0x28] sm:$0xff] %v189
                %v191 = vld [vmem:[%s177 + $0x50] sm:$0xff]
                %192 = vst [vmem:[%s178 + $0x30] sm:$0xff] %v191
                %v193 = vld [vmem:[%s177 + $0x58] sm:$0xff]
                %194 = vst [vmem:[%s178 + $0x38] sm:$0xff] %v193
                %v195 = vld [vmem:[%s177 + $0x80] sm:$0xff]
                %196 = vst [vmem:[%s178 + $0x40] sm:$0xff] %v195
                %v197 = vld [vmem:[%s177 + $0x88] sm:$0xff]
                %198 = vst [vmem:[%s178 + $0x48] sm:$0xff] %v197
                %v199 = vld [vmem:[%s177 + $0x90] sm:$0xff]
                %200 = vst [vmem:[%s178 + $0x50] sm:$0xff] %v199
                %v201 = vld [vmem:[%s177 + $0x98] sm:$0xff]
                %202 = vst [vmem:[%s178 + $0x58] sm:$0xff] %v201
                %v203 = vld [vmem:[%s177 + $0xc0] sm:$0xff]
                %204 = vst [vmem:[%s178 + $0x60] sm:$0xff] %v203
                %v205 = vld [vmem:[%s177 + $0xc8] sm:$0xff]
                %206 = vst [vmem:[%s178 + $0x68] sm:$0xff] %v205
                %v207 = vld [vmem:[%s177 + $0xd0] sm:$0xff]
                %208 = vst [vmem:[%s178 + $0x70] sm:$0xff] %v207
                %v209 = vld [vmem:[%s177 + $0xd8] sm:$0xff]
                %210 = vst [vmem:[%s178 + $0x78] sm:$0xff] %v209
              $region49: #{cnn_forward.8} parent=43 // loop_footer
                %s176 = sadd.s32 1, %s172
              $region50: #{cnn_forward.8} parent=43 // loop_footer_branch
                %171 = sbr.rel target = $region46
              $region51: #{cnn_forward.8} parent=43 // loop_exit
                _
            $region44: #{cnn_forward.8} parent=35 // pred_fallthru
              _
          $region36: #{cnn_forward.8} parent=31 // pred_fallthru
            _
          %255 = vnop
        $region32: #{cnn_forward.8} parent=27 // pred_fallthru
          _
      $region28: #{cnn_forward.8} parent=5 // pred_fallthru
        _
      %p256 = scmp.le.s32.totalorder 1, %s10
      %p257 = scmp.lt.s32.totalorder %s10, 3
      %p258 = pnand %p256, %p257
      %p259 = pneg %p258
      // Predicated region
      $region67: #{cnn_forward.8} parent=5 // pred_check
        _
      $region68: #{cnn_forward.8} parent=5 // pred_check_branch
        %261 = sbr.rel (%p258) target = $region70
      $region69: #{cnn_forward.8} parent=5 // pred_region
        %s262 = ssub.s32 %s10, 1
        %s263 = sand.u32 %s23, 1
        %s264 = sand.u32 %s23, 1
        %s265 = smul.addr %s264, 128
        %s266 = scalar_lea.vmem [#allocation2], %s265
        // Predicated region
        $region71: #{cnn_forward.8} parent=69 // pred_check
          %p267 = pneg %p36
        $region72: #{cnn_forward.8} parent=69 // pred_check_branch
          %269 = sbr.rel (%p267) target = $region74
        $region73: #{cnn_forward.8} parent=69 // pred_region
          _
        $region74: #{cnn_forward.8} parent=69 // pred_fallthru
          _
        %s270 = sand.u32 %s23, 1
        %s271 = sand.u32 %s23, 1
        %s272 = smul.addr %s271, 128
        %s273 = scalar_lea.vmem [#allocation2], %s272
        %p274 = pneg %p36
        %p275 = pneg %p33
        %p276 = pneg %p57
        %p277 = pneg %p54
        %p278 = pneg %p78
        %p279 = pneg %p75
        %p280 = pneg %p99
        %p281 = pneg %p96
        %p282 = pneg %p125
        %p283 = pneg %p122
        %s284 = smul.u32 4, %s15
        %p285 = scmp.lt.s32.totalorder %s284, 7
        %s286 = scalar_select %p285, %s284, 7
        %s287 = smul.addr %s286, 4
        %s288 = scalar_lea.vmem %s4, %s287
        %s289 = smul.u32 4, %s15
        %s290 = smul.u32 4, %s15
        %p291 = scmp.lt.s32.totalorder %s290, 7
        %s292 = scalar_select %p291, %s290, 7
        %s293 = smul.addr %s292, 4
        %s294 = scalar_lea.vmem %s4, %s293
        %s295 = smul.u32 4, %s15
        %v297 = vld [vmem:[%s266] sm:$0xff]
        %v298 = vld [vmem:[%s266 + $0x8] sm:$0xff]
        %v299 = vld [vmem:[%s266 + $0x10] sm:$0xff]
        %v300 = vld [vmem:[%s266 + $0x18] sm:$0xff]
        %v301 = vld [vmem:[%s1] sm:$0xf]
        %v302 = vld [vmem:[%s1 + $0x4] sm:$0xf]
        %v303 = vld [vmem:[%s1 + $0x8] sm:$0xf]
        %v304 = vld [vmem:[%s1 + $0xc] sm:$0xf]
        %v305 = vld [vmem:[%s1 + $0x10] sm:$0xf]
        %v306 = vld [vmem:[%s1 + $0x14] sm:$0xf]
        %v307 = vld [vmem:[%s1 + $0x18] sm:$0xf]
        %v308 = vld [vmem:[%s1 + $0x1c] sm:$0xf]
        %v309 = vld [vmem:[%s1 + $0x20] sm:$0xf]
        %v310 = vld [vmem:[%s1 + $0x24] sm:$0xf]
        %v311 = vld [vmem:[%s1 + $0x28] sm:$0xf]
        %v312 = vld [vmem:[%s1 + $0x2c] sm:$0xf]
        %v313 = vld [vmem:[%s1 + $0x30] sm:$0xf]
        %v314 = vld [vmem:[%s1 + $0x34] sm:$0xf]
        %v315 = vld [vmem:[%s1 + $0x38] sm:$0xf]
        %v316 = vld [vmem:[%s1 + $0x3c] sm:$0xf]
        %v317 = vld [vmem:[%s1 + $0x40] sm:$0xf]
        %v318 = vld [vmem:[%s1 + $0x44] sm:$0xf]
        %v319 = vld [vmem:[%s1 + $0x48] sm:$0xf]
        %v320 = vld [vmem:[%s1 + $0x4c] sm:$0xf]
        %v321 = vld [vmem:[%s1 + $0x50] sm:$0xf]
        %v322 = vld [vmem:[%s1 + $0x54] sm:$0xf]
        %v323 = vld [vmem:[%s1 + $0x58] sm:$0xf]
        %v324 = vld [vmem:[%s1 + $0x5c] sm:$0xf]
        %v325 = vld [vmem:[%s1 + $0x60] sm:$0xf]
        %v326 = vld [vmem:[%s1 + $0x64] sm:$0xf]
        %v327 = vld [vmem:[%s1 + $0x68] sm:$0xf]
        %v328 = vld [vmem:[%s1 + $0x6c] sm:$0xf]
        %v329 = vld [vmem:[%s1 + $0x70] sm:$0xf]
        %v330 = vld [vmem:[%s1 + $0x74] sm:$0xf]
        %v331 = vld [vmem:[%s1 + $0x78] sm:$0xf]
        %v332 = vld [vmem:[%s1 + $0x7c] sm:$0xf]
        %v337 = vunpack.c.l.b16 %v297
        %v338 = vunpack.c.h.b16 %v297
        %v339 = vunpack.c.l.b16 %v298
        %v340 = vunpack.c.h.b16 %v298
        %v341 = vunpack.c.l.b16 %v299
        %v342 = vunpack.c.h.b16 %v299
        %v343 = vunpack.c.l.b16 %v300
        %v344 = vunpack.c.h.b16 %v300
        %v345 = vpack.c.b16 %v339, %v337
        %v346 = vpack.c.b16 %v340, %v338
        %v347 = vpack.c.b16 %v343, %v341
        %v348 = vpack.c.b16 %v344, %v342
        %v385 = vunpack.c.l.b16 %v301
        %v386 = vunpack.c.l.b16 %v302
        %v387 = vunpack.c.l.b16 %v303
        %v388 = vunpack.c.l.b16 %v304
        %v389 = vunpack.c.l.b16 %v305
        %v390 = vunpack.c.l.b16 %v306
        %v391 = vunpack.c.l.b16 %v307
        %v392 = vunpack.c.l.b16 %v308
        %v393 = vunpack.c.l.b16 %v309
        %v394 = vunpack.c.l.b16 %v310
        %v395 = vunpack.c.l.b16 %v311
        %v396 = vunpack.c.l.b16 %v312
        %v397 = vunpack.c.l.b16 %v313
        %v398 = vunpack.c.l.b16 %v314
        %v399 = vunpack.c.l.b16 %v315
        %v400 = vunpack.c.l.b16 %v316
        %v401 = vunpack.c.l.b16 %v317
        %v402 = vunpack.c.l.b16 %v318
        %v403 = vunpack.c.l.b16 %v319
        %v404 = vunpack.c.l.b16 %v320
        %v405 = vunpack.c.l.b16 %v321
        %v406 = vunpack.c.l.b16 %v322
        %v407 = vunpack.c.l.b16 %v323
        %v408 = vunpack.c.l.b16 %v324
        %v409 = vunpack.c.l.b16 %v325
        %v410 = vunpack.c.l.b16 %v326
        %v411 = vunpack.c.l.b16 %v327
        %v412 = vunpack.c.l.b16 %v328
        %v413 = vunpack.c.l.b16 %v329
        %v414 = vunpack.c.l.b16 %v330
        %v415 = vunpack.c.l.b16 %v331
        %v416 = vunpack.c.l.b16 %v332
        %v417 = vpack.c.b16 %v386, %v385
        %v418 = vpack.c.b16 %v388, %v387
        %v419 = vpack.c.b16 %v390, %v389
        %v420 = vpack.c.b16 %v392, %v391
        %v421 = vpack.c.b16 %v394, %v393
        %v422 = vpack.c.b16 %v396, %v395
        %v423 = vpack.c.b16 %v398, %v397
        %v424 = vpack.c.b16 %v400, %v399
        %v425 = vpack.c.b16 %v402, %v401
        %v426 = vpack.c.b16 %v404, %v403
        %v427 = vpack.c.b16 %v406, %v405
        %v428 = vpack.c.b16 %v408, %v407
        %v429 = vpack.c.b16 %v410, %v409
        %v430 = vpack.c.b16 %v412, %v411
        %v431 = vpack.c.b16 %v414, %v413
        %v432 = vpack.c.b16 %v416, %v415
        %449 = vmatprep.subr.bf16.mxu0 0
        %450 = vmatpush1.bf16.msra.mxu0 %v417
        %451 = vmatprep.subr.bf16.mxu0 0
        %452 = vmatpush1.bf16.msra.mxu0 %v418
        %453 = vmatprep.subr.bf16.mxu0 0
        %454 = vmatpush1.bf16.msra.mxu0 %v419
        %455 = vmatprep.subr.bf16.mxu0 0
        %456 = vmatpush1.bf16.msra.mxu0 %v420
        %457 = vmatprep.subr.bf16.mxu0 0
        %458 = vmatpush1.bf16.msra.mxu0 %v421
        %459 = vmatprep.subr.bf16.mxu0 0
        %460 = vmatpush1.bf16.msra.mxu0 %v422
        %461 = vmatprep.subr.bf16.mxu0 0
        %462 = vmatpush1.bf16.msra.mxu0 %v423
        %463 = vmatprep.subr.bf16.mxu0 0
        %464 = vmatpush1.bf16.msra.mxu0 %v424
        %465 = vmatprep.subr.bf16.mxu0 0
        %466 = vmatpush1.bf16.msra.mxu0 %v425
        %467 = vmatprep.subr.bf16.mxu0 0
        %468 = vmatpush1.bf16.msra.mxu0 %v426
        %469 = vmatprep.subr.bf16.mxu0 0
        %470 = vmatpush1.bf16.msra.mxu0 %v427
        %471 = vmatprep.subr.bf16.mxu0 0
        %472 = vmatpush1.bf16.msra.mxu0 %v428
        %473 = vmatprep.subr.bf16.mxu0 0
        %474 = vmatpush1.bf16.msra.mxu0 %v429
        %475 = vmatprep.subr.bf16.mxu0 0
        %476 = vmatpush1.bf16.msra.mxu0 %v430
        %477 = vmatprep.subr.bf16.mxu0 0
        %478 = vmatpush1.bf16.msra.mxu0 %v431
        %479 = vmatprep.subr.bf16.mxu0 0
        %480 = vmatpush1.bf16.msra.mxu0 %v432
        %481 = vmatprep.mubr.bf16.mxu0 %v346
        %482 = vmatmul.mubr.bf16.gmra.mrb[0].mxu0 %v345
        %v483 = vpop.f32.mrb[0].mxu0
        %v484 = vadd.f32 0.0, %v483
        %v485 = vpop.f32.mrb[0].mxu0
        %v486 = vpop.f32.mrb[0].mxu0
        %v487 = vadd.f32 0.0, %v486
        %v488 = vpop.f32.mrb[0].mxu0
        %489 = vmatprep.mubr.bf16.mxu0 %v348
        %490 = vmatmul.mubr.bf16.gmra.mrb[0].mxu0 %v347
        %v491 = vpop.f32.mrb[0].mxu0
        %v492 = vadd.f32 0.0, %v491
        %v493 = vpop.f32.mrb[0].mxu0
        %v494 = vpop.f32.mrb[0].mxu0
        %v495 = vadd.f32 0.0, %v494
        %v496 = vpop.f32.mrb[0].mxu0
        %497 = vdwg.mxu0
        %v498 = vld [vmem:[%s2] sm:$0x1]
        %v500 = vlaneseq
        %v501 = vshrl.u32 %v500, 7
        %v502 = vsub.s32 0, %v501
        %v503 = vrot.slane %v498, %v502
        %v505 = vmul.f32 %v484, %v503
        %v506 = vmul.f32 %v487, %v503
        %v507 = vmul.f32 %v492, %v503
        %v508 = vmul.f32 %v495, %v503
        %v509 = vld [vmem:[%s3] sm:$0x1]
        %v511 = vlaneseq
        %v512 = vshrl.u32 %v511, 7
        %v513 = vsub.s32 0, %v512
        %v514 = vrot.slane %v509, %v513
        %v516 = vadd.f32 %v505, %v514
        %v517 = vadd.f32 %v506, %v514
        %v518 = vadd.f32 %v507, %v514
        %v519 = vadd.f32 %v508, %v514
        %v520 = vmax.f32 %v516, 0.0
        %v521 = vmax.f32 %v517, 0.0
        %v522 = vmax.f32 %v518, 0.0
        %v523 = vmax.f32 %v519, 0.0
        %s524 = scalar_lea.vmem %s266, 32 [#allocation2]
        %v525 = vld [vmem:[%s524] sm:$0xff]
        %v526 = vld [vmem:[%s524 + $0x8] sm:$0xff]
        %v527 = vld [vmem:[%s524 + $0x10] sm:$0xff]
        %v528 = vld [vmem:[%s524 + $0x18] sm:$0xff]
        %v533 = vunpack.c.l.b16 %v525
        %v534 = vunpack.c.h.b16 %v525
        %v535 = vunpack.c.l.b16 %v526
        %v536 = vunpack.c.h.b16 %v526
        %v537 = vunpack.c.l.b16 %v527
        %v538 = vunpack.c.h.b16 %v527
        %v539 = vunpack.c.l.b16 %v528
        %v540 = vunpack.c.h.b16 %v528
        %v541 = vpack.c.b16 %v535, %v533
        %v542 = vpack.c.b16 %v536, %v534
        %v543 = vpack.c.b16 %v539, %v537
        %v544 = vpack.c.b16 %v540, %v538
        %549 = vmatprep.subr.bf16.mxu0 0
        %550 = vmatpush1.bf16.msra.mxu0 %v417
        %551 = vmatprep.subr.bf16.mxu0 0
        %552 = vmatpush1.bf16.msra.mxu0 %v418
        %553 = vmatprep.subr.bf16.mxu0 0
        %554 = vmatpush1.bf16.msra.mxu0 %v419
        %555 = vmatprep.subr.bf16.mxu0 0
        %556 = vmatpush1.bf16.msra.mxu0 %v420
        %557 = vmatprep.subr.bf16.mxu0 0
        %558 = vmatpush1.bf16.msra.mxu0 %v421
        %559 = vmatprep.subr.bf16.mxu0 0
        %560 = vmatpush1.bf16.msra.mxu0 %v422
        %561 = vmatprep.subr.bf16.mxu0 0
        %562 = vmatpush1.bf16.msra.mxu0 %v423
        %563 = vmatprep.subr.bf16.mxu0 0
        %564 = vmatpush1.bf16.msra.mxu0 %v424
        %565 = vmatprep.subr.bf16.mxu0 0
        %566 = vmatpush1.bf16.msra.mxu0 %v425
        %567 = vmatprep.subr.bf16.mxu0 0
        %568 = vmatpush1.bf16.msra.mxu0 %v426
        %569 = vmatprep.subr.bf16.mxu0 0
        %570 = vmatpush1.bf16.msra.mxu0 %v427
        %571 = vmatprep.subr.bf16.mxu0 0
        %572 = vmatpush1.bf16.msra.mxu0 %v428
        %573 = vmatprep.subr.bf16.mxu0 0
        %574 = vmatpush1.bf16.msra.mxu0 %v429
        %575 = vmatprep.subr.bf16.mxu0 0
        %576 = vmatpush1.bf16.msra.mxu0 %v430
        %577 = vmatprep.subr.bf16.mxu0 0
        %578 = vmatpush1.bf16.msra.mxu0 %v431
        %579 = vmatprep.subr.bf16.mxu0 0
        %580 = vmatpush1.bf16.msra.mxu0 %v432
        %581 = vmatprep.mubr.bf16.mxu0 %v542
        %582 = vmatmul.mubr.bf16.gmra.mrb[0].mxu0 %v541
        %v583 = vpop.f32.mrb[0].mxu0
        %v584 = vadd.f32 0.0, %v583
        %v585 = vpop.f32.mrb[0].mxu0
        %v586 = vpop.f32.mrb[0].mxu0
        %v587 = vadd.f32 0.0, %v586
        %v588 = vpop.f32.mrb[0].mxu0
        %589 = vmatprep.mubr.bf16.mxu0 %v544
        %590 = vmatmul.mubr.bf16.gmra.mrb[0].mxu0 %v543
        %v591 = vpop.f32.mrb[0].mxu0
        %v592 = vadd.f32 0.0, %v591
        %v593 = vpop.f32.mrb[0].mxu0
        %v594 = vpop.f32.mrb[0].mxu0
        %v595 = vadd.f32 0.0, %v594
        %v596 = vpop.f32.mrb[0].mxu0
        %597 = vdwg.mxu0
        %v598 = vmul.f32 %v584, %v503
        %v599 = vmul.f32 %v587, %v503
        %v600 = vmul.f32 %v592, %v503
        %v601 = vmul.f32 %v595, %v503
        %v602 = vadd.f32 %v598, %v514
        %v603 = vadd.f32 %v599, %v514
        %v604 = vadd.f32 %v600, %v514
        %v605 = vadd.f32 %v601, %v514
        %v606 = vmax.f32 %v602, 0.0
        %v607 = vmax.f32 %v603, 0.0
        %v608 = vmax.f32 %v604, 0.0
        %v609 = vmax.f32 %v605, 0.0
        %v610 = vmax.f32 %v520, %v606
        %v611 = vmax.f32 %v521, %v607
        %v612 = vmax.f32 %v522, %v608
        %v613 = vmax.f32 %v523, %v609
        %s614 = scalar_lea.vmem %s266, 64 [#allocation2]
        %v615 = vld [vmem:[%s614] sm:$0xff]
        %v616 = vld [vmem:[%s614 + $0x8] sm:$0xff]
        %v617 = vld [vmem:[%s614 + $0x10] sm:$0xff]
        %v618 = vld [vmem:[%s614 + $0x18] sm:$0xff]
        %v623 = vunpack.c.l.b16 %v615
        %v624 = vunpack.c.h.b16 %v615
        %v625 = vunpack.c.l.b16 %v616
        %v626 = vunpack.c.h.b16 %v616
        %v627 = vunpack.c.l.b16 %v617
        %v628 = vunpack.c.h.b16 %v617
        %v629 = vunpack.c.l.b16 %v618
        %v630 = vunpack.c.h.b16 %v618
        %v631 = vpack.c.b16 %v625, %v623
        %v632 = vpack.c.b16 %v626, %v624
        %v633 = vpack.c.b16 %v629, %v627
        %v634 = vpack.c.b16 %v630, %v628
        %639 = vmatprep.subr.bf16.mxu0 0
        %640 = vmatpush1.bf16.msra.mxu0 %v417
        %641 = vmatprep.subr.bf16.mxu0 0
        %642 = vmatpush1.bf16.msra.mxu0 %v418
        %643 = vmatprep.subr.bf16.mxu0 0
        %644 = vmatpush1.bf16.msra.mxu0 %v419
        %645 = vmatprep.subr.bf16.mxu0 0
        %646 = vmatpush1.bf16.msra.mxu0 %v420
        %647 = vmatprep.subr.bf16.mxu0 0
        %648 = vmatpush1.bf16.msra.mxu0 %v421
        %649 = vmatprep.subr.bf16.mxu0 0
        %650 = vmatpush1.bf16.msra.mxu0 %v422
        %651 = vmatprep.subr.bf16.mxu0 0
        %652 = vmatpush1.bf16.msra.mxu0 %v423
        %653 = vmatprep.subr.bf16.mxu0 0
        %654 = vmatpush1.bf16.msra.mxu0 %v424
        %655 = vmatprep.subr.bf16.mxu0 0
        %656 = vmatpush1.bf16.msra.mxu0 %v425
        %657 = vmatprep.subr.bf16.mxu0 0
        %658 = vmatpush1.bf16.msra.mxu0 %v426
        %659 = vmatprep.subr.bf16.mxu0 0
        %660 = vmatpush1.bf16.msra.mxu0 %v427
        %661 = vmatprep.subr.bf16.mxu0 0
        %662 = vmatpush1.bf16.msra.mxu0 %v428
        %663 = vmatprep.subr.bf16.mxu0 0
        %664 = vmatpush1.bf16.msra.mxu0 %v429
        %665 = vmatprep.subr.bf16.mxu0 0
        %666 = vmatpush1.bf16.msra.mxu0 %v430
        %667 = vmatprep.subr.bf16.mxu0 0
        %668 = vmatpush1.bf16.msra.mxu0 %v431
        %669 = vmatprep.subr.bf16.mxu0 0
        %670 = vmatpush1.bf16.msra.mxu0 %v432
        %671 = vmatprep.mubr.bf16.mxu0 %v632
        %672 = vmatmul.mubr.bf16.gmra.mrb[0].mxu0 %v631
        %v673 = vpop.f32.mrb[0].mxu0
        %v674 = vadd.f32 0.0, %v673
        %v675 = vpop.f32.mrb[0].mxu0
        %v676 = vpop.f32.mrb[0].mxu0
        %v677 = vadd.f32 0.0, %v676
        %v678 = vpop.f32.mrb[0].mxu0
        %679 = vmatprep.mubr.bf16.mxu0 %v634
        %680 = vmatmul.mubr.bf16.gmra.mrb[0].mxu0 %v633
        %v681 = vpop.f32.mrb[0].mxu0
        %v682 = vadd.f32 0.0, %v681
        %v683 = vpop.f32.mrb[0].mxu0
        %v684 = vpop.f32.mrb[0].mxu0
        %v685 = vadd.f32 0.0, %v684
        %v686 = vpop.f32.mrb[0].mxu0
        %687 = vdwg.mxu0
        %v688 = vmul.f32 %v674, %v503
        %v689 = vmul.f32 %v677, %v503
        %v690 = vmul.f32 %v682, %v503
        %v691 = vmul.f32 %v685, %v503
        %v692 = vadd.f32 %v688, %v514
        %v693 = vadd.f32 %v689, %v514
        %v694 = vadd.f32 %v690, %v514
        %v695 = vadd.f32 %v691, %v514
        %v696 = vmax.f32 %v692, 0.0
        %v697 = vmax.f32 %v693, 0.0
        %v698 = vmax.f32 %v694, 0.0
        %v699 = vmax.f32 %v695, 0.0
        %v700 = vmax.f32 %v610, %v696
        %v701 = vmax.f32 %v611, %v697
        %v702 = vmax.f32 %v612, %v698
        %v703 = vmax.f32 %v613, %v699
        %s704 = scalar_lea.vmem %s266, 96 [#allocation2]
        %v705 = vld [vmem:[%s704] sm:$0xff]
        %v706 = vld [vmem:[%s704 + $0x8] sm:$0xff]
        %v707 = vld [vmem:[%s704 + $0x10] sm:$0xff]
        %v708 = vld [vmem:[%s704 + $0x18] sm:$0xff]
        %v713 = vunpack.c.l.b16 %v705
        %v714 = vunpack.c.h.b16 %v705
        %v715 = vunpack.c.l.b16 %v706
        %v716 = vunpack.c.h.b16 %v706
        %v717 = vunpack.c.l.b16 %v707
        %v718 = vunpack.c.h.b16 %v707
        %v719 = vunpack.c.l.b16 %v708
        %v720 = vunpack.c.h.b16 %v708
        %v721 = vpack.c.b16 %v715, %v713
        %v722 = vpack.c.b16 %v716, %v714
        %v723 = vpack.c.b16 %v719, %v717
        %v724 = vpack.c.b16 %v720, %v718
        %729 = vmatprep.subr.bf16.mxu0 0
        %730 = vmatpush1.bf16.msra.mxu0 %v417
        %731 = vmatprep.subr.bf16.mxu0 0
        %732 = vmatpush1.bf16.msra.mxu0 %v418
        %733 = vmatprep.subr.bf16.mxu0 0
        %734 = vmatpush1.bf16.msra.mxu0 %v419
        %735 = vmatprep.subr.bf16.mxu0 0
        %736 = vmatpush1.bf16.msra.mxu0 %v420
        %737 = vmatprep.subr.bf16.mxu0 0
        %738 = vmatpush1.bf16.msra.mxu0 %v421
        %739 = vmatprep.subr.bf16.mxu0 0
        %740 = vmatpush1.bf16.msra.mxu0 %v422
        %741 = vmatprep.subr.bf16.mxu0 0
        %742 = vmatpush1.bf16.msra.mxu0 %v423
        %743 = vmatprep.subr.bf16.mxu0 0
        %744 = vmatpush1.bf16.msra.mxu0 %v424
        %745 = vmatprep.subr.bf16.mxu0 0
        %746 = vmatpush1.bf16.msra.mxu0 %v425
        %747 = vmatprep.subr.bf16.mxu0 0
        %748 = vmatpush1.bf16.msra.mxu0 %v426
        %749 = vmatprep.subr.bf16.mxu0 0
        %750 = vmatpush1.bf16.msra.mxu0 %v427
        %751 = vmatprep.subr.bf16.mxu0 0
        %752 = vmatpush1.bf16.msra.mxu0 %v428
        %753 = vmatprep.subr.bf16.mxu0 0
        %754 = vmatpush1.bf16.msra.mxu0 %v429
        %755 = vmatprep.subr.bf16.mxu0 0
        %756 = vmatpush1.bf16.msra.mxu0 %v430
        %757 = vmatprep.subr.bf16.mxu0 0
        %758 = vmatpush1.bf16.msra.mxu0 %v431
        %759 = vmatprep.subr.bf16.mxu0 0
        %760 = vmatpush1.bf16.msra.mxu0 %v432
        %761 = vmatprep.mubr.bf16.mxu0 %v722
        %762 = vmatmul.mubr.bf16.gmra.mrb[0].mxu0 %v721
        %v763 = vpop.f32.mrb[0].mxu0
        %v764 = vadd.f32 0.0, %v763
        %v765 = vpop.f32.mrb[0].mxu0
        %v766 = vpop.f32.mrb[0].mxu0
        %v767 = vadd.f32 0.0, %v766
        %v768 = vpop.f32.mrb[0].mxu0
        %769 = vmatprep.mubr.bf16.mxu0 %v724
        %770 = vmatmul.mubr.bf16.gmra.mrb[0].mxu0 %v723
        %v771 = vpop.f32.mrb[0].mxu0
        %v772 = vadd.f32 0.0, %v771
        %v773 = vpop.f32.mrb[0].mxu0
        %v774 = vpop.f32.mrb[0].mxu0
        %v775 = vadd.f32 0.0, %v774
        %v776 = vpop.f32.mrb[0].mxu0
        %777 = vdwg.mxu0
        %v778 = vmul.f32 %v764, %v503
        %v779 = vmul.f32 %v767, %v503
        %v780 = vmul.f32 %v772, %v503
        %v781 = vmul.f32 %v775, %v503
        %v782 = vadd.f32 %v778, %v514
        %v783 = vadd.f32 %v779, %v514
        %v784 = vadd.f32 %v780, %v514
        %v785 = vadd.f32 %v781, %v514
        %v786 = vmax.f32 %v782, 0.0
        %v787 = vmax.f32 %v783, 0.0
        %v788 = vmax.f32 %v784, 0.0
        %v789 = vmax.f32 %v785, 0.0
        %v790 = vmax.f32 %v700, %v786
        %v791 = vmax.f32 %v701, %v787
        %v792 = vmax.f32 %v702, %v788
        %v793 = vmax.f32 %v703, %v789
        %v794 = vpack.c.bf16 %v791, %v790
        %v795 = vpack.c.bf16 %v793, %v792
        %v798 = vunpack.c.l.b16 %v794
        %v799 = vunpack.c.h.b16 %v794
        %v800 = vunpack.c.l.b16 %v795
        %v801 = vunpack.c.h.b16 %v795
        %v802 = vpack.c.b16 %v798, %v798
        %v803 = vpack.c.b16 %v799, %v799
        %v804 = vpack.c.b16 %v800, %v800
        %v805 = vpack.c.b16 %v801, %v801
        %810 = vst [vmem:[%s294] sm:$0xf] %v802
        %811 = vst [vmem:[%s294 + $0x4] sm:$0xf] %v803
        %812 = vst [vmem:[%s294 + $0x8] sm:$0xf] %v804
        %813 = vst [vmem:[%s294 + $0xc] sm:$0xf] %v805
        %s814 = smul.u32 4, %s15
        %p815 = scmp.lt.s32.totalorder %s814, 7
        %s816 = scalar_select %p815, %s814, 7
        %s817 = smul.addr %s816, 4
        %s818 = scalar_lea.vmem %s4, %s817
        // Predicated region
        $region75: #{cnn_forward.8} parent=69 // pred_check
          %p819 = pneg %p122
        $region76: #{cnn_forward.8} parent=69 // pred_check_branch
          %821 = sbr.rel (%p819) target = $region78
        $region77: #{cnn_forward.8} parent=69 // pred_region
          %s822 = smul.u32 4, %s15
        $region78: #{cnn_forward.8} parent=69 // pred_fallthru
          _
      $region70: #{cnn_forward.8} parent=5 // pred_fallthru
        _
      %p823 = scmp.le.s32.totalorder 2, %s10
      // Predicated region
      $region79: #{cnn_forward.8} parent=5 // pred_check
        %p824 = pneg %p823
      $region80: #{cnn_forward.8} parent=5 // pred_check_branch
        %826 = sbr.rel (%p824) target = $region82
      $region81: #{cnn_forward.8} parent=5 // pred_region
        %s827 = ssub.s32 %s10, 2
        // Predicated region
        $region83: #{cnn_forward.8} parent=81 // pred_check
          %p828 = pneg %p128
        $region84: #{cnn_forward.8} parent=81 // pred_check_branch
          %830 = sbr.rel (%p828) target = $region86
        $region85: #{cnn_forward.8} parent=81 // pred_region
          %s831 = smul.u32 4, %s16
          %p832 = scmp.lt.s32.totalorder %s831, 7
          %s833 = scalar_select %p832, %s831, 7
          %s834 = smul.addr %s833, 4
          %s835 = scalar_lea.vmem %s4, %s834
        $region86: #{cnn_forward.8} parent=81 // pred_fallthru
          _
      $region82: #{cnn_forward.8} parent=5 // pred_fallthru
        _
    $region6: #{cnn_forward.8} parent=1 // loop_footer
      %s14 = sadd.s32 1, %s10
    $region7: #{cnn_forward.8} parent=1 // loop_footer_branch
      %9 = sbr.rel target = $region3
    $region8: #{cnn_forward.8} parent=1 // loop_exit
      _

// kernel: cnn_forward.9
$region0: #{cnn_forward.9}
  #allocation0 [shape = 'u32[]', space=smem, size = 0x4, offset = 0x4, fixed_abs, tag = 'smem constant byte address 0x4 - core index']
  #allocation1 [shape = 'u32[144,128]{1,0:T(1,128)}', space=vmem, size = 0x12000, scoped, tag = 'internal scratch']
  %s0 = inlined_call_operand.vmem [shape: bf16[8,512], index: 0, kind: input, shape index: {}]
  %s1 = inlined_call_operand.vmem [shape: bf16[512,128], index: 1, kind: input, shape index: {}]
  %s2 = inlined_call_operand.vmem [shape: f32[1,128], index: 2, kind: input, shape index: {}]
  %s3 = inlined_call_operand.vmem [shape: bf16[128,128], index: 3, kind: input, shape index: {}]
  %s4 = inlined_call_operand.vmem [shape: f32[1,128], index: 4, kind: input, shape index: {}]
  %s5 = inlined_call_operand.vmem [shape: bf16[128,128], index: 5, kind: input, shape index: {}]
  %s6 = inlined_call_operand.vmem [shape: f32[1,128], index: 6, kind: input, shape index: {}]
  %s7 = inlined_call_operand.vmem [shape: f32[8,128], index: 7, kind: output, shape index: {}]
  %s8 = sld [smem:[#allocation0]]
  $region38: #{cnn_forward.9} parent=0
    _
  %s10 = ssub.s32 1, %s8
  %s11 = scalar_select 0, %s10, %s8
  // Predicated region
  $region2: #{cnn_forward.9} parent=0 // pred_check
    _
  $region3: #{cnn_forward.9} parent=0 // pred_check_branch
    %13 = sbr.rel (0) target = $region5
  $region4: #{cnn_forward.9} parent=0 // pred_region
    _
  $region5: #{cnn_forward.9} parent=0 // pred_fallthru
    _
  // Predicated region
  $region6: #{cnn_forward.9} parent=0 // pred_check
    _
  $region7: #{cnn_forward.9} parent=0 // pred_check_branch
    %15 = sbr.rel (0) target = $region9
  $region8: #{cnn_forward.9} parent=0 // pred_region
    _
  $region9: #{cnn_forward.9} parent=0 // pred_fallthru
    _
  // Predicated region
  $region10: #{cnn_forward.9} parent=0 // pred_check
    _
  $region11: #{cnn_forward.9} parent=0 // pred_check_branch
    %17 = sbr.rel (0) target = $region13
  $region12: #{cnn_forward.9} parent=0 // pred_region
    _
  $region13: #{cnn_forward.9} parent=0 // pred_fallthru
    _
  // Predicated region
  $region14: #{cnn_forward.9} parent=0 // pred_check
    _
  $region15: #{cnn_forward.9} parent=0 // pred_check_branch
    %19 = sbr.rel (0) target = $region17
  $region16: #{cnn_forward.9} parent=0 // pred_region
    _
  $region17: #{cnn_forward.9} parent=0 // pred_fallthru
    _
  // Predicated region
  $region18: #{cnn_forward.9} parent=0 // pred_check
    _
  $region19: #{cnn_forward.9} parent=0 // pred_check_branch
    %21 = sbr.rel (0) target = $region21
  $region20: #{cnn_forward.9} parent=0 // pred_region
    _
  $region21: #{cnn_forward.9} parent=0 // pred_fallthru
    _
  // Predicated region
  $region22: #{cnn_forward.9} parent=0 // pred_check
    _
  $region23: #{cnn_forward.9} parent=0 // pred_check_branch
    %23 = sbr.rel (0) target = $region25
  $region24: #{cnn_forward.9} parent=0 // pred_region
    _
  $region25: #{cnn_forward.9} parent=0 // pred_fallthru
    _
  // Predicated region
  $region26: #{cnn_forward.9} parent=0 // pred_check
    _
  $region27: #{cnn_forward.9} parent=0 // pred_check_branch
    %25 = sbr.rel (0) target = $region29
  $region28: #{cnn_forward.9} parent=0 // pred_region
    _
  $region29: #{cnn_forward.9} parent=0 // pred_fallthru
    _
  %v27 = vld [vmem:[%s0] sm:$0xff]
  %v28 = vld [vmem:[%s0 + $0x8] sm:$0xff]
  %v29 = vld [vmem:[%s1] sm:$0xf]
  %v30 = vld [vmem:[%s1 + $0x4] sm:$0xf]
  %v31 = vld [vmem:[%s1 + $0x8] sm:$0xf]
  %v32 = vld [vmem:[%s1 + $0xc] sm:$0xf]
  %v33 = vld [vmem:[%s1 + $0x10] sm:$0xf]
  %v34 = vld [vmem:[%s1 + $0x14] sm:$0xf]
  %v35 = vld [vmem:[%s1 + $0x18] sm:$0xf]
  %v36 = vld [vmem:[%s1 + $0x1c] sm:$0xf]
  %v37 = vld [vmem:[%s1 + $0x20] sm:$0xf]
  %v38 = vld [vmem:[%s1 + $0x24] sm:$0xf]
  %v39 = vld [vmem:[%s1 + $0x28] sm:$0xf]
  %v40 = vld [vmem:[%s1 + $0x2c] sm:$0xf]
  %v41 = vld [vmem:[%s1 + $0x30] sm:$0xf]
  %v42 = vld [vmem:[%s1 + $0x34] sm:$0xf]
  %v43 = vld [vmem:[%s1 + $0x38] sm:$0xf]
  %v44 = vld [vmem:[%s1 + $0x3c] sm:$0xf]
  %v45 = vld [vmem:[%s1 + $0x40] sm:$0xf]
  %v46 = vld [vmem:[%s1 + $0x44] sm:$0xf]
  %v47 = vld [vmem:[%s1 + $0x48] sm:$0xf]
  %v48 = vld [vmem:[%s1 + $0x4c] sm:$0xf]
  %v49 = vld [vmem:[%s1 + $0x50] sm:$0xf]
  %v50 = vld [vmem:[%s1 + $0x54] sm:$0xf]
  %v51 = vld [vmem:[%s1 + $0x58] sm:$0xf]
  %v52 = vld [vmem:[%s1 + $0x5c] sm:$0xf]
  %v53 = vld [vmem:[%s1 + $0x60] sm:$0xf]
  %v54 = vld [vmem:[%s1 + $0x64] sm:$0xf]
  %v55 = vld [vmem:[%s1 + $0x68] sm:$0xf]
  %v56 = vld [vmem:[%s1 + $0x6c] sm:$0xf]
  %v57 = vld [vmem:[%s1 + $0x70] sm:$0xf]
  %v58 = vld [vmem:[%s1 + $0x74] sm:$0xf]
  %v59 = vld [vmem:[%s1 + $0x78] sm:$0xf]
  %v60 = vld [vmem:[%s1 + $0x7c] sm:$0xf]
  %v61 = vld [vmem:[%s1 + $0x80] sm:$0xf]
  %v62 = vld [vmem:[%s1 + $0x84] sm:$0xf]
  %v63 = vld [vmem:[%s1 + $0x88] sm:$0xf]
  %v64 = vld [vmem:[%s1 + $0x8c] sm:$0xf]
  %v65 = vld [vmem:[%s1 + $0x90] sm:$0xf]
  %v66 = vld [vmem:[%s1 + $0x94] sm:$0xf]
  %v67 = vld [vmem:[%s1 + $0x98] sm:$0xf]
  %v68 = vld [vmem:[%s1 + $0x9c] sm:$0xf]
  %v69 = vld [vmem:[%s1 + $0xa0] sm:$0xf]
  %v70 = vld [vmem:[%s1 + $0xa4] sm:$0xf]
  %v71 = vld [vmem:[%s1 + $0xa8] sm:$0xf]
  %v72 = vld [vmem:[%s1 + $0xac] sm:$0xf]
  %v73 = vld [vmem:[%s1 + $0xb0] sm:$0xf]
  %v74 = vld [vmem:[%s1 + $0xb4] sm:$0xf]
  %v75 = vld [vmem:[%s1 + $0xb8] sm:$0xf]
  %v76 = vld [vmem:[%s1 + $0xbc] sm:$0xf]
  %v77 = vld [vmem:[%s1 + $0xc0] sm:$0xf]
  %v78 = vld [vmem:[%s1 + $0xc4] sm:$0xf]
  %v79 = vld [vmem:[%s1 + $0xc8] sm:$0xf]
  %v80 = vld [vmem:[%s1 + $0xcc] sm:$0xf]
  %v81 = vld [vmem:[%s1 + $0xd0] sm:$0xf]
  %v82 = vld [vmem:[%s1 + $0xd4] sm:$0xf]
  %v83 = vld [vmem:[%s1 + $0xd8] sm:$0xf]
  %v84 = vld [vmem:[%s1 + $0xdc] sm:$0xf]
  %v85 = vld [vmem:[%s1 + $0xe0] sm:$0xf]
  %v86 = vld [vmem:[%s1 + $0xe4] sm:$0xf]
  %v87 = vld [vmem:[%s1 + $0xe8] sm:$0xf]
  %v88 = vld [vmem:[%s1 + $0xec] sm:$0xf]
  %v89 = vld [vmem:[%s1 + $0xf0] sm:$0xf]
  %v90 = vld [vmem:[%s1 + $0xf4] sm:$0xf]
  %v91 = vld [vmem:[%s1 + $0xf8] sm:$0xf]
  %v92 = vld [vmem:[%s1 + $0xfc] sm:$0xf]
  %v93 = vld [vmem:[%s2] sm:$0x1]
  %v95 = vlaneseq
  %v96 = vshrl.u32 %v95, 7
  %v97 = vsub.s32 0, %v96
  %v98 = vrot.slane %v93, %v97
  %v102 = vunpack.c.l.b16 %v27
  %v103 = vunpack.c.h.b16 %v27
  %v104 = vunpack.c.l.b16 %v28
  %v105 = vunpack.c.h.b16 %v28
  %v106 = vpack.c.b16 %v102, %v102
  %v107 = vpack.c.b16 %v103, %v103
  %v108 = vpack.c.b16 %v104, %v104
  %v109 = vpack.c.b16 %v105, %v105
  %v178 = vunpack.c.l.b16 %v29
  %v179 = vunpack.c.l.b16 %v30
  %v180 = vunpack.c.l.b16 %v31
  %v181 = vunpack.c.l.b16 %v32
  %v182 = vunpack.c.l.b16 %v33
  %v183 = vunpack.c.l.b16 %v34
  %v184 = vunpack.c.l.b16 %v35
  %v185 = vunpack.c.l.b16 %v36
  %v186 = vunpack.c.l.b16 %v37
  %v187 = vunpack.c.l.b16 %v38
  %v188 = vunpack.c.l.b16 %v39
  %v189 = vunpack.c.l.b16 %v40
  %v190 = vunpack.c.l.b16 %v41
  %v191 = vunpack.c.l.b16 %v42
  %v192 = vunpack.c.l.b16 %v43
  %v193 = vunpack.c.l.b16 %v44
  %v194 = vunpack.c.l.b16 %v45
  %v195 = vunpack.c.l.b16 %v46
  %v196 = vunpack.c.l.b16 %v47
  %v197 = vunpack.c.l.b16 %v48
  %v198 = vunpack.c.l.b16 %v49
  %v199 = vunpack.c.l.b16 %v50
  %v200 = vunpack.c.l.b16 %v51
  %v201 = vunpack.c.l.b16 %v52
  %v202 = vunpack.c.l.b16 %v53
  %v203 = vunpack.c.l.b16 %v54
  %v204 = vunpack.c.l.b16 %v55
  %v205 = vunpack.c.l.b16 %v56
  %v206 = vunpack.c.l.b16 %v57
  %v207 = vunpack.c.l.b16 %v58
  %v208 = vunpack.c.l.b16 %v59
  %v209 = vunpack.c.l.b16 %v60
  %v210 = vunpack.c.l.b16 %v61
  %v211 = vunpack.c.l.b16 %v62
  %v212 = vunpack.c.l.b16 %v63
  %v213 = vunpack.c.l.b16 %v64
  %v214 = vunpack.c.l.b16 %v65
  %v215 = vunpack.c.l.b16 %v66
  %v216 = vunpack.c.l.b16 %v67
  %v217 = vunpack.c.l.b16 %v68
  %v218 = vunpack.c.l.b16 %v69
  %v219 = vunpack.c.l.b16 %v70
  %v220 = vunpack.c.l.b16 %v71
  %v221 = vunpack.c.l.b16 %v72
  %v222 = vunpack.c.l.b16 %v73
  %v223 = vunpack.c.l.b16 %v74
  %v224 = vunpack.c.l.b16 %v75
  %v225 = vunpack.c.l.b16 %v76
  %v226 = vunpack.c.l.b16 %v77
  %v227 = vunpack.c.l.b16 %v78
  %v228 = vunpack.c.l.b16 %v79
  %v229 = vunpack.c.l.b16 %v80
  %v230 = vunpack.c.l.b16 %v81
  %v231 = vunpack.c.l.b16 %v82
  %v232 = vunpack.c.l.b16 %v83
  %v233 = vunpack.c.l.b16 %v84
  %v234 = vunpack.c.l.b16 %v85
  %v235 = vunpack.c.l.b16 %v86
  %v236 = vunpack.c.l.b16 %v87
  %v237 = vunpack.c.l.b16 %v88
  %v238 = vunpack.c.l.b16 %v89
  %v239 = vunpack.c.l.b16 %v90
  %v240 = vunpack.c.l.b16 %v91
  %v241 = vunpack.c.l.b16 %v92
  %v242 = vpack.c.b16 %v179, %v178
  %v243 = vpack.c.b16 %v181, %v180
  %v244 = vpack.c.b16 %v183, %v182
  %v245 = vpack.c.b16 %v185, %v184
  %v246 = vpack.c.b16 %v187, %v186
  %v247 = vpack.c.b16 %v189, %v188
  %v248 = vpack.c.b16 %v191, %v190
  %v249 = vpack.c.b16 %v193, %v192
  %v250 = vpack.c.b16 %v195, %v194
  %v251 = vpack.c.b16 %v197, %v196
  %v252 = vpack.c.b16 %v199, %v198
  %v253 = vpack.c.b16 %v201, %v200
  %v254 = vpack.c.b16 %v203, %v202
  %v255 = vpack.c.b16 %v205, %v204
  %v256 = vpack.c.b16 %v207, %v206
  %v257 = vpack.c.b16 %v209, %v208
  %v258 = vpack.c.b16 %v211, %v210
  %v259 = vpack.c.b16 %v213, %v212
  %v260 = vpack.c.b16 %v215, %v214
  %v261 = vpack.c.b16 %v217, %v216
  %v262 = vpack.c.b16 %v219, %v218
  %v263 = vpack.c.b16 %v221, %v220
  %v264 = vpack.c.b16 %v223, %v222
  %v265 = vpack.c.b16 %v225, %v224
  %v266 = vpack.c.b16 %v227, %v226
  %v267 = vpack.c.b16 %v229, %v228
  %v268 = vpack.c.b16 %v231, %v230
  %v269 = vpack.c.b16 %v233, %v232
  %v270 = vpack.c.b16 %v235, %v234
  %v271 = vpack.c.b16 %v237, %v236
  %v272 = vpack.c.b16 %v239, %v238
  %v273 = vpack.c.b16 %v241, %v240
  %306 = vmatprep.subr.bf16.mxu0 0
  %307 = vmatpush1.bf16.msra.mxu0 %v242
  %308 = vmatprep.subr.bf16.mxu0 0
  %309 = vmatpush1.bf16.msra.mxu0 %v243
  %310 = vmatprep.subr.bf16.mxu0 0
  %311 = vmatpush1.bf16.msra.mxu0 %v244
  %312 = vmatprep.subr.bf16.mxu0 0
  %313 = vmatpush1.bf16.msra.mxu0 %v245
  %314 = vmatprep.subr.bf16.mxu0 0
  %315 = vmatpush1.bf16.msra.mxu0 %v246
  %316 = vmatprep.subr.bf16.mxu0 0
  %317 = vmatpush1.bf16.msra.mxu0 %v247
  %318 = vmatprep.subr.bf16.mxu0 0
  %319 = vmatpush1.bf16.msra.mxu0 %v248
  %320 = vmatprep.subr.bf16.mxu0 0
  %321 = vmatpush1.bf16.msra.mxu0 %v249
  %322 = vmatprep.subr.bf16.mxu0 0
  %323 = vmatpush1.bf16.msra.mxu0 %v250
  %324 = vmatprep.subr.bf16.mxu0 0
  %325 = vmatpush1.bf16.msra.mxu0 %v251
  %326 = vmatprep.subr.bf16.mxu0 0
  %327 = vmatpush1.bf16.msra.mxu0 %v252
  %328 = vmatprep.subr.bf16.mxu0 0
  %329 = vmatpush1.bf16.msra.mxu0 %v253
  %330 = vmatprep.subr.bf16.mxu0 0
  %331 = vmatpush1.bf16.msra.mxu0 %v254
  %332 = vmatprep.subr.bf16.mxu0 0
  %333 = vmatpush1.bf16.msra.mxu0 %v255
  %334 = vmatprep.subr.bf16.mxu0 0
  %335 = vmatpush1.bf16.msra.mxu0 %v256
  %336 = vmatprep.subr.bf16.mxu0 0
  %337 = vmatpush1.bf16.msra.mxu0 %v257
  %338 = vmatprep.mubr.bf16.mxu0 %v107
  %339 = vmatmul.mubr.bf16.gmra.mrb[0].mxu0 %v106
  %v340 = vpop.f32.mrb[0].mxu0
  %v341 = vadd.f32 %v98, %v340
  %v342 = vpop.f32.mrb[0].mxu0
  %v343 = vpop.f32.mrb[0].mxu0
  %v344 = vpop.f32.mrb[0].mxu0
  %345 = vdwg.mxu0
  %346 = vmatprep.subr.bf16.mxu0 0
  %347 = vmatpush1.bf16.msra.mxu0 %v258
  %348 = vmatprep.subr.bf16.mxu0 0
  %349 = vmatpush1.bf16.msra.mxu0 %v259
  %350 = vmatprep.subr.bf16.mxu0 0
  %351 = vmatpush1.bf16.msra.mxu0 %v260
  %352 = vmatprep.subr.bf16.mxu0 0
  %353 = vmatpush1.bf16.msra.mxu0 %v261
  %354 = vmatprep.subr.bf16.mxu0 0
  %355 = vmatpush1.bf16.msra.mxu0 %v262
  %356 = vmatprep.subr.bf16.mxu0 0
  %357 = vmatpush1.bf16.msra.mxu0 %v263
  %358 = vmatprep.subr.bf16.mxu0 0
  %359 = vmatpush1.bf16.msra.mxu0 %v264
  %360 = vmatprep.subr.bf16.mxu0 0
  %361 = vmatpush1.bf16.msra.mxu0 %v265
  %362 = vmatprep.subr.bf16.mxu0 0
  %363 = vmatpush1.bf16.msra.mxu0 %v266
  %364 = vmatprep.subr.bf16.mxu0 0
  %365 = vmatpush1.bf16.msra.mxu0 %v267
  %366 = vmatprep.subr.bf16.mxu0 0
  %367 = vmatpush1.bf16.msra.mxu0 %v268
  %368 = vmatprep.subr.bf16.mxu0 0
  %369 = vmatpush1.bf16.msra.mxu0 %v269
  %370 = vmatprep.subr.bf16.mxu0 0
  %371 = vmatpush1.bf16.msra.mxu0 %v270
  %372 = vmatprep.subr.bf16.mxu0 0
  %373 = vmatpush1.bf16.msra.mxu0 %v271
  %374 = vmatprep.subr.bf16.mxu0 0
  %375 = vmatpush1.bf16.msra.mxu0 %v272
  %376 = vmatprep.subr.bf16.mxu0 0
  %377 = vmatpush1.bf16.msra.mxu0 %v273
  %378 = vmatprep.mubr.bf16.mxu0 %v109
  %379 = vmatmul.mubr.bf16.gmra.mrb[0].mxu0 %v108
  %v380 = vpop.f32.mrb[0].mxu0
  %v381 = vadd.f32 %v341, %v380
  %v382 = vpop.f32.mrb[0].mxu0
  %v383 = vpop.f32.mrb[0].mxu0
  %v384 = vpop.f32.mrb[0].mxu0
  %385 = vdwg.mxu0
  %v386 = vmax.f32 %v381, 0.0
  %v387 = vpack.c.bf16 %v386, %v386
  %v388 = vld [vmem:[%s3] sm:$0xf]
  %v389 = vld [vmem:[%s3 + $0x4] sm:$0xf]
  %v390 = vld [vmem:[%s3 + $0x8] sm:$0xf]
  %v391 = vld [vmem:[%s3 + $0xc] sm:$0xf]
  %v392 = vld [vmem:[%s3 + $0x10] sm:$0xf]
  %v393 = vld [vmem:[%s3 + $0x14] sm:$0xf]
  %v394 = vld [vmem:[%s3 + $0x18] sm:$0xf]
  %v395 = vld [vmem:[%s3 + $0x1c] sm:$0xf]
  %v396 = vld [vmem:[%s3 + $0x20] sm:$0xf]
  %v397 = vld [vmem:[%s3 + $0x24] sm:$0xf]
  %v398 = vld [vmem:[%s3 + $0x28] sm:$0xf]
  %v399 = vld [vmem:[%s3 + $0x2c] sm:$0xf]
  %v400 = vld [vmem:[%s3 + $0x30] sm:$0xf]
  %v401 = vld [vmem:[%s3 + $0x34] sm:$0xf]
  %v402 = vld [vmem:[%s3 + $0x38] sm:$0xf]
  %v403 = vld [vmem:[%s3 + $0x3c] sm:$0xf]
  %v404 = vld [vmem:[%s4] sm:$0x1]
  %v406 = vlaneseq
  %v407 = vshrl.u32 %v406, 7
  %v408 = vsub.s32 0, %v407
  %v409 = vrot.slane %v404, %v408
  %v427 = vunpack.c.l.b16 %v388
  %v428 = vunpack.c.l.b16 %v389
  %v429 = vunpack.c.l.b16 %v390
  %v430 = vunpack.c.l.b16 %v391
  %v431 = vunpack.c.l.b16 %v392
  %v432 = vunpack.c.l.b16 %v393
  %v433 = vunpack.c.l.b16 %v394
  %v434 = vunpack.c.l.b16 %v395
  %v435 = vunpack.c.l.b16 %v396
  %v436 = vunpack.c.l.b16 %v397
  %v437 = vunpack.c.l.b16 %v398
  %v438 = vunpack.c.l.b16 %v399
  %v439 = vunpack.c.l.b16 %v400
  %v440 = vunpack.c.l.b16 %v401
  %v441 = vunpack.c.l.b16 %v402
  %v442 = vunpack.c.l.b16 %v403
  %v443 = vpack.c.b16 %v428, %v427
  %v444 = vpack.c.b16 %v430, %v429
  %v445 = vpack.c.b16 %v432, %v431
  %v446 = vpack.c.b16 %v434, %v433
  %v447 = vpack.c.b16 %v436, %v435
  %v448 = vpack.c.b16 %v438, %v437
  %v449 = vpack.c.b16 %v440, %v439
  %v450 = vpack.c.b16 %v442, %v441
  %459 = vmatprep.subr.bf16.mxu0 0
  %460 = vmatpush1.bf16.msra.mxu0 %v443
  %461 = vmatprep.subr.bf16.mxu0 0
  %462 = vmatpush1.bf16.msra.mxu0 %v444
  %463 = vmatprep.subr.bf16.mxu0 0
  %464 = vmatpush1.bf16.msra.mxu0 %v445
  %465 = vmatprep.subr.bf16.mxu0 0
  %466 = vmatpush1.bf16.msra.mxu0 %v446
  %467 = vmatprep.subr.bf16.mxu0 0
  %468 = vmatpush1.bf16.msra.mxu0 %v447
  %469 = vmatprep.subr.bf16.mxu0 0
  %470 = vmatpush1.bf16.msra.mxu0 %v448
  %471 = vmatprep.subr.bf16.mxu0 0
  %472 = vmatpush1.bf16.msra.mxu0 %v449
  %473 = vmatprep.subr.bf16.mxu0 0
  %474 = vmatpush1.bf16.msra.mxu0 %v450
  %475 = vmatprep.subr.bf16.mxu0 0
  %476 = vmatpush1.bf16.msra.mxu0 0
  %477 = vmatprep.subr.bf16.mxu0 0
  %478 = vmatpush1.bf16.msra.mxu0 0
  %479 = vmatprep.subr.bf16.mxu0 0
  %480 = vmatpush1.bf16.msra.mxu0 0
  %481 = vmatprep.subr.bf16.mxu0 0
  %482 = vmatpush1.bf16.msra.mxu0 0
  %483 = vmatprep.subr.bf16.mxu0 0
  %484 = vmatpush1.bf16.msra.mxu0 0
  %485 = vmatprep.subr.bf16.mxu0 0
  %486 = vmatpush1.bf16.msra.mxu0 0
  %487 = vmatprep.subr.bf16.mxu0 0
  %488 = vmatpush1.bf16.msra.mxu0 0
  %489 = vmatprep.subr.bf16.mxu0 0
  %490 = vmatpush1.bf16.msra.mxu0 0
  %491 = vmatprep.mubr.bf16.mxu0 0
  %492 = vmatmul.mubr.bf16.gmra.mrb[0].mxu0 %v387
  %v493 = vpop.f32.mrb[0].mxu0
  %v494 = vadd.f32 %v409, %v493
  %v495 = vpop.f32.mrb[0].mxu0
  %v496 = vpop.f32.mrb[0].mxu0
  %v497 = vpop.f32.mrb[0].mxu0
  %498 = vdwg.mxu0
  %v499 = vmax.f32 %v494, 0.0
  %v500 = vpack.c.bf16 %v499, %v499
  %v501 = vld [vmem:[%s5] sm:$0xf]
  %v502 = vld [vmem:[%s5 + $0x4] sm:$0xf]
  %v503 = vld [vmem:[%s5 + $0x8] sm:$0xf]
  %v504 = vld [vmem:[%s5 + $0xc] sm:$0xf]
  %v505 = vld [vmem:[%s5 + $0x10] sm:$0xf]
  %v506 = vld [vmem:[%s5 + $0x14] sm:$0xf]
  %v507 = vld [vmem:[%s5 + $0x18] sm:$0xf]
  %v508 = vld [vmem:[%s5 + $0x1c] sm:$0xf]
  %v509 = vld [vmem:[%s5 + $0x20] sm:$0xf]
  %v510 = vld [vmem:[%s5 + $0x24] sm:$0xf]
  %v511 = vld [vmem:[%s5 + $0x28] sm:$0xf]
  %v512 = vld [vmem:[%s5 + $0x2c] sm:$0xf]
  %v513 = vld [vmem:[%s5 + $0x30] sm:$0xf]
  %v514 = vld [vmem:[%s5 + $0x34] sm:$0xf]
  %v515 = vld [vmem:[%s5 + $0x38] sm:$0xf]
  %v516 = vld [vmem:[%s5 + $0x3c] sm:$0xf]
  %v517 = vld [vmem:[%s6] sm:$0x1]
  %v519 = vlaneseq
  %v520 = vshrl.u32 %v519, 7
  %v521 = vsub.s32 0, %v520
  %v522 = vrot.slane %v517, %v521
  %v540 = vunpack.c.l.b16 %v501
  %v541 = vunpack.c.l.b16 %v502
  %v542 = vunpack.c.l.b16 %v503
  %v543 = vunpack.c.l.b16 %v504
  %v544 = vunpack.c.l.b16 %v505
  %v545 = vunpack.c.l.b16 %v506
  %v546 = vunpack.c.l.b16 %v507
  %v547 = vunpack.c.l.b16 %v508
  %v548 = vunpack.c.l.b16 %v509
  %v549 = vunpack.c.l.b16 %v510
  %v550 = vunpack.c.l.b16 %v511
  %v551 = vunpack.c.l.b16 %v512
  %v552 = vunpack.c.l.b16 %v513
  %v553 = vunpack.c.l.b16 %v514
  %v554 = vunpack.c.l.b16 %v515
  %v555 = vunpack.c.l.b16 %v516
  %v556 = vpack.c.b16 %v541, %v540
  %v557 = vpack.c.b16 %v543, %v542
  %v558 = vpack.c.b16 %v545, %v544
  %v559 = vpack.c.b16 %v547, %v546
  %v560 = vpack.c.b16 %v549, %v548
  %v561 = vpack.c.b16 %v551, %v550
  %v562 = vpack.c.b16 %v553, %v552
  %v563 = vpack.c.b16 %v555, %v554
  %572 = vmatprep.subr.bf16.mxu0 0
  %573 = vmatpush1.bf16.msra.mxu0 %v556
  %574 = vmatprep.subr.bf16.mxu0 0
  %575 = vmatpush1.bf16.msra.mxu0 %v557
  %576 = vmatprep.subr.bf16.mxu0 0
  %577 = vmatpush1.bf16.msra.mxu0 %v558
  %578 = vmatprep.subr.bf16.mxu0 0
  %579 = vmatpush1.bf16.msra.mxu0 %v559
  %580 = vmatprep.subr.bf16.mxu0 0
  %581 = vmatpush1.bf16.msra.mxu0 %v560
  %582 = vmatprep.subr.bf16.mxu0 0
  %583 = vmatpush1.bf16.msra.mxu0 %v561
  %584 = vmatprep.subr.bf16.mxu0 0
  %585 = vmatpush1.bf16.msra.mxu0 %v562
  %586 = vmatprep.subr.bf16.mxu0 0
  %587 = vmatpush1.bf16.msra.mxu0 %v563
  %588 = vmatprep.subr.bf16.mxu0 0
  %589 = vmatpush1.bf16.msra.mxu0 0
  %590 = vmatprep.subr.bf16.mxu0 0
  %591 = vmatpush1.bf16.msra.mxu0 0
  %592 = vmatprep.subr.bf16.mxu0 0
  %593 = vmatpush1.bf16.msra.mxu0 0
  %594 = vmatprep.subr.bf16.mxu0 0
  %595 = vmatpush1.bf16.msra.mxu0 0
  %596 = vmatprep.subr.bf16.mxu0 0
  %597 = vmatpush1.bf16.msra.mxu0 0
  %598 = vmatprep.subr.bf16.mxu0 0
  %599 = vmatpush1.bf16.msra.mxu0 0
  %600 = vmatprep.subr.bf16.mxu0 0
  %601 = vmatpush1.bf16.msra.mxu0 0
  %602 = vmatprep.subr.bf16.mxu0 0
  %603 = vmatpush1.bf16.msra.mxu0 0
  %604 = vmatprep.mubr.bf16.mxu0 0
  %605 = vmatmul.mubr.bf16.gmra.mrb[0].mxu0 %v500
  %v606 = vpop.f32.mrb[0].mxu0
  %v607 = vadd.f32 %v522, %v606
  %v608 = vpop.f32.mrb[0].mxu0
  %v609 = vpop.f32.mrb[0].mxu0
  %v610 = vpop.f32.mrb[0].mxu0
  %611 = vdwg.mxu0
  %612 = vst [vmem:[%s7] sm:$0xff] %v607
  // Predicated region
  $region30: #{cnn_forward.9} parent=0 // pred_check
    _
  $region31: #{cnn_forward.9} parent=0 // pred_check_branch
    %614 = sbr.rel (0) target = $region33
  $region32: #{cnn_forward.9} parent=0 // pred_region
    _
  $region33: #{cnn_forward.9} parent=0 // pred_fallthru
    _
  // Predicated region
  $region34: #{cnn_forward.9} parent=0 // pred_check
    _
  $region35: #{cnn_forward.9} parent=0 // pred_check_branch
    %616 = sbr.rel (0) target = $region37
  $region36: #{cnn_forward.9} parent=0 // pred_region
    _
  $region37: #{cnn_forward.9} parent=0 // pred_fallthru
    _

</llo_original>
